<compile_context>
chip_gen: v5e
topology: v5e:2x2
jax: 0.10.0
libtpu: 0.0.40
codegen_flags: <defaults>
</compile_context>

<pallas_src>
import numpy as np
import jax
import jax.numpy as jnp
from jax.experimental import pallas as pl
from jax.experimental.pallas import tpu as pltpu

EXPANSION = 4
BN_EPS = 1e-5
LANE = 128
_PREC = jax.lax.Precision.HIGHEST      # reference path only


# ------------------------------ small helpers ------------------------------ #

def _round_up(x, m):
    return (x + m - 1) // m * m


def _row_tile(n, target=256):
    """Largest row tile (multiple of 8) from a candidate list that divides n."""
    for cand in (target, 128, 64, 32, 16, 8):
        if cand <= n and n % cand == 0:
            return cand
    return n                            # block == full dim (always legal)


def _vmem_limit_bytes():
    """Budget VMEM from the actual chip (64 MiB on v7x, 128 MiB on v5e/v6e)."""
    try:
        cap = pltpu.get_tpu_info().vmem_capacity_bytes
        return min(cap // 2, 64 * 1024 * 1024)
    except Exception:
        return None


def _fold_bn(s, q, count, gamma, beta):
    """Fold batch-stat sums into a single per-channel scale/shift (training-mode BN)."""
    mean = s / count
    var = q / count - mean * mean                     # biased variance
    scale = gamma * jax.lax.rsqrt(var + BN_EPS)
    shift = beta - mean * scale
    return scale, shift


# ----------------------- stage 1: conv1 (1x1) + stats ----------------------- #

def _conv1x1_stats_kernel(x_ref, w_ref, y_ref, s_ref, q_ref):
    y = jnp.dot(x_ref[...].astype(jnp.bfloat16), w_ref[...],
                preferred_element_type=jnp.float32)
    y_ref[...] = y

    @pl.when(pl.program_id(0) == 0)
    def _():
        s_ref[...] = jnp.zeros_like(s_ref)
        q_ref[...] = jnp.zeros_like(q_ref)

    s_ref[...] += jnp.sum(y, axis=0, keepdims=True)
    q_ref[...] += jnp.sum(y * y, axis=0, keepdims=True)


# ------------- stage 2: bn1+relu -> 3x3 conv (fused 9 taps) + stats ---------- #

def _make_conv2_kernel(H, W, Cp):
    HW = H * W

    def kernel(y1_ref, sc_ref, sh_ref, w_ref, y2_ref, s_ref, q_ref):
        # bn1 (folded scale/shift) + relu, then bf16 for the MXU
        h = y1_ref[...].reshape(HW, Cp) * sc_ref[...] + sh_ref[...]
        h = jnp.maximum(h, 0.0).astype(jnp.bfloat16)

        # x-coordinate of each flattened row (for left/right edge masking)
        x_col = jax.lax.broadcasted_iota(jnp.int32, (H, W, 1), 1).reshape(HW, 1)

        # 9 spatial taps as static row shifts (zero padded) + edge masks; the row
        # shift handles the top/bottom padding, the mask handles left/right.
        taps = []
        for kh in range(3):
            for kw in range(3):
                dy, dx = kh - 1, kw - 1
                s = dy * W + dx
                if s > 0:
                    t = jnp.concatenate(
                        [h[s:, :], jnp.zeros((s, Cp), h.dtype)], axis=0)
                elif s < 0:
                    t = jnp.concatenate(
                        [jnp.zeros((-s, Cp), h.dtype), h[:HW + s, :]], axis=0)
                else:
                    t = h
                if dx == 1:
                    t = jnp.where(x_col < (W - 1), t, jnp.zeros_like(t))
                elif dx == -1:
                    t = jnp.where(x_col > 0, t, jnp.zeros_like(t))
                taps.append(t)

        # im2col in VMEM: one deep contraction instead of 9 shallow matmuls
        col = jnp.concatenate(taps, axis=-1)                       # (HW, 9*Cp) bf16
        y2 = jnp.dot(col, w_ref[...], preferred_element_type=jnp.float32)
        y2_ref[...] = y2.reshape(1, H, W, Cp)

        @pl.when(pl.program_id(0) == 0)
        def _():
            s_ref[...] = jnp.zeros_like(s_ref)
            q_ref[...] = jnp.zeros_like(q_ref)

        s_ref[...] += jnp.sum(y2, axis=0, keepdims=True)
        q_ref[...] += jnp.sum(y2 * y2, axis=0, keepdims=True)

    return kernel


# ------- stage 3: bn2+relu -> avgpool -> conv3 (+ downsample branch) + stats -- #

def _make_stage3_kernel(H, W, Pp, Cin_p, Cout_p, stride, has_down):
    HW = H * W
    Ho, Wo = H // stride, W // stride
    HWo = Ho * Wo
    inv_area = 1.0 / float(stride * stride)

    def _pool(v, C):
        # (HW, C) f32, NHWC row order -> (HWo, C); VPU adds, no operator matmul.
        if stride == 1:
            return v
        v5 = v.reshape(Ho, stride, Wo, stride, C)
        acc = None
        for a in range(stride):
            for c in range(stride):
                piece = v5[:, a, :, c, :]
                acc = piece if acc is None else acc + piece
        return (acc * inv_area).reshape(HWo, C)

    def _branch(rows_bf16, w_ref, y_ref, s_ref, q_ref):
        y = jnp.dot(rows_bf16, w_ref[...], preferred_element_type=jnp.float32)
        y_ref[...] = y.reshape(1, Ho, Wo, Cout_p)

        @pl.when(pl.program_id(0) == 0)
        def _():
            s_ref[...] = jnp.zeros_like(s_ref)
            q_ref[...] = jnp.zeros_like(q_ref)

        s_ref[...] += jnp.sum(y, axis=0, keepdims=True)
        q_ref[...] += jnp.sum(y * y, axis=0, keepdims=True)

    if has_down:
        def kernel(y2_ref, sc_ref, sh_ref, w3_ref, x_ref, wd_ref,
                   y3_ref, s3_ref, q3_ref, yd_ref, sd_ref, qd_ref):
            h = y2_ref[...].reshape(HW, Pp) * sc_ref[...] + sh_ref[...]
            h = _pool(jnp.maximum(h, 0.0), Pp).astype(jnp.bfloat16)
            _branch(h, w3_ref, y3_ref, s3_ref, q3_ref)
            xi = _pool(x_ref[...].reshape(HW, Cin_p), Cin_p).astype(jnp.bfloat16)
            _branch(xi, wd_ref, yd_ref, sd_ref, qd_ref)
    else:
        def kernel(y2_ref, sc_ref, sh_ref, w3_ref, y3_ref, s3_ref, q3_ref):
            h = y2_ref[...].reshape(HW, Pp) * sc_ref[...] + sh_ref[...]
            h = _pool(jnp.maximum(h, 0.0), Pp).astype(jnp.bfloat16)
            _branch(h, w3_ref, y3_ref, s3_ref, q3_ref)

    return kernel


# -------------------- stage 4: bn3 / bn_d, residual add, relu ---------------- #

def _finalize_down_kernel(y3_ref, sc3_ref, sh3_ref, yd_ref, scd_ref, shd_ref, o_ref):
    main = y3_ref[...] * sc3_ref[...] + sh3_ref[...]
    idn = yd_ref[...] * scd_ref[...] + shd_ref[...]
    o_ref[...] = jnp.maximum(main + idn, 0.0)


def _finalize_identity_kernel(y3_ref, sc3_ref, sh3_ref, x_ref, o_ref):
    main = y3_ref[...] * sc3_ref[...] + sh3_ref[...]
    o_ref[...] = jnp.maximum(main + x_ref[...], 0.0)


# ---------------------------------- wrapper ---------------------------------- #

def init_params(key, inplanes, planes, stride):
    Cout = planes * EXPANSION
    ks = jax.random.split(key, 12)
    p = {
        "conv1": jax.random.normal(ks[0], (planes, inplanes, 1, 1), jnp.float32) * 0.2,
        "conv2": jax.random.normal(ks[1], (planes, planes, 3, 3), jnp.float32) * 0.2,
        "conv3": jax.random.normal(ks[2], (Cout, planes, 1, 1), jnp.float32) * 0.2,
        "bn1_w": 1.0 + 0.1 * jax.random.normal(ks[3], (planes,), jnp.float32),
        "bn1_b": 0.1 * jax.random.normal(ks[4], (planes,), jnp.float32),
        "bn2_w": 1.0 + 0.1 * jax.random.normal(ks[5], (planes,), jnp.float32),
        "bn2_b": 0.1 * jax.random.normal(ks[6], (planes,), jnp.float32),
        "bn3_w": 1.0 + 0.1 * jax.random.normal(ks[7], (Cout,), jnp.float32),
        "bn3_b": 0.1 * jax.random.normal(ks[8], (Cout,), jnp.float32),
    }
    if stride > 1 or inplanes != Cout:
        p["convd"] = jax.random.normal(ks[9], (Cout, inplanes, 1, 1), jnp.float32) * 0.2
        p["bnd_w"] = 1.0 + 0.1 * jax.random.normal(ks[10], (Cout,), jnp.float32)
        p["bnd_b"] = 0.1 * jax.random.normal(ks[11], (Cout,), jnp.float32)
    return p


def bottleneck_pallas(x_nchw, params, planes, stride):
    B, Cin, H, W = x_nchw.shape
    Cout = planes * EXPANSION
    has_down = (stride > 1) or (Cin != Cout)
    Ho, Wo = H // stride, W // stride
    N, No = B * H * W, B * Ho * Wo

    Cin_p = _round_up(Cin, LANE)
    Pp = _round_up(planes, LANE)
    Cout_p = _round_up(Cout, LANE)

    f32, bf16 = jnp.float32, jnp.bfloat16
    vmem = _vmem_limit_bytes()

    def cparams(sem):
        kw = dict(dimension_semantics=sem)
        if vmem is not None:
            kw["vmem_limit_bytes"] = vmem
        return pltpu.CompilerParams(**kw)

    # ---- layout glue: NCHW -> NHWC, zero-pad channels to lane multiples ----
    x_nhwc = jnp.transpose(x_nchw, (0, 2, 3, 1)).astype(f32)
    x4d = jnp.zeros((B, H, W, Cin_p), f32).at[..., :Cin].set(x_nhwc)
    x2d = x4d.reshape(N, Cin_p)

    # ---- weights: padded, bf16 operands ----
    w1 = jnp.zeros((Cin_p, Pp), f32).at[:Cin, :planes].set(
        params["conv1"].reshape(planes, Cin).T).astype(bf16)
    w2t = jnp.transpose(params["conv2"], (2, 3, 1, 0)).reshape(9, planes, planes)
    w2col = jnp.zeros((9, Pp, Pp), f32).at[:, :planes, :planes].set(w2t)
    w2col = w2col.reshape(9 * Pp, Pp).astype(bf16)
    w3 = jnp.zeros((Pp, Cout_p), f32).at[:planes, :Cout].set(
        params["conv3"].reshape(Cout, planes).T).astype(bf16)

    def pad_vec(v, n):
        return jnp.zeros((1, n), f32).at[0, :v.shape[0]].set(v)

    g1, b1 = pad_vec(params["bn1_w"], Pp), pad_vec(params["bn1_b"], Pp)
    g2, b2 = pad_vec(params["bn2_w"], Pp), pad_vec(params["bn2_b"], Pp)
    g3, b3 = pad_vec(params["bn3_w"], Cout_p), pad_vec(params["bn3_b"], Cout_p)

    # ------------------ stage 1: conv1 (1x1) + bn1 batch sums ------------------
    tm = _row_tile(N)
    y1, s1, q1 = pl.pallas_call(
        _conv1x1_stats_kernel,
        grid=(N // tm,),
        in_specs=[pl.BlockSpec((tm, Cin_p), lambda i: (i, 0)),
                  pl.BlockSpec((Cin_p, Pp), lambda i: (0, 0))],
        out_specs=[pl.BlockSpec((tm, Pp), lambda i: (i, 0)),
                   pl.BlockSpec((1, Pp), lambda i: (0, 0)),
                   pl.BlockSpec((1, Pp), lambda i: (0, 0))],
        out_shape=[jax.ShapeDtypeStruct((N, Pp), f32),
                   jax.ShapeDtypeStruct((1, Pp), f32),
                   jax.ShapeDtypeStruct((1, Pp), f32)],
        compiler_params=cparams(("arbitrary",)),
    )(x2d, w1)
    sc1, sh1 = _fold_bn(s1, q1, N, g1, b1)

    # ------------- stage 2: bn1+relu -> fused 3x3 conv + bn2 batch sums -------------
    y1_4d = y1.reshape(B, H, W, Pp)
    y2, s2, q2 = pl.pallas_call(
        _make_conv2_kernel(H, W, Pp),
        grid=(B,),
        in_specs=[pl.BlockSpec((1, H, W, Pp), lambda b: (b, 0, 0, 0)),
                  pl.BlockSpec((1, Pp), lambda b: (0, 0)),
                  pl.BlockSpec((1, Pp), lambda b: (0, 0)),
                  pl.BlockSpec((9 * Pp, Pp), lambda b: (0, 0))],
        out_specs=[pl.BlockSpec((1, H, W, Pp), lambda b: (b, 0, 0, 0)),
                   pl.BlockSpec((1, Pp), lambda b: (0, 0)),
                   pl.BlockSpec((1, Pp), lambda b: (0, 0))],
        out_shape=[jax.ShapeDtypeStruct((B, H, W, Pp), f32),
                   jax.ShapeDtypeStruct((1, Pp), f32),
                   jax.ShapeDtypeStruct((1, Pp), f32)],
        compiler_params=cparams(("arbitrary",)),
    )(y1_4d, sc1, sh1, w2col)
    sc2, sh2 = _fold_bn(s2, q2, N, g2, b2)

    # ---- stage 3: bn2+relu -> avgpool -> conv3 (+ downsample pool/conv) + sums ----
    stage3 = _make_stage3_kernel(H, W, Pp, Cin_p, Cout_p, stride, has_down)
    if has_down:
        wd = jnp.zeros((Cin_p, Cout_p), f32).at[:Cin, :Cout].set(
            params["convd"].reshape(Cout, Cin).T).astype(bf16)
        gd, bd = pad_vec(params["bnd_w"], Cout_p), pad_vec(params["bnd_b"], Cout_p)
        y3, s3, q3, yd, sd, qd = pl.pallas_call(
            stage3,
            grid=(B,),
            in_specs=[pl.BlockSpec((1, H, W, Pp), lambda b: (b, 0, 0, 0)),
                      pl.BlockSpec((1, Pp), lambda b: (0, 0)),
                      pl.BlockSpec((1, Pp), lambda b: (0, 0)),
                      pl.BlockSpec((Pp, Cout_p), lambda b: (0, 0)),
                      pl.BlockSpec((1, H, W, Cin_p), lambda b: (b, 0, 0, 0)),
                      pl.BlockSpec((Cin_p, Cout_p), lambda b: (0, 0))],
            out_specs=[pl.BlockSpec((1, Ho, Wo, Cout_p), lambda b: (b, 0, 0, 0)),
                       pl.BlockSpec((1, Cout_p), lambda b: (0, 0)),
                       pl.BlockSpec((1, Cout_p), lambda b: (0, 0)),
                       pl.BlockSpec((1, Ho, Wo, Cout_p), lambda b: (b, 0, 0, 0)),
                       pl.BlockSpec((1, Cout_p), lambda b: (0, 0)),
                       pl.BlockSpec((1, Cout_p), lambda b: (0, 0))],
            out_shape=[jax.ShapeDtypeStruct((B, Ho, Wo, Cout_p), f32),
                       jax.ShapeDtypeStruct((1, Cout_p), f32),
                       jax.ShapeDtypeStruct((1, Cout_p), f32),
                       jax.ShapeDtypeStruct((B, Ho, Wo, Cout_p), f32),
                       jax.ShapeDtypeStruct((1, Cout_p), f32),
                       jax.ShapeDtypeStruct((1, Cout_p), f32)],
            compiler_params=cparams(("arbitrary",)),
        )(y2, sc2, sh2, w3, x4d, wd)
        scd, shd = _fold_bn(sd, qd, No, gd, bd)
    else:
        y3, s3, q3 = pl.pallas_call(
            stage3,
            grid=(B,),
            in_specs=[pl.BlockSpec((1, H, W, Pp), lambda b: (b, 0, 0, 0)),
                      pl.BlockSpec((1, Pp), lambda b: (0, 0)),
                      pl.BlockSpec((1, Pp), lambda b: (0, 0)),
                      pl.BlockSpec((Pp, Cout_p), lambda b: (0, 0))],
            out_specs=[pl.BlockSpec((1, Ho, Wo, Cout_p), lambda b: (b, 0, 0, 0)),
                       pl.BlockSpec((1, Cout_p), lambda b: (0, 0)),
                       pl.BlockSpec((1, Cout_p), lambda b: (0, 0))],
            out_shape=[jax.ShapeDtypeStruct((B, Ho, Wo, Cout_p), f32),
                       jax.ShapeDtypeStruct((1, Cout_p), f32),
                       jax.ShapeDtypeStruct((1, Cout_p), f32)],
            compiler_params=cparams(("arbitrary",)),
        )(y2, sc2, sh2, w3)
    sc3, sh3 = _fold_bn(s3, q3, No, g3, b3)

    # ------------------ stage 4: bn3 / bn_d + residual add + relu ------------------
    y3_2d = y3.reshape(No, Cout_p)
    tm2 = _row_tile(No)
    if has_down:
        yd_2d = yd.reshape(No, Cout_p)
        out2d = pl.pallas_call(
            _finalize_down_kernel,
            grid=(No // tm2,),
            in_specs=[pl.BlockSpec((tm2, Cout_p), lambda i: (i, 0)),
                      pl.BlockSpec((1, Cout_p), lambda i: (0, 0)),
                      pl.BlockSpec((1, Cout_p), lambda i: (0, 0)),
                      pl.BlockSpec((tm2, Cout_p), lambda i: (i, 0)),
                      pl.BlockSpec((1, Cout_p), lambda i: (0, 0)),
                      pl.BlockSpec((1, Cout_p), lambda i: (0, 0))],
            out_specs=pl.BlockSpec((tm2, Cout_p), lambda i: (i, 0)),
            out_shape=jax.ShapeDtypeStruct((No, Cout_p), f32),
            compiler_params=cparams(("parallel",)),
        )(y3_2d, sc3, sh3, yd_2d, scd, shd)
    else:
        # identity path: Cin == Cout and stride == 1, so x2d rows/channels line up.
        out2d = pl.pallas_call(
            _finalize_identity_kernel,
            grid=(No // tm2,),
            in_specs=[pl.BlockSpec((tm2, Cout_p), lambda i: (i, 0)),
                      pl.BlockSpec((1, Cout_p), lambda i: (0, 0)),
                      pl.BlockSpec((1, Cout_p), lambda i: (0, 0)),
                      pl.BlockSpec((tm2, Cout_p), lambda i: (i, 0))],
            out_specs=pl.BlockSpec((tm2, Cout_p), lambda i: (i, 0)),
            out_shape=jax.ShapeDtypeStruct((No, Cout_p), f32),
            compiler_params=cparams(("parallel",)),
        )(y3_2d, sc3, sh3, x2d)

    # glue back: strip channel padding, (B*Ho*Wo, Cout) -> NCHW
    out = out2d[:, :Cout].reshape(B, Ho, Wo, Cout)
    return jnp.transpose(out, (0, 3, 1, 2))


# ---------------------------------- reference --------------------------------- #

def bottleneck_reference(x, params, planes, stride):
    Cout = planes * EXPANSION

    def bn(y, g, b):
        mean = y.mean(axis=(0, 2, 3), keepdims=True)
        var = ((y - mean) ** 2).mean(axis=(0, 2, 3), keepdims=True)
        return (y - mean) * jax.lax.rsqrt(var + BN_EPS) * g.reshape(1, -1, 1, 1) + b.reshape(1, -1, 1, 1)

    def conv(y, w, pad=0):
        return jax.lax.conv_general_dilated(
            y, w, (1, 1), [(pad, pad), (pad, pad)],
            dimension_numbers=("NCHW", "OIHW", "NCHW"), precision=_PREC)

    def pool(y, s):
        if s == 1:
            return y
        Bn, C, Hh, Ww = y.shape
        return y.reshape(Bn, C, Hh // s, s, Ww // s, s).mean(axis=(3, 5))

    out = jax.nn.relu(bn(conv(x, params["conv1"]), params["bn1_w"], params["bn1_b"]))
    out = jax.nn.relu(bn(conv(out, params["conv2"], 1), params["bn2_w"], params["bn2_b"]))
    out = pool(out, stride)
    out = bn(conv(out, params["conv3"]), params["bn3_w"], params["bn3_b"])
    if stride > 1 or x.shape[1] != Cout:
        idn = bn(conv(pool(x, stride), params["convd"]), params["bnd_w"], params["bnd_b"])
    else:
        idn = x
    return jax.nn.relu(out + idn)


# ------------------------------------ main ------------------------------------ #

if __name__ == "__main__":
    keys = jax.random.split(jax.random.PRNGKey(0), 4)
    fwd = jax.jit(bottleneck_pallas, static_argnames=("planes", "stride"))

    # Tolerance is bf16-MXU level (operands are bf16, accumulation f32).
    TOL = 5e-2

    # Case 1: stride=2 -> exercises avgpool + downsample branch.
    B, Cin, H, W = 2, 8, 16, 16
    planes, stride = 4, 2
    x = jax.random.normal(keys[0], (B, Cin, H, W), jnp.float32)
    params = init_params(keys[1], Cin, planes, stride)
    out = jax.block_until_ready(fwd(x, params, planes=planes, stride=stride))
    ref = bottleneck_reference(x, params, planes, stride)
    np.testing.assert_allclose(np.asarray(out), np.asarray(ref), atol=TOL, rtol=TOL)
    assert out.shape == (B, planes * EXPANSION, H // stride, W // stride)

    # Case 2: stride=1, inplanes == planes*4 -> identity residual path.
    B2, Cin2, planes2, stride2 = 2, 16, 4, 1
    x2 = jax.random.normal(keys[2], (B2, Cin2, 16, 16), jnp.float32)
    params2 = init_params(keys[3], Cin2, planes2, stride2)
    out2 = jax.block_until_ready(fwd(x2, params2, planes=planes2, stride=stride2))
    ref2 = bottleneck_reference(x2, params2, planes2, stride2)
    np.testing.assert_allclose(np.asarray(out2), np.asarray(ref2), atol=TOL, rtol=TOL)
    assert out2.shape == (B2, planes2 * EXPANSION, 16, 16)

    print("KERNEL_OK")
</pallas_src>

<mosaic_0001>
module attributes {stable_mosaic.version = 11 : i64} {
  func.func @_conv1x1_stats_kernel(%arg0: i32, %arg1: memref<256x128xf32, #tpu.memory_space<vmem>>, %arg2: memref<128x128xbf16, #tpu.memory_space<vmem>>, %arg3: memref<256x128xf32, #tpu.memory_space<vmem>>, %arg4: memref<1x128xf32, #tpu.memory_space<vmem>>, %arg5: memref<1x128xf32, #tpu.memory_space<vmem>>) attributes {dimension_semantics = [#tpu.dimension_semantics<arbitrary>], iteration_bounds = array<i64: 2>, scalar_prefetch = 0 : i64, scratch_operands = 0 : i64, tpu.core_type = #tpu.core_type<tc>, window_params = [{transform_indices = @transform_0, window_bounds = array<i64: 256, 128>}, {pipeline_mode = #tpu.pipeline_mode<synchronous>, transform_indices = @transform_1, window_bounds = array<i64: 128, 128>}, {transform_indices = @transform_2, window_bounds = array<i64: 256, 128>}, {pipeline_mode = #tpu.pipeline_mode<synchronous>, transform_indices = @transform_3, window_bounds = array<i64: 1, 128>}, {pipeline_mode = #tpu.pipeline_mode<synchronous>, transform_indices = @transform_4, window_bounds = array<i64: 1, 128>}]} {
    %c0 = arith.constant 0 : index
    %c0_0 = arith.constant 0 : index
    %0 = vector.load %arg1[%c0, %c0_0] : memref<256x128xf32, #tpu.memory_space<vmem>>, vector<256x128xf32>
    %1 = arith.truncf %0 : vector<256x128xf32> to vector<256x128xbf16>
    %c0_1 = arith.constant 0 : index
    %c0_2 = arith.constant 0 : index
    %2 = vector.load %arg2[%c0_1, %c0_2] : memref<128x128xbf16, #tpu.memory_space<vmem>>, vector<128x128xbf16>
    %cst = arith.constant dense<0.000000e+00> : vector<256x128xf32>
    %3 = tpu.matmul %1, %2, %cst {dimension_numbers = #tpu.dot_dimension_numbers<[1], [0], [0], [1], [0, 0, 1, 1], [], []>} : vector<256x128xbf16>, vector<128x128xbf16>, vector<256x128xf32> -> vector<256x128xf32>
    %c0_3 = arith.constant 0 : index
    %c0_4 = arith.constant 0 : index
    %4 = vector.load %arg3[%c0_3, %c0_4] : memref<256x128xf32, #tpu.memory_space<vmem>>, vector<256x128xf32>
    tpu.vector_store %arg3[%c0_3, %c0_4], %3 {strides = array<i32>} : memref<256x128xf32, #tpu.memory_space<vmem>>, vector<256x128xf32>,
    %c0_i32 = arith.constant 0 : i32
    %5 = arith.cmpi eq, %arg0, %c0_i32 : i32
    %6 = arith.extui %5 : i1 to i32
    %c0_i32_5 = arith.constant 0 : i32
    %7 = arith.cmpi ne, %6, %c0_i32_5 : i32
    scf.if %7 {
      %cst_16 = arith.constant 0.000000e+00 : f32
      %19 = vector.broadcast %cst_16 : f32 to vector<1x128xf32>
      %c0_17 = arith.constant 0 : index
      %c0_18 = arith.constant 0 : index
      %20 = vector.load %arg4[%c0_17, %c0_18] : memref<1x128xf32, #tpu.memory_space<vmem>>, vector<1x128xf32>
      tpu.vector_store %arg4[%c0_17, %c0_18], %19 {strides = array<i32>} : memref<1x128xf32, #tpu.memory_space<vmem>>, vector<1x128xf32>,
      %cst_19 = arith.constant 0.000000e+00 : f32
      %21 = vector.broadcast %cst_19 : f32 to vector<1x128xf32>
      %c0_20 = arith.constant 0 : index
      %c0_21 = arith.constant 0 : index
      %22 = vector.load %arg5[%c0_20, %c0_21] : memref<1x128xf32, #tpu.memory_space<vmem>>, vector<1x128xf32>
      tpu.vector_store %arg5[%c0_20, %c0_21], %21 {strides = array<i32>} : memref<1x128xf32, #tpu.memory_space<vmem>>, vector<1x128xf32>,
    } else {
    }
    %c0_6 = arith.constant 0 : index
    %c0_7 = arith.constant 0 : index
    %8 = vector.load %arg4[%c0_6, %c0_7] : memref<1x128xf32, #tpu.memory_space<vmem>>, vector<1x128xf32>
    %cst_8 = arith.constant dense<0.000000e+00> : vector<128xf32>
    %9 = vector.multi_reduction <add>, %3, %cst_8 [0] : vector<256x128xf32> to vector<128xf32>
    %10 = vector.shape_cast %9 : vector<128xf32> to vector<1x128xf32>
    %11 = arith.addf %8, %10 : vector<1x128xf32>
    %c0_9 = arith.constant 0 : index
    %c0_10 = arith.constant 0 : index
    %12 = vector.load %arg4[%c0_9, %c0_10] : memref<1x128xf32, #tpu.memory_space<vmem>>, vector<1x128xf32>
    tpu.vector_store %arg4[%c0_9, %c0_10], %11 {strides = array<i32>} : memref<1x128xf32, #tpu.memory_space<vmem>>, vector<1x128xf32>,
    %c0_11 = arith.constant 0 : index
    %c0_12 = arith.constant 0 : index
    %13 = vector.load %arg5[%c0_11, %c0_12] : memref<1x128xf32, #tpu.memory_space<vmem>>, vector<1x128xf32>
    %14 = arith.mulf %3, %3 : vector<256x128xf32>
    %cst_13 = arith.constant dense<0.000000e+00> : vector<128xf32>
    %15 = vector.multi_reduction <add>, %14, %cst_13 [0] : vector<256x128xf32> to vector<128xf32>
    %16 = vector.shape_cast %15 : vector<128xf32> to vector<1x128xf32>
    %17 = arith.addf %13, %16 : vector<1x128xf32>
    %c0_14 = arith.constant 0 : index
    %c0_15 = arith.constant 0 : index
    %18 = vector.load %arg5[%c0_14, %c0_15] : memref<1x128xf32, #tpu.memory_space<vmem>>, vector<1x128xf32>
    tpu.vector_store %arg5[%c0_14, %c0_15], %17 {strides = array<i32>} : memref<1x128xf32, #tpu.memory_space<vmem>>, vector<1x128xf32>,
    return
  }
  func.func @transform_0(%arg0: i32) -> (i32, i32) {
    %c0_i32 = arith.constant 0 : i32
    %c0_i32_0 = arith.constant 0 : i32
    return %arg0, %c0_i32 : i32, i32
  }
  func.func @transform_1(%arg0: i32) -> (i32, i32) {
    %c0_i32 = arith.constant 0 : i32
    %c0_i32_0 = arith.constant 0 : i32
    %c0_i32_1 = arith.constant 0 : i32
    return %c0_i32, %c0_i32_0 : i32, i32
  }
  func.func @transform_2(%arg0: i32) -> (i32, i32) {
    %c0_i32 = arith.constant 0 : i32
    %c0_i32_0 = arith.constant 0 : i32
    return %arg0, %c0_i32 : i32, i32
  }
  func.func @transform_3(%arg0: i32) -> (i32, i32) {
    %c0_i32 = arith.constant 0 : i32
    %c0_i32_0 = arith.constant 0 : i32
    %c0_i32_1 = arith.constant 0 : i32
    return %c0_i32, %c0_i32_0 : i32, i32
  }
  func.func @transform_4(%arg0: i32) -> (i32, i32) {
    %c0_i32 = arith.constant 0 : i32
    %c0_i32_0 = arith.constant 0 : i32
    %c0_i32_1 = arith.constant 0 : i32
    return %c0_i32, %c0_i32_0 : i32, i32
  }
}

module attributes {stable_mosaic.version = 11 : i64} {
  func.func @kernel(%arg0: i32, %arg1: memref<1x16x16x128xf32, #tpu.memory_space<vmem>>, %arg2: memref<1x128xf32, #tpu.memory_space<vmem>>, %arg3: memref<1x128xf32, #tpu.memory_space<vmem>>, %arg4: memref<128x128xbf16, #tpu.memory_space<vmem>>, %arg5: memref<1x16x16x128xf32, #tpu.memory_space<vmem>>, %arg6: memref<128x128xbf16, #tpu.memory_space<vmem>>, %arg7: memref<1x8x8x128xf32, #tpu.memory_space<vmem>>, %arg8: memref<1x128xf32, #tpu.memory_space<vmem>>, %arg9: memref<1x128xf32, #tpu.memory_space<vmem>>, %arg10: memref<1x8x8x128xf32, #tpu.memory_space<vmem>>, %arg11: memref<1x128xf32, #tpu.memory_space<vmem>>, %arg12: memref<1x128xf32, #tpu.memory_space<vmem>>) attributes {dimension_semantics = [#tpu.dimension_semantics<arbitrary>], iteration_bounds = array<i64: 2>, scalar_prefetch = 0 : i64, scratch_operands = 0 : i64, tpu.core_type = #tpu.core_type<tc>, window_params = [{transform_indices = @transform_0, window_bounds = array<i64: 1, 16, 16, 128>}, {pipeline_mode = #tpu.pipeline_mode<synchronous>, transform_indices = @transform_1, window_bounds = array<i64: 1, 128>}, {pipeline_mode = #tpu.pipeline_mode<synchronous>, transform_indices = @transform_2, window_bounds = array<i64: 1, 128>}, {pipeline_mode = #tpu.pipeline_mode<synchronous>, transform_indices = @transform_3, window_bounds = array<i64: 128, 128>}, {transform_indices = @transform_4, window_bounds = array<i64: 1, 16, 16, 128>}, {pipeline_mode = #tpu.pipeline_mode<synchronous>, transform_indices = @transform_5, window_bounds = array<i64: 128, 128>}, {transform_indices = @transform_6, window_bounds = array<i64: 1, 8, 8, 128>}, {pipeline_mode = #tpu.pipeline_mode<synchronous>, transform_indices = @transform_7, window_bounds = array<i64: 1, 128>}, {pipeline_mode = #tpu.pipeline_mode<synchronous>, transform_indices = @transform_8, window_bounds = array<i64: 1, 128>}, {transform_indices = @transform_9, window_bounds = array<i64: 1, 8, 8, 128>}, {pipeline_mode = #tpu.pipeline_mode<synchronous>, transform_indices = @transform_10, window_bounds = array<i64: 1, 128>}, {pipeline_mode = #tpu.pipeline_mode<synchronous>, transform_indices = @transform_11, window_bounds = array<i64: 1, 128>}]} {
    %c0 = arith.constant 0 : index
    %c0_0 = arith.constant 0 : index
    %c0_1 = arith.constant 0 : index
    %c0_2 = arith.constant 0 : index
    %0 = vector.load %arg1[%c0, %c0_0, %c0_1, %c0_2] : memref<1x16x16x128xf32, #tpu.memory_space<vmem>>, vector<1x16x16x128xf32>
    %1 = vector.shape_cast %0 : vector<1x16x16x128xf32> to vector<256x128xf32>
    %c0_3 = arith.constant 0 : index
    %c0_4 = arith.constant 0 : index
    %2 = vector.load %arg2[%c0_3, %c0_4] : memref<1x128xf32, #tpu.memory_space<vmem>>, vector<1x128xf32>
    %3 = vector.broadcast %2 : vector<1x128xf32> to vector<256x128xf32>
    %4 = arith.mulf %1, %3 : vector<256x128xf32>
    %c0_5 = arith.constant 0 : index
    %c0_6 = arith.constant 0 : index
    %5 = vector.load %arg3[%c0_5, %c0_6] : memref<1x128xf32, #tpu.memory_space<vmem>>, vector<1x128xf32>
    %6 = vector.broadcast %5 : vector<1x128xf32> to vector<256x128xf32>
    %7 = arith.addf %4, %6 : vector<256x128xf32>
    %cst = arith.constant 0.000000e+00 : f32
    %8 = vector.broadcast %cst : f32 to vector<256x128xf32>
    %9 = arith.maximumf %7, %8 : vector<256x128xf32>
    %10 = vector.shape_cast %9 : vector<256x128xf32> to vector<8x2x8x2x128xf32>
    %11 = vector.extract_strided_slice %10 {offsets = [0, 0, 0, 0, 0], sizes = [8, 1, 8, 1, 128], strides = [1, 1, 1, 1, 1]} : vector<8x2x8x2x128xf32> to vector<8x1x8x1x128xf32>
    %12 = vector.shape_cast %11 : vector<8x1x8x1x128xf32> to vector<8x8x128xf32>
    %13 = vector.extract_strided_slice %10 {offsets = [0, 0, 0, 1, 0], sizes = [8, 1, 8, 1, 128], strides = [1, 1, 1, 1, 1]} : vector<8x2x8x2x128xf32> to vector<8x1x8x1x128xf32>
    %14 = vector.shape_cast %13 : vector<8x1x8x1x128xf32> to vector<8x8x128xf32>
    %15 = arith.addf %12, %14 : vector<8x8x128xf32>
    %16 = vector.extract_strided_slice %10 {offsets = [0, 1, 0, 0, 0], sizes = [8, 1, 8, 1, 128], strides = [1, 1, 1, 1, 1]} : vector<8x2x8x2x128xf32> to vector<8x1x8x1x128xf32>
    %17 = vector.shape_cast %16 : vector<8x1x8x1x128xf32> to vector<8x8x128xf32>
    %18 = arith.addf %15, %17 : vector<8x8x128xf32>
    %19 = vector.extract_strided_slice %10 {offsets = [0, 1, 0, 1, 0], sizes = [8, 1, 8, 1, 128], strides = [1, 1, 1, 1, 1]} : vector<8x2x8x2x128xf32> to vector<8x1x8x1x128xf32>
    %20 = vector.shape_cast %19 : vector<8x1x8x1x128xf32> to vector<8x8x128xf32>
    %21 = arith.addf %18, %20 : vector<8x8x128xf32>
    %cst_7 = arith.constant 2.500000e-01 : f32
    %22 = vector.broadcast %cst_7 : f32 to vector<8x8x128xf32>
    %23 = arith.mulf %21, %22 : vector<8x8x128xf32>
    %24 = vector.shape_cast %23 : vector<8x8x128xf32> to vector<64x128xf32>
    %25 = arith.truncf %24 : vector<64x128xf32> to vector<64x128xbf16>
    %c0_8 = arith.constant 0 : index
    %c0_9 = arith.constant 0 : index
    %26 = vector.load %arg4[%c0_8, %c0_9] : memref<128x128xbf16, #tpu.memory_space<vmem>>, vector<128x128xbf16>
    %cst_10 = arith.constant dense<0.000000e+00> : vector<64x128xf32>
    %27 = tpu.matmul %25, %26, %cst_10 {dimension_numbers = #tpu.dot_dimension_numbers<[1], [0], [0], [1], [0, 0, 1, 1], [], []>} : vector<64x128xbf16>, vector<128x128xbf16>, vector<64x128xf32> -> vector<64x128xf32>
    %28 = vector.shape_cast %27 : vector<64x128xf32> to vector<1x8x8x128xf32>
    %c0_11 = arith.constant 0 : index
    %c0_12 = arith.constant 0 : index
    %c0_13 = arith.constant 0 : index
    %c0_14 = arith.constant 0 : index
    %29 = vector.load %arg7[%c0_11, %c0_12, %c0_13, %c0_14] : memref<1x8x8x128xf32, #tpu.memory_space<vmem>>, vector<1x8x8x128xf32>
    tpu.vector_store %arg7[%c0_11, %c0_12, %c0_13, %c0_14], %28 {strides = array<i32>} : memref<1x8x8x128xf32, #tpu.memory_space<vmem>>, vector<1x8x8x128xf32>,
    %c0_i32 = arith.constant 0 : i32
    %30 = arith.cmpi eq, %arg0, %c0_i32 : i32
    %31 = arith.extui %30 : i1 to i32
    %c0_i32_15 = arith.constant 0 : i32
    %32 = arith.cmpi ne, %31, %c0_i32_15 : i32
    scf.if %32 {
      %cst_50 = arith.constant 0.000000e+00 : f32
      %80 = vector.broadcast %cst_50 : f32 to vector<1x128xf32>
      %c0_51 = arith.constant 0 : index
      %c0_52 = arith.constant 0 : index
      %81 = vector.load %arg8[%c0_51, %c0_52] : memref<1x128xf32, #tpu.memory_space<vmem>>, vector<1x128xf32>
      tpu.vector_store %arg8[%c0_51, %c0_52], %80 {strides = array<i32>} : memref<1x128xf32, #tpu.memory_space<vmem>>, vector<1x128xf32>,
      %cst_53 = arith.constant 0.000000e+00 : f32
      %82 = vector.broadcast %cst_53 : f32 to vector<1x128xf32>
      %c0_54 = arith.constant 0 : index
      %c0_55 = arith.constant 0 : index
      %83 = vector.load %arg9[%c0_54, %c0_55] : memref<1x128xf32, #tpu.memory_space<vmem>>, vector<1x128xf32>
      tpu.vector_store %arg9[%c0_54, %c0_55], %82 {strides = array<i32>} : memref<1x128xf32, #tpu.memory_space<vmem>>, vector<1x128xf32>,
    } else {
    }
    %c0_16 = arith.constant 0 : index
    %c0_17 = arith.constant 0 : index
    %33 = vector.load %arg8[%c0_16, %c0_17] : memref<1x128xf32, #tpu.memory_space<vmem>>, vector<1x128xf32>
    %cst_18 = arith.constant dense<0.000000e+00> : vector<128xf32>
    %34 = vector.multi_reduction <add>, %27, %cst_18 [0] : vector<64x128xf32> to vector<128xf32>
    %35 = vector.shape_cast %34 : vector<128xf32> to vector<1x128xf32>
    %36 = arith.addf %33, %35 : vector<1x128xf32>
    %c0_19 = arith.constant 0 : index
    %c0_20 = arith.constant 0 : index
    %37 = vector.load %arg8[%c0_19, %c0_20] : memref<1x128xf32, #tpu.memory_space<vmem>>, vector<1x128xf32>
    tpu.vector_store %arg8[%c0_19, %c0_20], %36 {strides = array<i32>} : memref<1x128xf32, #tpu.memory_space<vmem>>, vector<1x128xf32>,
    %c0_21 = arith.constant 0 : index
    %c0_22 = arith.constant 0 : index
    %38 = vector.load %arg9[%c0_21, %c0_22] : memref<1x128xf32, #tpu.memory_space<vmem>>, vector<1x128xf32>
    %39 = arith.mulf %27, %27 : vector<64x128xf32>
    %cst_23 = arith.constant dense<0.000000e+00> : vector<128xf32>
    %40 = vector.multi_reduction <add>, %39, %cst_23 [0] : vector<64x128xf32> to vector<128xf32>
    %41 = vector.shape_cast %40 : vector<128xf32> to vector<1x128xf32>
    %42 = arith.addf %38, %41 : vector<1x128xf32>
    %c0_24 = arith.constant 0 : index
    %c0_25 = arith.constant 0 : index
    %43 = vector.load %arg9[%c0_24, %c0_25] : memref<1x128xf32, #tpu.memory_space<vmem>>, vector<1x128xf32>
    tpu.vector_store %arg9[%c0_24, %c0_25], %42 {strides = array<i32>} : memref<1x128xf32, #tpu.memory_space<vmem>>, vector<1x128xf32>,
    %c0_26 = arith.constant 0 : index
    %c0_27 = arith.constant 0 : index
    %c0_28 = arith.constant 0 : index
    %c0_29 = arith.constant 0 : index
    %44 = vector.load %arg5[%c0_26, %c0_27, %c0_28, %c0_29] : memref<1x16x16x128xf32, #tpu.memory_space<vmem>>, vector<1x16x16x128xf32>
    %45 = vector.shape_cast %44 : vector<1x16x16x128xf32> to vector<256x128xf32>
    %46 = vector.shape_cast %45 : vector<256x128xf32> to vector<8x2x8x2x128xf32>
    %47 = vector.extract_strided_slice %46 {offsets = [0, 0, 0, 0, 0], sizes = [8, 1, 8, 1, 128], strides = [1, 1, 1, 1, 1]} : vector<8x2x8x2x128xf32> to vector<8x1x8x1x128xf32>
    %48 = vector.shape_cast %47 : vector<8x1x8x1x128xf32> to vector<8x8x128xf32>
    %49 = vector.extract_strided_slice %46 {offsets = [0, 0, 0, 1, 0], sizes = [8, 1, 8, 1, 128], strides = [1, 1, 1, 1, 1]} : vector<8x2x8x2x128xf32> to vector<8x1x8x1x128xf32>
    %50 = vector.shape_cast %49 : vector<8x1x8x1x128xf32> to vector<8x8x128xf32>
    %51 = arith.addf %48, %50 : vector<8x8x128xf32>
    %52 = vector.extract_strided_slice %46 {offsets = [0, 1, 0, 0, 0], sizes = [8, 1, 8, 1, 128], strides = [1, 1, 1, 1, 1]} : vector<8x2x8x2x128xf32> to vector<8x1x8x1x128xf32>
    %53 = vector.shape_cast %52 : vector<8x1x8x1x128xf32> to vector<8x8x128xf32>
    %54 = arith.addf %51, %53 : vector<8x8x128xf32>
    %55 = vector.extract_strided_slice %46 {offsets = [0, 1, 0, 1, 0], sizes = [8, 1, 8, 1, 128], strides = [1, 1, 1, 1, 1]} : vector<8x2x8x2x128xf32> to vector<8x1x8x1x128xf32>
    %56 = vector.shape_cast %55 : vector<8x1x8x1x128xf32> to vector<8x8x128xf32>
    %57 = arith.addf %54, %56 : vector<8x8x128xf32>
    %cst_30 = arith.constant 2.500000e-01 : f32
    %58 = vector.broadcast %cst_30 : f32 to vector<8x8x128xf32>
    %59 = arith.mulf %57, %58 : vector<8x8x128xf32>
    %60 = vector.shape_cast %59 : vector<8x8x128xf32> to vector<64x128xf32>
    %61 = arith.truncf %60 : vector<64x128xf32> to vector<64x128xbf16>
    %c0_31 = arith.constant 0 : index
    %c0_32 = arith.constant 0 : index
    %62 = vector.load %arg6[%c0_31, %c0_32] : memref<128x128xbf16, #tpu.memory_space<vmem>>, vector<128x128xbf16>
    %cst_33 = arith.constant dense<0.000000e+00> : vector<64x128xf32>
    %63 = tpu.matmul %61, %62, %cst_33 {dimension_numbers = #tpu.dot_dimension_numbers<[1], [0], [0], [1], [0, 0, 1, 1], [], []>} : vector<64x128xbf16>, vector<128x128xbf16>, vector<64x128xf32> -> vector<64x128xf32>
    %64 = vector.shape_cast %63 : vector<64x128xf32> to vector<1x8x8x128xf32>
    %c0_34 = arith.constant 0 : index
    %c0_35 = arith.constant 0 : index
    %c0_36 = arith.constant 0 : index
    %c0_37 = arith.constant 0 : index
    %65 = vector.load %arg10[%c0_34, %c0_35, %c0_36, %c0_37] : memref<1x8x8x128xf32, #tpu.memory_space<vmem>>, vector<1x8x8x128xf32>
    tpu.vector_store %arg10[%c0_34, %c0_35, %c0_36, %c0_37], %64 {strides = array<i32>} : memref<1x8x8x128xf32, #tpu.memory_space<vmem>>, vector<1x8x8x128xf32>,
    %c0_i32_38 = arith.constant 0 : i32
    %66 = arith.cmpi eq, %arg0, %c0_i32_38 : i32
    %67 = arith.extui %66 : i1 to i32
    %c0_i32_39 = arith.constant 0 : i32
    %68 = arith.cmpi ne, %67, %c0_i32_39 : i32
    scf.if %68 {
      %cst_50 = arith.constant 0.000000e+00 : f32
      %80 = vector.broadcast %cst_50 : f32 to vector<1x128xf32>
      %c0_51 = arith.constant 0 : index
      %c0_52 = arith.constant 0 : index
      %81 = vector.load %arg11[%c0_51, %c0_52] : memref<1x128xf32, #tpu.memory_space<vmem>>, vector<1x128xf32>
      tpu.vector_store %arg11[%c0_51, %c0_52], %80 {strides = array<i32>} : memref<1x128xf32, #tpu.memory_space<vmem>>, vector<1x128xf32>,
      %cst_53 = arith.constant 0.000000e+00 : f32
      %82 = vector.broadcast %cst_53 : f32 to vector<1x128xf32>
      %c0_54 = arith.constant 0 : index
      %c0_55 = arith.constant 0 : index
      %83 = vector.load %arg12[%c0_54, %c0_55] : memref<1x128xf32, #tpu.memory_space<vmem>>, vector<1x128xf32>
      tpu.vector_store %arg12[%c0_54, %c0_55], %82 {strides = array<i32>} : memref<1x128xf32, #tpu.memory_space<vmem>>, vector<1x128xf32>,
    } else {
    }
    %c0_40 = arith.constant 0 : index
    %c0_41 = arith.constant 0 : index
    %69 = vector.load %arg11[%c0_40, %c0_41] : memref<1x128xf32, #tpu.memory_space<vmem>>, vector<1x128xf32>
    %cst_42 = arith.constant dense<0.000000e+00> : vector<128xf32>
    %70 = vector.multi_reduction <add>, %63, %cst_42 [0] : vector<64x128xf32> to vector<128xf32>
    %71 = vector.shape_cast %70 : vector<128xf32> to vector<1x128xf32>
    %72 = arith.addf %69, %71 : vector<1x128xf32>
    %c0_43 = arith.constant 0 : index
    %c0_44 = arith.constant 0 : index
    %73 = vector.load %arg11[%c0_43, %c0_44] : memref<1x128xf32, #tpu.memory_space<vmem>>, vector<1x128xf32>
    tpu.vector_store %arg11[%c0_43, %c0_44], %72 {strides = array<i32>} : memref<1x128xf32, #tpu.memory_space<vmem>>, vector<1x128xf32>,
    %c0_45 = arith.constant 0 : index
    %c0_46 = arith.constant 0 : index
    %74 = vector.load %arg12[%c0_45, %c0_46] : memref<1x128xf32, #tpu.memory_space<vmem>>, vector<1x128xf32>
    %75 = arith.mulf %63, %63 : vector<64x128xf32>
    %cst_47 = arith.constant dense<0.000000e+00> : vector<128xf32>
    %76 = vector.multi_reduction <add>, %75, %cst_47 [0] : vector<64x128xf32> to vector<128xf32>
    %77 = vector.shape_cast %76 : vector<128xf32> to vector<1x128xf32>
    %78 = arith.addf %74, %77 : vector<1x128xf32>
    %c0_48 = arith.constant 0 : index
    %c0_49 = arith.constant 0 : index
    %79 = vector.load %arg12[%c0_48, %c0_49] : memref<1x128xf32, #tpu.memory_space<vmem>>, vector<1x128xf32>
    tpu.vector_store %arg12[%c0_48, %c0_49], %78 {strides = array<i32>} : memref<1x128xf32, #tpu.memory_space<vmem>>, vector<1x128xf32>,
    return
  }
  func.func @transform_0(%arg0: i32) -> (i32, i32, i32, i32) {
    %c0_i32 = arith.constant 0 : i32
    %c0_i32_0 = arith.constant 0 : i32
    %c0_i32_1 = arith.constant 0 : i32
    %c0_i32_2 = arith.constant 0 : i32
    return %arg0, %c0_i32, %c0_i32_0, %c0_i32_1 : i32, i32, i32, i32
  }
  func.func @transform_1(%arg0: i32) -> (i32, i32) {
    %c0_i32 = arith.constant 0 : i32
    %c0_i32_0 = arith.constant 0 : i32
    %c0_i32_1 = arith.constant 0 : i32
    return %c0_i32, %c0_i32_0 : i32, i32
  }
  func.func @transform_2(%arg0: i32) -> (i32, i32) {
    %c0_i32 = arith.constant 0 : i32
    %c0_i32_0 = arith.constant 0 : i32
    %c0_i32_1 = arith.constant 0 : i32
    return %c0_i32, %c0_i32_0 : i32, i32
  }
  func.func @transform_3(%arg0: i32) -> (i32, i32) {
    %c0_i32 = arith.constant 0 : i32
    %c0_i32_0 = arith.constant 0 : i32
    %c0_i32_1 = arith.constant 0 : i32
    return %c0_i32, %c0_i32_0 : i32, i32
  }
  func.func @transform_4(%arg0: i32) -> (i32, i32, i32, i32) {
    %c0_i32 = arith.constant 0 : i32
    %c0_i32_0 = arith.constant 0 : i32
    %c0_i32_1 = arith.constant 0 : i32
    %c0_i32_2 = arith.constant 0 : i32
    return %arg0, %c0_i32, %c0_i32_0, %c0_i32_1 : i32, i32, i32, i32
  }
  func.func @transform_5(%arg0: i32) -> (i32, i32) {
    %c0_i32 = arith.constant 0 : i32
    %c0_i32_0 = arith.constant 0 : i32
    %c0_i32_1 = arith.constant 0 : i32
    return %c0_i32, %c0_i32_0 : i32, i32
  }
  func.func @transform_6(%arg0: i32) -> (i32, i32, i32, i32) {
    %c0_i32 = arith.constant 0 : i32
    %c0_i32_0 = arith.constant 0 : i32
    %c0_i32_1 = arith.constant 0 : i32
    %c0_i32_2 = arith.constant 0 : i32
    return %arg0, %c0_i32, %c0_i32_0, %c0_i32_1 : i32, i32, i32, i32
  }
  func.func @transform_7(%arg0: i32) -> (i32, i32) {
    %c0_i32 = arith.constant 0 : i32
    %c0_i32_0 = arith.constant 0 : i32
    %c0_i32_1 = arith.constant 0 : i32
    return %c0_i32, %c0_i32_0 : i32, i32
  }
  func.func @transform_8(%arg0: i32) -> (i32, i32) {
    %c0_i32 = arith.constant 0 : i32
    %c0_i32_0 = arith.constant 0 : i32
    %c0_i32_1 = arith.constant 0 : i32
    return %c0_i32, %c0_i32_0 : i32, i32
  }
  func.func @transform_9(%arg0: i32) -> (i32, i32, i32, i32) {
    %c0_i32 = arith.constant 0 : i32
    %c0_i32_0 = arith.constant 0 : i32
    %c0_i32_1 = arith.constant 0 : i32
    %c0_i32_2 = arith.constant 0 : i32
    return %arg0, %c0_i32, %c0_i32_0, %c0_i32_1 : i32, i32, i32, i32
  }
  func.func @transform_10(%arg0: i32) -> (i32, i32) {
    %c0_i32 = arith.constant 0 : i32
    %c0_i32_0 = arith.constant 0 : i32
    %c0_i32_1 = arith.constant 0 : i32
    return %c0_i32, %c0_i32_0 : i32, i32
  }
  func.func @transform_11(%arg0: i32) -> (i32, i32) {
    %c0_i32 = arith.constant 0 : i32
    %c0_i32_0 = arith.constant 0 : i32
    %c0_i32_1 = arith.constant 0 : i32
    return %c0_i32, %c0_i32_0 : i32, i32
  }
}

module attributes {stable_mosaic.version = 11 : i64} {
  func.func @kernel(%arg0: i32, %arg1: memref<1x16x16x128xf32, #tpu.memory_space<vmem>>, %arg2: memref<1x128xf32, #tpu.memory_space<vmem>>, %arg3: memref<1x128xf32, #tpu.memory_space<vmem>>, %arg4: memref<1152x128xbf16, #tpu.memory_space<vmem>>, %arg5: memref<1x16x16x128xf32, #tpu.memory_space<vmem>>, %arg6: memref<1x128xf32, #tpu.memory_space<vmem>>, %arg7: memref<1x128xf32, #tpu.memory_space<vmem>>) attributes {dimension_semantics = [#tpu.dimension_semantics<arbitrary>], iteration_bounds = array<i64: 2>, scalar_prefetch = 0 : i64, scratch_operands = 0 : i64, tpu.core_type = #tpu.core_type<tc>, window_params = [{transform_indices = @transform_0, window_bounds = array<i64: 1, 16, 16, 128>}, {pipeline_mode = #tpu.pipeline_mode<synchronous>, transform_indices = @transform_1, window_bounds = array<i64: 1, 128>}, {pipeline_mode = #tpu.pipeline_mode<synchronous>, transform_indices = @transform_2, window_bounds = array<i64: 1, 128>}, {pipeline_mode = #tpu.pipeline_mode<synchronous>, transform_indices = @transform_3, window_bounds = array<i64: 1152, 128>}, {transform_indices = @transform_4, window_bounds = array<i64: 1, 16, 16, 128>}, {pipeline_mode = #tpu.pipeline_mode<synchronous>, transform_indices = @transform_5, window_bounds = array<i64: 1, 128>}, {pipeline_mode = #tpu.pipeline_mode<synchronous>, transform_indices = @transform_6, window_bounds = array<i64: 1, 128>}]} {
    %c0 = arith.constant 0 : index
    %c0_0 = arith.constant 0 : index
    %c0_1 = arith.constant 0 : index
    %c0_2 = arith.constant 0 : index
    %0 = vector.load %arg1[%c0, %c0_0, %c0_1, %c0_2] : memref<1x16x16x128xf32, #tpu.memory_space<vmem>>, vector<1x16x16x128xf32>
    %1 = vector.shape_cast %0 : vector<1x16x16x128xf32> to vector<256x128xf32>
    %c0_3 = arith.constant 0 : index
    %c0_4 = arith.constant 0 : index
    %2 = vector.load %arg2[%c0_3, %c0_4] : memref<1x128xf32, #tpu.memory_space<vmem>>, vector<1x128xf32>
    %3 = vector.broadcast %2 : vector<1x128xf32> to vector<256x128xf32>
    %4 = arith.mulf %1, %3 : vector<256x128xf32>
    %c0_5 = arith.constant 0 : index
    %c0_6 = arith.constant 0 : index
    %5 = vector.load %arg3[%c0_5, %c0_6] : memref<1x128xf32, #tpu.memory_space<vmem>>, vector<1x128xf32>
    %6 = vector.broadcast %5 : vector<1x128xf32> to vector<256x128xf32>
    %7 = arith.addf %4, %6 : vector<256x128xf32>
    %cst = arith.constant 0.000000e+00 : f32
    %8 = vector.broadcast %cst : f32 to vector<256x128xf32>
    %9 = arith.maximumf %7, %8 : vector<256x128xf32>
    %10 = arith.truncf %9 : vector<256x128xf32> to vector<256x128xbf16>
    %11 = tpu.iota {dimensions = array<i32: 1>} : vector<16x16x1xi32>
    %12 = vector.shape_cast %11 : vector<16x16x1xi32> to vector<256x1xi32>
    %cst_7 = arith.constant 0.000000e+00 : bf16
    %13 = vector.broadcast %cst_7 : bf16 to vector<17x128xbf16>
    %14 = vector.extract_strided_slice %10 {offsets = [0, 0], sizes = [239, 128], strides = [1, 1]} : vector<256x128xbf16> to vector<239x128xbf16>
    %15 = tpu.concatenate %13, %14 in 0 : vector<17x128xbf16>, vector<239x128xbf16> -> vector<256x128xbf16>
    %c0_i32 = arith.constant 0 : i32
    %16 = vector.broadcast %c0_i32 : i32 to vector<256x1xi32>
    %17 = arith.cmpi sgt, %12, %16 : vector<256x1xi32>
    %cst_8 = arith.constant 0.000000e+00 : bf16
    %18 = vector.broadcast %cst_8 : bf16 to vector<256x128xbf16>
    %19 = vector.shape_cast %17 : vector<256x1xi1> to vector<256x1xi1>
    %20 = vector.broadcast %19 : vector<256x1xi1> to vector<256x128xi1>
    %21 = arith.select %20, %15, %18 : vector<256x128xi1>, vector<256x128xbf16>
    %cst_9 = arith.constant 0.000000e+00 : bf16
    %22 = vector.broadcast %cst_9 : bf16 to vector<16x128xbf16>
    %23 = vector.extract_strided_slice %10 {offsets = [0, 0], sizes = [240, 128], strides = [1, 1]} : vector<256x128xbf16> to vector<240x128xbf16>
    %24 = tpu.concatenate %22, %23 in 0 : vector<16x128xbf16>, vector<240x128xbf16> -> vector<256x128xbf16>
    %cst_10 = arith.constant 0.000000e+00 : bf16
    %25 = vector.broadcast %cst_10 : bf16 to vector<15x128xbf16>
    %26 = vector.extract_strided_slice %10 {offsets = [0, 0], sizes = [241, 128], strides = [1, 1]} : vector<256x128xbf16> to vector<241x128xbf16>
    %27 = tpu.concatenate %25, %26 in 0 : vector<15x128xbf16>, vector<241x128xbf16> -> vector<256x128xbf16>
    %c15_i32 = arith.constant 15 : i32
    %28 = vector.broadcast %c15_i32 : i32 to vector<256x1xi32>
    %29 = arith.cmpi slt, %12, %28 : vector<256x1xi32>
    %cst_11 = arith.constant 0.000000e+00 : bf16
    %30 = vector.broadcast %cst_11 : bf16 to vector<256x128xbf16>
    %31 = vector.shape_cast %29 : vector<256x1xi1> to vector<256x1xi1>
    %32 = vector.broadcast %31 : vector<256x1xi1> to vector<256x128xi1>
    %33 = arith.select %32, %27, %30 : vector<256x128xi1>, vector<256x128xbf16>
    %cst_12 = arith.constant 0.000000e+00 : bf16
    %34 = vector.broadcast %cst_12 : bf16 to vector<1x128xbf16>
    %35 = vector.extract_strided_slice %10 {offsets = [0, 0], sizes = [255, 128], strides = [1, 1]} : vector<256x128xbf16> to vector<255x128xbf16>
    %36 = tpu.concatenate %34, %35 in 0 : vector<1x128xbf16>, vector<255x128xbf16> -> vector<256x128xbf16>
    %c0_i32_13 = arith.constant 0 : i32
    %37 = vector.broadcast %c0_i32_13 : i32 to vector<256x1xi32>
    %38 = arith.cmpi sgt, %12, %37 : vector<256x1xi32>
    %cst_14 = arith.constant 0.000000e+00 : bf16
    %39 = vector.broadcast %cst_14 : bf16 to vector<256x128xbf16>
    %40 = vector.shape_cast %38 : vector<256x1xi1> to vector<256x1xi1>
    %41 = vector.broadcast %40 : vector<256x1xi1> to vector<256x128xi1>
    %42 = arith.select %41, %36, %39 : vector<256x128xi1>, vector<256x128xbf16>
    %43 = vector.extract_strided_slice %10 {offsets = [1, 0], sizes = [255, 128], strides = [1, 1]} : vector<256x128xbf16> to vector<255x128xbf16>
    %cst_15 = arith.constant 0.000000e+00 : bf16
    %44 = vector.broadcast %cst_15 : bf16 to vector<1x128xbf16>
    %45 = tpu.concatenate %43, %44 in 0 : vector<255x128xbf16>, vector<1x128xbf16> -> vector<256x128xbf16>
    %c15_i32_16 = arith.constant 15 : i32
    %46 = vector.broadcast %c15_i32_16 : i32 to vector<256x1xi32>
    %47 = arith.cmpi slt, %12, %46 : vector<256x1xi32>
    %cst_17 = arith.constant 0.000000e+00 : bf16
    %48 = vector.broadcast %cst_17 : bf16 to vector<256x128xbf16>
    %49 = vector.shape_cast %47 : vector<256x1xi1> to vector<256x1xi1>
    %50 = vector.broadcast %49 : vector<256x1xi1> to vector<256x128xi1>
    %51 = arith.select %50, %45, %48 : vector<256x128xi1>, vector<256x128xbf16>
    %52 = vector.extract_strided_slice %10 {offsets = [15, 0], sizes = [241, 128], strides = [1, 1]} : vector<256x128xbf16> to vector<241x128xbf16>
    %cst_18 = arith.constant 0.000000e+00 : bf16
    %53 = vector.broadcast %cst_18 : bf16 to vector<15x128xbf16>
    %54 = tpu.concatenate %52, %53 in 0 : vector<241x128xbf16>, vector<15x128xbf16> -> vector<256x128xbf16>
    %c0_i32_19 = arith.constant 0 : i32
    %55 = vector.broadcast %c0_i32_19 : i32 to vector<256x1xi32>
    %56 = arith.cmpi sgt, %12, %55 : vector<256x1xi32>
    %cst_20 = arith.constant 0.000000e+00 : bf16
    %57 = vector.broadcast %cst_20 : bf16 to vector<256x128xbf16>
    %58 = vector.shape_cast %56 : vector<256x1xi1> to vector<256x1xi1>
    %59 = vector.broadcast %58 : vector<256x1xi1> to vector<256x128xi1>
    %60 = arith.select %59, %54, %57 : vector<256x128xi1>, vector<256x128xbf16>
    %61 = vector.extract_strided_slice %10 {offsets = [16, 0], sizes = [240, 128], strides = [1, 1]} : vector<256x128xbf16> to vector<240x128xbf16>
    %cst_21 = arith.constant 0.000000e+00 : bf16
    %62 = vector.broadcast %cst_21 : bf16 to vector<16x128xbf16>
    %63 = tpu.concatenate %61, %62 in 0 : vector<240x128xbf16>, vector<16x128xbf16> -> vector<256x128xbf16>
    %64 = vector.extract_strided_slice %10 {offsets = [17, 0], sizes = [239, 128], strides = [1, 1]} : vector<256x128xbf16> to vector<239x128xbf16>
    %cst_22 = arith.constant 0.000000e+00 : bf16
    %65 = vector.broadcast %cst_22 : bf16 to vector<17x128xbf16>
    %66 = tpu.concatenate %64, %65 in 0 : vector<239x128xbf16>, vector<17x128xbf16> -> vector<256x128xbf16>
    %c15_i32_23 = arith.constant 15 : i32
    %67 = vector.broadcast %c15_i32_23 : i32 to vector<256x1xi32>
    %68 = arith.cmpi slt, %12, %67 : vector<256x1xi32>
    %cst_24 = arith.constant 0.000000e+00 : bf16
    %69 = vector.broadcast %cst_24 : bf16 to vector<256x128xbf16>
    %70 = vector.shape_cast %68 : vector<256x1xi1> to vector<256x1xi1>
    %71 = vector.broadcast %70 : vector<256x1xi1> to vector<256x128xi1>
    %72 = arith.select %71, %66, %69 : vector<256x128xi1>, vector<256x128xbf16>
    %73 = tpu.concatenate %21, %24, %33, %42, %10, %51, %60, %63, %72 in 1 : vector<256x128xbf16>, vector<256x128xbf16>, vector<256x128xbf16>, vector<256x128xbf16>, vector<256x128xbf16>, vector<256x128xbf16>, vector<256x128xbf16>, vector<256x128xbf16>, vector<256x128xbf16> -> vector<256x1152xbf16>
    %c0_25 = arith.constant 0 : index
    %c0_26 = arith.constant 0 : index
    %74 = vector.load %arg4[%c0_25, %c0_26] : memref<1152x128xbf16, #tpu.memory_space<vmem>>, vector<1152x128xbf16>
    %cst_27 = arith.constant dense<0.000000e+00> : vector<256x128xf32>
    %75 = tpu.matmul %73, %74, %cst_27 {dimension_numbers = #tpu.dot_dimension_numbers<[1], [0], [0], [1], [0, 0, 1, 1], [], []>} : vector<256x1152xbf16>, vector<1152x128xbf16>, vector<256x128xf32> -> vector<256x128xf32>
    %76 = vector.shape_cast %75 : vector<256x128xf32> to vector<1x16x16x128xf32>
    %c0_28 = arith.constant 0 : index
    %c0_29 = arith.constant 0 : index
    %c0_30 = arith.constant 0 : index
    %c0_31 = arith.constant 0 : index
    %77 = vector.load %arg5[%c0_28, %c0_29, %c0_30, %c0_31] : memref<1x16x16x128xf32, #tpu.memory_space<vmem>>, vector<1x16x16x128xf32>
    tpu.vector_store %arg5[%c0_28, %c0_29, %c0_30, %c0_31], %76 {strides = array<i32>} : memref<1x16x16x128xf32, #tpu.memory_space<vmem>>, vector<1x16x16x128xf32>,
    %c0_i32_32 = arith.constant 0 : i32
    %78 = arith.cmpi eq, %arg0, %c0_i32_32 : i32
    %79 = arith.extui %78 : i1 to i32
    %c0_i32_33 = arith.constant 0 : i32
    %80 = arith.cmpi ne, %79, %c0_i32_33 : i32
    scf.if %80 {
      %cst_44 = arith.constant 0.000000e+00 : f32
      %92 = vector.broadcast %cst_44 : f32 to vector<1x128xf32>
      %c0_45 = arith.constant 0 : index
      %c0_46 = arith.constant 0 : index
      %93 = vector.load %arg6[%c0_45, %c0_46] : memref<1x128xf32, #tpu.memory_space<vmem>>, vector<1x128xf32>
      tpu.vector_store %arg6[%c0_45, %c0_46], %92 {strides = array<i32>} : memref<1x128xf32, #tpu.memory_space<vmem>>, vector<1x128xf32>,
      %cst_47 = arith.constant 0.000000e+00 : f32
      %94 = vector.broadcast %cst_47 : f32 to vector<1x128xf32>
      %c0_48 = arith.constant 0 : index
      %c0_49 = arith.constant 0 : index
      %95 = vector.load %arg7[%c0_48, %c0_49] : memref<1x128xf32, #tpu.memory_space<vmem>>, vector<1x128xf32>
      tpu.vector_store %arg7[%c0_48, %c0_49], %94 {strides = array<i32>} : memref<1x128xf32, #tpu.memory_space<vmem>>, vector<1x128xf32>,
    } else {
    }
    %c0_34 = arith.constant 0 : index
    %c0_35 = arith.constant 0 : index
    %81 = vector.load %arg6[%c0_34, %c0_35] : memref<1x128xf32, #tpu.memory_space<vmem>>, vector<1x128xf32>
    %cst_36 = arith.constant dense<0.000000e+00> : vector<128xf32>
    %82 = vector.multi_reduction <add>, %75, %cst_36 [0] : vector<256x128xf32> to vector<128xf32>
    %83 = vector.shape_cast %82 : vector<128xf32> to vector<1x128xf32>
    %84 = arith.addf %81, %83 : vector<1x128xf32>
    %c0_37 = arith.constant 0 : index
    %c0_38 = arith.constant 0 : index
    %85 = vector.load %arg6[%c0_37, %c0_38] : memref<1x128xf32, #tpu.memory_space<vmem>>, vector<1x128xf32>
    tpu.vector_store %arg6[%c0_37, %c0_38], %84 {strides = array<i32>} : memref<1x128xf32, #tpu.memory_space<vmem>>, vector<1x128xf32>,
    %c0_39 = arith.constant 0 : index
    %c0_40 = arith.constant 0 : index
    %86 = vector.load %arg7[%c0_39, %c0_40] : memref<1x128xf32, #tpu.memory_space<vmem>>, vector<1x128xf32>
    %87 = arith.mulf %75, %75 : vector<256x128xf32>
    %cst_41 = arith.constant dense<0.000000e+00> : vector<128xf32>
    %88 = vector.multi_reduction <add>, %87, %cst_41 [0] : vector<256x128xf32> to vector<128xf32>
    %89 = vector.shape_cast %88 : vector<128xf32> to vector<1x128xf32>
    %90 = arith.addf %86, %89 : vector<1x128xf32>
    %c0_42 = arith.constant 0 : index
    %c0_43 = arith.constant 0 : index
    %91 = vector.load %arg7[%c0_42, %c0_43] : memref<1x128xf32, #tpu.memory_space<vmem>>, vector<1x128xf32>
    tpu.vector_store %arg7[%c0_42, %c0_43], %90 {strides = array<i32>} : memref<1x128xf32, #tpu.memory_space<vmem>>, vector<1x128xf32>,
    return
  }
  func.func @transform_0(%arg0: i32) -> (i32, i32, i32, i32) {
    %c0_i32 = arith.constant 0 : i32
    %c0_i32_0 = arith.constant 0 : i32
    %c0_i32_1 = arith.constant 0 : i32
    %c0_i32_2 = arith.constant 0 : i32
    return %arg0, %c0_i32, %c0_i32_0, %c0_i32_1 : i32, i32, i32, i32
  }
  func.func @transform_1(%arg0: i32) -> (i32, i32) {
    %c0_i32 = arith.constant 0 : i32
    %c0_i32_0 = arith.constant 0 : i32
    %c0_i32_1 = arith.constant 0 : i32
    return %c0_i32, %c0_i32_0 : i32, i32
  }
  func.func @transform_2(%arg0: i32) -> (i32, i32) {
    %c0_i32 = arith.constant 0 : i32
    %c0_i32_0 = arith.constant 0 : i32
    %c0_i32_1 = arith.constant 0 : i32
    return %c0_i32, %c0_i32_0 : i32, i32
  }
  func.func @transform_3(%arg0: i32) -> (i32, i32) {
    %c0_i32 = arith.constant 0 : i32
    %c0_i32_0 = arith.constant 0 : i32
    %c0_i32_1 = arith.constant 0 : i32
    return %c0_i32, %c0_i32_0 : i32, i32
  }
  func.func @transform_4(%arg0: i32) -> (i32, i32, i32, i32) {
    %c0_i32 = arith.constant 0 : i32
    %c0_i32_0 = arith.constant 0 : i32
    %c0_i32_1 = arith.constant 0 : i32
    %c0_i32_2 = arith.constant 0 : i32
    return %arg0, %c0_i32, %c0_i32_0, %c0_i32_1 : i32, i32, i32, i32
  }
  func.func @transform_5(%arg0: i32) -> (i32, i32) {
    %c0_i32 = arith.constant 0 : i32
    %c0_i32_0 = arith.constant 0 : i32
    %c0_i32_1 = arith.constant 0 : i32
    return %c0_i32, %c0_i32_0 : i32, i32
  }
  func.func @transform_6(%arg0: i32) -> (i32, i32) {
    %c0_i32 = arith.constant 0 : i32
    %c0_i32_0 = arith.constant 0 : i32
    %c0_i32_1 = arith.constant 0 : i32
    return %c0_i32, %c0_i32_0 : i32, i32
  }
}

module attributes {stable_mosaic.version = 11 : i64} {
  func.func @_finalize_down_kernel(%arg0: i32, %arg1: memref<128x128xf32, #tpu.memory_space<vmem>>, %arg2: memref<1x128xf32, #tpu.memory_space<vmem>>, %arg3: memref<1x128xf32, #tpu.memory_space<vmem>>, %arg4: memref<128x128xf32, #tpu.memory_space<vmem>>, %arg5: memref<1x128xf32, #tpu.memory_space<vmem>>, %arg6: memref<1x128xf32, #tpu.memory_space<vmem>>, %arg7: memref<128x128xf32, #tpu.memory_space<vmem>>) attributes {dimension_semantics = [#tpu.dimension_semantics<parallel>], iteration_bounds = array<i64: 1>, scalar_prefetch = 0 : i64, scratch_operands = 0 : i64, tpu.core_type = #tpu.core_type<tc>, window_params = [{transform_indices = @transform_0, window_bounds = array<i64: 128, 128>}, {pipeline_mode = #tpu.pipeline_mode<synchronous>, transform_indices = @transform_1, window_bounds = array<i64: 1, 128>}, {pipeline_mode = #tpu.pipeline_mode<synchronous>, transform_indices = @transform_2, window_bounds = array<i64: 1, 128>}, {transform_indices = @transform_3, window_bounds = array<i64: 128, 128>}, {pipeline_mode = #tpu.pipeline_mode<synchronous>, transform_indices = @transform_4, window_bounds = array<i64: 1, 128>}, {pipeline_mode = #tpu.pipeline_mode<synchronous>, transform_indices = @transform_5, window_bounds = array<i64: 1, 128>}, {transform_indices = @transform_6, window_bounds = array<i64: 128, 128>}]} {
    %c0 = arith.constant 0 : index
    %c0_0 = arith.constant 0 : index
    %0 = vector.load %arg1[%c0, %c0_0] : memref<128x128xf32, #tpu.memory_space<vmem>>, vector<128x128xf32>
    %c0_1 = arith.constant 0 : index
    %c0_2 = arith.constant 0 : index
    %1 = vector.load %arg2[%c0_1, %c0_2] : memref<1x128xf32, #tpu.memory_space<vmem>>, vector<1x128xf32>
    %2 = vector.broadcast %1 : vector<1x128xf32> to vector<128x128xf32>
    %3 = arith.mulf %0, %2 : vector<128x128xf32>
    %c0_3 = arith.constant 0 : index
    %c0_4 = arith.constant 0 : index
    %4 = vector.load %arg3[%c0_3, %c0_4] : memref<1x128xf32, #tpu.memory_space<vmem>>, vector<1x128xf32>
    %5 = vector.broadcast %4 : vector<1x128xf32> to vector<128x128xf32>
    %6 = arith.addf %3, %5 : vector<128x128xf32>
    %c0_5 = arith.constant 0 : index
    %c0_6 = arith.constant 0 : index
    %7 = vector.load %arg4[%c0_5, %c0_6] : memref<128x128xf32, #tpu.memory_space<vmem>>, vector<128x128xf32>
    %c0_7 = arith.constant 0 : index
    %c0_8 = arith.constant 0 : index
    %8 = vector.load %arg5[%c0_7, %c0_8] : memref<1x128xf32, #tpu.memory_space<vmem>>, vector<1x128xf32>
    %9 = vector.broadcast %8 : vector<1x128xf32> to vector<128x128xf32>
    %10 = arith.mulf %7, %9 : vector<128x128xf32>
    %c0_9 = arith.constant 0 : index
    %c0_10 = arith.constant 0 : index
    %11 = vector.load %arg6[%c0_9, %c0_10] : memref<1x128xf32, #tpu.memory_space<vmem>>, vector<1x128xf32>
    %12 = vector.broadcast %11 : vector<1x128xf32> to vector<128x128xf32>
    %13 = arith.addf %10, %12 : vector<128x128xf32>
    %14 = arith.addf %6, %13 : vector<128x128xf32>
    %cst = arith.constant 0.000000e+00 : f32
    %15 = vector.broadcast %cst : f32 to vector<128x128xf32>
    %16 = arith.maximumf %14, %15 : vector<128x128xf32>
    %c0_11 = arith.constant 0 : index
    %c0_12 = arith.constant 0 : index
    %17 = vector.load %arg7[%c0_11, %c0_12] : memref<128x128xf32, #tpu.memory_space<vmem>>, vector<128x128xf32>
    tpu.vector_store %arg7[%c0_11, %c0_12], %16 {strides = array<i32>} : memref<128x128xf32, #tpu.memory_space<vmem>>, vector<128x128xf32>,
    return
  }
  func.func @transform_0(%arg0: i32) -> (i32, i32) {
    %c0_i32 = arith.constant 0 : i32
    %c0_i32_0 = arith.constant 0 : i32
    return %arg0, %c0_i32 : i32, i32
  }
  func.func @transform_1(%arg0: i32) -> (i32, i32) {
    %c0_i32 = arith.constant 0 : i32
    %c0_i32_0 = arith.constant 0 : i32
    %c0_i32_1 = arith.constant 0 : i32
    return %c0_i32, %c0_i32_0 : i32, i32
  }
  func.func @transform_2(%arg0: i32) -> (i32, i32) {
    %c0_i32 = arith.constant 0 : i32
    %c0_i32_0 = arith.constant 0 : i32
    %c0_i32_1 = arith.constant 0 : i32
    return %c0_i32, %c0_i32_0 : i32, i32
  }
  func.func @transform_3(%arg0: i32) -> (i32, i32) {
    %c0_i32 = arith.constant 0 : i32
    %c0_i32_0 = arith.constant 0 : i32
    return %arg0, %c0_i32 : i32, i32
  }
  func.func @transform_4(%arg0: i32) -> (i32, i32) {
    %c0_i32 = arith.constant 0 : i32
    %c0_i32_0 = arith.constant 0 : i32
    %c0_i32_1 = arith.constant 0 : i32
    return %c0_i32, %c0_i32_0 : i32, i32
  }
  func.func @transform_5(%arg0: i32) -> (i32, i32) {
    %c0_i32 = arith.constant 0 : i32
    %c0_i32_0 = arith.constant 0 : i32
    %c0_i32_1 = arith.constant 0 : i32
    return %c0_i32, %c0_i32_0 : i32, i32
  }
  func.func @transform_6(%arg0: i32) -> (i32, i32) {
    %c0_i32 = arith.constant 0 : i32
    %c0_i32_0 = arith.constant 0 : i32
    return %arg0, %c0_i32 : i32, i32
  }
}

</mosaic_0001>

<llo_original>
// kernel: bottleneck_pallas.4
$region0: #{bottleneck_pallas.4}
  #allocation0 [shape = 'u32[]', space=smem, size = 0x4, offset = 0x4, fixed_abs, tag = 'smem constant byte address 0x4 - core index']
  #allocation1 [shape = 'u32[72,128]{1,0:T(1,128)}', space=vmem, size = 0x9000, scoped, tag = 'internal scratch']
  %s0 = inlined_call_operand.vmem [shape: f32[512,128], index: 0, kind: input, shape index: {}]
  %s1 = inlined_call_operand.vmem [shape: bf16[128,128], index: 1, kind: input, shape index: {}]
  %s2 = inlined_call_operand.vmem [shape: f32[512,128], index: 2, kind: output, shape index: {0}]
  %s3 = inlined_call_operand.vmem [shape: f32[1,128], index: 3, kind: output, shape index: {1}]
  %s4 = inlined_call_operand.vmem [shape: f32[1,128], index: 4, kind: output, shape index: {2}]
  %5 = xla_tuple %s2, %s3, %s4
  %s6 = sld [smem:[#allocation0]]
  $region61: #{bottleneck_pallas.4} parent=0
    _
  %s8 = ssub.s32 1, %s6
  %s9 = scalar_select 0, %s8, %s6
  loop: start=0, step=1, limit=4
  $region2: #{bottleneck_pallas.4} parent=0 // loop_pre_header
    _
  $region3: #{bottleneck_pallas.4} parent=0 // loop_header
    %s11 = sphi 0, %s15
    %p12 = scmp.ge.s32.totalorder %s11, 4
    %s21 = sphi 0, %s23
    %s24 = sphi 0, %s21
    %s25 = sphi 0, %s24
    %s41 = sphi 0, %s25
    %s45 = sphi 0, %s45
    %s47 = sphi 0, %s45
    %s48 = sphi 0, %s47
    %s62 = sphi 0, %s48
    %s68 = sphi 0, %s70
    %s71 = sphi 0, %s68
    %s72 = sphi 0, %s71
    %s88 = sphi 0, %s72
    %s92 = sphi 0, %s92
    %s94 = sphi 0, %s92
    %s95 = sphi 0, %s94
    %s109 = sphi 0, %s95
    %s113 = sphi 0, %s113
    %s115 = sphi 0, %s113
    %s116 = sphi 0, %s115
    %s130 = sphi 0, %s116
  $region4: #{bottleneck_pallas.4} parent=0 // loop_header_branch
    %14 = sbr.rel (%p12) target = $region8
  $region5: #{bottleneck_pallas.4} parent=0 // loop_body
    %s16 = ssub.s32 %s11, 1
    %s17 = ssub.s32 %s11, 2
    %s18 = sadd.s32 %s11, 1
    %s19 = ssub.s32 %s11, %s18
    %p20 = scmp.eq.s32.totalorder %s19, 0
    %s22 = sadd.s32 %s21, 1
    %s23 = scalar_select %p20, %s21, %s22
    %p26 = pneg %p20
    %p27 = scmp.eq.s32.totalorder %s11, 1
    %p28 = por %p26, %p27
    %p29 = scmp.ne.s32.totalorder %s21, %s24
    %p30 = scmp.eq.s32.totalorder %s11, 0
    %p31 = por %p29, %p30
    %p32 = scmp.ne.s32.totalorder %s21, %s24
    %p33 = scmp.eq.s32.totalorder %s16, 1
    %p34 = por %p32, %p33
    %p35 = scmp.ne.s32.totalorder %s24, %s25
    %p36 = scmp.eq.s32.totalorder %s16, 0
    %p37 = por %p35, %p36
    %p38 = scmp.ne.s32.totalorder %s24, %s25
    %p39 = scmp.eq.s32.totalorder %s17, 1
    %p40 = por %p38, %p39
    %p42 = scmp.ne.s32.totalorder %s25, %s41
    %p43 = scmp.eq.s32.totalorder %s17, 0
    %p44 = por %p42, %p43
    %s46 = sadd.s32 %s45, 1
    %p49 = scmp.eq.s32.totalorder %s11, 1
    %p50 = scmp.ne.s32.totalorder %s45, %s47
    %p51 = scmp.eq.s32.totalorder %s11, 0
    %p52 = por %p50, %p51
    %p53 = scmp.ne.s32.totalorder %s45, %s47
    %p54 = scmp.eq.s32.totalorder %s16, 1
    %p55 = por %p53, %p54
    %p56 = scmp.ne.s32.totalorder %s47, %s48
    %p57 = scmp.eq.s32.totalorder %s16, 0
    %p58 = por %p56, %p57
    %p59 = scmp.ne.s32.totalorder %s47, %s48
    %p60 = scmp.eq.s32.totalorder %s17, 1
    %p61 = por %p59, %p60
    %p63 = scmp.ne.s32.totalorder %s48, %s62
    %p64 = scmp.eq.s32.totalorder %s17, 0
    %p65 = por %p63, %p64
    %s66 = ssub.s32 %s11, %s18
    %p67 = scmp.eq.s32.totalorder %s66, 0
    %s69 = sadd.s32 %s68, 1
    %s70 = scalar_select %p67, %s68, %s69
    %p73 = pneg %p67
    %p74 = scmp.eq.s32.totalorder %s11, 1
    %p75 = por %p73, %p74
    %p76 = scmp.ne.s32.totalorder %s68, %s71
    %p77 = scmp.eq.s32.totalorder %s11, 0
    %p78 = por %p76, %p77
    %p79 = scmp.ne.s32.totalorder %s68, %s71
    %p80 = scmp.eq.s32.totalorder %s16, 1
    %p81 = por %p79, %p80
    %p82 = scmp.ne.s32.totalorder %s71, %s72
    %p83 = scmp.eq.s32.totalorder %s16, 0
    %p84 = por %p82, %p83
    %p85 = scmp.ne.s32.totalorder %s71, %s72
    %p86 = scmp.eq.s32.totalorder %s17, 1
    %p87 = por %p85, %p86
    %p89 = scmp.ne.s32.totalorder %s72, %s88
    %p90 = scmp.eq.s32.totalorder %s17, 0
    %p91 = por %p89, %p90
    %s93 = sadd.s32 %s92, 1
    %p96 = scmp.eq.s32.totalorder %s11, 1
    %p97 = scmp.ne.s32.totalorder %s92, %s94
    %p98 = scmp.eq.s32.totalorder %s11, 0
    %p99 = por %p97, %p98
    %p100 = scmp.ne.s32.totalorder %s92, %s94
    %p101 = scmp.eq.s32.totalorder %s16, 1
    %p102 = por %p100, %p101
    %p103 = scmp.ne.s32.totalorder %s94, %s95
    %p104 = scmp.eq.s32.totalorder %s16, 0
    %p105 = por %p103, %p104
    %p106 = scmp.ne.s32.totalorder %s94, %s95
    %p107 = scmp.eq.s32.totalorder %s17, 1
    %p108 = por %p106, %p107
    %p110 = scmp.ne.s32.totalorder %s95, %s109
    %p111 = scmp.eq.s32.totalorder %s17, 0
    %p112 = por %p110, %p111
    %s114 = sadd.s32 %s113, 1
    %p117 = scmp.eq.s32.totalorder %s11, 1
    %p118 = scmp.ne.s32.totalorder %s113, %s115
    %p119 = scmp.eq.s32.totalorder %s11, 0
    %p120 = por %p118, %p119
    %p121 = scmp.ne.s32.totalorder %s113, %s115
    %p122 = scmp.eq.s32.totalorder %s16, 1
    %p123 = por %p121, %p122
    %p124 = scmp.ne.s32.totalorder %s115, %s116
    %p125 = scmp.eq.s32.totalorder %s16, 0
    %p126 = por %p124, %p125
    %p127 = scmp.ne.s32.totalorder %s115, %s116
    %p128 = scmp.eq.s32.totalorder %s17, 1
    %p129 = por %p127, %p128
    %p131 = scmp.ne.s32.totalorder %s116, %s130
    %p132 = scmp.eq.s32.totalorder %s17, 0
    %p133 = por %p131, %p132
    %p134 = scmp.le.s32.totalorder 1, %s11
    %p135 = scmp.lt.s32.totalorder %s11, 3
    %p136 = pnand %p134, %p135
    %p137 = pneg %p136
    // Predicated region
    $region9: #{bottleneck_pallas.4} parent=5 // pred_check
      _
    $region10: #{bottleneck_pallas.4} parent=5 // pred_check_branch
      %139 = sbr.rel (%p136) target = $region12
    $region11: #{bottleneck_pallas.4} parent=5 // pred_region
      %s140 = ssub.s32 %s11, 1
      // Predicated region
      $region13: #{bottleneck_pallas.4} parent=11 // pred_check
        %p141 = pneg %p58
      $region14: #{bottleneck_pallas.4} parent=11 // pred_check_branch
        %143 = sbr.rel (%p141) target = $region16
      $region15: #{bottleneck_pallas.4} parent=11 // pred_region
        _
      $region16: #{bottleneck_pallas.4} parent=11 // pred_fallthru
        _
    $region12: #{bottleneck_pallas.4} parent=5 // pred_fallthru
      _
    %p144 = scmp.lt.s32.totalorder %s11, 2
    // Predicated region
    $region17: #{bottleneck_pallas.4} parent=5 // pred_check
      %p145 = pneg %p144
    $region18: #{bottleneck_pallas.4} parent=5 // pred_check_branch
      %147 = sbr.rel (%p145) target = $region20
    $region19: #{bottleneck_pallas.4} parent=5 // pred_region
      // Predicated region
      $region21: #{bottleneck_pallas.4} parent=19 // pred_check
        %p148 = pneg %p31
      $region22: #{bottleneck_pallas.4} parent=19 // pred_check_branch
        %150 = sbr.rel (%p148) target = $region24
      $region23: #{bottleneck_pallas.4} parent=19 // pred_region
        %s151 = smul.u32 32, %s11
        %p152 = scmp.lt.s32.totalorder %s151, 63
        %s153 = scalar_select %p152, %s151, 63
        %s154 = smul.addr %s153, 8
        %s155 = scalar_lea.vmem %s0, %s154
        %s156 = smul.u32 32, %s11
      $region24: #{bottleneck_pallas.4} parent=19 // pred_fallthru
        _
    $region20: #{bottleneck_pallas.4} parent=5 // pred_fallthru
      _
    %p157 = scmp.le.s32.totalorder 1, %s11
    %p158 = scmp.lt.s32.totalorder %s11, 3
    %p159 = pnand %p157, %p158
    %p160 = pneg %p159
    // Predicated region
    $region25: #{bottleneck_pallas.4} parent=5 // pred_check
      _
    $region26: #{bottleneck_pallas.4} parent=5 // pred_check_branch
      %162 = sbr.rel (%p159) target = $region28
    $region27: #{bottleneck_pallas.4} parent=5 // pred_region
      %s163 = ssub.s32 %s11, 1
      %s164 = smul.u32 32, %s16
      %p165 = scmp.lt.s32.totalorder %s164, 63
      %s166 = scalar_select %p165, %s164, 63
      %s167 = smul.addr %s166, 8
      %s168 = scalar_lea.vmem %s0, %s167
      %p169 = pneg %p37
      %p170 = pneg %p34
      %p171 = pneg %p58
      %p172 = pneg %p55
      %p173 = pneg %p84
      %p174 = pneg %p81
      %s175 = smul.u32 32, %s16
      %p176 = scmp.lt.s32.totalorder %s175, 63
      %s177 = scalar_select %p176, %s175, 63
      %s178 = smul.addr %s177, 8
      %s179 = scalar_lea.vmem %s2, %s178
      %p180 = pneg %p105
      %p181 = pneg %p102
      %p182 = pneg %p126
      %p183 = pneg %p123
      %s184 = smul.u32 32, %s16
      %p185 = scmp.lt.s32.totalorder %s184, 63
      %s186 = scalar_select %p185, %s184, 63
      %s187 = smul.addr %s186, 8
      %s188 = scalar_lea.vmem %s0, %s187
      %s189 = smul.u32 32, %s16
      %s190 = smul.u32 32, %s16
      %p191 = scmp.lt.s32.totalorder %s190, 63
      %s192 = scalar_select %p191, %s190, 63
      %s193 = smul.addr %s192, 8
      %s194 = scalar_lea.vmem %s2, %s193
      %s195 = smul.u32 32, %s16
      %v196 = vld [vmem:[%s188] sm:$0xff]
      %v197 = vld [vmem:[%s188 + $0x8] sm:$0xff]
      %v198 = vld [vmem:[%s188 + $0x10] sm:$0xff]
      %v199 = vld [vmem:[%s188 + $0x18] sm:$0xff]
      %v200 = vld [vmem:[%s188 + $0x20] sm:$0xff]
      %v201 = vld [vmem:[%s188 + $0x28] sm:$0xff]
      %v202 = vld [vmem:[%s188 + $0x30] sm:$0xff]
      %v203 = vld [vmem:[%s188 + $0x38] sm:$0xff]
      %v204 = vld [vmem:[%s188 + $0x40] sm:$0xff]
      %v205 = vld [vmem:[%s188 + $0x48] sm:$0xff]
      %v206 = vld [vmem:[%s188 + $0x50] sm:$0xff]
      %v207 = vld [vmem:[%s188 + $0x58] sm:$0xff]
      %v208 = vld [vmem:[%s188 + $0x60] sm:$0xff]
      %v209 = vld [vmem:[%s188 + $0x68] sm:$0xff]
      %v210 = vld [vmem:[%s188 + $0x70] sm:$0xff]
      %v211 = vld [vmem:[%s188 + $0x78] sm:$0xff]
      %v212 = vld [vmem:[%s188 + $0x80] sm:$0xff]
      %v213 = vld [vmem:[%s188 + $0x88] sm:$0xff]
      %v214 = vld [vmem:[%s188 + $0x90] sm:$0xff]
      %v215 = vld [vmem:[%s188 + $0x98] sm:$0xff]
      %v216 = vld [vmem:[%s188 + $0xa0] sm:$0xff]
      %v217 = vld [vmem:[%s188 + $0xa8] sm:$0xff]
      %v218 = vld [vmem:[%s188 + $0xb0] sm:$0xff]
      %v219 = vld [vmem:[%s188 + $0xb8] sm:$0xff]
      %v220 = vld [vmem:[%s188 + $0xc0] sm:$0xff]
      %v221 = vld [vmem:[%s188 + $0xc8] sm:$0xff]
      %v222 = vld [vmem:[%s188 + $0xd0] sm:$0xff]
      %v223 = vld [vmem:[%s188 + $0xd8] sm:$0xff]
      %v224 = vld [vmem:[%s188 + $0xe0] sm:$0xff]
      %v225 = vld [vmem:[%s188 + $0xe8] sm:$0xff]
      %v226 = vld [vmem:[%s188 + $0xf0] sm:$0xff]
      %v227 = vld [vmem:[%s188 + $0xf8] sm:$0xff]
      %v228 = vpack.c.bf16 %v197, %v196
      %v229 = vpack.c.bf16 %v199, %v198
      %v230 = vpack.c.bf16 %v201, %v200
      %v231 = vpack.c.bf16 %v203, %v202
      %v232 = vpack.c.bf16 %v205, %v204
      %v233 = vpack.c.bf16 %v207, %v206
      %v234 = vpack.c.bf16 %v209, %v208
      %v235 = vpack.c.bf16 %v211, %v210
      %v236 = vpack.c.bf16 %v213, %v212
      %v237 = vpack.c.bf16 %v215, %v214
      %v238 = vpack.c.bf16 %v217, %v216
      %v239 = vpack.c.bf16 %v219, %v218
      %v240 = vpack.c.bf16 %v221, %v220
      %v241 = vpack.c.bf16 %v223, %v222
      %v242 = vpack.c.bf16 %v225, %v224
      %v243 = vpack.c.bf16 %v227, %v226
      %v244 = vld [vmem:[%s1] sm:$0xf]
      %v245 = vld [vmem:[%s1 + $0x4] sm:$0xf]
      %v246 = vld [vmem:[%s1 + $0x8] sm:$0xf]
      %v247 = vld [vmem:[%s1 + $0xc] sm:$0xf]
      %v248 = vld [vmem:[%s1 + $0x10] sm:$0xf]
      %v249 = vld [vmem:[%s1 + $0x14] sm:$0xf]
      %v250 = vld [vmem:[%s1 + $0x18] sm:$0xf]
      %v251 = vld [vmem:[%s1 + $0x1c] sm:$0xf]
      %v252 = vld [vmem:[%s1 + $0x20] sm:$0xf]
      %v253 = vld [vmem:[%s1 + $0x24] sm:$0xf]
      %v254 = vld [vmem:[%s1 + $0x28] sm:$0xf]
      %v255 = vld [vmem:[%s1 + $0x2c] sm:$0xf]
      %v256 = vld [vmem:[%s1 + $0x30] sm:$0xf]
      %v257 = vld [vmem:[%s1 + $0x34] sm:$0xf]
      %v258 = vld [vmem:[%s1 + $0x38] sm:$0xf]
      %v259 = vld [vmem:[%s1 + $0x3c] sm:$0xf]
      %v276 = vunpack.c.l.b16 %v244
      %v277 = vunpack.c.l.b16 %v245
      %v278 = vunpack.c.l.b16 %v246
      %v279 = vunpack.c.l.b16 %v247
      %v280 = vunpack.c.l.b16 %v248
      %v281 = vunpack.c.l.b16 %v249
      %v282 = vunpack.c.l.b16 %v250
      %v283 = vunpack.c.l.b16 %v251
      %v284 = vunpack.c.l.b16 %v252
      %v285 = vunpack.c.l.b16 %v253
      %v286 = vunpack.c.l.b16 %v254
      %v287 = vunpack.c.l.b16 %v255
      %v288 = vunpack.c.l.b16 %v256
      %v289 = vunpack.c.l.b16 %v257
      %v290 = vunpack.c.l.b16 %v258
      %v291 = vunpack.c.l.b16 %v259
      %v292 = vpack.c.b16 %v277, %v276
      %v293 = vpack.c.b16 %v279, %v278
      %v294 = vpack.c.b16 %v281, %v280
      %v295 = vpack.c.b16 %v283, %v282
      %v296 = vpack.c.b16 %v285, %v284
      %v297 = vpack.c.b16 %v287, %v286
      %v298 = vpack.c.b16 %v289, %v288
      %v299 = vpack.c.b16 %v291, %v290
      %308 = vmatpush.bf16.msra.mxu0 %v299
      %309 = vmatpush.bf16.msra.mxu0 %v298
      %310 = vmatpush.bf16.msra.mxu0 %v297
      %311 = vmatpush.bf16.msra.mxu0 %v296
      %312 = vmatpush.bf16.msra.mxu0 %v295
      %313 = vmatpush.bf16.msra.mxu0 %v294
      %314 = vmatpush.bf16.msra.mxu0 %v293
      %315 = vmatpush.bf16.msra.mxu0 %v292
      %316 = vmatmul.bf16.gmra.mxu0 %v228
      %v317 = vpop.f32.mrf.mxu0
      %v318 = vadd.f32 0.0, %v317
      %v319 = vpop.f32.mrf.mxu0
      %v320 = vadd.f32 0.0, %v319
      %321 = vmatmul.bf16.gmra.mxu0 %v229
      %v322 = vpop.f32.mrf.mxu0
      %v323 = vadd.f32 0.0, %v322
      %v324 = vpop.f32.mrf.mxu0
      %v325 = vadd.f32 0.0, %v324
      %326 = vmatmul.bf16.gmra.mxu0 %v230
      %v327 = vpop.f32.mrf.mxu0
      %v328 = vadd.f32 0.0, %v327
      %v329 = vpop.f32.mrf.mxu0
      %v330 = vadd.f32 0.0, %v329
      %331 = vmatmul.bf16.gmra.mxu0 %v231
      %v332 = vpop.f32.mrf.mxu0
      %v333 = vadd.f32 0.0, %v332
      %v334 = vpop.f32.mrf.mxu0
      %v335 = vadd.f32 0.0, %v334
      %336 = vmatmul.bf16.gmra.mxu0 %v232
      %v337 = vpop.f32.mrf.mxu0
      %v338 = vadd.f32 0.0, %v337
      %v339 = vpop.f32.mrf.mxu0
      %v340 = vadd.f32 0.0, %v339
      %341 = vmatmul.bf16.gmra.mxu0 %v233
      %v342 = vpop.f32.mrf.mxu0
      %v343 = vadd.f32 0.0, %v342
      %v344 = vpop.f32.mrf.mxu0
      %v345 = vadd.f32 0.0, %v344
      %346 = vmatmul.bf16.gmra.mxu0 %v234
      %v347 = vpop.f32.mrf.mxu0
      %v348 = vadd.f32 0.0, %v347
      %v349 = vpop.f32.mrf.mxu0
      %v350 = vadd.f32 0.0, %v349
      %351 = vmatmul.bf16.gmra.mxu0 %v235
      %v352 = vpop.f32.mrf.mxu0
      %v353 = vadd.f32 0.0, %v352
      %v354 = vpop.f32.mrf.mxu0
      %v355 = vadd.f32 0.0, %v354
      %356 = vmatmul.bf16.gmra.mxu0 %v236
      %v357 = vpop.f32.mrf.mxu0
      %v358 = vadd.f32 0.0, %v357
      %v359 = vpop.f32.mrf.mxu0
      %v360 = vadd.f32 0.0, %v359
      %361 = vmatmul.bf16.gmra.mxu0 %v237
      %v362 = vpop.f32.mrf.mxu0
      %v363 = vadd.f32 0.0, %v362
      %v364 = vpop.f32.mrf.mxu0
      %v365 = vadd.f32 0.0, %v364
      %366 = vmatmul.bf16.gmra.mxu0 %v238
      %v367 = vpop.f32.mrf.mxu0
      %v368 = vadd.f32 0.0, %v367
      %v369 = vpop.f32.mrf.mxu0
      %v370 = vadd.f32 0.0, %v369
      %371 = vmatmul.bf16.gmra.mxu0 %v239
      %v372 = vpop.f32.mrf.mxu0
      %v373 = vadd.f32 0.0, %v372
      %v374 = vpop.f32.mrf.mxu0
      %v375 = vadd.f32 0.0, %v374
      %376 = vmatmul.bf16.gmra.mxu0 %v240
      %v377 = vpop.f32.mrf.mxu0
      %v378 = vadd.f32 0.0, %v377
      %v379 = vpop.f32.mrf.mxu0
      %v380 = vadd.f32 0.0, %v379
      %381 = vmatmul.bf16.gmra.mxu0 %v241
      %v382 = vpop.f32.mrf.mxu0
      %v383 = vadd.f32 0.0, %v382
      %v384 = vpop.f32.mrf.mxu0
      %v385 = vadd.f32 0.0, %v384
      %386 = vmatmul.bf16.gmra.mxu0 %v242
      %v387 = vpop.f32.mrf.mxu0
      %v388 = vadd.f32 0.0, %v387
      %v389 = vpop.f32.mrf.mxu0
      %v390 = vadd.f32 0.0, %v389
      %391 = vmatmul.bf16.gmra.mxu0 %v243
      %v392 = vpop.f32.mrf.mxu0
      %v393 = vadd.f32 0.0, %v392
      %v394 = vpop.f32.mrf.mxu0
      %v395 = vadd.f32 0.0, %v394
      %396 = vdwg.mxu0
      %397 = vst [vmem:[%s194] sm:$0xff] %v318
      %398 = vst [vmem:[%s194 + $0x8] sm:$0xff] %v320
      %399 = vst [vmem:[%s194 + $0x10] sm:$0xff] %v323
      %400 = vst [vmem:[%s194 + $0x18] sm:$0xff] %v325
      %401 = vst [vmem:[%s194 + $0x20] sm:$0xff] %v328
      %402 = vst [vmem:[%s194 + $0x28] sm:$0xff] %v330
      %403 = vst [vmem:[%s194 + $0x30] sm:$0xff] %v333
      %404 = vst [vmem:[%s194 + $0x38] sm:$0xff] %v335
      %405 = vst [vmem:[%s194 + $0x40] sm:$0xff] %v338
      %406 = vst [vmem:[%s194 + $0x48] sm:$0xff] %v340
      %407 = vst [vmem:[%s194 + $0x50] sm:$0xff] %v343
      %408 = vst [vmem:[%s194 + $0x58] sm:$0xff] %v345
      %409 = vst [vmem:[%s194 + $0x60] sm:$0xff] %v348
      %410 = vst [vmem:[%s194 + $0x68] sm:$0xff] %v350
      %411 = vst [vmem:[%s194 + $0x70] sm:$0xff] %v353
      %412 = vst [vmem:[%s194 + $0x78] sm:$0xff] %v355
      %413 = vst [vmem:[%s194 + $0x80] sm:$0xff] %v358
      %414 = vst [vmem:[%s194 + $0x88] sm:$0xff] %v360
      %415 = vst [vmem:[%s194 + $0x90] sm:$0xff] %v363
      %416 = vst [vmem:[%s194 + $0x98] sm:$0xff] %v365
      %417 = vst [vmem:[%s194 + $0xa0] sm:$0xff] %v368
      %418 = vst [vmem:[%s194 + $0xa8] sm:$0xff] %v370
      %419 = vst [vmem:[%s194 + $0xb0] sm:$0xff] %v373
      %420 = vst [vmem:[%s194 + $0xb8] sm:$0xff] %v375
      %421 = vst [vmem:[%s194 + $0xc0] sm:$0xff] %v378
      %422 = vst [vmem:[%s194 + $0xc8] sm:$0xff] %v380
      %423 = vst [vmem:[%s194 + $0xd0] sm:$0xff] %v383
      %424 = vst [vmem:[%s194 + $0xd8] sm:$0xff] %v385
      %425 = vst [vmem:[%s194 + $0xe0] sm:$0xff] %v388
      %426 = vst [vmem:[%s194 + $0xe8] sm:$0xff] %v390
      %427 = vst [vmem:[%s194 + $0xf0] sm:$0xff] %v393
      %428 = vst [vmem:[%s194 + $0xf8] sm:$0xff] %v395
      %p429 = scmp.eq.s32.totalorder %s16, 0
      // Predicated region
      $region29: #{bottleneck_pallas.4} parent=27 // pred_check
        %p430 = pneg %p429
      $region30: #{bottleneck_pallas.4} parent=27 // pred_check_branch
        %432 = sbr.rel (%p430) target = $region32
      $region31: #{bottleneck_pallas.4} parent=27 // pred_region
        %433 = vst [vmem:[%s3] sm:$0x1] 0.0
        %434 = vst [vmem:[%s4] sm:$0x1] 0.0
      $region32: #{bottleneck_pallas.4} parent=27 // pred_fallthru
        _
      %v435 = vld [vmem:[%s3] sm:$0x1]
      %v436 = vadd.f32 %v318, %v320
      %v437 = vadd.f32 %v436, %v323
      %v438 = vadd.f32 %v437, %v325
      %v439 = vadd.f32 %v438, %v328
      %v440 = vadd.f32 %v439, %v330
      %v441 = vadd.f32 %v440, %v333
      %v442 = vadd.f32 %v441, %v335
      %v443 = vadd.f32 %v442, %v338
      %v444 = vadd.f32 %v443, %v340
      %v445 = vadd.f32 %v444, %v343
      %v446 = vadd.f32 %v445, %v345
      %v447 = vadd.f32 %v446, %v348
      %v448 = vadd.f32 %v447, %v350
      %v449 = vadd.f32 %v448, %v353
      %v450 = vadd.f32 %v449, %v355
      %v451 = vadd.f32 %v450, %v358
      %v452 = vadd.f32 %v451, %v360
      %v453 = vadd.f32 %v452, %v363
      %v454 = vadd.f32 %v453, %v365
      %v455 = vadd.f32 %v454, %v368
      %v456 = vadd.f32 %v455, %v370
      %v457 = vadd.f32 %v456, %v373
      %v458 = vadd.f32 %v457, %v375
      %v459 = vadd.f32 %v458, %v378
      %v460 = vadd.f32 %v459, %v380
      %v461 = vadd.f32 %v460, %v383
      %v462 = vadd.f32 %v461, %v385
      %v463 = vadd.f32 %v462, %v388
      %v464 = vadd.f32 %v463, %v390
      %v465 = vadd.f32 %v464, %v393
      %v466 = vadd.f32 %v465, %v395
      %v467 = vrot.slane %v466, 4
      %v468 = vadd.f32 %v466, %v467
      %v469 = vrot.slane %v468, 2
      %v470 = vadd.f32 %v468, %v469
      %v471 = vrot.slane %v470, 1
      %v472 = vadd.f32 %v470, %v471
      %v473 = vadd.f32 %v435, %v472
      %474 = vst [vmem:[%s3] sm:$0x1] %v473
      %v475 = vld [vmem:[%s4] sm:$0x1]
      %v476 = vmul.f32 %v318, %v318
      %v477 = vmul.f32 %v320, %v320
      %v478 = vmul.f32 %v323, %v323
      %v479 = vmul.f32 %v325, %v325
      %v480 = vmul.f32 %v328, %v328
      %v481 = vmul.f32 %v330, %v330
      %v482 = vmul.f32 %v333, %v333
      %v483 = vmul.f32 %v335, %v335
      %v484 = vmul.f32 %v338, %v338
      %v485 = vmul.f32 %v340, %v340
      %v486 = vmul.f32 %v343, %v343
      %v487 = vmul.f32 %v345, %v345
      %v488 = vmul.f32 %v348, %v348
      %v489 = vmul.f32 %v350, %v350
      %v490 = vmul.f32 %v353, %v353
      %v491 = vmul.f32 %v355, %v355
      %v492 = vmul.f32 %v358, %v358
      %v493 = vmul.f32 %v360, %v360
      %v494 = vmul.f32 %v363, %v363
      %v495 = vmul.f32 %v365, %v365
      %v496 = vmul.f32 %v368, %v368
      %v497 = vmul.f32 %v370, %v370
      %v498 = vmul.f32 %v373, %v373
      %v499 = vmul.f32 %v375, %v375
      %v500 = vmul.f32 %v378, %v378
      %v501 = vmul.f32 %v380, %v380
      %v502 = vmul.f32 %v383, %v383
      %v503 = vmul.f32 %v385, %v385
      %v504 = vmul.f32 %v388, %v388
      %v505 = vmul.f32 %v390, %v390
      %v506 = vmul.f32 %v393, %v393
      %v507 = vmul.f32 %v395, %v395
      %v508 = vadd.f32 %v476, %v477
      %v509 = vadd.f32 %v508, %v478
      %v510 = vadd.f32 %v509, %v479
      %v511 = vadd.f32 %v510, %v480
      %v512 = vadd.f32 %v511, %v481
      %v513 = vadd.f32 %v512, %v482
      %v514 = vadd.f32 %v513, %v483
      %v515 = vadd.f32 %v514, %v484
      %v516 = vadd.f32 %v515, %v485
      %v517 = vadd.f32 %v516, %v486
      %v518 = vadd.f32 %v517, %v487
      %v519 = vadd.f32 %v518, %v488
      %v520 = vadd.f32 %v519, %v489
      %v521 = vadd.f32 %v520, %v490
      %v522 = vadd.f32 %v521, %v491
      %v523 = vadd.f32 %v522, %v492
      %v524 = vadd.f32 %v523, %v493
      %v525 = vadd.f32 %v524, %v494
      %v526 = vadd.f32 %v525, %v495
      %v527 = vadd.f32 %v526, %v496
      %v528 = vadd.f32 %v527, %v497
      %v529 = vadd.f32 %v528, %v498
      %v530 = vadd.f32 %v529, %v499
      %v531 = vadd.f32 %v530, %v500
      %v532 = vadd.f32 %v531, %v501
      %v533 = vadd.f32 %v532, %v502
      %v534 = vadd.f32 %v533, %v503
      %v535 = vadd.f32 %v534, %v504
      %v536 = vadd.f32 %v535, %v505
      %v537 = vadd.f32 %v536, %v506
      %v538 = vadd.f32 %v537, %v507
      %v539 = vrot.slane %v538, 4
      %v540 = vadd.f32 %v538, %v539
      %v541 = vrot.slane %v540, 2
      %v542 = vadd.f32 %v540, %v541
      %v543 = vrot.slane %v542, 1
      %v544 = vadd.f32 %v542, %v543
      %v545 = vadd.f32 %v475, %v544
      %546 = vst [vmem:[%s4] sm:$0x1] %v545
      %s547 = smul.u32 32, %s16
      %p548 = scmp.lt.s32.totalorder %s547, 63
      %s549 = scalar_select %p548, %s547, 63
      %s550 = smul.addr %s549, 8
      %s551 = scalar_lea.vmem %s2, %s550
      // Predicated region
      $region33: #{bottleneck_pallas.4} parent=27 // pred_check
        %p552 = pneg %p81
      $region34: #{bottleneck_pallas.4} parent=27 // pred_check_branch
        %554 = sbr.rel (%p552) target = $region36
      $region35: #{bottleneck_pallas.4} parent=27 // pred_region
        %s555 = smul.u32 32, %s16
      $region36: #{bottleneck_pallas.4} parent=27 // pred_fallthru
        _
      // Predicated region
      $region37: #{bottleneck_pallas.4} parent=27 // pred_check
        %p556 = pneg %p102
      $region38: #{bottleneck_pallas.4} parent=27 // pred_check_branch
        %558 = sbr.rel (%p556) target = $region40
      $region39: #{bottleneck_pallas.4} parent=27 // pred_region
        _
      $region40: #{bottleneck_pallas.4} parent=27 // pred_fallthru
        _
      // Predicated region
      $region41: #{bottleneck_pallas.4} parent=27 // pred_check
        %p559 = pneg %p123
      $region42: #{bottleneck_pallas.4} parent=27 // pred_check_branch
        %561 = sbr.rel (%p559) target = $region44
      $region43: #{bottleneck_pallas.4} parent=27 // pred_region
        _
      $region44: #{bottleneck_pallas.4} parent=27 // pred_fallthru
        _
      // Predicated region
      $region45: #{bottleneck_pallas.4} parent=27 // pred_check
        %p562 = pneg %p102
      $region46: #{bottleneck_pallas.4} parent=27 // pred_check_branch
        %564 = sbr.rel (%p562) target = $region48
      $region47: #{bottleneck_pallas.4} parent=27 // pred_region
        _
      $region48: #{bottleneck_pallas.4} parent=27 // pred_fallthru
        _
      // Predicated region
      $region49: #{bottleneck_pallas.4} parent=27 // pred_check
        %p565 = pneg %p123
      $region50: #{bottleneck_pallas.4} parent=27 // pred_check_branch
        %567 = sbr.rel (%p565) target = $region52
      $region51: #{bottleneck_pallas.4} parent=27 // pred_region
        _
      $region52: #{bottleneck_pallas.4} parent=27 // pred_fallthru
        _
    $region28: #{bottleneck_pallas.4} parent=5 // pred_fallthru
      _
    %p568 = scmp.le.s32.totalorder 2, %s11
    // Predicated region
    $region53: #{bottleneck_pallas.4} parent=5 // pred_check
      %p569 = pneg %p568
    $region54: #{bottleneck_pallas.4} parent=5 // pred_check_branch
      %571 = sbr.rel (%p569) target = $region56
    $region55: #{bottleneck_pallas.4} parent=5 // pred_region
      %s572 = ssub.s32 %s11, 2
      // Predicated region
      $region57: #{bottleneck_pallas.4} parent=55 // pred_check
        %p573 = pneg %p87
      $region58: #{bottleneck_pallas.4} parent=55 // pred_check_branch
        %575 = sbr.rel (%p573) target = $region60
      $region59: #{bottleneck_pallas.4} parent=55 // pred_region
        %s576 = smul.u32 32, %s17
        %p577 = scmp.lt.s32.totalorder %s576, 63
        %s578 = scalar_select %p577, %s576, 63
        %s579 = smul.addr %s578, 8
        %s580 = scalar_lea.vmem %s2, %s579
      $region60: #{bottleneck_pallas.4} parent=55 // pred_fallthru
        _
    $region56: #{bottleneck_pallas.4} parent=5 // pred_fallthru
      _
  $region6: #{bottleneck_pallas.4} parent=0 // loop_footer
    %s15 = sadd.s32 1, %s11
  $region7: #{bottleneck_pallas.4} parent=0 // loop_footer_branch
    %10 = sbr.rel target = $region3
  $region8: #{bottleneck_pallas.4} parent=0 // loop_exit
    _

// kernel: bottleneck_pallas.7
$region0: #{bottleneck_pallas.7}
  #allocation0 [shape = 'u32[]', space=smem, size = 0x4, offset = 0x4, fixed_abs, tag = 'smem constant byte address 0x4 - core index']
  #allocation1 [shape = 'u32[72,128]{1,0:T(1,128)}', space=vmem, size = 0x9000, scoped, tag = 'internal scratch']
  %s0 = inlined_call_operand.vmem [shape: f32[128,128], index: 0, kind: input, shape index: {}]
  %s1 = inlined_call_operand.vmem [shape: f32[1,128], index: 1, kind: input, shape index: {}]
  %s2 = inlined_call_operand.vmem [shape: f32[1,128], index: 2, kind: input, shape index: {}]
  %s3 = inlined_call_operand.vmem [shape: f32[128,128], index: 3, kind: input, shape index: {}]
  %s4 = inlined_call_operand.vmem [shape: f32[1,128], index: 4, kind: input, shape index: {}]
  %s5 = inlined_call_operand.vmem [shape: f32[1,128], index: 5, kind: input, shape index: {}]
  %s6 = inlined_call_operand.hbm [shape: f32[128,128], index: 6, kind: output, shape index: {}]
  %s7 = sld [smem:[#allocation0]]
  $region34: #{bottleneck_pallas.7} parent=0
    _
  %s9 = ssub.s32 1, %s7
  %s10 = scalar_select 0, %s9, %s7
  $region1: #{bottleneck_pallas.7} parent=0
    #allocation2 [shape = 'u8[65536]{0}', space=vmem, size = 0x10000, scoped, tag = 'output window, operand 0, single buffered']
    #allocation3 [shape = 's32[1]{0}', space=sflag, size = 0x4, scoped, tag = 'scoped memory for bottleneck_pallas.7']
    %11 = vsyncpa [#allocation3], 0
    // Predicated region
    $region2: #{bottleneck_pallas.7} parent=1 // pred_check
      _
    $region3: #{bottleneck_pallas.7} parent=1 // pred_check_branch
      %13 = sbr.rel (0) target = $region5
    $region4: #{bottleneck_pallas.7} parent=1 // pred_region
      _
    $region5: #{bottleneck_pallas.7} parent=1 // pred_fallthru
      _
    // Predicated region
    $region6: #{bottleneck_pallas.7} parent=1 // pred_check
      _
    $region7: #{bottleneck_pallas.7} parent=1 // pred_check_branch
      %15 = sbr.rel (0) target = $region9
    $region8: #{bottleneck_pallas.7} parent=1 // pred_region
      _
    $region9: #{bottleneck_pallas.7} parent=1 // pred_fallthru
      _
    // Predicated region
    $region10: #{bottleneck_pallas.7} parent=1 // pred_check
      _
    $region11: #{bottleneck_pallas.7} parent=1 // pred_check_branch
      %17 = sbr.rel (0) target = $region13
    $region12: #{bottleneck_pallas.7} parent=1 // pred_region
      _
    $region13: #{bottleneck_pallas.7} parent=1 // pred_fallthru
      _
    // Predicated region
    $region14: #{bottleneck_pallas.7} parent=1 // pred_check
      _
    $region15: #{bottleneck_pallas.7} parent=1 // pred_check_branch
      %19 = sbr.rel (0) target = $region17
    $region16: #{bottleneck_pallas.7} parent=1 // pred_region
      _
    $region17: #{bottleneck_pallas.7} parent=1 // pred_fallthru
      _
    // Predicated region
    $region18: #{bottleneck_pallas.7} parent=1 // pred_check
      _
    $region19: #{bottleneck_pallas.7} parent=1 // pred_check_branch
      %21 = sbr.rel (0) target = $region21
    $region20: #{bottleneck_pallas.7} parent=1 // pred_region
      _
    $region21: #{bottleneck_pallas.7} parent=1 // pred_fallthru
      _
    // Predicated region
    $region22: #{bottleneck_pallas.7} parent=1 // pred_check
      _
    $region23: #{bottleneck_pallas.7} parent=1 // pred_check_branch
      %23 = sbr.rel (0) target = $region25
    $region24: #{bottleneck_pallas.7} parent=1 // pred_region
      _
    $region25: #{bottleneck_pallas.7} parent=1 // pred_fallthru
      _
    %v24 = vld [vmem:[%s0] sm:$0xff]
    %v25 = vld [vmem:[%s0 + $0x8] sm:$0xff]
    %v26 = vld [vmem:[%s0 + $0x10] sm:$0xff]
    %v27 = vld [vmem:[%s0 + $0x18] sm:$0xff]
    %v28 = vld [vmem:[%s0 + $0x20] sm:$0xff]
    %v29 = vld [vmem:[%s0 + $0x28] sm:$0xff]
    %v30 = vld [vmem:[%s0 + $0x30] sm:$0xff]
    %v31 = vld [vmem:[%s0 + $0x38] sm:$0xff]
    %v32 = vld [vmem:[%s0 + $0x40] sm:$0xff]
    %v33 = vld [vmem:[%s0 + $0x48] sm:$0xff]
    %v34 = vld [vmem:[%s0 + $0x50] sm:$0xff]
    %v35 = vld [vmem:[%s0 + $0x58] sm:$0xff]
    %v36 = vld [vmem:[%s0 + $0x60] sm:$0xff]
    %v37 = vld [vmem:[%s0 + $0x68] sm:$0xff]
    %v38 = vld [vmem:[%s0 + $0x70] sm:$0xff]
    %v39 = vld [vmem:[%s0 + $0x78] sm:$0xff]
    %v40 = vld [vmem:[%s1] sm:$0x1]
    %v42 = vperm.slane %v40, 0
    %v44 = vmul.f32 %v24, %v42
    %v45 = vmul.f32 %v25, %v42
    %v46 = vmul.f32 %v26, %v42
    %v47 = vmul.f32 %v27, %v42
    %v48 = vmul.f32 %v28, %v42
    %v49 = vmul.f32 %v29, %v42
    %v50 = vmul.f32 %v30, %v42
    %v51 = vmul.f32 %v31, %v42
    %v52 = vmul.f32 %v32, %v42
    %v53 = vmul.f32 %v33, %v42
    %v54 = vmul.f32 %v34, %v42
    %v55 = vmul.f32 %v35, %v42
    %v56 = vmul.f32 %v36, %v42
    %v57 = vmul.f32 %v37, %v42
    %v58 = vmul.f32 %v38, %v42
    %v59 = vmul.f32 %v39, %v42
    %v60 = vld [vmem:[%s2] sm:$0x1]
    %v62 = vperm.slane %v60, 0
    %v64 = vadd.f32 %v44, %v62
    %v65 = vadd.f32 %v45, %v62
    %v66 = vadd.f32 %v46, %v62
    %v67 = vadd.f32 %v47, %v62
    %v68 = vadd.f32 %v48, %v62
    %v69 = vadd.f32 %v49, %v62
    %v70 = vadd.f32 %v50, %v62
    %v71 = vadd.f32 %v51, %v62
    %v72 = vadd.f32 %v52, %v62
    %v73 = vadd.f32 %v53, %v62
    %v74 = vadd.f32 %v54, %v62
    %v75 = vadd.f32 %v55, %v62
    %v76 = vadd.f32 %v56, %v62
    %v77 = vadd.f32 %v57, %v62
    %v78 = vadd.f32 %v58, %v62
    %v79 = vadd.f32 %v59, %v62
    %v80 = vld [vmem:[%s3] sm:$0xff]
    %v81 = vld [vmem:[%s3 + $0x8] sm:$0xff]
    %v82 = vld [vmem:[%s3 + $0x10] sm:$0xff]
    %v83 = vld [vmem:[%s3 + $0x18] sm:$0xff]
    %v84 = vld [vmem:[%s3 + $0x20] sm:$0xff]
    %v85 = vld [vmem:[%s3 + $0x28] sm:$0xff]
    %v86 = vld [vmem:[%s3 + $0x30] sm:$0xff]
    %v87 = vld [vmem:[%s3 + $0x38] sm:$0xff]
    %v88 = vld [vmem:[%s3 + $0x40] sm:$0xff]
    %v89 = vld [vmem:[%s3 + $0x48] sm:$0xff]
    %v90 = vld [vmem:[%s3 + $0x50] sm:$0xff]
    %v91 = vld [vmem:[%s3 + $0x58] sm:$0xff]
    %v92 = vld [vmem:[%s3 + $0x60] sm:$0xff]
    %v93 = vld [vmem:[%s3 + $0x68] sm:$0xff]
    %v94 = vld [vmem:[%s3 + $0x70] sm:$0xff]
    %v95 = vld [vmem:[%s3 + $0x78] sm:$0xff]
    %v96 = vld [vmem:[%s4] sm:$0x1]
    %v98 = vperm.slane %v96, 0
    %v100 = vmul.f32 %v80, %v98
    %v101 = vmul.f32 %v81, %v98
    %v102 = vmul.f32 %v82, %v98
    %v103 = vmul.f32 %v83, %v98
    %v104 = vmul.f32 %v84, %v98
    %v105 = vmul.f32 %v85, %v98
    %v106 = vmul.f32 %v86, %v98
    %v107 = vmul.f32 %v87, %v98
    %v108 = vmul.f32 %v88, %v98
    %v109 = vmul.f32 %v89, %v98
    %v110 = vmul.f32 %v90, %v98
    %v111 = vmul.f32 %v91, %v98
    %v112 = vmul.f32 %v92, %v98
    %v113 = vmul.f32 %v93, %v98
    %v114 = vmul.f32 %v94, %v98
    %v115 = vmul.f32 %v95, %v98
    %v116 = vld [vmem:[%s5] sm:$0x1]
    %v118 = vperm.slane %v116, 0
    %v120 = vadd.f32 %v100, %v118
    %v121 = vadd.f32 %v101, %v118
    %v122 = vadd.f32 %v102, %v118
    %v123 = vadd.f32 %v103, %v118
    %v124 = vadd.f32 %v104, %v118
    %v125 = vadd.f32 %v105, %v118
    %v126 = vadd.f32 %v106, %v118
    %v127 = vadd.f32 %v107, %v118
    %v128 = vadd.f32 %v108, %v118
    %v129 = vadd.f32 %v109, %v118
    %v130 = vadd.f32 %v110, %v118
    %v131 = vadd.f32 %v111, %v118
    %v132 = vadd.f32 %v112, %v118
    %v133 = vadd.f32 %v113, %v118
    %v134 = vadd.f32 %v114, %v118
    %v135 = vadd.f32 %v115, %v118
    %v136 = vadd.f32 %v64, %v120
    %v137 = vadd.f32 %v65, %v121
    %v138 = vadd.f32 %v66, %v122
    %v139 = vadd.f32 %v67, %v123
    %v140 = vadd.f32 %v68, %v124
    %v141 = vadd.f32 %v69, %v125
    %v142 = vadd.f32 %v70, %v126
    %v143 = vadd.f32 %v71, %v127
    %v144 = vadd.f32 %v72, %v128
    %v145 = vadd.f32 %v73, %v129
    %v146 = vadd.f32 %v74, %v130
    %v147 = vadd.f32 %v75, %v131
    %v148 = vadd.f32 %v76, %v132
    %v149 = vadd.f32 %v77, %v133
    %v150 = vadd.f32 %v78, %v134
    %v151 = vadd.f32 %v79, %v135
    %v152 = vmax.f32 %v136, 0.0
    %v153 = vmax.f32 %v137, 0.0
    %v154 = vmax.f32 %v138, 0.0
    %v155 = vmax.f32 %v139, 0.0
    %v156 = vmax.f32 %v140, 0.0
    %v157 = vmax.f32 %v141, 0.0
    %v158 = vmax.f32 %v142, 0.0
    %v159 = vmax.f32 %v143, 0.0
    %v160 = vmax.f32 %v144, 0.0
    %v161 = vmax.f32 %v145, 0.0
    %v162 = vmax.f32 %v146, 0.0
    %v163 = vmax.f32 %v147, 0.0
    %v164 = vmax.f32 %v148, 0.0
    %v165 = vmax.f32 %v149, 0.0
    %v166 = vmax.f32 %v150, 0.0
    %v167 = vmax.f32 %v151, 0.0
    %168 = vst [vmem:[#allocation2] sm:$0xff] %v152
    %169 = vst [vmem:[#allocation2 + $0x8] sm:$0xff] %v153
    %170 = vst [vmem:[#allocation2 + $0x10] sm:$0xff] %v154
    %171 = vst [vmem:[#allocation2 + $0x18] sm:$0xff] %v155
    %172 = vst [vmem:[#allocation2 + $0x20] sm:$0xff] %v156
    %173 = vst [vmem:[#allocation2 + $0x28] sm:$0xff] %v157
    %174 = vst [vmem:[#allocation2 + $0x30] sm:$0xff] %v158
    %175 = vst [vmem:[#allocation2 + $0x38] sm:$0xff] %v159
    %176 = vst [vmem:[#allocation2 + $0x40] sm:$0xff] %v160
    %177 = vst [vmem:[#allocation2 + $0x48] sm:$0xff] %v161
    %178 = vst [vmem:[#allocation2 + $0x50] sm:$0xff] %v162
    %179 = vst [vmem:[#allocation2 + $0x58] sm:$0xff] %v163
    %180 = vst [vmem:[#allocation2 + $0x60] sm:$0xff] %v164
    %181 = vst [vmem:[#allocation2 + $0x68] sm:$0xff] %v165
    %182 = vst [vmem:[#allocation2 + $0x70] sm:$0xff] %v166
    %183 = vst [vmem:[#allocation2 + $0x78] sm:$0xff] %v167
    // Predicated region
    $region26: #{bottleneck_pallas.7} parent=1 // pred_check
      _
    $region27: #{bottleneck_pallas.7} parent=1 // pred_check_branch
      %185 = sbr.rel (0) target = $region29
    $region28: #{bottleneck_pallas.7} parent=1 // pred_region
      %187 = vsyncadd [#allocation3], 0
      %s188 = sshll.u32 [#allocation2], 4
      %s189 = int_to_ptr.vmem [resolvable:$true] %s188
      %s190 = sshll.u32 %s6, 4
      %s191 = int_to_ptr.hbm [resolvable:$true] %s190
      %196 = dma.vmem_to_hbm [thread:$0]  %s189, 2048, %s191, [#allocation3], 128, 128, 8
    $region29: #{bottleneck_pallas.7} parent=1 // pred_fallthru
      _
    // Predicated region
    $region30: #{bottleneck_pallas.7} parent=1 // pred_check
      _
    $region31: #{bottleneck_pallas.7} parent=1 // pred_check_branch
      %198 = sbr.rel (0) target = $region33
    $region32: #{bottleneck_pallas.7} parent=1 // pred_region
      %200 = dma.done [#allocation3], 2048
    $region33: #{bottleneck_pallas.7} parent=1 // pred_fallthru
      _
    %201 = vsyncpa [#allocation3], 1

// kernel: bottleneck_pallas.6
$region0: #{bottleneck_pallas.6}
  #allocation0 [shape = 'u32[]', space=smem, size = 0x4, offset = 0x4, fixed_abs, tag = 'smem constant byte address 0x4 - core index']
  #allocation1 [shape = 'u32[72,128]{1,0:T(1,128)}', space=vmem, size = 0x9000, scoped, tag = 'internal scratch']
  %s0 = inlined_call_operand.vmem [shape: f32[2,16,16,128], index: 0, kind: input, shape index: {}]
  %s1 = inlined_call_operand.vmem [shape: f32[1,128], index: 1, kind: input, shape index: {}]
  %s2 = inlined_call_operand.vmem [shape: f32[1,128], index: 2, kind: input, shape index: {}]
  %s3 = inlined_call_operand.vmem [shape: bf16[128,128], index: 3, kind: input, shape index: {}]
  %s4 = inlined_call_operand.vmem [shape: f32[2,16,16,128], index: 4, kind: input, shape index: {}]
  %s5 = inlined_call_operand.vmem [shape: bf16[128,128], index: 5, kind: input, shape index: {}]
  %s6 = inlined_call_operand.vmem [shape: f32[2,8,8,128], index: 6, kind: output, shape index: {0}]
  %s7 = inlined_call_operand.vmem [shape: f32[1,128], index: 7, kind: output, shape index: {1}]
  %s8 = inlined_call_operand.vmem [shape: f32[1,128], index: 8, kind: output, shape index: {2}]
  %s9 = inlined_call_operand.vmem [shape: f32[2,8,8,128], index: 9, kind: output, shape index: {3}]
  %s10 = inlined_call_operand.vmem [shape: f32[1,128], index: 10, kind: output, shape index: {4}]
  %s11 = inlined_call_operand.vmem [shape: f32[1,128], index: 11, kind: output, shape index: {5}]
  %12 = xla_tuple %s6, %s7, %s8, %s9, %s10, %s11
  %s13 = sld [smem:[#allocation0]]
  $region105: #{bottleneck_pallas.6} parent=0
    _
  %s15 = ssub.s32 1, %s13
  %s16 = scalar_select 0, %s15, %s13
  loop: start=0, step=1, limit=4
  $region2: #{bottleneck_pallas.6} parent=0 // loop_pre_header
    _
  $region3: #{bottleneck_pallas.6} parent=0 // loop_header
    %s18 = sphi 0, %s22
    %p19 = scmp.ge.s32.totalorder %s18, 4
    %s28 = sphi 0, %s30
    %s31 = sphi 0, %s28
    %s32 = sphi 0, %s31
    %s48 = sphi 0, %s32
    %s52 = sphi 0, %s52
    %s54 = sphi 0, %s52
    %s55 = sphi 0, %s54
    %s69 = sphi 0, %s55
    %s73 = sphi 0, %s73
    %s75 = sphi 0, %s73
    %s76 = sphi 0, %s75
    %s90 = sphi 0, %s76
    %s94 = sphi 0, %s94
    %s96 = sphi 0, %s94
    %s97 = sphi 0, %s96
    %s111 = sphi 0, %s97
    %s117 = sphi 0, %s119
    %s120 = sphi 0, %s117
    %s121 = sphi 0, %s120
    %s137 = sphi 0, %s121
    %s141 = sphi 0, %s141
    %s143 = sphi 0, %s141
    %s144 = sphi 0, %s143
    %s158 = sphi 0, %s144
    %s164 = sphi 0, %s166
    %s167 = sphi 0, %s164
    %s168 = sphi 0, %s167
    %s184 = sphi 0, %s168
    %s188 = sphi 0, %s188
    %s190 = sphi 0, %s188
    %s191 = sphi 0, %s190
    %s205 = sphi 0, %s191
    %s209 = sphi 0, %s209
    %s211 = sphi 0, %s209
    %s212 = sphi 0, %s211
    %s226 = sphi 0, %s212
    %s232 = sphi 0, %s234
    %s235 = sphi 0, %s232
    %s236 = sphi 0, %s235
    %s252 = sphi 0, %s236
    %s256 = sphi 0, %s256
    %s258 = sphi 0, %s256
    %s259 = sphi 0, %s258
    %s273 = sphi 0, %s259
    %s277 = sphi 0, %s277
    %s279 = sphi 0, %s277
    %s280 = sphi 0, %s279
    %s294 = sphi 0, %s280
  $region4: #{bottleneck_pallas.6} parent=0 // loop_header_branch
    %21 = sbr.rel (%p19) target = $region8
  $region5: #{bottleneck_pallas.6} parent=0 // loop_body
    %s23 = ssub.s32 %s18, 1
    %s24 = ssub.s32 %s18, 2
    %s25 = sadd.s32 %s18, 1
    %s26 = ssub.s32 %s18, %s25
    %p27 = scmp.eq.s32.totalorder %s26, 0
    %s29 = sadd.s32 %s28, 1
    %s30 = scalar_select %p27, %s28, %s29
    %p33 = pneg %p27
    %p34 = scmp.eq.s32.totalorder %s18, 1
    %p35 = por %p33, %p34
    %p36 = scmp.ne.s32.totalorder %s28, %s31
    %p37 = scmp.eq.s32.totalorder %s18, 0
    %p38 = por %p36, %p37
    %p39 = scmp.ne.s32.totalorder %s28, %s31
    %p40 = scmp.eq.s32.totalorder %s23, 1
    %p41 = por %p39, %p40
    %p42 = scmp.ne.s32.totalorder %s31, %s32
    %p43 = scmp.eq.s32.totalorder %s23, 0
    %p44 = por %p42, %p43
    %p45 = scmp.ne.s32.totalorder %s31, %s32
    %p46 = scmp.eq.s32.totalorder %s24, 1
    %p47 = por %p45, %p46
    %p49 = scmp.ne.s32.totalorder %s32, %s48
    %p50 = scmp.eq.s32.totalorder %s24, 0
    %p51 = por %p49, %p50
    %s53 = sadd.s32 %s52, 1
    %p56 = scmp.eq.s32.totalorder %s18, 1
    %p57 = scmp.ne.s32.totalorder %s52, %s54
    %p58 = scmp.eq.s32.totalorder %s18, 0
    %p59 = por %p57, %p58
    %p60 = scmp.ne.s32.totalorder %s52, %s54
    %p61 = scmp.eq.s32.totalorder %s23, 1
    %p62 = por %p60, %p61
    %p63 = scmp.ne.s32.totalorder %s54, %s55
    %p64 = scmp.eq.s32.totalorder %s23, 0
    %p65 = por %p63, %p64
    %p66 = scmp.ne.s32.totalorder %s54, %s55
    %p67 = scmp.eq.s32.totalorder %s24, 1
    %p68 = por %p66, %p67
    %p70 = scmp.ne.s32.totalorder %s55, %s69
    %p71 = scmp.eq.s32.totalorder %s24, 0
    %p72 = por %p70, %p71
    %s74 = sadd.s32 %s73, 1
    %p77 = scmp.eq.s32.totalorder %s18, 1
    %p78 = scmp.ne.s32.totalorder %s73, %s75
    %p79 = scmp.eq.s32.totalorder %s18, 0
    %p80 = por %p78, %p79
    %p81 = scmp.ne.s32.totalorder %s73, %s75
    %p82 = scmp.eq.s32.totalorder %s23, 1
    %p83 = por %p81, %p82
    %p84 = scmp.ne.s32.totalorder %s75, %s76
    %p85 = scmp.eq.s32.totalorder %s23, 0
    %p86 = por %p84, %p85
    %p87 = scmp.ne.s32.totalorder %s75, %s76
    %p88 = scmp.eq.s32.totalorder %s24, 1
    %p89 = por %p87, %p88
    %p91 = scmp.ne.s32.totalorder %s76, %s90
    %p92 = scmp.eq.s32.totalorder %s24, 0
    %p93 = por %p91, %p92
    %s95 = sadd.s32 %s94, 1
    %p98 = scmp.eq.s32.totalorder %s18, 1
    %p99 = scmp.ne.s32.totalorder %s94, %s96
    %p100 = scmp.eq.s32.totalorder %s18, 0
    %p101 = por %p99, %p100
    %p102 = scmp.ne.s32.totalorder %s94, %s96
    %p103 = scmp.eq.s32.totalorder %s23, 1
    %p104 = por %p102, %p103
    %p105 = scmp.ne.s32.totalorder %s96, %s97
    %p106 = scmp.eq.s32.totalorder %s23, 0
    %p107 = por %p105, %p106
    %p108 = scmp.ne.s32.totalorder %s96, %s97
    %p109 = scmp.eq.s32.totalorder %s24, 1
    %p110 = por %p108, %p109
    %p112 = scmp.ne.s32.totalorder %s97, %s111
    %p113 = scmp.eq.s32.totalorder %s24, 0
    %p114 = por %p112, %p113
    %s115 = ssub.s32 %s18, %s25
    %p116 = scmp.eq.s32.totalorder %s115, 0
    %s118 = sadd.s32 %s117, 1
    %s119 = scalar_select %p116, %s117, %s118
    %p122 = pneg %p116
    %p123 = scmp.eq.s32.totalorder %s18, 1
    %p124 = por %p122, %p123
    %p125 = scmp.ne.s32.totalorder %s117, %s120
    %p126 = scmp.eq.s32.totalorder %s18, 0
    %p127 = por %p125, %p126
    %p128 = scmp.ne.s32.totalorder %s117, %s120
    %p129 = scmp.eq.s32.totalorder %s23, 1
    %p130 = por %p128, %p129
    %p131 = scmp.ne.s32.totalorder %s120, %s121
    %p132 = scmp.eq.s32.totalorder %s23, 0
    %p133 = por %p131, %p132
    %p134 = scmp.ne.s32.totalorder %s120, %s121
    %p135 = scmp.eq.s32.totalorder %s24, 1
    %p136 = por %p134, %p135
    %p138 = scmp.ne.s32.totalorder %s121, %s137
    %p139 = scmp.eq.s32.totalorder %s24, 0
    %p140 = por %p138, %p139
    %s142 = sadd.s32 %s141, 1
    %p145 = scmp.eq.s32.totalorder %s18, 1
    %p146 = scmp.ne.s32.totalorder %s141, %s143
    %p147 = scmp.eq.s32.totalorder %s18, 0
    %p148 = por %p146, %p147
    %p149 = scmp.ne.s32.totalorder %s141, %s143
    %p150 = scmp.eq.s32.totalorder %s23, 1
    %p151 = por %p149, %p150
    %p152 = scmp.ne.s32.totalorder %s143, %s144
    %p153 = scmp.eq.s32.totalorder %s23, 0
    %p154 = por %p152, %p153
    %p155 = scmp.ne.s32.totalorder %s143, %s144
    %p156 = scmp.eq.s32.totalorder %s24, 1
    %p157 = por %p155, %p156
    %p159 = scmp.ne.s32.totalorder %s144, %s158
    %p160 = scmp.eq.s32.totalorder %s24, 0
    %p161 = por %p159, %p160
    %s162 = ssub.s32 %s18, %s25
    %p163 = scmp.eq.s32.totalorder %s162, 0
    %s165 = sadd.s32 %s164, 1
    %s166 = scalar_select %p163, %s164, %s165
    %p169 = pneg %p163
    %p170 = scmp.eq.s32.totalorder %s18, 1
    %p171 = por %p169, %p170
    %p172 = scmp.ne.s32.totalorder %s164, %s167
    %p173 = scmp.eq.s32.totalorder %s18, 0
    %p174 = por %p172, %p173
    %p175 = scmp.ne.s32.totalorder %s164, %s167
    %p176 = scmp.eq.s32.totalorder %s23, 1
    %p177 = por %p175, %p176
    %p178 = scmp.ne.s32.totalorder %s167, %s168
    %p179 = scmp.eq.s32.totalorder %s23, 0
    %p180 = por %p178, %p179
    %p181 = scmp.ne.s32.totalorder %s167, %s168
    %p182 = scmp.eq.s32.totalorder %s24, 1
    %p183 = por %p181, %p182
    %p185 = scmp.ne.s32.totalorder %s168, %s184
    %p186 = scmp.eq.s32.totalorder %s24, 0
    %p187 = por %p185, %p186
    %s189 = sadd.s32 %s188, 1
    %p192 = scmp.eq.s32.totalorder %s18, 1
    %p193 = scmp.ne.s32.totalorder %s188, %s190
    %p194 = scmp.eq.s32.totalorder %s18, 0
    %p195 = por %p193, %p194
    %p196 = scmp.ne.s32.totalorder %s188, %s190
    %p197 = scmp.eq.s32.totalorder %s23, 1
    %p198 = por %p196, %p197
    %p199 = scmp.ne.s32.totalorder %s190, %s191
    %p200 = scmp.eq.s32.totalorder %s23, 0
    %p201 = por %p199, %p200
    %p202 = scmp.ne.s32.totalorder %s190, %s191
    %p203 = scmp.eq.s32.totalorder %s24, 1
    %p204 = por %p202, %p203
    %p206 = scmp.ne.s32.totalorder %s191, %s205
    %p207 = scmp.eq.s32.totalorder %s24, 0
    %p208 = por %p206, %p207
    %s210 = sadd.s32 %s209, 1
    %p213 = scmp.eq.s32.totalorder %s18, 1
    %p214 = scmp.ne.s32.totalorder %s209, %s211
    %p215 = scmp.eq.s32.totalorder %s18, 0
    %p216 = por %p214, %p215
    %p217 = scmp.ne.s32.totalorder %s209, %s211
    %p218 = scmp.eq.s32.totalorder %s23, 1
    %p219 = por %p217, %p218
    %p220 = scmp.ne.s32.totalorder %s211, %s212
    %p221 = scmp.eq.s32.totalorder %s23, 0
    %p222 = por %p220, %p221
    %p223 = scmp.ne.s32.totalorder %s211, %s212
    %p224 = scmp.eq.s32.totalorder %s24, 1
    %p225 = por %p223, %p224
    %p227 = scmp.ne.s32.totalorder %s212, %s226
    %p228 = scmp.eq.s32.totalorder %s24, 0
    %p229 = por %p227, %p228
    %s230 = ssub.s32 %s18, %s25
    %p231 = scmp.eq.s32.totalorder %s230, 0
    %s233 = sadd.s32 %s232, 1
    %s234 = scalar_select %p231, %s232, %s233
    %p237 = pneg %p231
    %p238 = scmp.eq.s32.totalorder %s18, 1
    %p239 = por %p237, %p238
    %p240 = scmp.ne.s32.totalorder %s232, %s235
    %p241 = scmp.eq.s32.totalorder %s18, 0
    %p242 = por %p240, %p241
    %p243 = scmp.ne.s32.totalorder %s232, %s235
    %p244 = scmp.eq.s32.totalorder %s23, 1
    %p245 = por %p243, %p244
    %p246 = scmp.ne.s32.totalorder %s235, %s236
    %p247 = scmp.eq.s32.totalorder %s23, 0
    %p248 = por %p246, %p247
    %p249 = scmp.ne.s32.totalorder %s235, %s236
    %p250 = scmp.eq.s32.totalorder %s24, 1
    %p251 = por %p249, %p250
    %p253 = scmp.ne.s32.totalorder %s236, %s252
    %p254 = scmp.eq.s32.totalorder %s24, 0
    %p255 = por %p253, %p254
    %s257 = sadd.s32 %s256, 1
    %p260 = scmp.eq.s32.totalorder %s18, 1
    %p261 = scmp.ne.s32.totalorder %s256, %s258
    %p262 = scmp.eq.s32.totalorder %s18, 0
    %p263 = por %p261, %p262
    %p264 = scmp.ne.s32.totalorder %s256, %s258
    %p265 = scmp.eq.s32.totalorder %s23, 1
    %p266 = por %p264, %p265
    %p267 = scmp.ne.s32.totalorder %s258, %s259
    %p268 = scmp.eq.s32.totalorder %s23, 0
    %p269 = por %p267, %p268
    %p270 = scmp.ne.s32.totalorder %s258, %s259
    %p271 = scmp.eq.s32.totalorder %s24, 1
    %p272 = por %p270, %p271
    %p274 = scmp.ne.s32.totalorder %s259, %s273
    %p275 = scmp.eq.s32.totalorder %s24, 0
    %p276 = por %p274, %p275
    %s278 = sadd.s32 %s277, 1
    %p281 = scmp.eq.s32.totalorder %s18, 1
    %p282 = scmp.ne.s32.totalorder %s277, %s279
    %p283 = scmp.eq.s32.totalorder %s18, 0
    %p284 = por %p282, %p283
    %p285 = scmp.ne.s32.totalorder %s277, %s279
    %p286 = scmp.eq.s32.totalorder %s23, 1
    %p287 = por %p285, %p286
    %p288 = scmp.ne.s32.totalorder %s279, %s280
    %p289 = scmp.eq.s32.totalorder %s23, 0
    %p290 = por %p288, %p289
    %p291 = scmp.ne.s32.totalorder %s279, %s280
    %p292 = scmp.eq.s32.totalorder %s24, 1
    %p293 = por %p291, %p292
    %p295 = scmp.ne.s32.totalorder %s280, %s294
    %p296 = scmp.eq.s32.totalorder %s24, 0
    %p297 = por %p295, %p296
    %p298 = scmp.le.s32.totalorder 1, %s18
    %p299 = scmp.lt.s32.totalorder %s18, 3
    %p300 = pnand %p298, %p299
    %p301 = pneg %p300
    // Predicated region
    $region9: #{bottleneck_pallas.6} parent=5 // pred_check
      _
    $region10: #{bottleneck_pallas.6} parent=5 // pred_check_branch
      %303 = sbr.rel (%p300) target = $region12
    $region11: #{bottleneck_pallas.6} parent=5 // pred_region
      %s304 = ssub.s32 %s18, 1
      // Predicated region
      $region13: #{bottleneck_pallas.6} parent=11 // pred_check
        %p305 = pneg %p65
      $region14: #{bottleneck_pallas.6} parent=11 // pred_check_branch
        %307 = sbr.rel (%p305) target = $region16
      $region15: #{bottleneck_pallas.6} parent=11 // pred_region
        _
      $region16: #{bottleneck_pallas.6} parent=11 // pred_fallthru
        _
      // Predicated region
      $region17: #{bottleneck_pallas.6} parent=11 // pred_check
        %p308 = pneg %p86
      $region18: #{bottleneck_pallas.6} parent=11 // pred_check_branch
        %310 = sbr.rel (%p308) target = $region20
      $region19: #{bottleneck_pallas.6} parent=11 // pred_region
        _
      $region20: #{bottleneck_pallas.6} parent=11 // pred_fallthru
        _
      // Predicated region
      $region21: #{bottleneck_pallas.6} parent=11 // pred_check
        %p311 = pneg %p107
      $region22: #{bottleneck_pallas.6} parent=11 // pred_check_branch
        %313 = sbr.rel (%p311) target = $region24
      $region23: #{bottleneck_pallas.6} parent=11 // pred_region
        _
      $region24: #{bottleneck_pallas.6} parent=11 // pred_fallthru
        _
      // Predicated region
      $region25: #{bottleneck_pallas.6} parent=11 // pred_check
        %p314 = pneg %p154
      $region26: #{bottleneck_pallas.6} parent=11 // pred_check_branch
        %316 = sbr.rel (%p314) target = $region28
      $region27: #{bottleneck_pallas.6} parent=11 // pred_region
        _
      $region28: #{bottleneck_pallas.6} parent=11 // pred_fallthru
        _
    $region12: #{bottleneck_pallas.6} parent=5 // pred_fallthru
      _
    %p317 = scmp.lt.s32.totalorder %s18, 2
    // Predicated region
    $region29: #{bottleneck_pallas.6} parent=5 // pred_check
      %p318 = pneg %p317
    $region30: #{bottleneck_pallas.6} parent=5 // pred_check_branch
      %320 = sbr.rel (%p318) target = $region32
    $region31: #{bottleneck_pallas.6} parent=5 // pred_region
      // Predicated region
      $region33: #{bottleneck_pallas.6} parent=31 // pred_check
        %p321 = pneg %p38
      $region34: #{bottleneck_pallas.6} parent=31 // pred_check_branch
        %323 = sbr.rel (%p321) target = $region36
      $region35: #{bottleneck_pallas.6} parent=31 // pred_region
        %p324 = scmp.lt.s32.totalorder %s18, 1
        %s325 = scalar_select %p324, %s18, 1
        %s326 = smul.addr %s325, 32
        %s327 = smul.addr %s326, 8
        %s328 = scalar_lea.vmem %s0, %s327
      $region36: #{bottleneck_pallas.6} parent=31 // pred_fallthru
        _
      // Predicated region
      $region37: #{bottleneck_pallas.6} parent=31 // pred_check
        %p329 = pneg %p127
      $region38: #{bottleneck_pallas.6} parent=31 // pred_check_branch
        %331 = sbr.rel (%p329) target = $region40
      $region39: #{bottleneck_pallas.6} parent=31 // pred_region
        %p332 = scmp.lt.s32.totalorder %s18, 1
        %s333 = scalar_select %p332, %s18, 1
        %s334 = smul.addr %s333, 32
        %s335 = smul.addr %s334, 8
        %s336 = scalar_lea.vmem %s4, %s335
      $region40: #{bottleneck_pallas.6} parent=31 // pred_fallthru
        _
    $region32: #{bottleneck_pallas.6} parent=5 // pred_fallthru
      _
    %p337 = scmp.le.s32.totalorder 1, %s18
    %p338 = scmp.lt.s32.totalorder %s18, 3
    %p339 = pnand %p337, %p338
    %p340 = pneg %p339
    // Predicated region
    $region41: #{bottleneck_pallas.6} parent=5 // pred_check
      _
    $region42: #{bottleneck_pallas.6} parent=5 // pred_check_branch
      %342 = sbr.rel (%p339) target = $region44
    $region43: #{bottleneck_pallas.6} parent=5 // pred_region
      %s343 = ssub.s32 %s18, 1
      %p344 = scmp.lt.s32.totalorder %s23, 1
      %s345 = scalar_select %p344, %s23, 1
      %s346 = smul.addr %s345, 32
      %s347 = smul.addr %s346, 8
      %s348 = scalar_lea.vmem %s0, %s347
      %p349 = pneg %p44
      %p350 = pneg %p41
      %p351 = pneg %p65
      %p352 = pneg %p62
      %p353 = pneg %p86
      %p354 = pneg %p83
      %p355 = pneg %p107
      %p356 = pneg %p104
      %p357 = scmp.lt.s32.totalorder %s23, 1
      %s358 = scalar_select %p357, %s23, 1
      %s359 = smul.addr %s358, 32
      %s360 = smul.addr %s359, 8
      %s361 = scalar_lea.vmem %s4, %s360
      %p362 = pneg %p133
      %p363 = pneg %p130
      %p364 = pneg %p154
      %p365 = pneg %p151
      %p366 = pneg %p180
      %p367 = pneg %p177
      %p368 = scmp.lt.s32.totalorder %s23, 1
      %s369 = scalar_select %p368, %s23, 1
      %s370 = smul.addr %s369, 8
      %s371 = smul.addr %s370, 8
      %s372 = scalar_lea.vmem %s6, %s371
      %p373 = pneg %p201
      %p374 = pneg %p198
      %p375 = pneg %p222
      %p376 = pneg %p219
      %p377 = pneg %p248
      %p378 = pneg %p245
      %p379 = scmp.lt.s32.totalorder %s23, 1
      %s380 = scalar_select %p379, %s23, 1
      %s381 = smul.addr %s380, 8
      %s382 = smul.addr %s381, 8
      %s383 = scalar_lea.vmem %s9, %s382
      %p384 = pneg %p269
      %p385 = pneg %p266
      %p386 = pneg %p290
      %p387 = pneg %p287
      %p388 = scmp.lt.s32.totalorder %s23, 1
      %s389 = scalar_select %p388, %s23, 1
      %s390 = smul.addr %s389, 32
      %s391 = smul.addr %s390, 8
      %s392 = scalar_lea.vmem %s0, %s391
      %p393 = scmp.lt.s32.totalorder %s23, 1
      %s394 = scalar_select %p393, %s23, 1
      %s395 = smul.addr %s394, 32
      %s396 = smul.addr %s395, 8
      %s397 = scalar_lea.vmem %s4, %s396
      %p398 = scmp.lt.s32.totalorder %s23, 1
      %s399 = scalar_select %p398, %s23, 1
      %s400 = smul.addr %s399, 8
      %s401 = smul.addr %s400, 8
      %s402 = scalar_lea.vmem %s6, %s401
      %p403 = scmp.lt.s32.totalorder %s23, 1
      %s404 = scalar_select %p403, %s23, 1
      %s405 = smul.addr %s404, 8
      %s406 = smul.addr %s405, 8
      %s407 = scalar_lea.vmem %s9, %s406
      %v408 = vld [vmem:[%s392] sm:$0xff]
      %v409 = vld [vmem:[%s392 + $0x8] sm:$0xff]
      %v410 = vld [vmem:[%s392 + $0x10] sm:$0xff]
      %v411 = vld [vmem:[%s392 + $0x18] sm:$0xff]
      %v412 = vld [vmem:[%s392 + $0x20] sm:$0xff]
      %v413 = vld [vmem:[%s392 + $0x28] sm:$0xff]
      %v414 = vld [vmem:[%s392 + $0x30] sm:$0xff]
      %v415 = vld [vmem:[%s392 + $0x38] sm:$0xff]
      %v416 = vld [vmem:[%s392 + $0x40] sm:$0xff]
      %v417 = vld [vmem:[%s392 + $0x48] sm:$0xff]
      %v418 = vld [vmem:[%s392 + $0x50] sm:$0xff]
      %v419 = vld [vmem:[%s392 + $0x58] sm:$0xff]
      %v420 = vld [vmem:[%s392 + $0x60] sm:$0xff]
      %v421 = vld [vmem:[%s392 + $0x68] sm:$0xff]
      %v422 = vld [vmem:[%s392 + $0x70] sm:$0xff]
      %v423 = vld [vmem:[%s392 + $0x78] sm:$0xff]
      %v424 = vld [vmem:[%s392 + $0x80] sm:$0xff]
      %v425 = vld [vmem:[%s392 + $0x88] sm:$0xff]
      %v426 = vld [vmem:[%s392 + $0x90] sm:$0xff]
      %v427 = vld [vmem:[%s392 + $0x98] sm:$0xff]
      %v428 = vld [vmem:[%s392 + $0xa0] sm:$0xff]
      %v429 = vld [vmem:[%s392 + $0xa8] sm:$0xff]
      %v430 = vld [vmem:[%s392 + $0xb0] sm:$0xff]
      %v431 = vld [vmem:[%s392 + $0xb8] sm:$0xff]
      %v432 = vld [vmem:[%s392 + $0xc0] sm:$0xff]
      %v433 = vld [vmem:[%s392 + $0xc8] sm:$0xff]
      %v434 = vld [vmem:[%s392 + $0xd0] sm:$0xff]
      %v435 = vld [vmem:[%s392 + $0xd8] sm:$0xff]
      %v436 = vld [vmem:[%s392 + $0xe0] sm:$0xff]
      %v437 = vld [vmem:[%s392 + $0xe8] sm:$0xff]
      %v438 = vld [vmem:[%s392 + $0xf0] sm:$0xff]
      %v439 = vld [vmem:[%s392 + $0xf8] sm:$0xff]
      %v440 = vld [vmem:[%s1] sm:$0x1]
      %v442 = vperm.slane %v440, 0
      %v444 = vmul.f32 %v408, %v442
      %v445 = vmul.f32 %v409, %v442
      %v446 = vmul.f32 %v410, %v442
      %v447 = vmul.f32 %v411, %v442
      %v448 = vmul.f32 %v412, %v442
      %v449 = vmul.f32 %v413, %v442
      %v450 = vmul.f32 %v414, %v442
      %v451 = vmul.f32 %v415, %v442
      %v452 = vmul.f32 %v416, %v442
      %v453 = vmul.f32 %v417, %v442
      %v454 = vmul.f32 %v418, %v442
      %v455 = vmul.f32 %v419, %v442
      %v456 = vmul.f32 %v420, %v442
      %v457 = vmul.f32 %v421, %v442
      %v458 = vmul.f32 %v422, %v442
      %v459 = vmul.f32 %v423, %v442
      %v460 = vmul.f32 %v424, %v442
      %v461 = vmul.f32 %v425, %v442
      %v462 = vmul.f32 %v426, %v442
      %v463 = vmul.f32 %v427, %v442
      %v464 = vmul.f32 %v428, %v442
      %v465 = vmul.f32 %v429, %v442
      %v466 = vmul.f32 %v430, %v442
      %v467 = vmul.f32 %v431, %v442
      %v468 = vmul.f32 %v432, %v442
      %v469 = vmul.f32 %v433, %v442
      %v470 = vmul.f32 %v434, %v442
      %v471 = vmul.f32 %v435, %v442
      %v472 = vmul.f32 %v436, %v442
      %v473 = vmul.f32 %v437, %v442
      %v474 = vmul.f32 %v438, %v442
      %v475 = vmul.f32 %v439, %v442
      %v476 = vld [vmem:[%s2] sm:$0x1]
      %v478 = vperm.slane %v476, 0
      %v480 = vadd.f32 %v444, %v478
      %v481 = vadd.f32 %v445, %v478
      %v482 = vadd.f32 %v446, %v478
      %v483 = vadd.f32 %v447, %v478
      %v484 = vadd.f32 %v448, %v478
      %v485 = vadd.f32 %v449, %v478
      %v486 = vadd.f32 %v450, %v478
      %v487 = vadd.f32 %v451, %v478
      %v488 = vadd.f32 %v452, %v478
      %v489 = vadd.f32 %v453, %v478
      %v490 = vadd.f32 %v454, %v478
      %v491 = vadd.f32 %v455, %v478
      %v492 = vadd.f32 %v456, %v478
      %v493 = vadd.f32 %v457, %v478
      %v494 = vadd.f32 %v458, %v478
      %v495 = vadd.f32 %v459, %v478
      %v496 = vadd.f32 %v460, %v478
      %v497 = vadd.f32 %v461, %v478
      %v498 = vadd.f32 %v462, %v478
      %v499 = vadd.f32 %v463, %v478
      %v500 = vadd.f32 %v464, %v478
      %v501 = vadd.f32 %v465, %v478
      %v502 = vadd.f32 %v466, %v478
      %v503 = vadd.f32 %v467, %v478
      %v504 = vadd.f32 %v468, %v478
      %v505 = vadd.f32 %v469, %v478
      %v506 = vadd.f32 %v470, %v478
      %v507 = vadd.f32 %v471, %v478
      %v508 = vadd.f32 %v472, %v478
      %v509 = vadd.f32 %v473, %v478
      %v510 = vadd.f32 %v474, %v478
      %v511 = vadd.f32 %v475, %v478
      %v512 = vmax.f32 %v480, 0.0
      %v513 = vmax.f32 %v481, 0.0
      %v514 = vmax.f32 %v482, 0.0
      %v515 = vmax.f32 %v483, 0.0
      %v516 = vmax.f32 %v484, 0.0
      %v517 = vmax.f32 %v485, 0.0
      %v518 = vmax.f32 %v486, 0.0
      %v519 = vmax.f32 %v487, 0.0
      %v520 = vmax.f32 %v488, 0.0
      %v521 = vmax.f32 %v489, 0.0
      %v522 = vmax.f32 %v490, 0.0
      %v523 = vmax.f32 %v491, 0.0
      %v524 = vmax.f32 %v492, 0.0
      %v525 = vmax.f32 %v493, 0.0
      %v526 = vmax.f32 %v494, 0.0
      %v527 = vmax.f32 %v495, 0.0
      %v528 = vmax.f32 %v496, 0.0
      %v529 = vmax.f32 %v497, 0.0
      %v530 = vmax.f32 %v498, 0.0
      %v531 = vmax.f32 %v499, 0.0
      %v532 = vmax.f32 %v500, 0.0
      %v533 = vmax.f32 %v501, 0.0
      %v534 = vmax.f32 %v502, 0.0
      %v535 = vmax.f32 %v503, 0.0
      %v536 = vmax.f32 %v504, 0.0
      %v537 = vmax.f32 %v505, 0.0
      %v538 = vmax.f32 %v506, 0.0
      %v539 = vmax.f32 %v507, 0.0
      %v540 = vmax.f32 %v508, 0.0
      %v541 = vmax.f32 %v509, 0.0
      %v542 = vmax.f32 %v510, 0.0
      %v543 = vmax.f32 %v511, 0.0
      %v576 = vrot.slane %v512, 2
      %v577 = vrot.slane %v512, 4
      %v578 = vrot.slane %v512, 6
      %v579 = vrot.slane %v513, 2
      %v580 = vrot.slane %v513, 4
      %v581 = vrot.slane %v513, 6
      %v582 = vrot.slane %v514, 2
      %v583 = vrot.slane %v514, 4
      %v584 = vrot.slane %v514, 6
      %v585 = vrot.slane %v515, 2
      %v586 = vrot.slane %v515, 4
      %v587 = vrot.slane %v515, 6
      %v588 = vrot.slane %v516, 2
      %v589 = vrot.slane %v516, 4
      %v590 = vrot.slane %v516, 6
      %v591 = vrot.slane %v517, 2
      %v592 = vrot.slane %v517, 4
      %v593 = vrot.slane %v517, 6
      %v594 = vrot.slane %v518, 2
      %v595 = vrot.slane %v518, 4
      %v596 = vrot.slane %v518, 6
      %v597 = vrot.slane %v519, 2
      %v598 = vrot.slane %v519, 4
      %v599 = vrot.slane %v519, 6
      %v600 = vrot.slane %v520, 2
      %v601 = vrot.slane %v520, 4
      %v602 = vrot.slane %v520, 6
      %v603 = vrot.slane %v521, 2
      %v604 = vrot.slane %v521, 4
      %v605 = vrot.slane %v521, 6
      %v606 = vrot.slane %v522, 2
      %v607 = vrot.slane %v522, 4
      %v608 = vrot.slane %v522, 6
      %v609 = vrot.slane %v523, 2
      %v610 = vrot.slane %v523, 4
      %v611 = vrot.slane %v523, 6
      %v612 = vrot.slane %v524, 2
      %v613 = vrot.slane %v524, 4
      %v614 = vrot.slane %v524, 6
      %v615 = vrot.slane %v525, 2
      %v616 = vrot.slane %v525, 4
      %v617 = vrot.slane %v525, 6
      %v618 = vrot.slane %v526, 2
      %v619 = vrot.slane %v526, 4
      %v620 = vrot.slane %v526, 6
      %v621 = vrot.slane %v527, 2
      %v622 = vrot.slane %v527, 4
      %v623 = vrot.slane %v527, 6
      %v624 = vrot.slane %v528, 2
      %v625 = vrot.slane %v528, 4
      %v626 = vrot.slane %v528, 6
      %v627 = vrot.slane %v529, 2
      %v628 = vrot.slane %v529, 4
      %v629 = vrot.slane %v529, 6
      %v630 = vrot.slane %v530, 2
      %v631 = vrot.slane %v530, 4
      %v632 = vrot.slane %v530, 6
      %v633 = vrot.slane %v531, 2
      %v634 = vrot.slane %v531, 4
      %v635 = vrot.slane %v531, 6
      %v636 = vrot.slane %v532, 2
      %v637 = vrot.slane %v532, 4
      %v638 = vrot.slane %v532, 6
      %v639 = vrot.slane %v533, 2
      %v640 = vrot.slane %v533, 4
      %v641 = vrot.slane %v533, 6
      %v642 = vrot.slane %v534, 2
      %v643 = vrot.slane %v534, 4
      %v644 = vrot.slane %v534, 6
      %v645 = vrot.slane %v535, 2
      %v646 = vrot.slane %v535, 4
      %v647 = vrot.slane %v535, 6
      %v648 = vrot.slane %v536, 2
      %v649 = vrot.slane %v536, 4
      %v650 = vrot.slane %v536, 6
      %v651 = vrot.slane %v537, 2
      %v652 = vrot.slane %v537, 4
      %v653 = vrot.slane %v537, 6
      %v654 = vrot.slane %v538, 2
      %v655 = vrot.slane %v538, 4
      %v656 = vrot.slane %v538, 6
      %v657 = vrot.slane %v539, 2
      %v658 = vrot.slane %v539, 4
      %v659 = vrot.slane %v539, 6
      %v660 = vrot.slane %v540, 2
      %v661 = vrot.slane %v540, 4
      %v662 = vrot.slane %v540, 6
      %v663 = vrot.slane %v541, 2
      %v664 = vrot.slane %v541, 4
      %v665 = vrot.slane %v541, 6
      %v666 = vrot.slane %v542, 2
      %v667 = vrot.slane %v542, 4
      %v668 = vrot.slane %v542, 6
      %v669 = vrot.slane %v543, 2
      %v670 = vrot.slane %v543, 4
      %v671 = vrot.slane %v543, 6
      %v768 = vrot.slane %v512, 7
      %v769 = vrot.slane %v768, 2
      %v770 = vrot.slane %v576, 7
      %v771 = vrot.slane %v770, 2
      %v772 = vrot.slane %v577, 7
      %v773 = vrot.slane %v772, 2
      %v774 = vrot.slane %v578, 7
      %v775 = vrot.slane %v774, 2
      %v776 = vrot.slane %v513, 7
      %v777 = vrot.slane %v776, 2
      %v778 = vrot.slane %v579, 7
      %v779 = vrot.slane %v778, 2
      %v780 = vrot.slane %v580, 7
      %v781 = vrot.slane %v780, 2
      %v782 = vrot.slane %v581, 7
      %v783 = vrot.slane %v782, 2
      %v784 = vrot.slane %v516, 7
      %v785 = vrot.slane %v784, 2
      %v786 = vrot.slane %v588, 7
      %v787 = vrot.slane %v786, 2
      %v788 = vrot.slane %v589, 7
      %v789 = vrot.slane %v788, 2
      %v790 = vrot.slane %v590, 7
      %v791 = vrot.slane %v790, 2
      %v792 = vrot.slane %v517, 7
      %v793 = vrot.slane %v792, 2
      %v794 = vrot.slane %v591, 7
      %v795 = vrot.slane %v794, 2
      %v796 = vrot.slane %v592, 7
      %v797 = vrot.slane %v796, 2
      %v798 = vrot.slane %v593, 7
      %v799 = vrot.slane %v798, 2
      %v800 = vrot.slane %v520, 7
      %v801 = vrot.slane %v800, 2
      %v802 = vrot.slane %v600, 7
      %v803 = vrot.slane %v802, 2
      %v804 = vrot.slane %v601, 7
      %v805 = vrot.slane %v804, 2
      %v806 = vrot.slane %v602, 7
      %v807 = vrot.slane %v806, 2
      %v808 = vrot.slane %v521, 7
      %v809 = vrot.slane %v808, 2
      %v810 = vrot.slane %v603, 7
      %v811 = vrot.slane %v810, 2
      %v812 = vrot.slane %v604, 7
      %v813 = vrot.slane %v812, 2
      %v814 = vrot.slane %v605, 7
      %v815 = vrot.slane %v814, 2
      %v816 = vrot.slane %v524, 7
      %v817 = vrot.slane %v816, 2
      %v818 = vrot.slane %v612, 7
      %v819 = vrot.slane %v818, 2
      %v820 = vrot.slane %v613, 7
      %v821 = vrot.slane %v820, 2
      %v822 = vrot.slane %v614, 7
      %v823 = vrot.slane %v822, 2
      %v824 = vrot.slane %v525, 7
      %v825 = vrot.slane %v824, 2
      %v826 = vrot.slane %v615, 7
      %v827 = vrot.slane %v826, 2
      %v828 = vrot.slane %v616, 7
      %v829 = vrot.slane %v828, 2
      %v830 = vrot.slane %v617, 7
      %v831 = vrot.slane %v830, 2
      %v832 = vrot.slane %v528, 7
      %v833 = vrot.slane %v832, 2
      %v834 = vrot.slane %v624, 7
      %v835 = vrot.slane %v834, 2
      %v836 = vrot.slane %v625, 7
      %v837 = vrot.slane %v836, 2
      %v838 = vrot.slane %v626, 7
      %v839 = vrot.slane %v838, 2
      %v840 = vrot.slane %v529, 7
      %v841 = vrot.slane %v840, 2
      %v842 = vrot.slane %v627, 7
      %v843 = vrot.slane %v842, 2
      %v844 = vrot.slane %v628, 7
      %v845 = vrot.slane %v844, 2
      %v846 = vrot.slane %v629, 7
      %v847 = vrot.slane %v846, 2
      %v848 = vrot.slane %v532, 7
      %v849 = vrot.slane %v848, 2
      %v850 = vrot.slane %v636, 7
      %v851 = vrot.slane %v850, 2
      %v852 = vrot.slane %v637, 7
      %v853 = vrot.slane %v852, 2
      %v854 = vrot.slane %v638, 7
      %v855 = vrot.slane %v854, 2
      %v856 = vrot.slane %v533, 7
      %v857 = vrot.slane %v856, 2
      %v858 = vrot.slane %v639, 7
      %v859 = vrot.slane %v858, 2
      %v860 = vrot.slane %v640, 7
      %v861 = vrot.slane %v860, 2
      %v862 = vrot.slane %v641, 7
      %v863 = vrot.slane %v862, 2
      %v864 = vrot.slane %v536, 7
      %v865 = vrot.slane %v864, 2
      %v866 = vrot.slane %v648, 7
      %v867 = vrot.slane %v866, 2
      %v868 = vrot.slane %v649, 7
      %v869 = vrot.slane %v868, 2
      %v870 = vrot.slane %v650, 7
      %v871 = vrot.slane %v870, 2
      %v872 = vrot.slane %v537, 7
      %v873 = vrot.slane %v872, 2
      %v874 = vrot.slane %v651, 7
      %v875 = vrot.slane %v874, 2
      %v876 = vrot.slane %v652, 7
      %v877 = vrot.slane %v876, 2
      %v878 = vrot.slane %v653, 7
      %v879 = vrot.slane %v878, 2
      %v880 = vrot.slane %v540, 7
      %v881 = vrot.slane %v880, 2
      %v882 = vrot.slane %v660, 7
      %v883 = vrot.slane %v882, 2
      %v884 = vrot.slane %v661, 7
      %v885 = vrot.slane %v884, 2
      %v886 = vrot.slane %v662, 7
      %v887 = vrot.slane %v886, 2
      %v888 = vrot.slane %v541, 7
      %v889 = vrot.slane %v888, 2
      %v890 = vrot.slane %v663, 7
      %v891 = vrot.slane %v890, 2
      %v892 = vrot.slane %v664, 7
      %v893 = vrot.slane %v892, 2
      %v894 = vrot.slane %v665, 7
      %v895 = vrot.slane %v894, 2
      %v960 = vadd.f32 %v512, %v769
      %v961 = vadd.f32 %v576, %v771
      %v962 = vadd.f32 %v577, %v773
      %v963 = vadd.f32 %v578, %v775
      %v964 = vadd.f32 %v513, %v777
      %v965 = vadd.f32 %v579, %v779
      %v966 = vadd.f32 %v580, %v781
      %v967 = vadd.f32 %v581, %v783
      %v968 = vadd.f32 %v516, %v785
      %v969 = vadd.f32 %v588, %v787
      %v970 = vadd.f32 %v589, %v789
      %v971 = vadd.f32 %v590, %v791
      %v972 = vadd.f32 %v517, %v793
      %v973 = vadd.f32 %v591, %v795
      %v974 = vadd.f32 %v592, %v797
      %v975 = vadd.f32 %v593, %v799
      %v976 = vadd.f32 %v520, %v801
      %v977 = vadd.f32 %v600, %v803
      %v978 = vadd.f32 %v601, %v805
      %v979 = vadd.f32 %v602, %v807
      %v980 = vadd.f32 %v521, %v809
      %v981 = vadd.f32 %v603, %v811
      %v982 = vadd.f32 %v604, %v813
      %v983 = vadd.f32 %v605, %v815
      %v984 = vadd.f32 %v524, %v817
      %v985 = vadd.f32 %v612, %v819
      %v986 = vadd.f32 %v613, %v821
      %v987 = vadd.f32 %v614, %v823
      %v988 = vadd.f32 %v525, %v825
      %v989 = vadd.f32 %v615, %v827
      %v990 = vadd.f32 %v616, %v829
      %v991 = vadd.f32 %v617, %v831
      %v992 = vadd.f32 %v528, %v833
      %v993 = vadd.f32 %v624, %v835
      %v994 = vadd.f32 %v625, %v837
      %v995 = vadd.f32 %v626, %v839
      %v996 = vadd.f32 %v529, %v841
      %v997 = vadd.f32 %v627, %v843
      %v998 = vadd.f32 %v628, %v845
      %v999 = vadd.f32 %v629, %v847
      %v1000 = vadd.f32 %v532, %v849
      %v1001 = vadd.f32 %v636, %v851
      %v1002 = vadd.f32 %v637, %v853
      %v1003 = vadd.f32 %v638, %v855
      %v1004 = vadd.f32 %v533, %v857
      %v1005 = vadd.f32 %v639, %v859
      %v1006 = vadd.f32 %v640, %v861
      %v1007 = vadd.f32 %v641, %v863
      %v1008 = vadd.f32 %v536, %v865
      %v1009 = vadd.f32 %v648, %v867
      %v1010 = vadd.f32 %v649, %v869
      %v1011 = vadd.f32 %v650, %v871
      %v1012 = vadd.f32 %v537, %v873
      %v1013 = vadd.f32 %v651, %v875
      %v1014 = vadd.f32 %v652, %v877
      %v1015 = vadd.f32 %v653, %v879
      %v1016 = vadd.f32 %v540, %v881
      %v1017 = vadd.f32 %v660, %v883
      %v1018 = vadd.f32 %v661, %v885
      %v1019 = vadd.f32 %v662, %v887
      %v1020 = vadd.f32 %v541, %v889
      %v1021 = vadd.f32 %v663, %v891
      %v1022 = vadd.f32 %v664, %v893
      %v1023 = vadd.f32 %v665, %v895
      %v1024 = vadd.f32 %v960, %v514
      %v1025 = vadd.f32 %v961, %v582
      %v1026 = vadd.f32 %v962, %v583
      %v1027 = vadd.f32 %v963, %v584
      %v1028 = vadd.f32 %v964, %v515
      %v1029 = vadd.f32 %v965, %v585
      %v1030 = vadd.f32 %v966, %v586
      %v1031 = vadd.f32 %v967, %v587
      %v1032 = vadd.f32 %v968, %v518
      %v1033 = vadd.f32 %v969, %v594
      %v1034 = vadd.f32 %v970, %v595
      %v1035 = vadd.f32 %v971, %v596
      %v1036 = vadd.f32 %v972, %v519
      %v1037 = vadd.f32 %v973, %v597
      %v1038 = vadd.f32 %v974, %v598
      %v1039 = vadd.f32 %v975, %v599
      %v1040 = vadd.f32 %v976, %v522
      %v1041 = vadd.f32 %v977, %v606
      %v1042 = vadd.f32 %v978, %v607
      %v1043 = vadd.f32 %v979, %v608
      %v1044 = vadd.f32 %v980, %v523
      %v1045 = vadd.f32 %v981, %v609
      %v1046 = vadd.f32 %v982, %v610
      %v1047 = vadd.f32 %v983, %v611
      %v1048 = vadd.f32 %v984, %v526
      %v1049 = vadd.f32 %v985, %v618
      %v1050 = vadd.f32 %v986, %v619
      %v1051 = vadd.f32 %v987, %v620
      %v1052 = vadd.f32 %v988, %v527
      %v1053 = vadd.f32 %v989, %v621
      %v1054 = vadd.f32 %v990, %v622
      %v1055 = vadd.f32 %v991, %v623
      %v1056 = vadd.f32 %v992, %v530
      %v1057 = vadd.f32 %v993, %v630
      %v1058 = vadd.f32 %v994, %v631
      %v1059 = vadd.f32 %v995, %v632
      %v1060 = vadd.f32 %v996, %v531
      %v1061 = vadd.f32 %v997, %v633
      %v1062 = vadd.f32 %v998, %v634
      %v1063 = vadd.f32 %v999, %v635
      %v1064 = vadd.f32 %v1000, %v534
      %v1065 = vadd.f32 %v1001, %v642
      %v1066 = vadd.f32 %v1002, %v643
      %v1067 = vadd.f32 %v1003, %v644
      %v1068 = vadd.f32 %v1004, %v535
      %v1069 = vadd.f32 %v1005, %v645
      %v1070 = vadd.f32 %v1006, %v646
      %v1071 = vadd.f32 %v1007, %v647
      %v1072 = vadd.f32 %v1008, %v538
      %v1073 = vadd.f32 %v1009, %v654
      %v1074 = vadd.f32 %v1010, %v655
      %v1075 = vadd.f32 %v1011, %v656
      %v1076 = vadd.f32 %v1012, %v539
      %v1077 = vadd.f32 %v1013, %v657
      %v1078 = vadd.f32 %v1014, %v658
      %v1079 = vadd.f32 %v1015, %v659
      %v1080 = vadd.f32 %v1016, %v542
      %v1081 = vadd.f32 %v1017, %v666
      %v1082 = vadd.f32 %v1018, %v667
      %v1083 = vadd.f32 %v1019, %v668
      %v1084 = vadd.f32 %v1020, %v543
      %v1085 = vadd.f32 %v1021, %v669
      %v1086 = vadd.f32 %v1022, %v670
      %v1087 = vadd.f32 %v1023, %v671
      %v1088 = vrot.slane %v514, 7
      %v1089 = vrot.slane %v1088, 2
      %v1090 = vrot.slane %v582, 7
      %v1091 = vrot.slane %v1090, 2
      %v1092 = vrot.slane %v583, 7
      %v1093 = vrot.slane %v1092, 2
      %v1094 = vrot.slane %v584, 7
      %v1095 = vrot.slane %v1094, 2
      %v1096 = vrot.slane %v515, 7
      %v1097 = vrot.slane %v1096, 2
      %v1098 = vrot.slane %v585, 7
      %v1099 = vrot.slane %v1098, 2
      %v1100 = vrot.slane %v586, 7
      %v1101 = vrot.slane %v1100, 2
      %v1102 = vrot.slane %v587, 7
      %v1103 = vrot.slane %v1102, 2
      %v1104 = vrot.slane %v518, 7
      %v1105 = vrot.slane %v1104, 2
      %v1106 = vrot.slane %v594, 7
      %v1107 = vrot.slane %v1106, 2
      %v1108 = vrot.slane %v595, 7
      %v1109 = vrot.slane %v1108, 2
      %v1110 = vrot.slane %v596, 7
      %v1111 = vrot.slane %v1110, 2
      %v1112 = vrot.slane %v519, 7
      %v1113 = vrot.slane %v1112, 2
      %v1114 = vrot.slane %v597, 7
      %v1115 = vrot.slane %v1114, 2
      %v1116 = vrot.slane %v598, 7
      %v1117 = vrot.slane %v1116, 2
      %v1118 = vrot.slane %v599, 7
      %v1119 = vrot.slane %v1118, 2
      %v1120 = vrot.slane %v522, 7
      %v1121 = vrot.slane %v1120, 2
      %v1122 = vrot.slane %v606, 7
      %v1123 = vrot.slane %v1122, 2
      %v1124 = vrot.slane %v607, 7
      %v1125 = vrot.slane %v1124, 2
      %v1126 = vrot.slane %v608, 7
      %v1127 = vrot.slane %v1126, 2
      %v1128 = vrot.slane %v523, 7
      %v1129 = vrot.slane %v1128, 2
      %v1130 = vrot.slane %v609, 7
      %v1131 = vrot.slane %v1130, 2
      %v1132 = vrot.slane %v610, 7
      %v1133 = vrot.slane %v1132, 2
      %v1134 = vrot.slane %v611, 7
      %v1135 = vrot.slane %v1134, 2
      %v1136 = vrot.slane %v526, 7
      %v1137 = vrot.slane %v1136, 2
      %v1138 = vrot.slane %v618, 7
      %v1139 = vrot.slane %v1138, 2
      %v1140 = vrot.slane %v619, 7
      %v1141 = vrot.slane %v1140, 2
      %v1142 = vrot.slane %v620, 7
      %v1143 = vrot.slane %v1142, 2
      %v1144 = vrot.slane %v527, 7
      %v1145 = vrot.slane %v1144, 2
      %v1146 = vrot.slane %v621, 7
      %v1147 = vrot.slane %v1146, 2
      %v1148 = vrot.slane %v622, 7
      %v1149 = vrot.slane %v1148, 2
      %v1150 = vrot.slane %v623, 7
      %v1151 = vrot.slane %v1150, 2
      %v1152 = vrot.slane %v530, 7
      %v1153 = vrot.slane %v1152, 2
      %v1154 = vrot.slane %v630, 7
      %v1155 = vrot.slane %v1154, 2
      %v1156 = vrot.slane %v631, 7
      %v1157 = vrot.slane %v1156, 2
      %v1158 = vrot.slane %v632, 7
      %v1159 = vrot.slane %v1158, 2
      %v1160 = vrot.slane %v531, 7
      %v1161 = vrot.slane %v1160, 2
      %v1162 = vrot.slane %v633, 7
      %v1163 = vrot.slane %v1162, 2
      %v1164 = vrot.slane %v634, 7
      %v1165 = vrot.slane %v1164, 2
      %v1166 = vrot.slane %v635, 7
      %v1167 = vrot.slane %v1166, 2
      %v1168 = vrot.slane %v534, 7
      %v1169 = vrot.slane %v1168, 2
      %v1170 = vrot.slane %v642, 7
      %v1171 = vrot.slane %v1170, 2
      %v1172 = vrot.slane %v643, 7
      %v1173 = vrot.slane %v1172, 2
      %v1174 = vrot.slane %v644, 7
      %v1175 = vrot.slane %v1174, 2
      %v1176 = vrot.slane %v535, 7
      %v1177 = vrot.slane %v1176, 2
      %v1178 = vrot.slane %v645, 7
      %v1179 = vrot.slane %v1178, 2
      %v1180 = vrot.slane %v646, 7
      %v1181 = vrot.slane %v1180, 2
      %v1182 = vrot.slane %v647, 7
      %v1183 = vrot.slane %v1182, 2
      %v1184 = vrot.slane %v538, 7
      %v1185 = vrot.slane %v1184, 2
      %v1186 = vrot.slane %v654, 7
      %v1187 = vrot.slane %v1186, 2
      %v1188 = vrot.slane %v655, 7
      %v1189 = vrot.slane %v1188, 2
      %v1190 = vrot.slane %v656, 7
      %v1191 = vrot.slane %v1190, 2
      %v1192 = vrot.slane %v539, 7
      %v1193 = vrot.slane %v1192, 2
      %v1194 = vrot.slane %v657, 7
      %v1195 = vrot.slane %v1194, 2
      %v1196 = vrot.slane %v658, 7
      %v1197 = vrot.slane %v1196, 2
      %v1198 = vrot.slane %v659, 7
      %v1199 = vrot.slane %v1198, 2
      %v1200 = vrot.slane %v542, 7
      %v1201 = vrot.slane %v1200, 2
      %v1202 = vrot.slane %v666, 7
      %v1203 = vrot.slane %v1202, 2
      %v1204 = vrot.slane %v667, 7
      %v1205 = vrot.slane %v1204, 2
      %v1206 = vrot.slane %v668, 7
      %v1207 = vrot.slane %v1206, 2
      %v1208 = vrot.slane %v543, 7
      %v1209 = vrot.slane %v1208, 2
      %v1210 = vrot.slane %v669, 7
      %v1211 = vrot.slane %v1210, 2
      %v1212 = vrot.slane %v670, 7
      %v1213 = vrot.slane %v1212, 2
      %v1214 = vrot.slane %v671, 7
      %v1215 = vrot.slane %v1214, 2
      %v1280 = vadd.f32 %v1024, %v1089
      %v1281 = vadd.f32 %v1025, %v1091
      %v1282 = vadd.f32 %v1026, %v1093
      %v1283 = vadd.f32 %v1027, %v1095
      %v1284 = vadd.f32 %v1028, %v1097
      %v1285 = vadd.f32 %v1029, %v1099
      %v1286 = vadd.f32 %v1030, %v1101
      %v1287 = vadd.f32 %v1031, %v1103
      %v1288 = vadd.f32 %v1032, %v1105
      %v1289 = vadd.f32 %v1033, %v1107
      %v1290 = vadd.f32 %v1034, %v1109
      %v1291 = vadd.f32 %v1035, %v1111
      %v1292 = vadd.f32 %v1036, %v1113
      %v1293 = vadd.f32 %v1037, %v1115
      %v1294 = vadd.f32 %v1038, %v1117
      %v1295 = vadd.f32 %v1039, %v1119
      %v1296 = vadd.f32 %v1040, %v1121
      %v1297 = vadd.f32 %v1041, %v1123
      %v1298 = vadd.f32 %v1042, %v1125
      %v1299 = vadd.f32 %v1043, %v1127
      %v1300 = vadd.f32 %v1044, %v1129
      %v1301 = vadd.f32 %v1045, %v1131
      %v1302 = vadd.f32 %v1046, %v1133
      %v1303 = vadd.f32 %v1047, %v1135
      %v1304 = vadd.f32 %v1048, %v1137
      %v1305 = vadd.f32 %v1049, %v1139
      %v1306 = vadd.f32 %v1050, %v1141
      %v1307 = vadd.f32 %v1051, %v1143
      %v1308 = vadd.f32 %v1052, %v1145
      %v1309 = vadd.f32 %v1053, %v1147
      %v1310 = vadd.f32 %v1054, %v1149
      %v1311 = vadd.f32 %v1055, %v1151
      %v1312 = vadd.f32 %v1056, %v1153
      %v1313 = vadd.f32 %v1057, %v1155
      %v1314 = vadd.f32 %v1058, %v1157
      %v1315 = vadd.f32 %v1059, %v1159
      %v1316 = vadd.f32 %v1060, %v1161
      %v1317 = vadd.f32 %v1061, %v1163
      %v1318 = vadd.f32 %v1062, %v1165
      %v1319 = vadd.f32 %v1063, %v1167
      %v1320 = vadd.f32 %v1064, %v1169
      %v1321 = vadd.f32 %v1065, %v1171
      %v1322 = vadd.f32 %v1066, %v1173
      %v1323 = vadd.f32 %v1067, %v1175
      %v1324 = vadd.f32 %v1068, %v1177
      %v1325 = vadd.f32 %v1069, %v1179
      %v1326 = vadd.f32 %v1070, %v1181
      %v1327 = vadd.f32 %v1071, %v1183
      %v1328 = vadd.f32 %v1072, %v1185
      %v1329 = vadd.f32 %v1073, %v1187
      %v1330 = vadd.f32 %v1074, %v1189
      %v1331 = vadd.f32 %v1075, %v1191
      %v1332 = vadd.f32 %v1076, %v1193
      %v1333 = vadd.f32 %v1077, %v1195
      %v1334 = vadd.f32 %v1078, %v1197
      %v1335 = vadd.f32 %v1079, %v1199
      %v1336 = vadd.f32 %v1080, %v1201
      %v1337 = vadd.f32 %v1081, %v1203
      %v1338 = vadd.f32 %v1082, %v1205
      %v1339 = vadd.f32 %v1083, %v1207
      %v1340 = vadd.f32 %v1084, %v1209
      %v1341 = vadd.f32 %v1085, %v1211
      %v1342 = vadd.f32 %v1086, %v1213
      %v1343 = vadd.f32 %v1087, %v1215
      %v1344 = vmul.f32 %v1280, 0.25
      %v1345 = vmul.f32 %v1281, 0.25
      %v1346 = vmul.f32 %v1282, 0.25
      %v1347 = vmul.f32 %v1283, 0.25
      %v1348 = vmul.f32 %v1284, 0.25
      %v1349 = vmul.f32 %v1285, 0.25
      %v1350 = vmul.f32 %v1286, 0.25
      %v1351 = vmul.f32 %v1287, 0.25
      %v1352 = vmul.f32 %v1288, 0.25
      %v1353 = vmul.f32 %v1289, 0.25
      %v1354 = vmul.f32 %v1290, 0.25
      %v1355 = vmul.f32 %v1291, 0.25
      %v1356 = vmul.f32 %v1292, 0.25
      %v1357 = vmul.f32 %v1293, 0.25
      %v1358 = vmul.f32 %v1294, 0.25
      %v1359 = vmul.f32 %v1295, 0.25
      %v1360 = vmul.f32 %v1296, 0.25
      %v1361 = vmul.f32 %v1297, 0.25
      %v1362 = vmul.f32 %v1298, 0.25
      %v1363 = vmul.f32 %v1299, 0.25
      %v1364 = vmul.f32 %v1300, 0.25
      %v1365 = vmul.f32 %v1301, 0.25
      %v1366 = vmul.f32 %v1302, 0.25
      %v1367 = vmul.f32 %v1303, 0.25
      %v1368 = vmul.f32 %v1304, 0.25
      %v1369 = vmul.f32 %v1305, 0.25
      %v1370 = vmul.f32 %v1306, 0.25
      %v1371 = vmul.f32 %v1307, 0.25
      %v1372 = vmul.f32 %v1308, 0.25
      %v1373 = vmul.f32 %v1309, 0.25
      %v1374 = vmul.f32 %v1310, 0.25
      %v1375 = vmul.f32 %v1311, 0.25
      %v1376 = vmul.f32 %v1312, 0.25
      %v1377 = vmul.f32 %v1313, 0.25
      %v1378 = vmul.f32 %v1314, 0.25
      %v1379 = vmul.f32 %v1315, 0.25
      %v1380 = vmul.f32 %v1316, 0.25
      %v1381 = vmul.f32 %v1317, 0.25
      %v1382 = vmul.f32 %v1318, 0.25
      %v1383 = vmul.f32 %v1319, 0.25
      %v1384 = vmul.f32 %v1320, 0.25
      %v1385 = vmul.f32 %v1321, 0.25
      %v1386 = vmul.f32 %v1322, 0.25
      %v1387 = vmul.f32 %v1323, 0.25
      %v1388 = vmul.f32 %v1324, 0.25
      %v1389 = vmul.f32 %v1325, 0.25
      %v1390 = vmul.f32 %v1326, 0.25
      %v1391 = vmul.f32 %v1327, 0.25
      %v1392 = vmul.f32 %v1328, 0.25
      %v1393 = vmul.f32 %v1329, 0.25
      %v1394 = vmul.f32 %v1330, 0.25
      %v1395 = vmul.f32 %v1331, 0.25
      %v1396 = vmul.f32 %v1332, 0.25
      %v1397 = vmul.f32 %v1333, 0.25
      %v1398 = vmul.f32 %v1334, 0.25
      %v1399 = vmul.f32 %v1335, 0.25
      %v1400 = vmul.f32 %v1336, 0.25
      %v1401 = vmul.f32 %v1337, 0.25
      %v1402 = vmul.f32 %v1338, 0.25
      %v1403 = vmul.f32 %v1339, 0.25
      %v1404 = vmul.f32 %v1340, 0.25
      %v1405 = vmul.f32 %v1341, 0.25
      %v1406 = vmul.f32 %v1342, 0.25
      %v1407 = vmul.f32 %v1343, 0.25
      %v1408 = vpack.c.bf16 %v1344, %v1344
      %v1409 = vpack.c.bf16 %v1345, %v1345
      %v1410 = vpack.c.bf16 %v1346, %v1346
      %v1411 = vpack.c.bf16 %v1347, %v1347
      %v1412 = vpack.c.bf16 %v1348, %v1348
      %v1413 = vpack.c.bf16 %v1349, %v1349
      %v1414 = vpack.c.bf16 %v1350, %v1350
      %v1415 = vpack.c.bf16 %v1351, %v1351
      %v1416 = vpack.c.bf16 %v1352, %v1352
      %v1417 = vpack.c.bf16 %v1353, %v1353
      %v1418 = vpack.c.bf16 %v1354, %v1354
      %v1419 = vpack.c.bf16 %v1355, %v1355
      %v1420 = vpack.c.bf16 %v1356, %v1356
      %v1421 = vpack.c.bf16 %v1357, %v1357
      %v1422 = vpack.c.bf16 %v1358, %v1358
      %v1423 = vpack.c.bf16 %v1359, %v1359
      %v1424 = vpack.c.bf16 %v1360, %v1360
      %v1425 = vpack.c.bf16 %v1361, %v1361
      %v1426 = vpack.c.bf16 %v1362, %v1362
      %v1427 = vpack.c.bf16 %v1363, %v1363
      %v1428 = vpack.c.bf16 %v1364, %v1364
      %v1429 = vpack.c.bf16 %v1365, %v1365
      %v1430 = vpack.c.bf16 %v1366, %v1366
      %v1431 = vpack.c.bf16 %v1367, %v1367
      %v1432 = vpack.c.bf16 %v1368, %v1368
      %v1433 = vpack.c.bf16 %v1369, %v1369
      %v1434 = vpack.c.bf16 %v1370, %v1370
      %v1435 = vpack.c.bf16 %v1371, %v1371
      %v1436 = vpack.c.bf16 %v1372, %v1372
      %v1437 = vpack.c.bf16 %v1373, %v1373
      %v1438 = vpack.c.bf16 %v1374, %v1374
      %v1439 = vpack.c.bf16 %v1375, %v1375
      %v1440 = vpack.c.bf16 %v1376, %v1376
      %v1441 = vpack.c.bf16 %v1377, %v1377
      %v1442 = vpack.c.bf16 %v1378, %v1378
      %v1443 = vpack.c.bf16 %v1379, %v1379
      %v1444 = vpack.c.bf16 %v1380, %v1380
      %v1445 = vpack.c.bf16 %v1381, %v1381
      %v1446 = vpack.c.bf16 %v1382, %v1382
      %v1447 = vpack.c.bf16 %v1383, %v1383
      %v1448 = vpack.c.bf16 %v1384, %v1384
      %v1449 = vpack.c.bf16 %v1385, %v1385
      %v1450 = vpack.c.bf16 %v1386, %v1386
      %v1451 = vpack.c.bf16 %v1387, %v1387
      %v1452 = vpack.c.bf16 %v1388, %v1388
      %v1453 = vpack.c.bf16 %v1389, %v1389
      %v1454 = vpack.c.bf16 %v1390, %v1390
      %v1455 = vpack.c.bf16 %v1391, %v1391
      %v1456 = vpack.c.bf16 %v1392, %v1392
      %v1457 = vpack.c.bf16 %v1393, %v1393
      %v1458 = vpack.c.bf16 %v1394, %v1394
      %v1459 = vpack.c.bf16 %v1395, %v1395
      %v1460 = vpack.c.bf16 %v1396, %v1396
      %v1461 = vpack.c.bf16 %v1397, %v1397
      %v1462 = vpack.c.bf16 %v1398, %v1398
      %v1463 = vpack.c.bf16 %v1399, %v1399
      %v1464 = vpack.c.bf16 %v1400, %v1400
      %v1465 = vpack.c.bf16 %v1401, %v1401
      %v1466 = vpack.c.bf16 %v1402, %v1402
      %v1467 = vpack.c.bf16 %v1403, %v1403
      %v1468 = vpack.c.bf16 %v1404, %v1404
      %v1469 = vpack.c.bf16 %v1405, %v1405
      %v1470 = vpack.c.bf16 %v1406, %v1406
      %v1471 = vpack.c.bf16 %v1407, %v1407
      %v1472 = vld [vmem:[%s3] sm:$0xf]
      %v1473 = vld [vmem:[%s3 + $0x4] sm:$0xf]
      %v1474 = vld [vmem:[%s3 + $0x8] sm:$0xf]
      %v1475 = vld [vmem:[%s3 + $0xc] sm:$0xf]
      %v1476 = vld [vmem:[%s3 + $0x10] sm:$0xf]
      %v1477 = vld [vmem:[%s3 + $0x14] sm:$0xf]
      %v1478 = vld [vmem:[%s3 + $0x18] sm:$0xf]
      %v1479 = vld [vmem:[%s3 + $0x1c] sm:$0xf]
      %v1480 = vld [vmem:[%s3 + $0x20] sm:$0xf]
      %v1481 = vld [vmem:[%s3 + $0x24] sm:$0xf]
      %v1482 = vld [vmem:[%s3 + $0x28] sm:$0xf]
      %v1483 = vld [vmem:[%s3 + $0x2c] sm:$0xf]
      %v1484 = vld [vmem:[%s3 + $0x30] sm:$0xf]
      %v1485 = vld [vmem:[%s3 + $0x34] sm:$0xf]
      %v1486 = vld [vmem:[%s3 + $0x38] sm:$0xf]
      %v1487 = vld [vmem:[%s3 + $0x3c] sm:$0xf]
      %v1552 = vunpack.c.l.b16 %v1408
      %v1553 = vunpack.c.l.b16 %v1409
      %v1554 = vunpack.c.l.b16 %v1410
      %v1555 = vunpack.c.l.b16 %v1411
      %v1556 = vunpack.c.l.b16 %v1412
      %v1557 = vunpack.c.l.b16 %v1413
      %v1558 = vunpack.c.l.b16 %v1414
      %v1559 = vunpack.c.l.b16 %v1415
      %v1560 = vunpack.c.l.b16 %v1416
      %v1561 = vunpack.c.l.b16 %v1417
      %v1562 = vunpack.c.l.b16 %v1418
      %v1563 = vunpack.c.l.b16 %v1419
      %v1564 = vunpack.c.l.b16 %v1420
      %v1565 = vunpack.c.l.b16 %v1421
      %v1566 = vunpack.c.l.b16 %v1422
      %v1567 = vunpack.c.l.b16 %v1423
      %v1568 = vunpack.c.l.b16 %v1424
      %v1569 = vunpack.c.l.b16 %v1425
      %v1570 = vunpack.c.l.b16 %v1426
      %v1571 = vunpack.c.l.b16 %v1427
      %v1572 = vunpack.c.l.b16 %v1428
      %v1573 = vunpack.c.l.b16 %v1429
      %v1574 = vunpack.c.l.b16 %v1430
      %v1575 = vunpack.c.l.b16 %v1431
      %v1576 = vunpack.c.l.b16 %v1432
      %v1577 = vunpack.c.l.b16 %v1433
      %v1578 = vunpack.c.l.b16 %v1434
      %v1579 = vunpack.c.l.b16 %v1435
      %v1580 = vunpack.c.l.b16 %v1436
      %v1581 = vunpack.c.l.b16 %v1437
      %v1582 = vunpack.c.l.b16 %v1438
      %v1583 = vunpack.c.l.b16 %v1439
      %v1584 = vunpack.c.l.b16 %v1440
      %v1585 = vunpack.c.l.b16 %v1441
      %v1586 = vunpack.c.l.b16 %v1442
      %v1587 = vunpack.c.l.b16 %v1443
      %v1588 = vunpack.c.l.b16 %v1444
      %v1589 = vunpack.c.l.b16 %v1445
      %v1590 = vunpack.c.l.b16 %v1446
      %v1591 = vunpack.c.l.b16 %v1447
      %v1592 = vunpack.c.l.b16 %v1448
      %v1593 = vunpack.c.l.b16 %v1449
      %v1594 = vunpack.c.l.b16 %v1450
      %v1595 = vunpack.c.l.b16 %v1451
      %v1596 = vunpack.c.l.b16 %v1452
      %v1597 = vunpack.c.l.b16 %v1453
      %v1598 = vunpack.c.l.b16 %v1454
      %v1599 = vunpack.c.l.b16 %v1455
      %v1600 = vunpack.c.l.b16 %v1456
      %v1601 = vunpack.c.l.b16 %v1457
      %v1602 = vunpack.c.l.b16 %v1458
      %v1603 = vunpack.c.l.b16 %v1459
      %v1604 = vunpack.c.l.b16 %v1460
      %v1605 = vunpack.c.l.b16 %v1461
      %v1606 = vunpack.c.l.b16 %v1462
      %v1607 = vunpack.c.l.b16 %v1463
      %v1608 = vunpack.c.l.b16 %v1464
      %v1609 = vunpack.c.l.b16 %v1465
      %v1610 = vunpack.c.l.b16 %v1466
      %v1611 = vunpack.c.l.b16 %v1467
      %v1612 = vunpack.c.l.b16 %v1468
      %v1613 = vunpack.c.l.b16 %v1469
      %v1614 = vunpack.c.l.b16 %v1470
      %v1615 = vunpack.c.l.b16 %v1471
      %v1616 = vrot.slane %v1553, 7
      %vm1617 = vcmask 1041409
      %v1618 = vsel %vm1617, %v1616, %v1552
      %v1619 = vrot.slane %v1554, 6
      %vm1620 = vcmask 1042434
      %v1621 = vsel %vm1620, %v1619, %v1618
      %v1622 = vrot.slane %v1555, 5
      %vm1623 = vcmask 1043459
      %v1624 = vsel %vm1623, %v1622, %v1621
      %v1625 = vrot.slane %v1556, 4
      %vm1626 = vcmask 1044484
      %v1627 = vsel %vm1626, %v1625, %v1624
      %v1628 = vrot.slane %v1557, 3
      %vm1629 = vcmask 1045509
      %v1630 = vsel %vm1629, %v1628, %v1627
      %v1631 = vrot.slane %v1558, 2
      %vm1632 = vcmask 1046534
      %v1633 = vsel %vm1632, %v1631, %v1630
      %v1634 = vrot.slane %v1559, 1
      %vm1635 = vcmask 1047559
      %v1636 = vsel %vm1635, %v1634, %v1633
      %v1637 = vrot.slane %v1561, 7
      %v1638 = vsel %vm1617, %v1637, %v1560
      %v1639 = vrot.slane %v1562, 6
      %v1640 = vsel %vm1620, %v1639, %v1638
      %v1641 = vrot.slane %v1563, 5
      %v1642 = vsel %vm1623, %v1641, %v1640
      %v1643 = vrot.slane %v1564, 4
      %v1644 = vsel %vm1626, %v1643, %v1642
      %v1645 = vrot.slane %v1565, 3
      %v1646 = vsel %vm1629, %v1645, %v1644
      %v1647 = vrot.slane %v1566, 2
      %v1648 = vsel %vm1632, %v1647, %v1646
      %v1649 = vrot.slane %v1567, 1
      %v1650 = vsel %vm1635, %v1649, %v1648
      %v1651 = vrot.slane %v1569, 7
      %v1652 = vsel %vm1617, %v1651, %v1568
      %v1653 = vrot.slane %v1570, 6
      %v1654 = vsel %vm1620, %v1653, %v1652
      %v1655 = vrot.slane %v1571, 5
      %v1656 = vsel %vm1623, %v1655, %v1654
      %v1657 = vrot.slane %v1572, 4
      %v1658 = vsel %vm1626, %v1657, %v1656
      %v1659 = vrot.slane %v1573, 3
      %v1660 = vsel %vm1629, %v1659, %v1658
      %v1661 = vrot.slane %v1574, 2
      %v1662 = vsel %vm1632, %v1661, %v1660
      %v1663 = vrot.slane %v1575, 1
      %v1664 = vsel %vm1635, %v1663, %v1662
      %v1665 = vrot.slane %v1577, 7
      %v1666 = vsel %vm1617, %v1665, %v1576
      %v1667 = vrot.slane %v1578, 6
      %v1668 = vsel %vm1620, %v1667, %v1666
      %v1669 = vrot.slane %v1579, 5
      %v1670 = vsel %vm1623, %v1669, %v1668
      %v1671 = vrot.slane %v1580, 4
      %v1672 = vsel %vm1626, %v1671, %v1670
      %v1673 = vrot.slane %v1581, 3
      %v1674 = vsel %vm1629, %v1673, %v1672
      %v1675 = vrot.slane %v1582, 2
      %v1676 = vsel %vm1632, %v1675, %v1674
      %v1677 = vrot.slane %v1583, 1
      %v1678 = vsel %vm1635, %v1677, %v1676
      %v1679 = vrot.slane %v1585, 7
      %v1680 = vsel %vm1617, %v1679, %v1584
      %v1681 = vrot.slane %v1586, 6
      %v1682 = vsel %vm1620, %v1681, %v1680
      %v1683 = vrot.slane %v1587, 5
      %v1684 = vsel %vm1623, %v1683, %v1682
      %v1685 = vrot.slane %v1588, 4
      %v1686 = vsel %vm1626, %v1685, %v1684
      %v1687 = vrot.slane %v1589, 3
      %v1688 = vsel %vm1629, %v1687, %v1686
      %v1689 = vrot.slane %v1590, 2
      %v1690 = vsel %vm1632, %v1689, %v1688
      %v1691 = vrot.slane %v1591, 1
      %v1692 = vsel %vm1635, %v1691, %v1690
      %v1693 = vrot.slane %v1593, 7
      %v1694 = vsel %vm1617, %v1693, %v1592
      %v1695 = vrot.slane %v1594, 6
      %v1696 = vsel %vm1620, %v1695, %v1694
      %v1697 = vrot.slane %v1595, 5
      %v1698 = vsel %vm1623, %v1697, %v1696
      %v1699 = vrot.slane %v1596, 4
      %v1700 = vsel %vm1626, %v1699, %v1698
      %v1701 = vrot.slane %v1597, 3
      %v1702 = vsel %vm1629, %v1701, %v1700
      %v1703 = vrot.slane %v1598, 2
      %v1704 = vsel %vm1632, %v1703, %v1702
      %v1705 = vrot.slane %v1599, 1
      %v1706 = vsel %vm1635, %v1705, %v1704
      %v1707 = vrot.slane %v1601, 7
      %v1708 = vsel %vm1617, %v1707, %v1600
      %v1709 = vrot.slane %v1602, 6
      %v1710 = vsel %vm1620, %v1709, %v1708
      %v1711 = vrot.slane %v1603, 5
      %v1712 = vsel %vm1623, %v1711, %v1710
      %v1713 = vrot.slane %v1604, 4
      %v1714 = vsel %vm1626, %v1713, %v1712
      %v1715 = vrot.slane %v1605, 3
      %v1716 = vsel %vm1629, %v1715, %v1714
      %v1717 = vrot.slane %v1606, 2
      %v1718 = vsel %vm1632, %v1717, %v1716
      %v1719 = vrot.slane %v1607, 1
      %v1720 = vsel %vm1635, %v1719, %v1718
      %v1721 = vrot.slane %v1609, 7
      %v1722 = vsel %vm1617, %v1721, %v1608
      %v1723 = vrot.slane %v1610, 6
      %v1724 = vsel %vm1620, %v1723, %v1722
      %v1725 = vrot.slane %v1611, 5
      %v1726 = vsel %vm1623, %v1725, %v1724
      %v1727 = vrot.slane %v1612, 4
      %v1728 = vsel %vm1626, %v1727, %v1726
      %v1729 = vrot.slane %v1613, 3
      %v1730 = vsel %vm1629, %v1729, %v1728
      %v1731 = vrot.slane %v1614, 2
      %v1732 = vsel %vm1632, %v1731, %v1730
      %v1733 = vrot.slane %v1615, 1
      %v1734 = vsel %vm1635, %v1733, %v1732
      %v1735 = vpack.c.b16 %v1650, %v1636
      %v1736 = vpack.c.b16 %v1678, %v1664
      %v1737 = vpack.c.b16 %v1706, %v1692
      %v1738 = vpack.c.b16 %v1734, %v1720
      %v1759 = vunpack.c.l.b16 %v1472
      %v1760 = vunpack.c.l.b16 %v1473
      %v1761 = vunpack.c.l.b16 %v1474
      %v1762 = vunpack.c.l.b16 %v1475
      %v1763 = vunpack.c.l.b16 %v1476
      %v1764 = vunpack.c.l.b16 %v1477
      %v1765 = vunpack.c.l.b16 %v1478
      %v1766 = vunpack.c.l.b16 %v1479
      %v1767 = vunpack.c.l.b16 %v1480
      %v1768 = vunpack.c.l.b16 %v1481
      %v1769 = vunpack.c.l.b16 %v1482
      %v1770 = vunpack.c.l.b16 %v1483
      %v1771 = vunpack.c.l.b16 %v1484
      %v1772 = vunpack.c.l.b16 %v1485
      %v1773 = vunpack.c.l.b16 %v1486
      %v1774 = vunpack.c.l.b16 %v1487
      %v1775 = vpack.c.b16 %v1760, %v1759
      %v1776 = vpack.c.b16 %v1762, %v1761
      %v1777 = vpack.c.b16 %v1764, %v1763
      %v1778 = vpack.c.b16 %v1766, %v1765
      %v1779 = vpack.c.b16 %v1768, %v1767
      %v1780 = vpack.c.b16 %v1770, %v1769
      %v1781 = vpack.c.b16 %v1772, %v1771
      %v1782 = vpack.c.b16 %v1774, %v1773
      %1791 = vmatpush.bf16.msra.mxu0 %v1782
      %1792 = vmatpush.bf16.msra.mxu0 %v1781
      %1793 = vmatpush.bf16.msra.mxu0 %v1780
      %1794 = vmatpush.bf16.msra.mxu0 %v1779
      %1795 = vmatpush.bf16.msra.mxu0 %v1778
      %1796 = vmatpush.bf16.msra.mxu0 %v1777
      %1797 = vmatpush.bf16.msra.mxu0 %v1776
      %1798 = vmatpush.bf16.msra.mxu0 %v1775
      %1799 = vmatmul.bf16.gmra.mxu0 %v1735
      %v1800 = vpop.f32.mrf.mxu0
      %v1801 = vadd.f32 0.0, %v1800
      %v1802 = vpop.f32.mrf.mxu0
      %v1803 = vadd.f32 0.0, %v1802
      %1804 = vmatmul.bf16.gmra.mxu0 %v1736
      %v1805 = vpop.f32.mrf.mxu0
      %v1806 = vadd.f32 0.0, %v1805
      %v1807 = vpop.f32.mrf.mxu0
      %v1808 = vadd.f32 0.0, %v1807
      %1809 = vmatmul.bf16.gmra.mxu0 %v1737
      %v1810 = vpop.f32.mrf.mxu0
      %v1811 = vadd.f32 0.0, %v1810
      %v1812 = vpop.f32.mrf.mxu0
      %v1813 = vadd.f32 0.0, %v1812
      %1814 = vmatmul.bf16.gmra.mxu0 %v1738
      %v1815 = vpop.f32.mrf.mxu0
      %v1816 = vadd.f32 0.0, %v1815
      %v1817 = vpop.f32.mrf.mxu0
      %v1818 = vadd.f32 0.0, %v1817
      %1819 = vdwg.mxu0
      %1820 = vst [vmem:[%s402] sm:$0xff] %v1801
      %1821 = vst [vmem:[%s402 + $0x8] sm:$0xff] %v1803
      %1822 = vst [vmem:[%s402 + $0x10] sm:$0xff] %v1806
      %1823 = vst [vmem:[%s402 + $0x18] sm:$0xff] %v1808
      %1824 = vst [vmem:[%s402 + $0x20] sm:$0xff] %v1811
      %1825 = vst [vmem:[%s402 + $0x28] sm:$0xff] %v1813
      %1826 = vst [vmem:[%s402 + $0x30] sm:$0xff] %v1816
      %1827 = vst [vmem:[%s402 + $0x38] sm:$0xff] %v1818
      %p1828 = scmp.eq.s32.totalorder %s23, 0
      // Predicated region
      $region45: #{bottleneck_pallas.6} parent=43 // pred_check
        %p1829 = pneg %p1828
      $region46: #{bottleneck_pallas.6} parent=43 // pred_check_branch
        %1831 = sbr.rel (%p1829) target = $region48
      $region47: #{bottleneck_pallas.6} parent=43 // pred_region
        %1832 = vst [vmem:[%s7] sm:$0x1] 0.0
        %1833 = vst [vmem:[%s8] sm:$0x1] 0.0
      $region48: #{bottleneck_pallas.6} parent=43 // pred_fallthru
        _
      %v1834 = vld [vmem:[%s7] sm:$0x1]
      %v1835 = vadd.f32 %v1801, %v1803
      %v1836 = vadd.f32 %v1835, %v1806
      %v1837 = vadd.f32 %v1836, %v1808
      %v1838 = vadd.f32 %v1837, %v1811
      %v1839 = vadd.f32 %v1838, %v1813
      %v1840 = vadd.f32 %v1839, %v1816
      %v1841 = vadd.f32 %v1840, %v1818
      %v1842 = vrot.slane %v1841, 4
      %v1843 = vadd.f32 %v1841, %v1842
      %v1844 = vrot.slane %v1843, 2
      %v1845 = vadd.f32 %v1843, %v1844
      %v1846 = vrot.slane %v1845, 1
      %v1847 = vadd.f32 %v1845, %v1846
      %v1848 = vadd.f32 %v1834, %v1847
      %1849 = vst [vmem:[%s7] sm:$0x1] %v1848
      %v1850 = vld [vmem:[%s8] sm:$0x1]
      %v1851 = vmul.f32 %v1801, %v1801
      %v1852 = vmul.f32 %v1803, %v1803
      %v1853 = vmul.f32 %v1806, %v1806
      %v1854 = vmul.f32 %v1808, %v1808
      %v1855 = vmul.f32 %v1811, %v1811
      %v1856 = vmul.f32 %v1813, %v1813
      %v1857 = vmul.f32 %v1816, %v1816
      %v1858 = vmul.f32 %v1818, %v1818
      %v1859 = vadd.f32 %v1851, %v1852
      %v1860 = vadd.f32 %v1859, %v1853
      %v1861 = vadd.f32 %v1860, %v1854
      %v1862 = vadd.f32 %v1861, %v1855
      %v1863 = vadd.f32 %v1862, %v1856
      %v1864 = vadd.f32 %v1863, %v1857
      %v1865 = vadd.f32 %v1864, %v1858
      %v1866 = vrot.slane %v1865, 4
      %v1867 = vadd.f32 %v1865, %v1866
      %v1868 = vrot.slane %v1867, 2
      %v1869 = vadd.f32 %v1867, %v1868
      %v1870 = vrot.slane %v1869, 1
      %v1871 = vadd.f32 %v1869, %v1870
      %v1872 = vadd.f32 %v1850, %v1871
      %1873 = vst [vmem:[%s8] sm:$0x1] %v1872
      %v1874 = vld [vmem:[%s397] sm:$0xff]
      %v1875 = vld [vmem:[%s397 + $0x8] sm:$0xff]
      %v1876 = vld [vmem:[%s397 + $0x10] sm:$0xff]
      %v1877 = vld [vmem:[%s397 + $0x18] sm:$0xff]
      %v1878 = vld [vmem:[%s397 + $0x20] sm:$0xff]
      %v1879 = vld [vmem:[%s397 + $0x28] sm:$0xff]
      %v1880 = vld [vmem:[%s397 + $0x30] sm:$0xff]
      %v1881 = vld [vmem:[%s397 + $0x38] sm:$0xff]
      %v1882 = vld [vmem:[%s397 + $0x40] sm:$0xff]
      %v1883 = vld [vmem:[%s397 + $0x48] sm:$0xff]
      %v1884 = vld [vmem:[%s397 + $0x50] sm:$0xff]
      %v1885 = vld [vmem:[%s397 + $0x58] sm:$0xff]
      %v1886 = vld [vmem:[%s397 + $0x60] sm:$0xff]
      %v1887 = vld [vmem:[%s397 + $0x68] sm:$0xff]
      %v1888 = vld [vmem:[%s397 + $0x70] sm:$0xff]
      %v1889 = vld [vmem:[%s397 + $0x78] sm:$0xff]
      %v1890 = vld [vmem:[%s397 + $0x80] sm:$0xff]
      %v1891 = vld [vmem:[%s397 + $0x88] sm:$0xff]
      %v1892 = vld [vmem:[%s397 + $0x90] sm:$0xff]
      %v1893 = vld [vmem:[%s397 + $0x98] sm:$0xff]
      %v1894 = vld [vmem:[%s397 + $0xa0] sm:$0xff]
      %v1895 = vld [vmem:[%s397 + $0xa8] sm:$0xff]
      %v1896 = vld [vmem:[%s397 + $0xb0] sm:$0xff]
      %v1897 = vld [vmem:[%s397 + $0xb8] sm:$0xff]
      %v1898 = vld [vmem:[%s397 + $0xc0] sm:$0xff]
      %v1899 = vld [vmem:[%s397 + $0xc8] sm:$0xff]
      %v1900 = vld [vmem:[%s397 + $0xd0] sm:$0xff]
      %v1901 = vld [vmem:[%s397 + $0xd8] sm:$0xff]
      %v1902 = vld [vmem:[%s397 + $0xe0] sm:$0xff]
      %v1903 = vld [vmem:[%s397 + $0xe8] sm:$0xff]
      %v1904 = vld [vmem:[%s397 + $0xf0] sm:$0xff]
      %v1905 = vld [vmem:[%s397 + $0xf8] sm:$0xff]
      %v1938 = vrot.slane %v1874, 2
      %v1939 = vrot.slane %v1874, 4
      %v1940 = vrot.slane %v1874, 6
      %v1941 = vrot.slane %v1875, 2
      %v1942 = vrot.slane %v1875, 4
      %v1943 = vrot.slane %v1875, 6
      %v1944 = vrot.slane %v1876, 2
      %v1945 = vrot.slane %v1876, 4
      %v1946 = vrot.slane %v1876, 6
      %v1947 = vrot.slane %v1877, 2
      %v1948 = vrot.slane %v1877, 4
      %v1949 = vrot.slane %v1877, 6
      %v1950 = vrot.slane %v1878, 2
      %v1951 = vrot.slane %v1878, 4
      %v1952 = vrot.slane %v1878, 6
      %v1953 = vrot.slane %v1879, 2
      %v1954 = vrot.slane %v1879, 4
      %v1955 = vrot.slane %v1879, 6
      %v1956 = vrot.slane %v1880, 2
      %v1957 = vrot.slane %v1880, 4
      %v1958 = vrot.slane %v1880, 6
      %v1959 = vrot.slane %v1881, 2
      %v1960 = vrot.slane %v1881, 4
      %v1961 = vrot.slane %v1881, 6
      %v1962 = vrot.slane %v1882, 2
      %v1963 = vrot.slane %v1882, 4
      %v1964 = vrot.slane %v1882, 6
      %v1965 = vrot.slane %v1883, 2
      %v1966 = vrot.slane %v1883, 4
      %v1967 = vrot.slane %v1883, 6
      %v1968 = vrot.slane %v1884, 2
      %v1969 = vrot.slane %v1884, 4
      %v1970 = vrot.slane %v1884, 6
      %v1971 = vrot.slane %v1885, 2
      %v1972 = vrot.slane %v1885, 4
      %v1973 = vrot.slane %v1885, 6
      %v1974 = vrot.slane %v1886, 2
      %v1975 = vrot.slane %v1886, 4
      %v1976 = vrot.slane %v1886, 6
      %v1977 = vrot.slane %v1887, 2
      %v1978 = vrot.slane %v1887, 4
      %v1979 = vrot.slane %v1887, 6
      %v1980 = vrot.slane %v1888, 2
      %v1981 = vrot.slane %v1888, 4
      %v1982 = vrot.slane %v1888, 6
      %v1983 = vrot.slane %v1889, 2
      %v1984 = vrot.slane %v1889, 4
      %v1985 = vrot.slane %v1889, 6
      %v1986 = vrot.slane %v1890, 2
      %v1987 = vrot.slane %v1890, 4
      %v1988 = vrot.slane %v1890, 6
      %v1989 = vrot.slane %v1891, 2
      %v1990 = vrot.slane %v1891, 4
      %v1991 = vrot.slane %v1891, 6
      %v1992 = vrot.slane %v1892, 2
      %v1993 = vrot.slane %v1892, 4
      %v1994 = vrot.slane %v1892, 6
      %v1995 = vrot.slane %v1893, 2
      %v1996 = vrot.slane %v1893, 4
      %v1997 = vrot.slane %v1893, 6
      %v1998 = vrot.slane %v1894, 2
      %v1999 = vrot.slane %v1894, 4
      %v2000 = vrot.slane %v1894, 6
      %v2001 = vrot.slane %v1895, 2
      %v2002 = vrot.slane %v1895, 4
      %v2003 = vrot.slane %v1895, 6
      %v2004 = vrot.slane %v1896, 2
      %v2005 = vrot.slane %v1896, 4
      %v2006 = vrot.slane %v1896, 6
      %v2007 = vrot.slane %v1897, 2
      %v2008 = vrot.slane %v1897, 4
      %v2009 = vrot.slane %v1897, 6
      %v2010 = vrot.slane %v1898, 2
      %v2011 = vrot.slane %v1898, 4
      %v2012 = vrot.slane %v1898, 6
      %v2013 = vrot.slane %v1899, 2
      %v2014 = vrot.slane %v1899, 4
      %v2015 = vrot.slane %v1899, 6
      %v2016 = vrot.slane %v1900, 2
      %v2017 = vrot.slane %v1900, 4
      %v2018 = vrot.slane %v1900, 6
      %v2019 = vrot.slane %v1901, 2
      %v2020 = vrot.slane %v1901, 4
      %v2021 = vrot.slane %v1901, 6
      %v2022 = vrot.slane %v1902, 2
      %v2023 = vrot.slane %v1902, 4
      %v2024 = vrot.slane %v1902, 6
      %v2025 = vrot.slane %v1903, 2
      %v2026 = vrot.slane %v1903, 4
      %v2027 = vrot.slane %v1903, 6
      %v2028 = vrot.slane %v1904, 2
      %v2029 = vrot.slane %v1904, 4
      %v2030 = vrot.slane %v1904, 6
      %v2031 = vrot.slane %v1905, 2
      %v2032 = vrot.slane %v1905, 4
      %v2033 = vrot.slane %v1905, 6
      %v2130 = vrot.slane %v1874, 7
      %v2131 = vrot.slane %v2130, 2
      %v2132 = vrot.slane %v1938, 7
      %v2133 = vrot.slane %v2132, 2
      %v2134 = vrot.slane %v1939, 7
      %v2135 = vrot.slane %v2134, 2
      %v2136 = vrot.slane %v1940, 7
      %v2137 = vrot.slane %v2136, 2
      %v2138 = vrot.slane %v1875, 7
      %v2139 = vrot.slane %v2138, 2
      %v2140 = vrot.slane %v1941, 7
      %v2141 = vrot.slane %v2140, 2
      %v2142 = vrot.slane %v1942, 7
      %v2143 = vrot.slane %v2142, 2
      %v2144 = vrot.slane %v1943, 7
      %v2145 = vrot.slane %v2144, 2
      %v2146 = vrot.slane %v1878, 7
      %v2147 = vrot.slane %v2146, 2
      %v2148 = vrot.slane %v1950, 7
      %v2149 = vrot.slane %v2148, 2
      %v2150 = vrot.slane %v1951, 7
      %v2151 = vrot.slane %v2150, 2
      %v2152 = vrot.slane %v1952, 7
      %v2153 = vrot.slane %v2152, 2
      %v2154 = vrot.slane %v1879, 7
      %v2155 = vrot.slane %v2154, 2
      %v2156 = vrot.slane %v1953, 7
      %v2157 = vrot.slane %v2156, 2
      %v2158 = vrot.slane %v1954, 7
      %v2159 = vrot.slane %v2158, 2
      %v2160 = vrot.slane %v1955, 7
      %v2161 = vrot.slane %v2160, 2
      %v2162 = vrot.slane %v1882, 7
      %v2163 = vrot.slane %v2162, 2
      %v2164 = vrot.slane %v1962, 7
      %v2165 = vrot.slane %v2164, 2
      %v2166 = vrot.slane %v1963, 7
      %v2167 = vrot.slane %v2166, 2
      %v2168 = vrot.slane %v1964, 7
      %v2169 = vrot.slane %v2168, 2
      %v2170 = vrot.slane %v1883, 7
      %v2171 = vrot.slane %v2170, 2
      %v2172 = vrot.slane %v1965, 7
      %v2173 = vrot.slane %v2172, 2
      %v2174 = vrot.slane %v1966, 7
      %v2175 = vrot.slane %v2174, 2
      %v2176 = vrot.slane %v1967, 7
      %v2177 = vrot.slane %v2176, 2
      %v2178 = vrot.slane %v1886, 7
      %v2179 = vrot.slane %v2178, 2
      %v2180 = vrot.slane %v1974, 7
      %v2181 = vrot.slane %v2180, 2
      %v2182 = vrot.slane %v1975, 7
      %v2183 = vrot.slane %v2182, 2
      %v2184 = vrot.slane %v1976, 7
      %v2185 = vrot.slane %v2184, 2
      %v2186 = vrot.slane %v1887, 7
      %v2187 = vrot.slane %v2186, 2
      %v2188 = vrot.slane %v1977, 7
      %v2189 = vrot.slane %v2188, 2
      %v2190 = vrot.slane %v1978, 7
      %v2191 = vrot.slane %v2190, 2
      %v2192 = vrot.slane %v1979, 7
      %v2193 = vrot.slane %v2192, 2
      %v2194 = vrot.slane %v1890, 7
      %v2195 = vrot.slane %v2194, 2
      %v2196 = vrot.slane %v1986, 7
      %v2197 = vrot.slane %v2196, 2
      %v2198 = vrot.slane %v1987, 7
      %v2199 = vrot.slane %v2198, 2
      %v2200 = vrot.slane %v1988, 7
      %v2201 = vrot.slane %v2200, 2
      %v2202 = vrot.slane %v1891, 7
      %v2203 = vrot.slane %v2202, 2
      %v2204 = vrot.slane %v1989, 7
      %v2205 = vrot.slane %v2204, 2
      %v2206 = vrot.slane %v1990, 7
      %v2207 = vrot.slane %v2206, 2
      %v2208 = vrot.slane %v1991, 7
      %v2209 = vrot.slane %v2208, 2
      %v2210 = vrot.slane %v1894, 7
      %v2211 = vrot.slane %v2210, 2
      %v2212 = vrot.slane %v1998, 7
      %v2213 = vrot.slane %v2212, 2
      %v2214 = vrot.slane %v1999, 7
      %v2215 = vrot.slane %v2214, 2
      %v2216 = vrot.slane %v2000, 7
      %v2217 = vrot.slane %v2216, 2
      %v2218 = vrot.slane %v1895, 7
      %v2219 = vrot.slane %v2218, 2
      %v2220 = vrot.slane %v2001, 7
      %v2221 = vrot.slane %v2220, 2
      %v2222 = vrot.slane %v2002, 7
      %v2223 = vrot.slane %v2222, 2
      %v2224 = vrot.slane %v2003, 7
      %v2225 = vrot.slane %v2224, 2
      %v2226 = vrot.slane %v1898, 7
      %v2227 = vrot.slane %v2226, 2
      %v2228 = vrot.slane %v2010, 7
      %v2229 = vrot.slane %v2228, 2
      %v2230 = vrot.slane %v2011, 7
      %v2231 = vrot.slane %v2230, 2
      %v2232 = vrot.slane %v2012, 7
      %v2233 = vrot.slane %v2232, 2
      %v2234 = vrot.slane %v1899, 7
      %v2235 = vrot.slane %v2234, 2
      %v2236 = vrot.slane %v2013, 7
      %v2237 = vrot.slane %v2236, 2
      %v2238 = vrot.slane %v2014, 7
      %v2239 = vrot.slane %v2238, 2
      %v2240 = vrot.slane %v2015, 7
      %v2241 = vrot.slane %v2240, 2
      %v2242 = vrot.slane %v1902, 7
      %v2243 = vrot.slane %v2242, 2
      %v2244 = vrot.slane %v2022, 7
      %v2245 = vrot.slane %v2244, 2
      %v2246 = vrot.slane %v2023, 7
      %v2247 = vrot.slane %v2246, 2
      %v2248 = vrot.slane %v2024, 7
      %v2249 = vrot.slane %v2248, 2
      %v2250 = vrot.slane %v1903, 7
      %v2251 = vrot.slane %v2250, 2
      %v2252 = vrot.slane %v2025, 7
      %v2253 = vrot.slane %v2252, 2
      %v2254 = vrot.slane %v2026, 7
      %v2255 = vrot.slane %v2254, 2
      %v2256 = vrot.slane %v2027, 7
      %v2257 = vrot.slane %v2256, 2
      %v2322 = vadd.f32 %v1874, %v2131
      %v2323 = vadd.f32 %v1938, %v2133
      %v2324 = vadd.f32 %v1939, %v2135
      %v2325 = vadd.f32 %v1940, %v2137
      %v2326 = vadd.f32 %v1875, %v2139
      %v2327 = vadd.f32 %v1941, %v2141
      %v2328 = vadd.f32 %v1942, %v2143
      %v2329 = vadd.f32 %v1943, %v2145
      %v2330 = vadd.f32 %v1878, %v2147
      %v2331 = vadd.f32 %v1950, %v2149
      %v2332 = vadd.f32 %v1951, %v2151
      %v2333 = vadd.f32 %v1952, %v2153
      %v2334 = vadd.f32 %v1879, %v2155
      %v2335 = vadd.f32 %v1953, %v2157
      %v2336 = vadd.f32 %v1954, %v2159
      %v2337 = vadd.f32 %v1955, %v2161
      %v2338 = vadd.f32 %v1882, %v2163
      %v2339 = vadd.f32 %v1962, %v2165
      %v2340 = vadd.f32 %v1963, %v2167
      %v2341 = vadd.f32 %v1964, %v2169
      %v2342 = vadd.f32 %v1883, %v2171
      %v2343 = vadd.f32 %v1965, %v2173
      %v2344 = vadd.f32 %v1966, %v2175
      %v2345 = vadd.f32 %v1967, %v2177
      %v2346 = vadd.f32 %v1886, %v2179
      %v2347 = vadd.f32 %v1974, %v2181
      %v2348 = vadd.f32 %v1975, %v2183
      %v2349 = vadd.f32 %v1976, %v2185
      %v2350 = vadd.f32 %v1887, %v2187
      %v2351 = vadd.f32 %v1977, %v2189
      %v2352 = vadd.f32 %v1978, %v2191
      %v2353 = vadd.f32 %v1979, %v2193
      %v2354 = vadd.f32 %v1890, %v2195
      %v2355 = vadd.f32 %v1986, %v2197
      %v2356 = vadd.f32 %v1987, %v2199
      %v2357 = vadd.f32 %v1988, %v2201
      %v2358 = vadd.f32 %v1891, %v2203
      %v2359 = vadd.f32 %v1989, %v2205
      %v2360 = vadd.f32 %v1990, %v2207
      %v2361 = vadd.f32 %v1991, %v2209
      %v2362 = vadd.f32 %v1894, %v2211
      %v2363 = vadd.f32 %v1998, %v2213
      %v2364 = vadd.f32 %v1999, %v2215
      %v2365 = vadd.f32 %v2000, %v2217
      %v2366 = vadd.f32 %v1895, %v2219
      %v2367 = vadd.f32 %v2001, %v2221
      %v2368 = vadd.f32 %v2002, %v2223
      %v2369 = vadd.f32 %v2003, %v2225
      %v2370 = vadd.f32 %v1898, %v2227
      %v2371 = vadd.f32 %v2010, %v2229
      %v2372 = vadd.f32 %v2011, %v2231
      %v2373 = vadd.f32 %v2012, %v2233
      %v2374 = vadd.f32 %v1899, %v2235
      %v2375 = vadd.f32 %v2013, %v2237
      %v2376 = vadd.f32 %v2014, %v2239
      %v2377 = vadd.f32 %v2015, %v2241
      %v2378 = vadd.f32 %v1902, %v2243
      %v2379 = vadd.f32 %v2022, %v2245
      %v2380 = vadd.f32 %v2023, %v2247
      %v2381 = vadd.f32 %v2024, %v2249
      %v2382 = vadd.f32 %v1903, %v2251
      %v2383 = vadd.f32 %v2025, %v2253
      %v2384 = vadd.f32 %v2026, %v2255
      %v2385 = vadd.f32 %v2027, %v2257
      %v2386 = vadd.f32 %v2322, %v1876
      %v2387 = vadd.f32 %v2323, %v1944
      %v2388 = vadd.f32 %v2324, %v1945
      %v2389 = vadd.f32 %v2325, %v1946
      %v2390 = vadd.f32 %v2326, %v1877
      %v2391 = vadd.f32 %v2327, %v1947
      %v2392 = vadd.f32 %v2328, %v1948
      %v2393 = vadd.f32 %v2329, %v1949
      %v2394 = vadd.f32 %v2330, %v1880
      %v2395 = vadd.f32 %v2331, %v1956
      %v2396 = vadd.f32 %v2332, %v1957
      %v2397 = vadd.f32 %v2333, %v1958
      %v2398 = vadd.f32 %v2334, %v1881
      %v2399 = vadd.f32 %v2335, %v1959
      %v2400 = vadd.f32 %v2336, %v1960
      %v2401 = vadd.f32 %v2337, %v1961
      %v2402 = vadd.f32 %v2338, %v1884
      %v2403 = vadd.f32 %v2339, %v1968
      %v2404 = vadd.f32 %v2340, %v1969
      %v2405 = vadd.f32 %v2341, %v1970
      %v2406 = vadd.f32 %v2342, %v1885
      %v2407 = vadd.f32 %v2343, %v1971
      %v2408 = vadd.f32 %v2344, %v1972
      %v2409 = vadd.f32 %v2345, %v1973
      %v2410 = vadd.f32 %v2346, %v1888
      %v2411 = vadd.f32 %v2347, %v1980
      %v2412 = vadd.f32 %v2348, %v1981
      %v2413 = vadd.f32 %v2349, %v1982
      %v2414 = vadd.f32 %v2350, %v1889
      %v2415 = vadd.f32 %v2351, %v1983
      %v2416 = vadd.f32 %v2352, %v1984
      %v2417 = vadd.f32 %v2353, %v1985
      %v2418 = vadd.f32 %v2354, %v1892
      %v2419 = vadd.f32 %v2355, %v1992
      %v2420 = vadd.f32 %v2356, %v1993
      %v2421 = vadd.f32 %v2357, %v1994
      %v2422 = vadd.f32 %v2358, %v1893
      %v2423 = vadd.f32 %v2359, %v1995
      %v2424 = vadd.f32 %v2360, %v1996
      %v2425 = vadd.f32 %v2361, %v1997
      %v2426 = vadd.f32 %v2362, %v1896
      %v2427 = vadd.f32 %v2363, %v2004
      %v2428 = vadd.f32 %v2364, %v2005
      %v2429 = vadd.f32 %v2365, %v2006
      %v2430 = vadd.f32 %v2366, %v1897
      %v2431 = vadd.f32 %v2367, %v2007
      %v2432 = vadd.f32 %v2368, %v2008
      %v2433 = vadd.f32 %v2369, %v2009
      %v2434 = vadd.f32 %v2370, %v1900
      %v2435 = vadd.f32 %v2371, %v2016
      %v2436 = vadd.f32 %v2372, %v2017
      %v2437 = vadd.f32 %v2373, %v2018
      %v2438 = vadd.f32 %v2374, %v1901
      %v2439 = vadd.f32 %v2375, %v2019
      %v2440 = vadd.f32 %v2376, %v2020
      %v2441 = vadd.f32 %v2377, %v2021
      %v2442 = vadd.f32 %v2378, %v1904
      %v2443 = vadd.f32 %v2379, %v2028
      %v2444 = vadd.f32 %v2380, %v2029
      %v2445 = vadd.f32 %v2381, %v2030
      %v2446 = vadd.f32 %v2382, %v1905
      %v2447 = vadd.f32 %v2383, %v2031
      %v2448 = vadd.f32 %v2384, %v2032
      %v2449 = vadd.f32 %v2385, %v2033
      %v2450 = vrot.slane %v1876, 7
      %v2451 = vrot.slane %v2450, 2
      %v2452 = vrot.slane %v1944, 7
      %v2453 = vrot.slane %v2452, 2
      %v2454 = vrot.slane %v1945, 7
      %v2455 = vrot.slane %v2454, 2
      %v2456 = vrot.slane %v1946, 7
      %v2457 = vrot.slane %v2456, 2
      %v2458 = vrot.slane %v1877, 7
      %v2459 = vrot.slane %v2458, 2
      %v2460 = vrot.slane %v1947, 7
      %v2461 = vrot.slane %v2460, 2
      %v2462 = vrot.slane %v1948, 7
      %v2463 = vrot.slane %v2462, 2
      %v2464 = vrot.slane %v1949, 7
      %v2465 = vrot.slane %v2464, 2
      %v2466 = vrot.slane %v1880, 7
      %v2467 = vrot.slane %v2466, 2
      %v2468 = vrot.slane %v1956, 7
      %v2469 = vrot.slane %v2468, 2
      %v2470 = vrot.slane %v1957, 7
      %v2471 = vrot.slane %v2470, 2
      %v2472 = vrot.slane %v1958, 7
      %v2473 = vrot.slane %v2472, 2
      %v2474 = vrot.slane %v1881, 7
      %v2475 = vrot.slane %v2474, 2
      %v2476 = vrot.slane %v1959, 7
      %v2477 = vrot.slane %v2476, 2
      %v2478 = vrot.slane %v1960, 7
      %v2479 = vrot.slane %v2478, 2
      %v2480 = vrot.slane %v1961, 7
      %v2481 = vrot.slane %v2480, 2
      %v2482 = vrot.slane %v1884, 7
      %v2483 = vrot.slane %v2482, 2
      %v2484 = vrot.slane %v1968, 7
      %v2485 = vrot.slane %v2484, 2
      %v2486 = vrot.slane %v1969, 7
      %v2487 = vrot.slane %v2486, 2
      %v2488 = vrot.slane %v1970, 7
      %v2489 = vrot.slane %v2488, 2
      %v2490 = vrot.slane %v1885, 7
      %v2491 = vrot.slane %v2490, 2
      %v2492 = vrot.slane %v1971, 7
      %v2493 = vrot.slane %v2492, 2
      %v2494 = vrot.slane %v1972, 7
      %v2495 = vrot.slane %v2494, 2
      %v2496 = vrot.slane %v1973, 7
      %v2497 = vrot.slane %v2496, 2
      %v2498 = vrot.slane %v1888, 7
      %v2499 = vrot.slane %v2498, 2
      %v2500 = vrot.slane %v1980, 7
      %v2501 = vrot.slane %v2500, 2
      %v2502 = vrot.slane %v1981, 7
      %v2503 = vrot.slane %v2502, 2
      %v2504 = vrot.slane %v1982, 7
      %v2505 = vrot.slane %v2504, 2
      %v2506 = vrot.slane %v1889, 7
      %v2507 = vrot.slane %v2506, 2
      %v2508 = vrot.slane %v1983, 7
      %v2509 = vrot.slane %v2508, 2
      %v2510 = vrot.slane %v1984, 7
      %v2511 = vrot.slane %v2510, 2
      %v2512 = vrot.slane %v1985, 7
      %v2513 = vrot.slane %v2512, 2
      %v2514 = vrot.slane %v1892, 7
      %v2515 = vrot.slane %v2514, 2
      %v2516 = vrot.slane %v1992, 7
      %v2517 = vrot.slane %v2516, 2
      %v2518 = vrot.slane %v1993, 7
      %v2519 = vrot.slane %v2518, 2
      %v2520 = vrot.slane %v1994, 7
      %v2521 = vrot.slane %v2520, 2
      %v2522 = vrot.slane %v1893, 7
      %v2523 = vrot.slane %v2522, 2
      %v2524 = vrot.slane %v1995, 7
      %v2525 = vrot.slane %v2524, 2
      %v2526 = vrot.slane %v1996, 7
      %v2527 = vrot.slane %v2526, 2
      %v2528 = vrot.slane %v1997, 7
      %v2529 = vrot.slane %v2528, 2
      %v2530 = vrot.slane %v1896, 7
      %v2531 = vrot.slane %v2530, 2
      %v2532 = vrot.slane %v2004, 7
      %v2533 = vrot.slane %v2532, 2
      %v2534 = vrot.slane %v2005, 7
      %v2535 = vrot.slane %v2534, 2
      %v2536 = vrot.slane %v2006, 7
      %v2537 = vrot.slane %v2536, 2
      %v2538 = vrot.slane %v1897, 7
      %v2539 = vrot.slane %v2538, 2
      %v2540 = vrot.slane %v2007, 7
      %v2541 = vrot.slane %v2540, 2
      %v2542 = vrot.slane %v2008, 7
      %v2543 = vrot.slane %v2542, 2
      %v2544 = vrot.slane %v2009, 7
      %v2545 = vrot.slane %v2544, 2
      %v2546 = vrot.slane %v1900, 7
      %v2547 = vrot.slane %v2546, 2
      %v2548 = vrot.slane %v2016, 7
      %v2549 = vrot.slane %v2548, 2
      %v2550 = vrot.slane %v2017, 7
      %v2551 = vrot.slane %v2550, 2
      %v2552 = vrot.slane %v2018, 7
      %v2553 = vrot.slane %v2552, 2
      %v2554 = vrot.slane %v1901, 7
      %v2555 = vrot.slane %v2554, 2
      %v2556 = vrot.slane %v2019, 7
      %v2557 = vrot.slane %v2556, 2
      %v2558 = vrot.slane %v2020, 7
      %v2559 = vrot.slane %v2558, 2
      %v2560 = vrot.slane %v2021, 7
      %v2561 = vrot.slane %v2560, 2
      %v2562 = vrot.slane %v1904, 7
      %v2563 = vrot.slane %v2562, 2
      %v2564 = vrot.slane %v2028, 7
      %v2565 = vrot.slane %v2564, 2
      %v2566 = vrot.slane %v2029, 7
      %v2567 = vrot.slane %v2566, 2
      %v2568 = vrot.slane %v2030, 7
      %v2569 = vrot.slane %v2568, 2
      %v2570 = vrot.slane %v1905, 7
      %v2571 = vrot.slane %v2570, 2
      %v2572 = vrot.slane %v2031, 7
      %v2573 = vrot.slane %v2572, 2
      %v2574 = vrot.slane %v2032, 7
      %v2575 = vrot.slane %v2574, 2
      %v2576 = vrot.slane %v2033, 7
      %v2577 = vrot.slane %v2576, 2
      %v2642 = vadd.f32 %v2386, %v2451
      %v2643 = vadd.f32 %v2387, %v2453
      %v2644 = vadd.f32 %v2388, %v2455
      %v2645 = vadd.f32 %v2389, %v2457
      %v2646 = vadd.f32 %v2390, %v2459
      %v2647 = vadd.f32 %v2391, %v2461
      %v2648 = vadd.f32 %v2392, %v2463
      %v2649 = vadd.f32 %v2393, %v2465
      %v2650 = vadd.f32 %v2394, %v2467
      %v2651 = vadd.f32 %v2395, %v2469
      %v2652 = vadd.f32 %v2396, %v2471
      %v2653 = vadd.f32 %v2397, %v2473
      %v2654 = vadd.f32 %v2398, %v2475
      %v2655 = vadd.f32 %v2399, %v2477
      %v2656 = vadd.f32 %v2400, %v2479
      %v2657 = vadd.f32 %v2401, %v2481
      %v2658 = vadd.f32 %v2402, %v2483
      %v2659 = vadd.f32 %v2403, %v2485
      %v2660 = vadd.f32 %v2404, %v2487
      %v2661 = vadd.f32 %v2405, %v2489
      %v2662 = vadd.f32 %v2406, %v2491
      %v2663 = vadd.f32 %v2407, %v2493
      %v2664 = vadd.f32 %v2408, %v2495
      %v2665 = vadd.f32 %v2409, %v2497
      %v2666 = vadd.f32 %v2410, %v2499
      %v2667 = vadd.f32 %v2411, %v2501
      %v2668 = vadd.f32 %v2412, %v2503
      %v2669 = vadd.f32 %v2413, %v2505
      %v2670 = vadd.f32 %v2414, %v2507
      %v2671 = vadd.f32 %v2415, %v2509
      %v2672 = vadd.f32 %v2416, %v2511
      %v2673 = vadd.f32 %v2417, %v2513
      %v2674 = vadd.f32 %v2418, %v2515
      %v2675 = vadd.f32 %v2419, %v2517
      %v2676 = vadd.f32 %v2420, %v2519
      %v2677 = vadd.f32 %v2421, %v2521
      %v2678 = vadd.f32 %v2422, %v2523
      %v2679 = vadd.f32 %v2423, %v2525
      %v2680 = vadd.f32 %v2424, %v2527
      %v2681 = vadd.f32 %v2425, %v2529
      %v2682 = vadd.f32 %v2426, %v2531
      %v2683 = vadd.f32 %v2427, %v2533
      %v2684 = vadd.f32 %v2428, %v2535
      %v2685 = vadd.f32 %v2429, %v2537
      %v2686 = vadd.f32 %v2430, %v2539
      %v2687 = vadd.f32 %v2431, %v2541
      %v2688 = vadd.f32 %v2432, %v2543
      %v2689 = vadd.f32 %v2433, %v2545
      %v2690 = vadd.f32 %v2434, %v2547
      %v2691 = vadd.f32 %v2435, %v2549
      %v2692 = vadd.f32 %v2436, %v2551
      %v2693 = vadd.f32 %v2437, %v2553
      %v2694 = vadd.f32 %v2438, %v2555
      %v2695 = vadd.f32 %v2439, %v2557
      %v2696 = vadd.f32 %v2440, %v2559
      %v2697 = vadd.f32 %v2441, %v2561
      %v2698 = vadd.f32 %v2442, %v2563
      %v2699 = vadd.f32 %v2443, %v2565
      %v2700 = vadd.f32 %v2444, %v2567
      %v2701 = vadd.f32 %v2445, %v2569
      %v2702 = vadd.f32 %v2446, %v2571
      %v2703 = vadd.f32 %v2447, %v2573
      %v2704 = vadd.f32 %v2448, %v2575
      %v2705 = vadd.f32 %v2449, %v2577
      %v2706 = vmul.f32 %v2642, 0.25
      %v2707 = vmul.f32 %v2643, 0.25
      %v2708 = vmul.f32 %v2644, 0.25
      %v2709 = vmul.f32 %v2645, 0.25
      %v2710 = vmul.f32 %v2646, 0.25
      %v2711 = vmul.f32 %v2647, 0.25
      %v2712 = vmul.f32 %v2648, 0.25
      %v2713 = vmul.f32 %v2649, 0.25
      %v2714 = vmul.f32 %v2650, 0.25
      %v2715 = vmul.f32 %v2651, 0.25
      %v2716 = vmul.f32 %v2652, 0.25
      %v2717 = vmul.f32 %v2653, 0.25
      %v2718 = vmul.f32 %v2654, 0.25
      %v2719 = vmul.f32 %v2655, 0.25
      %v2720 = vmul.f32 %v2656, 0.25
      %v2721 = vmul.f32 %v2657, 0.25
      %v2722 = vmul.f32 %v2658, 0.25
      %v2723 = vmul.f32 %v2659, 0.25
      %v2724 = vmul.f32 %v2660, 0.25
      %v2725 = vmul.f32 %v2661, 0.25
      %v2726 = vmul.f32 %v2662, 0.25
      %v2727 = vmul.f32 %v2663, 0.25
      %v2728 = vmul.f32 %v2664, 0.25
      %v2729 = vmul.f32 %v2665, 0.25
      %v2730 = vmul.f32 %v2666, 0.25
      %v2731 = vmul.f32 %v2667, 0.25
      %v2732 = vmul.f32 %v2668, 0.25
      %v2733 = vmul.f32 %v2669, 0.25
      %v2734 = vmul.f32 %v2670, 0.25
      %v2735 = vmul.f32 %v2671, 0.25
      %v2736 = vmul.f32 %v2672, 0.25
      %v2737 = vmul.f32 %v2673, 0.25
      %v2738 = vmul.f32 %v2674, 0.25
      %v2739 = vmul.f32 %v2675, 0.25
      %v2740 = vmul.f32 %v2676, 0.25
      %v2741 = vmul.f32 %v2677, 0.25
      %v2742 = vmul.f32 %v2678, 0.25
      %v2743 = vmul.f32 %v2679, 0.25
      %v2744 = vmul.f32 %v2680, 0.25
      %v2745 = vmul.f32 %v2681, 0.25
      %v2746 = vmul.f32 %v2682, 0.25
      %v2747 = vmul.f32 %v2683, 0.25
      %v2748 = vmul.f32 %v2684, 0.25
      %v2749 = vmul.f32 %v2685, 0.25
      %v2750 = vmul.f32 %v2686, 0.25
      %v2751 = vmul.f32 %v2687, 0.25
      %v2752 = vmul.f32 %v2688, 0.25
      %v2753 = vmul.f32 %v2689, 0.25
      %v2754 = vmul.f32 %v2690, 0.25
      %v2755 = vmul.f32 %v2691, 0.25
      %v2756 = vmul.f32 %v2692, 0.25
      %v2757 = vmul.f32 %v2693, 0.25
      %v2758 = vmul.f32 %v2694, 0.25
      %v2759 = vmul.f32 %v2695, 0.25
      %v2760 = vmul.f32 %v2696, 0.25
      %v2761 = vmul.f32 %v2697, 0.25
      %v2762 = vmul.f32 %v2698, 0.25
      %v2763 = vmul.f32 %v2699, 0.25
      %v2764 = vmul.f32 %v2700, 0.25
      %v2765 = vmul.f32 %v2701, 0.25
      %v2766 = vmul.f32 %v2702, 0.25
      %v2767 = vmul.f32 %v2703, 0.25
      %v2768 = vmul.f32 %v2704, 0.25
      %v2769 = vmul.f32 %v2705, 0.25
      %v2770 = vpack.c.bf16 %v2706, %v2706
      %v2771 = vpack.c.bf16 %v2707, %v2707
      %v2772 = vpack.c.bf16 %v2708, %v2708
      %v2773 = vpack.c.bf16 %v2709, %v2709
      %v2774 = vpack.c.bf16 %v2710, %v2710
      %v2775 = vpack.c.bf16 %v2711, %v2711
      %v2776 = vpack.c.bf16 %v2712, %v2712
      %v2777 = vpack.c.bf16 %v2713, %v2713
      %v2778 = vpack.c.bf16 %v2714, %v2714
      %v2779 = vpack.c.bf16 %v2715, %v2715
      %v2780 = vpack.c.bf16 %v2716, %v2716
      %v2781 = vpack.c.bf16 %v2717, %v2717
      %v2782 = vpack.c.bf16 %v2718, %v2718
      %v2783 = vpack.c.bf16 %v2719, %v2719
      %v2784 = vpack.c.bf16 %v2720, %v2720
      %v2785 = vpack.c.bf16 %v2721, %v2721
      %v2786 = vpack.c.bf16 %v2722, %v2722
      %v2787 = vpack.c.bf16 %v2723, %v2723
      %v2788 = vpack.c.bf16 %v2724, %v2724
      %v2789 = vpack.c.bf16 %v2725, %v2725
      %v2790 = vpack.c.bf16 %v2726, %v2726
      %v2791 = vpack.c.bf16 %v2727, %v2727
      %v2792 = vpack.c.bf16 %v2728, %v2728
      %v2793 = vpack.c.bf16 %v2729, %v2729
      %v2794 = vpack.c.bf16 %v2730, %v2730
      %v2795 = vpack.c.bf16 %v2731, %v2731
      %v2796 = vpack.c.bf16 %v2732, %v2732
      %v2797 = vpack.c.bf16 %v2733, %v2733
      %v2798 = vpack.c.bf16 %v2734, %v2734
      %v2799 = vpack.c.bf16 %v2735, %v2735
      %v2800 = vpack.c.bf16 %v2736, %v2736
      %v2801 = vpack.c.bf16 %v2737, %v2737
      %v2802 = vpack.c.bf16 %v2738, %v2738
      %v2803 = vpack.c.bf16 %v2739, %v2739
      %v2804 = vpack.c.bf16 %v2740, %v2740
      %v2805 = vpack.c.bf16 %v2741, %v2741
      %v2806 = vpack.c.bf16 %v2742, %v2742
      %v2807 = vpack.c.bf16 %v2743, %v2743
      %v2808 = vpack.c.bf16 %v2744, %v2744
      %v2809 = vpack.c.bf16 %v2745, %v2745
      %v2810 = vpack.c.bf16 %v2746, %v2746
      %v2811 = vpack.c.bf16 %v2747, %v2747
      %v2812 = vpack.c.bf16 %v2748, %v2748
      %v2813 = vpack.c.bf16 %v2749, %v2749
      %v2814 = vpack.c.bf16 %v2750, %v2750
      %v2815 = vpack.c.bf16 %v2751, %v2751
      %v2816 = vpack.c.bf16 %v2752, %v2752
      %v2817 = vpack.c.bf16 %v2753, %v2753
      %v2818 = vpack.c.bf16 %v2754, %v2754
      %v2819 = vpack.c.bf16 %v2755, %v2755
      %v2820 = vpack.c.bf16 %v2756, %v2756
      %v2821 = vpack.c.bf16 %v2757, %v2757
      %v2822 = vpack.c.bf16 %v2758, %v2758
      %v2823 = vpack.c.bf16 %v2759, %v2759
      %v2824 = vpack.c.bf16 %v2760, %v2760
      %v2825 = vpack.c.bf16 %v2761, %v2761
      %v2826 = vpack.c.bf16 %v2762, %v2762
      %v2827 = vpack.c.bf16 %v2763, %v2763
      %v2828 = vpack.c.bf16 %v2764, %v2764
      %v2829 = vpack.c.bf16 %v2765, %v2765
      %v2830 = vpack.c.bf16 %v2766, %v2766
      %v2831 = vpack.c.bf16 %v2767, %v2767
      %v2832 = vpack.c.bf16 %v2768, %v2768
      %v2833 = vpack.c.bf16 %v2769, %v2769
      %v2834 = vld [vmem:[%s5] sm:$0xf]
      %v2835 = vld [vmem:[%s5 + $0x4] sm:$0xf]
      %v2836 = vld [vmem:[%s5 + $0x8] sm:$0xf]
      %v2837 = vld [vmem:[%s5 + $0xc] sm:$0xf]
      %v2838 = vld [vmem:[%s5 + $0x10] sm:$0xf]
      %v2839 = vld [vmem:[%s5 + $0x14] sm:$0xf]
      %v2840 = vld [vmem:[%s5 + $0x18] sm:$0xf]
      %v2841 = vld [vmem:[%s5 + $0x1c] sm:$0xf]
      %v2842 = vld [vmem:[%s5 + $0x20] sm:$0xf]
      %v2843 = vld [vmem:[%s5 + $0x24] sm:$0xf]
      %v2844 = vld [vmem:[%s5 + $0x28] sm:$0xf]
      %v2845 = vld [vmem:[%s5 + $0x2c] sm:$0xf]
      %v2846 = vld [vmem:[%s5 + $0x30] sm:$0xf]
      %v2847 = vld [vmem:[%s5 + $0x34] sm:$0xf]
      %v2848 = vld [vmem:[%s5 + $0x38] sm:$0xf]
      %v2849 = vld [vmem:[%s5 + $0x3c] sm:$0xf]
      %v2914 = vunpack.c.l.b16 %v2770
      %v2915 = vunpack.c.l.b16 %v2771
      %v2916 = vunpack.c.l.b16 %v2772
      %v2917 = vunpack.c.l.b16 %v2773
      %v2918 = vunpack.c.l.b16 %v2774
      %v2919 = vunpack.c.l.b16 %v2775
      %v2920 = vunpack.c.l.b16 %v2776
      %v2921 = vunpack.c.l.b16 %v2777
      %v2922 = vunpack.c.l.b16 %v2778
      %v2923 = vunpack.c.l.b16 %v2779
      %v2924 = vunpack.c.l.b16 %v2780
      %v2925 = vunpack.c.l.b16 %v2781
      %v2926 = vunpack.c.l.b16 %v2782
      %v2927 = vunpack.c.l.b16 %v2783
      %v2928 = vunpack.c.l.b16 %v2784
      %v2929 = vunpack.c.l.b16 %v2785
      %v2930 = vunpack.c.l.b16 %v2786
      %v2931 = vunpack.c.l.b16 %v2787
      %v2932 = vunpack.c.l.b16 %v2788
      %v2933 = vunpack.c.l.b16 %v2789
      %v2934 = vunpack.c.l.b16 %v2790
      %v2935 = vunpack.c.l.b16 %v2791
      %v2936 = vunpack.c.l.b16 %v2792
      %v2937 = vunpack.c.l.b16 %v2793
      %v2938 = vunpack.c.l.b16 %v2794
      %v2939 = vunpack.c.l.b16 %v2795
      %v2940 = vunpack.c.l.b16 %v2796
      %v2941 = vunpack.c.l.b16 %v2797
      %v2942 = vunpack.c.l.b16 %v2798
      %v2943 = vunpack.c.l.b16 %v2799
      %v2944 = vunpack.c.l.b16 %v2800
      %v2945 = vunpack.c.l.b16 %v2801
      %v2946 = vunpack.c.l.b16 %v2802
      %v2947 = vunpack.c.l.b16 %v2803
      %v2948 = vunpack.c.l.b16 %v2804
      %v2949 = vunpack.c.l.b16 %v2805
      %v2950 = vunpack.c.l.b16 %v2806
      %v2951 = vunpack.c.l.b16 %v2807
      %v2952 = vunpack.c.l.b16 %v2808
      %v2953 = vunpack.c.l.b16 %v2809
      %v2954 = vunpack.c.l.b16 %v2810
      %v2955 = vunpack.c.l.b16 %v2811
      %v2956 = vunpack.c.l.b16 %v2812
      %v2957 = vunpack.c.l.b16 %v2813
      %v2958 = vunpack.c.l.b16 %v2814
      %v2959 = vunpack.c.l.b16 %v2815
      %v2960 = vunpack.c.l.b16 %v2816
      %v2961 = vunpack.c.l.b16 %v2817
      %v2962 = vunpack.c.l.b16 %v2818
      %v2963 = vunpack.c.l.b16 %v2819
      %v2964 = vunpack.c.l.b16 %v2820
      %v2965 = vunpack.c.l.b16 %v2821
      %v2966 = vunpack.c.l.b16 %v2822
      %v2967 = vunpack.c.l.b16 %v2823
      %v2968 = vunpack.c.l.b16 %v2824
      %v2969 = vunpack.c.l.b16 %v2825
      %v2970 = vunpack.c.l.b16 %v2826
      %v2971 = vunpack.c.l.b16 %v2827
      %v2972 = vunpack.c.l.b16 %v2828
      %v2973 = vunpack.c.l.b16 %v2829
      %v2974 = vunpack.c.l.b16 %v2830
      %v2975 = vunpack.c.l.b16 %v2831
      %v2976 = vunpack.c.l.b16 %v2832
      %v2977 = vunpack.c.l.b16 %v2833
      %v2978 = vrot.slane %v2915, 7
      %v2979 = vsel %vm1617, %v2978, %v2914
      %v2980 = vrot.slane %v2916, 6
      %v2981 = vsel %vm1620, %v2980, %v2979
      %v2982 = vrot.slane %v2917, 5
      %v2983 = vsel %vm1623, %v2982, %v2981
      %v2984 = vrot.slane %v2918, 4
      %v2985 = vsel %vm1626, %v2984, %v2983
      %v2986 = vrot.slane %v2919, 3
      %v2987 = vsel %vm1629, %v2986, %v2985
      %v2988 = vrot.slane %v2920, 2
      %v2989 = vsel %vm1632, %v2988, %v2987
      %v2990 = vrot.slane %v2921, 1
      %v2991 = vsel %vm1635, %v2990, %v2989
      %v2992 = vrot.slane %v2923, 7
      %v2993 = vsel %vm1617, %v2992, %v2922
      %v2994 = vrot.slane %v2924, 6
      %v2995 = vsel %vm1620, %v2994, %v2993
      %v2996 = vrot.slane %v2925, 5
      %v2997 = vsel %vm1623, %v2996, %v2995
      %v2998 = vrot.slane %v2926, 4
      %v2999 = vsel %vm1626, %v2998, %v2997
      %v3000 = vrot.slane %v2927, 3
      %v3001 = vsel %vm1629, %v3000, %v2999
      %v3002 = vrot.slane %v2928, 2
      %v3003 = vsel %vm1632, %v3002, %v3001
      %v3004 = vrot.slane %v2929, 1
      %v3005 = vsel %vm1635, %v3004, %v3003
      %v3006 = vrot.slane %v2931, 7
      %v3007 = vsel %vm1617, %v3006, %v2930
      %v3008 = vrot.slane %v2932, 6
      %v3009 = vsel %vm1620, %v3008, %v3007
      %v3010 = vrot.slane %v2933, 5
      %v3011 = vsel %vm1623, %v3010, %v3009
      %v3012 = vrot.slane %v2934, 4
      %v3013 = vsel %vm1626, %v3012, %v3011
      %v3014 = vrot.slane %v2935, 3
      %v3015 = vsel %vm1629, %v3014, %v3013
      %v3016 = vrot.slane %v2936, 2
      %v3017 = vsel %vm1632, %v3016, %v3015
      %v3018 = vrot.slane %v2937, 1
      %v3019 = vsel %vm1635, %v3018, %v3017
      %v3020 = vrot.slane %v2939, 7
      %v3021 = vsel %vm1617, %v3020, %v2938
      %v3022 = vrot.slane %v2940, 6
      %v3023 = vsel %vm1620, %v3022, %v3021
      %v3024 = vrot.slane %v2941, 5
      %v3025 = vsel %vm1623, %v3024, %v3023
      %v3026 = vrot.slane %v2942, 4
      %v3027 = vsel %vm1626, %v3026, %v3025
      %v3028 = vrot.slane %v2943, 3
      %v3029 = vsel %vm1629, %v3028, %v3027
      %v3030 = vrot.slane %v2944, 2
      %v3031 = vsel %vm1632, %v3030, %v3029
      %v3032 = vrot.slane %v2945, 1
      %v3033 = vsel %vm1635, %v3032, %v3031
      %v3034 = vrot.slane %v2947, 7
      %v3035 = vsel %vm1617, %v3034, %v2946
      %v3036 = vrot.slane %v2948, 6
      %v3037 = vsel %vm1620, %v3036, %v3035
      %v3038 = vrot.slane %v2949, 5
      %v3039 = vsel %vm1623, %v3038, %v3037
      %v3040 = vrot.slane %v2950, 4
      %v3041 = vsel %vm1626, %v3040, %v3039
      %v3042 = vrot.slane %v2951, 3
      %v3043 = vsel %vm1629, %v3042, %v3041
      %v3044 = vrot.slane %v2952, 2
      %v3045 = vsel %vm1632, %v3044, %v3043
      %v3046 = vrot.slane %v2953, 1
      %v3047 = vsel %vm1635, %v3046, %v3045
      %v3048 = vrot.slane %v2955, 7
      %v3049 = vsel %vm1617, %v3048, %v2954
      %v3050 = vrot.slane %v2956, 6
      %v3051 = vsel %vm1620, %v3050, %v3049
      %v3052 = vrot.slane %v2957, 5
      %v3053 = vsel %vm1623, %v3052, %v3051
      %v3054 = vrot.slane %v2958, 4
      %v3055 = vsel %vm1626, %v3054, %v3053
      %v3056 = vrot.slane %v2959, 3
      %v3057 = vsel %vm1629, %v3056, %v3055
      %v3058 = vrot.slane %v2960, 2
      %v3059 = vsel %vm1632, %v3058, %v3057
      %v3060 = vrot.slane %v2961, 1
      %v3061 = vsel %vm1635, %v3060, %v3059
      %v3062 = vrot.slane %v2963, 7
      %v3063 = vsel %vm1617, %v3062, %v2962
      %v3064 = vrot.slane %v2964, 6
      %v3065 = vsel %vm1620, %v3064, %v3063
      %v3066 = vrot.slane %v2965, 5
      %v3067 = vsel %vm1623, %v3066, %v3065
      %v3068 = vrot.slane %v2966, 4
      %v3069 = vsel %vm1626, %v3068, %v3067
      %v3070 = vrot.slane %v2967, 3
      %v3071 = vsel %vm1629, %v3070, %v3069
      %v3072 = vrot.slane %v2968, 2
      %v3073 = vsel %vm1632, %v3072, %v3071
      %v3074 = vrot.slane %v2969, 1
      %v3075 = vsel %vm1635, %v3074, %v3073
      %v3076 = vrot.slane %v2971, 7
      %v3077 = vsel %vm1617, %v3076, %v2970
      %v3078 = vrot.slane %v2972, 6
      %v3079 = vsel %vm1620, %v3078, %v3077
      %v3080 = vrot.slane %v2973, 5
      %v3081 = vsel %vm1623, %v3080, %v3079
      %v3082 = vrot.slane %v2974, 4
      %v3083 = vsel %vm1626, %v3082, %v3081
      %v3084 = vrot.slane %v2975, 3
      %v3085 = vsel %vm1629, %v3084, %v3083
      %v3086 = vrot.slane %v2976, 2
      %v3087 = vsel %vm1632, %v3086, %v3085
      %v3088 = vrot.slane %v2977, 1
      %v3089 = vsel %vm1635, %v3088, %v3087
      %v3090 = vpack.c.b16 %v3005, %v2991
      %v3091 = vpack.c.b16 %v3033, %v3019
      %v3092 = vpack.c.b16 %v3061, %v3047
      %v3093 = vpack.c.b16 %v3089, %v3075
      %v3114 = vunpack.c.l.b16 %v2834
      %v3115 = vunpack.c.l.b16 %v2835
      %v3116 = vunpack.c.l.b16 %v2836
      %v3117 = vunpack.c.l.b16 %v2837
      %v3118 = vunpack.c.l.b16 %v2838
      %v3119 = vunpack.c.l.b16 %v2839
      %v3120 = vunpack.c.l.b16 %v2840
      %v3121 = vunpack.c.l.b16 %v2841
      %v3122 = vunpack.c.l.b16 %v2842
      %v3123 = vunpack.c.l.b16 %v2843
      %v3124 = vunpack.c.l.b16 %v2844
      %v3125 = vunpack.c.l.b16 %v2845
      %v3126 = vunpack.c.l.b16 %v2846
      %v3127 = vunpack.c.l.b16 %v2847
      %v3128 = vunpack.c.l.b16 %v2848
      %v3129 = vunpack.c.l.b16 %v2849
      %v3130 = vpack.c.b16 %v3115, %v3114
      %v3131 = vpack.c.b16 %v3117, %v3116
      %v3132 = vpack.c.b16 %v3119, %v3118
      %v3133 = vpack.c.b16 %v3121, %v3120
      %v3134 = vpack.c.b16 %v3123, %v3122
      %v3135 = vpack.c.b16 %v3125, %v3124
      %v3136 = vpack.c.b16 %v3127, %v3126
      %v3137 = vpack.c.b16 %v3129, %v3128
      %3146 = vmatpush.bf16.msra.mxu0 %v3137
      %3147 = vmatpush.bf16.msra.mxu0 %v3136
      %3148 = vmatpush.bf16.msra.mxu0 %v3135
      %3149 = vmatpush.bf16.msra.mxu0 %v3134
      %3150 = vmatpush.bf16.msra.mxu0 %v3133
      %3151 = vmatpush.bf16.msra.mxu0 %v3132
      %3152 = vmatpush.bf16.msra.mxu0 %v3131
      %3153 = vmatpush.bf16.msra.mxu0 %v3130
      %3154 = vmatmul.bf16.gmra.mxu0 %v3090
      %v3155 = vpop.f32.mrf.mxu0
      %v3156 = vadd.f32 0.0, %v3155
      %v3157 = vpop.f32.mrf.mxu0
      %v3158 = vadd.f32 0.0, %v3157
      %3159 = vmatmul.bf16.gmra.mxu0 %v3091
      %v3160 = vpop.f32.mrf.mxu0
      %v3161 = vadd.f32 0.0, %v3160
      %v3162 = vpop.f32.mrf.mxu0
      %v3163 = vadd.f32 0.0, %v3162
      %3164 = vmatmul.bf16.gmra.mxu0 %v3092
      %v3165 = vpop.f32.mrf.mxu0
      %v3166 = vadd.f32 0.0, %v3165
      %v3167 = vpop.f32.mrf.mxu0
      %v3168 = vadd.f32 0.0, %v3167
      %3169 = vmatmul.bf16.gmra.mxu0 %v3093
      %v3170 = vpop.f32.mrf.mxu0
      %v3171 = vadd.f32 0.0, %v3170
      %v3172 = vpop.f32.mrf.mxu0
      %v3173 = vadd.f32 0.0, %v3172
      %3174 = vdwg.mxu0
      %3175 = vst [vmem:[%s407] sm:$0xff] %v3156
      %3176 = vst [vmem:[%s407 + $0x8] sm:$0xff] %v3158
      %3177 = vst [vmem:[%s407 + $0x10] sm:$0xff] %v3161
      %3178 = vst [vmem:[%s407 + $0x18] sm:$0xff] %v3163
      %3179 = vst [vmem:[%s407 + $0x20] sm:$0xff] %v3166
      %3180 = vst [vmem:[%s407 + $0x28] sm:$0xff] %v3168
      %3181 = vst [vmem:[%s407 + $0x30] sm:$0xff] %v3171
      %3182 = vst [vmem:[%s407 + $0x38] sm:$0xff] %v3173
      // Predicated region
      $region49: #{bottleneck_pallas.6} parent=43 // pred_check
        %p3183 = pneg %p1828
      $region50: #{bottleneck_pallas.6} parent=43 // pred_check_branch
        %3185 = sbr.rel (%p3183) target = $region52
      $region51: #{bottleneck_pallas.6} parent=43 // pred_region
        %3186 = vst [vmem:[%s10] sm:$0x1] 0.0
        %3187 = vst [vmem:[%s11] sm:$0x1] 0.0
      $region52: #{bottleneck_pallas.6} parent=43 // pred_fallthru
        _
      %v3188 = vld [vmem:[%s10] sm:$0x1]
      %v3189 = vadd.f32 %v3156, %v3158
      %v3190 = vadd.f32 %v3189, %v3161
      %v3191 = vadd.f32 %v3190, %v3163
      %v3192 = vadd.f32 %v3191, %v3166
      %v3193 = vadd.f32 %v3192, %v3168
      %v3194 = vadd.f32 %v3193, %v3171
      %v3195 = vadd.f32 %v3194, %v3173
      %v3196 = vrot.slane %v3195, 4
      %v3197 = vadd.f32 %v3195, %v3196
      %v3198 = vrot.slane %v3197, 2
      %v3199 = vadd.f32 %v3197, %v3198
      %v3200 = vrot.slane %v3199, 1
      %v3201 = vadd.f32 %v3199, %v3200
      %v3202 = vadd.f32 %v3188, %v3201
      %3203 = vst [vmem:[%s10] sm:$0x1] %v3202
      %v3204 = vld [vmem:[%s11] sm:$0x1]
      %v3205 = vmul.f32 %v3156, %v3156
      %v3206 = vmul.f32 %v3158, %v3158
      %v3207 = vmul.f32 %v3161, %v3161
      %v3208 = vmul.f32 %v3163, %v3163
      %v3209 = vmul.f32 %v3166, %v3166
      %v3210 = vmul.f32 %v3168, %v3168
      %v3211 = vmul.f32 %v3171, %v3171
      %v3212 = vmul.f32 %v3173, %v3173
      %v3213 = vadd.f32 %v3205, %v3206
      %v3214 = vadd.f32 %v3213, %v3207
      %v3215 = vadd.f32 %v3214, %v3208
      %v3216 = vadd.f32 %v3215, %v3209
      %v3217 = vadd.f32 %v3216, %v3210
      %v3218 = vadd.f32 %v3217, %v3211
      %v3219 = vadd.f32 %v3218, %v3212
      %v3220 = vrot.slane %v3219, 4
      %v3221 = vadd.f32 %v3219, %v3220
      %v3222 = vrot.slane %v3221, 2
      %v3223 = vadd.f32 %v3221, %v3222
      %v3224 = vrot.slane %v3223, 1
      %v3225 = vadd.f32 %v3223, %v3224
      %v3226 = vadd.f32 %v3204, %v3225
      %3227 = vst [vmem:[%s11] sm:$0x1] %v3226
      %p3228 = scmp.lt.s32.totalorder %s23, 1
      %s3229 = scalar_select %p3228, %s23, 1
      %s3230 = smul.addr %s3229, 8
      %s3231 = smul.addr %s3230, 8
      %s3232 = scalar_lea.vmem %s6, %s3231
      %p3233 = scmp.lt.s32.totalorder %s23, 1
      %s3234 = scalar_select %p3233, %s23, 1
      %s3235 = smul.addr %s3234, 8
      %s3236 = smul.addr %s3235, 8
      %s3237 = scalar_lea.vmem %s9, %s3236
      // Predicated region
      $region53: #{bottleneck_pallas.6} parent=43 // pred_check
        %p3238 = pneg %p177
      $region54: #{bottleneck_pallas.6} parent=43 // pred_check_branch
        %3240 = sbr.rel (%p3238) target = $region56
      $region55: #{bottleneck_pallas.6} parent=43 // pred_region
        _
      $region56: #{bottleneck_pallas.6} parent=43 // pred_fallthru
        _
      // Predicated region
      $region57: #{bottleneck_pallas.6} parent=43 // pred_check
        %p3241 = pneg %p198
      $region58: #{bottleneck_pallas.6} parent=43 // pred_check_branch
        %3243 = sbr.rel (%p3241) target = $region60
      $region59: #{bottleneck_pallas.6} parent=43 // pred_region
        _
      $region60: #{bottleneck_pallas.6} parent=43 // pred_fallthru
        _
      // Predicated region
      $region61: #{bottleneck_pallas.6} parent=43 // pred_check
        %p3244 = pneg %p219
      $region62: #{bottleneck_pallas.6} parent=43 // pred_check_branch
        %3246 = sbr.rel (%p3244) target = $region64
      $region63: #{bottleneck_pallas.6} parent=43 // pred_region
        _
      $region64: #{bottleneck_pallas.6} parent=43 // pred_fallthru
        _
      // Predicated region
      $region65: #{bottleneck_pallas.6} parent=43 // pred_check
        %p3247 = pneg %p245
      $region66: #{bottleneck_pallas.6} parent=43 // pred_check_branch
        %3249 = sbr.rel (%p3247) target = $region68
      $region67: #{bottleneck_pallas.6} parent=43 // pred_region
        _
      $region68: #{bottleneck_pallas.6} parent=43 // pred_fallthru
        _
      // Predicated region
      $region69: #{bottleneck_pallas.6} parent=43 // pred_check
        %p3250 = pneg %p266
      $region70: #{bottleneck_pallas.6} parent=43 // pred_check_branch
        %3252 = sbr.rel (%p3250) target = $region72
      $region71: #{bottleneck_pallas.6} parent=43 // pred_region
        _
      $region72: #{bottleneck_pallas.6} parent=43 // pred_fallthru
        _
      // Predicated region
      $region73: #{bottleneck_pallas.6} parent=43 // pred_check
        %p3253 = pneg %p287
      $region74: #{bottleneck_pallas.6} parent=43 // pred_check_branch
        %3255 = sbr.rel (%p3253) target = $region76
      $region75: #{bottleneck_pallas.6} parent=43 // pred_region
        _
      $region76: #{bottleneck_pallas.6} parent=43 // pred_fallthru
        _
      // Predicated region
      $region77: #{bottleneck_pallas.6} parent=43 // pred_check
        %p3256 = pneg %p198
      $region78: #{bottleneck_pallas.6} parent=43 // pred_check_branch
        %3258 = sbr.rel (%p3256) target = $region80
      $region79: #{bottleneck_pallas.6} parent=43 // pred_region
        _
      $region80: #{bottleneck_pallas.6} parent=43 // pred_fallthru
        _
      // Predicated region
      $region81: #{bottleneck_pallas.6} parent=43 // pred_check
        %p3259 = pneg %p219
      $region82: #{bottleneck_pallas.6} parent=43 // pred_check_branch
        %3261 = sbr.rel (%p3259) target = $region84
      $region83: #{bottleneck_pallas.6} parent=43 // pred_region
        _
      $region84: #{bottleneck_pallas.6} parent=43 // pred_fallthru
        _
      // Predicated region
      $region85: #{bottleneck_pallas.6} parent=43 // pred_check
        %p3262 = pneg %p266
      $region86: #{bottleneck_pallas.6} parent=43 // pred_check_branch
        %3264 = sbr.rel (%p3262) target = $region88
      $region87: #{bottleneck_pallas.6} parent=43 // pred_region
        _
      $region88: #{bottleneck_pallas.6} parent=43 // pred_fallthru
        _
      // Predicated region
      $region89: #{bottleneck_pallas.6} parent=43 // pred_check
        %p3265 = pneg %p287
      $region90: #{bottleneck_pallas.6} parent=43 // pred_check_branch
        %3267 = sbr.rel (%p3265) target = $region92
      $region91: #{bottleneck_pallas.6} parent=43 // pred_region
        _
      $region92: #{bottleneck_pallas.6} parent=43 // pred_fallthru
        _
    $region44: #{bottleneck_pallas.6} parent=5 // pred_fallthru
      _
    %p3268 = scmp.le.s32.totalorder 2, %s18
    // Predicated region
    $region93: #{bottleneck_pallas.6} parent=5 // pred_check
      %p3269 = pneg %p3268
    $region94: #{bottleneck_pallas.6} parent=5 // pred_check_branch
      %3271 = sbr.rel (%p3269) target = $region96
    $region95: #{bottleneck_pallas.6} parent=5 // pred_region
      %s3272 = ssub.s32 %s18, 2
      // Predicated region
      $region97: #{bottleneck_pallas.6} parent=95 // pred_check
        %p3273 = pneg %p183
      $region98: #{bottleneck_pallas.6} parent=95 // pred_check_branch
        %3275 = sbr.rel (%p3273) target = $region100
      $region99: #{bottleneck_pallas.6} parent=95 // pred_region
        %p3276 = scmp.lt.s32.totalorder %s24, 1
        %s3277 = scalar_select %p3276, %s24, 1
        %s3278 = smul.addr %s3277, 8
        %s3279 = smul.addr %s3278, 8
        %s3280 = scalar_lea.vmem %s6, %s3279
      $region100: #{bottleneck_pallas.6} parent=95 // pred_fallthru
        _
      // Predicated region
      $region101: #{bottleneck_pallas.6} parent=95 // pred_check
        %p3281 = pneg %p251
      $region102: #{bottleneck_pallas.6} parent=95 // pred_check_branch
        %3283 = sbr.rel (%p3281) target = $region104
      $region103: #{bottleneck_pallas.6} parent=95 // pred_region
        %p3284 = scmp.lt.s32.totalorder %s24, 1
        %s3285 = scalar_select %p3284, %s24, 1
        %s3286 = smul.addr %s3285, 8
        %s3287 = smul.addr %s3286, 8
        %s3288 = scalar_lea.vmem %s9, %s3287
      $region104: #{bottleneck_pallas.6} parent=95 // pred_fallthru
        _
    $region96: #{bottleneck_pallas.6} parent=5 // pred_fallthru
      _
  $region6: #{bottleneck_pallas.6} parent=0 // loop_footer
    %s22 = sadd.s32 1, %s18
  $region7: #{bottleneck_pallas.6} parent=0 // loop_footer_branch
    %17 = sbr.rel target = $region3
  $region8: #{bottleneck_pallas.6} parent=0 // loop_exit
    _

// kernel: bottleneck_pallas.5
$region0: #{bottleneck_pallas.5}
  #allocation0 [shape = 'u32[]', space=smem, size = 0x4, offset = 0x4, fixed_abs, tag = 'smem constant byte address 0x4 - core index']
  #allocation1 [shape = 'u32[72,128]{1,0:T(1,128)}', space=vmem, size = 0x9000, scoped, tag = 'internal scratch']
  %s0 = inlined_call_operand.vmem [shape: f32[2,16,16,128], index: 0, kind: input, shape index: {}]
  %s1 = inlined_call_operand.vmem [shape: f32[1,128], index: 1, kind: input, shape index: {}]
  %s2 = inlined_call_operand.vmem [shape: f32[1,128], index: 2, kind: input, shape index: {}]
  %s3 = inlined_call_operand.vmem [shape: bf16[1152,128], index: 3, kind: input, shape index: {}]
  %s4 = inlined_call_operand.vmem [shape: f32[2,16,16,128], index: 4, kind: output, shape index: {0}]
  %s5 = inlined_call_operand.vmem [shape: f32[1,128], index: 5, kind: output, shape index: {1}]
  %s6 = inlined_call_operand.vmem [shape: f32[1,128], index: 6, kind: output, shape index: {2}]
  %7 = xla_tuple %s4, %s5, %s6
  %s8 = sld [smem:[#allocation0]]
  $region69: #{bottleneck_pallas.5} parent=0
    _
  %s10 = ssub.s32 1, %s8
  %s11 = scalar_select 0, %s10, %s8
  loop: start=0, step=1, limit=4
  $region2: #{bottleneck_pallas.5} parent=0 // loop_pre_header
    _
  $region3: #{bottleneck_pallas.5} parent=0 // loop_header
    %s13 = sphi 0, %s17
    %p14 = scmp.ge.s32.totalorder %s13, 4
    %s23 = sphi 0, %s25
    %s26 = sphi 0, %s23
    %s27 = sphi 0, %s26
    %s43 = sphi 0, %s27
    %s47 = sphi 0, %s47
    %s49 = sphi 0, %s47
    %s50 = sphi 0, %s49
    %s64 = sphi 0, %s50
    %s68 = sphi 0, %s68
    %s70 = sphi 0, %s68
    %s71 = sphi 0, %s70
    %s85 = sphi 0, %s71
    %s89 = sphi 0, %s89
    %s91 = sphi 0, %s89
    %s92 = sphi 0, %s91
    %s106 = sphi 0, %s92
    %s112 = sphi 0, %s114
    %s115 = sphi 0, %s112
    %s116 = sphi 0, %s115
    %s132 = sphi 0, %s116
    %s136 = sphi 0, %s136
    %s138 = sphi 0, %s136
    %s139 = sphi 0, %s138
    %s153 = sphi 0, %s139
    %s157 = sphi 0, %s157
    %s159 = sphi 0, %s157
    %s160 = sphi 0, %s159
    %s174 = sphi 0, %s160
  $region4: #{bottleneck_pallas.5} parent=0 // loop_header_branch
    %16 = sbr.rel (%p14) target = $region8
  $region5: #{bottleneck_pallas.5} parent=0 // loop_body
    %s18 = ssub.s32 %s13, 1
    %s19 = ssub.s32 %s13, 2
    %s20 = sadd.s32 %s13, 1
    %s21 = ssub.s32 %s13, %s20
    %p22 = scmp.eq.s32.totalorder %s21, 0
    %s24 = sadd.s32 %s23, 1
    %s25 = scalar_select %p22, %s23, %s24
    %p28 = pneg %p22
    %p29 = scmp.eq.s32.totalorder %s13, 1
    %p30 = por %p28, %p29
    %p31 = scmp.ne.s32.totalorder %s23, %s26
    %p32 = scmp.eq.s32.totalorder %s13, 0
    %p33 = por %p31, %p32
    %p34 = scmp.ne.s32.totalorder %s23, %s26
    %p35 = scmp.eq.s32.totalorder %s18, 1
    %p36 = por %p34, %p35
    %p37 = scmp.ne.s32.totalorder %s26, %s27
    %p38 = scmp.eq.s32.totalorder %s18, 0
    %p39 = por %p37, %p38
    %p40 = scmp.ne.s32.totalorder %s26, %s27
    %p41 = scmp.eq.s32.totalorder %s19, 1
    %p42 = por %p40, %p41
    %p44 = scmp.ne.s32.totalorder %s27, %s43
    %p45 = scmp.eq.s32.totalorder %s19, 0
    %p46 = por %p44, %p45
    %s48 = sadd.s32 %s47, 1
    %p51 = scmp.eq.s32.totalorder %s13, 1
    %p52 = scmp.ne.s32.totalorder %s47, %s49
    %p53 = scmp.eq.s32.totalorder %s13, 0
    %p54 = por %p52, %p53
    %p55 = scmp.ne.s32.totalorder %s47, %s49
    %p56 = scmp.eq.s32.totalorder %s18, 1
    %p57 = por %p55, %p56
    %p58 = scmp.ne.s32.totalorder %s49, %s50
    %p59 = scmp.eq.s32.totalorder %s18, 0
    %p60 = por %p58, %p59
    %p61 = scmp.ne.s32.totalorder %s49, %s50
    %p62 = scmp.eq.s32.totalorder %s19, 1
    %p63 = por %p61, %p62
    %p65 = scmp.ne.s32.totalorder %s50, %s64
    %p66 = scmp.eq.s32.totalorder %s19, 0
    %p67 = por %p65, %p66
    %s69 = sadd.s32 %s68, 1
    %p72 = scmp.eq.s32.totalorder %s13, 1
    %p73 = scmp.ne.s32.totalorder %s68, %s70
    %p74 = scmp.eq.s32.totalorder %s13, 0
    %p75 = por %p73, %p74
    %p76 = scmp.ne.s32.totalorder %s68, %s70
    %p77 = scmp.eq.s32.totalorder %s18, 1
    %p78 = por %p76, %p77
    %p79 = scmp.ne.s32.totalorder %s70, %s71
    %p80 = scmp.eq.s32.totalorder %s18, 0
    %p81 = por %p79, %p80
    %p82 = scmp.ne.s32.totalorder %s70, %s71
    %p83 = scmp.eq.s32.totalorder %s19, 1
    %p84 = por %p82, %p83
    %p86 = scmp.ne.s32.totalorder %s71, %s85
    %p87 = scmp.eq.s32.totalorder %s19, 0
    %p88 = por %p86, %p87
    %s90 = sadd.s32 %s89, 1
    %p93 = scmp.eq.s32.totalorder %s13, 1
    %p94 = scmp.ne.s32.totalorder %s89, %s91
    %p95 = scmp.eq.s32.totalorder %s13, 0
    %p96 = por %p94, %p95
    %p97 = scmp.ne.s32.totalorder %s89, %s91
    %p98 = scmp.eq.s32.totalorder %s18, 1
    %p99 = por %p97, %p98
    %p100 = scmp.ne.s32.totalorder %s91, %s92
    %p101 = scmp.eq.s32.totalorder %s18, 0
    %p102 = por %p100, %p101
    %p103 = scmp.ne.s32.totalorder %s91, %s92
    %p104 = scmp.eq.s32.totalorder %s19, 1
    %p105 = por %p103, %p104
    %p107 = scmp.ne.s32.totalorder %s92, %s106
    %p108 = scmp.eq.s32.totalorder %s19, 0
    %p109 = por %p107, %p108
    %s110 = ssub.s32 %s13, %s20
    %p111 = scmp.eq.s32.totalorder %s110, 0
    %s113 = sadd.s32 %s112, 1
    %s114 = scalar_select %p111, %s112, %s113
    %p117 = pneg %p111
    %p118 = scmp.eq.s32.totalorder %s13, 1
    %p119 = por %p117, %p118
    %p120 = scmp.ne.s32.totalorder %s112, %s115
    %p121 = scmp.eq.s32.totalorder %s13, 0
    %p122 = por %p120, %p121
    %p123 = scmp.ne.s32.totalorder %s112, %s115
    %p124 = scmp.eq.s32.totalorder %s18, 1
    %p125 = por %p123, %p124
    %p126 = scmp.ne.s32.totalorder %s115, %s116
    %p127 = scmp.eq.s32.totalorder %s18, 0
    %p128 = por %p126, %p127
    %p129 = scmp.ne.s32.totalorder %s115, %s116
    %p130 = scmp.eq.s32.totalorder %s19, 1
    %p131 = por %p129, %p130
    %p133 = scmp.ne.s32.totalorder %s116, %s132
    %p134 = scmp.eq.s32.totalorder %s19, 0
    %p135 = por %p133, %p134
    %s137 = sadd.s32 %s136, 1
    %p140 = scmp.eq.s32.totalorder %s13, 1
    %p141 = scmp.ne.s32.totalorder %s136, %s138
    %p142 = scmp.eq.s32.totalorder %s13, 0
    %p143 = por %p141, %p142
    %p144 = scmp.ne.s32.totalorder %s136, %s138
    %p145 = scmp.eq.s32.totalorder %s18, 1
    %p146 = por %p144, %p145
    %p147 = scmp.ne.s32.totalorder %s138, %s139
    %p148 = scmp.eq.s32.totalorder %s18, 0
    %p149 = por %p147, %p148
    %p150 = scmp.ne.s32.totalorder %s138, %s139
    %p151 = scmp.eq.s32.totalorder %s19, 1
    %p152 = por %p150, %p151
    %p154 = scmp.ne.s32.totalorder %s139, %s153
    %p155 = scmp.eq.s32.totalorder %s19, 0
    %p156 = por %p154, %p155
    %s158 = sadd.s32 %s157, 1
    %p161 = scmp.eq.s32.totalorder %s13, 1
    %p162 = scmp.ne.s32.totalorder %s157, %s159
    %p163 = scmp.eq.s32.totalorder %s13, 0
    %p164 = por %p162, %p163
    %p165 = scmp.ne.s32.totalorder %s157, %s159
    %p166 = scmp.eq.s32.totalorder %s18, 1
    %p167 = por %p165, %p166
    %p168 = scmp.ne.s32.totalorder %s159, %s160
    %p169 = scmp.eq.s32.totalorder %s18, 0
    %p170 = por %p168, %p169
    %p171 = scmp.ne.s32.totalorder %s159, %s160
    %p172 = scmp.eq.s32.totalorder %s19, 1
    %p173 = por %p171, %p172
    %p175 = scmp.ne.s32.totalorder %s160, %s174
    %p176 = scmp.eq.s32.totalorder %s19, 0
    %p177 = por %p175, %p176
    %p178 = scmp.le.s32.totalorder 1, %s13
    %p179 = scmp.lt.s32.totalorder %s13, 3
    %p180 = pnand %p178, %p179
    %p181 = pneg %p180
    // Predicated region
    $region9: #{bottleneck_pallas.5} parent=5 // pred_check
      _
    $region10: #{bottleneck_pallas.5} parent=5 // pred_check_branch
      %183 = sbr.rel (%p180) target = $region12
    $region11: #{bottleneck_pallas.5} parent=5 // pred_region
      %s184 = ssub.s32 %s13, 1
      // Predicated region
      $region13: #{bottleneck_pallas.5} parent=11 // pred_check
        %p185 = pneg %p60
      $region14: #{bottleneck_pallas.5} parent=11 // pred_check_branch
        %187 = sbr.rel (%p185) target = $region16
      $region15: #{bottleneck_pallas.5} parent=11 // pred_region
        _
      $region16: #{bottleneck_pallas.5} parent=11 // pred_fallthru
        _
      // Predicated region
      $region17: #{bottleneck_pallas.5} parent=11 // pred_check
        %p188 = pneg %p81
      $region18: #{bottleneck_pallas.5} parent=11 // pred_check_branch
        %190 = sbr.rel (%p188) target = $region20
      $region19: #{bottleneck_pallas.5} parent=11 // pred_region
        _
      $region20: #{bottleneck_pallas.5} parent=11 // pred_fallthru
        _
      // Predicated region
      $region21: #{bottleneck_pallas.5} parent=11 // pred_check
        %p191 = pneg %p102
      $region22: #{bottleneck_pallas.5} parent=11 // pred_check_branch
        %193 = sbr.rel (%p191) target = $region24
      $region23: #{bottleneck_pallas.5} parent=11 // pred_region
        _
      $region24: #{bottleneck_pallas.5} parent=11 // pred_fallthru
        _
    $region12: #{bottleneck_pallas.5} parent=5 // pred_fallthru
      _
    %p194 = scmp.lt.s32.totalorder %s13, 2
    // Predicated region
    $region25: #{bottleneck_pallas.5} parent=5 // pred_check
      %p195 = pneg %p194
    $region26: #{bottleneck_pallas.5} parent=5 // pred_check_branch
      %197 = sbr.rel (%p195) target = $region28
    $region27: #{bottleneck_pallas.5} parent=5 // pred_region
      // Predicated region
      $region29: #{bottleneck_pallas.5} parent=27 // pred_check
        %p198 = pneg %p33
      $region30: #{bottleneck_pallas.5} parent=27 // pred_check_branch
        %200 = sbr.rel (%p198) target = $region32
      $region31: #{bottleneck_pallas.5} parent=27 // pred_region
        %p201 = scmp.lt.s32.totalorder %s13, 1
        %s202 = scalar_select %p201, %s13, 1
        %s203 = smul.addr %s202, 32
        %s204 = smul.addr %s203, 8
        %s205 = scalar_lea.vmem %s0, %s204
      $region32: #{bottleneck_pallas.5} parent=27 // pred_fallthru
        _
    $region28: #{bottleneck_pallas.5} parent=5 // pred_fallthru
      _
    %p206 = scmp.le.s32.totalorder 1, %s13
    %p207 = scmp.lt.s32.totalorder %s13, 3
    %p208 = pnand %p206, %p207
    %p209 = pneg %p208
    // Predicated region
    $region33: #{bottleneck_pallas.5} parent=5 // pred_check
      _
    $region34: #{bottleneck_pallas.5} parent=5 // pred_check_branch
      %211 = sbr.rel (%p208) target = $region36
    $region35: #{bottleneck_pallas.5} parent=5 // pred_region
      %s212 = ssub.s32 %s13, 1
      %p213 = scmp.lt.s32.totalorder %s18, 1
      %s214 = scalar_select %p213, %s18, 1
      %s215 = smul.addr %s214, 32
      %s216 = smul.addr %s215, 8
      %s217 = scalar_lea.vmem %s0, %s216
      %p218 = pneg %p39
      %p219 = pneg %p36
      %p220 = pneg %p60
      %p221 = pneg %p57
      %p222 = pneg %p81
      %p223 = pneg %p78
      %p224 = pneg %p102
      %p225 = pneg %p99
      %p226 = pneg %p128
      %p227 = pneg %p125
      %p228 = scmp.lt.s32.totalorder %s18, 1
      %s229 = scalar_select %p228, %s18, 1
      %s230 = smul.addr %s229, 32
      %s231 = smul.addr %s230, 8
      %s232 = scalar_lea.vmem %s4, %s231
      %p233 = pneg %p149
      %p234 = pneg %p146
      %p235 = pneg %p170
      %p236 = pneg %p167
      %p237 = scmp.lt.s32.totalorder %s18, 1
      %s238 = scalar_select %p237, %s18, 1
      %s239 = smul.addr %s238, 32
      %s240 = smul.addr %s239, 8
      %s241 = scalar_lea.vmem %s0, %s240
      %p242 = scmp.lt.s32.totalorder %s18, 1
      %s243 = scalar_select %p242, %s18, 1
      %s244 = smul.addr %s243, 32
      %s245 = smul.addr %s244, 8
      %s246 = scalar_lea.vmem %s4, %s245
      %v250 = vld [vmem:[%s241] sm:$0xff]
      %v251 = vld [vmem:[%s241 + $0x8] sm:$0xff]
      %v252 = vld [vmem:[%s241 + $0x10] sm:$0xff]
      %v253 = vld [vmem:[%s241 + $0x18] sm:$0xff]
      %v254 = vld [vmem:[%s241 + $0x20] sm:$0xff]
      %v255 = vld [vmem:[%s241 + $0x28] sm:$0xff]
      %v256 = vld [vmem:[%s241 + $0x30] sm:$0xff]
      %v257 = vld [vmem:[%s241 + $0x38] sm:$0xff]
      %v258 = vld [vmem:[%s241 + $0x40] sm:$0xff]
      %v259 = vld [vmem:[%s241 + $0x48] sm:$0xff]
      %v260 = vld [vmem:[%s241 + $0x50] sm:$0xff]
      %v261 = vld [vmem:[%s241 + $0x58] sm:$0xff]
      %v262 = vld [vmem:[%s241 + $0x60] sm:$0xff]
      %v263 = vld [vmem:[%s241 + $0x68] sm:$0xff]
      %v264 = vld [vmem:[%s241 + $0x70] sm:$0xff]
      %v265 = vld [vmem:[%s241 + $0x78] sm:$0xff]
      %v266 = vld [vmem:[%s241 + $0x80] sm:$0xff]
      %v267 = vld [vmem:[%s241 + $0x88] sm:$0xff]
      %v268 = vld [vmem:[%s241 + $0x90] sm:$0xff]
      %v269 = vld [vmem:[%s241 + $0x98] sm:$0xff]
      %v270 = vld [vmem:[%s241 + $0xa0] sm:$0xff]
      %v271 = vld [vmem:[%s241 + $0xa8] sm:$0xff]
      %v272 = vld [vmem:[%s241 + $0xb0] sm:$0xff]
      %v273 = vld [vmem:[%s241 + $0xb8] sm:$0xff]
      %v274 = vld [vmem:[%s241 + $0xc0] sm:$0xff]
      %v275 = vld [vmem:[%s241 + $0xc8] sm:$0xff]
      %v276 = vld [vmem:[%s241 + $0xd0] sm:$0xff]
      %v277 = vld [vmem:[%s241 + $0xd8] sm:$0xff]
      %v278 = vld [vmem:[%s241 + $0xe0] sm:$0xff]
      %v279 = vld [vmem:[%s241 + $0xe8] sm:$0xff]
      %v280 = vld [vmem:[%s241 + $0xf0] sm:$0xff]
      %v281 = vld [vmem:[%s241 + $0xf8] sm:$0xff]
      %v282 = vld [vmem:[%s1] sm:$0x1]
      %v284 = vperm.slane %v282, 0
      %v286 = vmul.f32 %v250, %v284
      %v287 = vmul.f32 %v251, %v284
      %v288 = vmul.f32 %v252, %v284
      %v289 = vmul.f32 %v253, %v284
      %v290 = vmul.f32 %v254, %v284
      %v291 = vmul.f32 %v255, %v284
      %v292 = vmul.f32 %v256, %v284
      %v293 = vmul.f32 %v257, %v284
      %v294 = vmul.f32 %v258, %v284
      %v295 = vmul.f32 %v259, %v284
      %v296 = vmul.f32 %v260, %v284
      %v297 = vmul.f32 %v261, %v284
      %v298 = vmul.f32 %v262, %v284
      %v299 = vmul.f32 %v263, %v284
      %v300 = vmul.f32 %v264, %v284
      %v301 = vmul.f32 %v265, %v284
      %v302 = vmul.f32 %v266, %v284
      %v303 = vmul.f32 %v267, %v284
      %v304 = vmul.f32 %v268, %v284
      %v305 = vmul.f32 %v269, %v284
      %v306 = vmul.f32 %v270, %v284
      %v307 = vmul.f32 %v271, %v284
      %v308 = vmul.f32 %v272, %v284
      %v309 = vmul.f32 %v273, %v284
      %v310 = vmul.f32 %v274, %v284
      %v311 = vmul.f32 %v275, %v284
      %v312 = vmul.f32 %v276, %v284
      %v313 = vmul.f32 %v277, %v284
      %v314 = vmul.f32 %v278, %v284
      %v315 = vmul.f32 %v279, %v284
      %v316 = vmul.f32 %v280, %v284
      %v317 = vmul.f32 %v281, %v284
      %v318 = vld [vmem:[%s2] sm:$0x1]
      %v320 = vperm.slane %v318, 0
      %v322 = vadd.f32 %v286, %v320
      %v323 = vadd.f32 %v287, %v320
      %v324 = vadd.f32 %v288, %v320
      %v325 = vadd.f32 %v289, %v320
      %v326 = vadd.f32 %v290, %v320
      %v327 = vadd.f32 %v291, %v320
      %v328 = vadd.f32 %v292, %v320
      %v329 = vadd.f32 %v293, %v320
      %v330 = vadd.f32 %v294, %v320
      %v331 = vadd.f32 %v295, %v320
      %v332 = vadd.f32 %v296, %v320
      %v333 = vadd.f32 %v297, %v320
      %v334 = vadd.f32 %v298, %v320
      %v335 = vadd.f32 %v299, %v320
      %v336 = vadd.f32 %v300, %v320
      %v337 = vadd.f32 %v301, %v320
      %v338 = vadd.f32 %v302, %v320
      %v339 = vadd.f32 %v303, %v320
      %v340 = vadd.f32 %v304, %v320
      %v341 = vadd.f32 %v305, %v320
      %v342 = vadd.f32 %v306, %v320
      %v343 = vadd.f32 %v307, %v320
      %v344 = vadd.f32 %v308, %v320
      %v345 = vadd.f32 %v309, %v320
      %v346 = vadd.f32 %v310, %v320
      %v347 = vadd.f32 %v311, %v320
      %v348 = vadd.f32 %v312, %v320
      %v349 = vadd.f32 %v313, %v320
      %v350 = vadd.f32 %v314, %v320
      %v351 = vadd.f32 %v315, %v320
      %v352 = vadd.f32 %v316, %v320
      %v353 = vadd.f32 %v317, %v320
      %v354 = vmax.f32 %v322, 0.0
      %v355 = vmax.f32 %v323, 0.0
      %v356 = vmax.f32 %v324, 0.0
      %v357 = vmax.f32 %v325, 0.0
      %v358 = vmax.f32 %v326, 0.0
      %v359 = vmax.f32 %v327, 0.0
      %v360 = vmax.f32 %v328, 0.0
      %v361 = vmax.f32 %v329, 0.0
      %v362 = vmax.f32 %v330, 0.0
      %v363 = vmax.f32 %v331, 0.0
      %v364 = vmax.f32 %v332, 0.0
      %v365 = vmax.f32 %v333, 0.0
      %v366 = vmax.f32 %v334, 0.0
      %v367 = vmax.f32 %v335, 0.0
      %v368 = vmax.f32 %v336, 0.0
      %v369 = vmax.f32 %v337, 0.0
      %v370 = vmax.f32 %v338, 0.0
      %v371 = vmax.f32 %v339, 0.0
      %v372 = vmax.f32 %v340, 0.0
      %v373 = vmax.f32 %v341, 0.0
      %v374 = vmax.f32 %v342, 0.0
      %v375 = vmax.f32 %v343, 0.0
      %v376 = vmax.f32 %v344, 0.0
      %v377 = vmax.f32 %v345, 0.0
      %v378 = vmax.f32 %v346, 0.0
      %v379 = vmax.f32 %v347, 0.0
      %v380 = vmax.f32 %v348, 0.0
      %v381 = vmax.f32 %v349, 0.0
      %v382 = vmax.f32 %v350, 0.0
      %v383 = vmax.f32 %v351, 0.0
      %v384 = vmax.f32 %v352, 0.0
      %v385 = vmax.f32 %v353, 0.0
      %v386 = vpack.c.bf16 %v354, %v354
      %v387 = vpack.c.bf16 %v355, %v355
      %v388 = vpack.c.bf16 %v356, %v356
      %v389 = vpack.c.bf16 %v357, %v357
      %v390 = vpack.c.bf16 %v358, %v358
      %v391 = vpack.c.bf16 %v359, %v359
      %v392 = vpack.c.bf16 %v360, %v360
      %v393 = vpack.c.bf16 %v361, %v361
      %v394 = vpack.c.bf16 %v362, %v362
      %v395 = vpack.c.bf16 %v363, %v363
      %v396 = vpack.c.bf16 %v364, %v364
      %v397 = vpack.c.bf16 %v365, %v365
      %v398 = vpack.c.bf16 %v366, %v366
      %v399 = vpack.c.bf16 %v367, %v367
      %v400 = vpack.c.bf16 %v368, %v368
      %v401 = vpack.c.bf16 %v369, %v369
      %v402 = vpack.c.bf16 %v370, %v370
      %v403 = vpack.c.bf16 %v371, %v371
      %v404 = vpack.c.bf16 %v372, %v372
      %v405 = vpack.c.bf16 %v373, %v373
      %v406 = vpack.c.bf16 %v374, %v374
      %v407 = vpack.c.bf16 %v375, %v375
      %v408 = vpack.c.bf16 %v376, %v376
      %v409 = vpack.c.bf16 %v377, %v377
      %v410 = vpack.c.bf16 %v378, %v378
      %v411 = vpack.c.bf16 %v379, %v379
      %v412 = vpack.c.bf16 %v380, %v380
      %v413 = vpack.c.bf16 %v381, %v381
      %v414 = vpack.c.bf16 %v382, %v382
      %v415 = vpack.c.bf16 %v383, %v383
      %v416 = vpack.c.bf16 %v384, %v384
      %v417 = vpack.c.bf16 %v385, %v385
      %v418 = vlaneseq
      %v419 = vshrl.u32 %v418, 7
      %v420 = vadd.s32 %v419, 8
      %v451 = vunpack.c.l.b16 %v386
      %v452 = vunpack.c.l.b16 %v387
      %v453 = vunpack.c.l.b16 %v388
      %v454 = vunpack.c.l.b16 %v389
      %v455 = vunpack.c.l.b16 %v390
      %v456 = vunpack.c.l.b16 %v391
      %v457 = vunpack.c.l.b16 %v392
      %v458 = vunpack.c.l.b16 %v393
      %v459 = vunpack.c.l.b16 %v394
      %v460 = vunpack.c.l.b16 %v395
      %v461 = vunpack.c.l.b16 %v396
      %v462 = vunpack.c.l.b16 %v397
      %v463 = vunpack.c.l.b16 %v398
      %v464 = vunpack.c.l.b16 %v399
      %v465 = vunpack.c.l.b16 %v400
      %v466 = vunpack.c.l.b16 %v401
      %v467 = vunpack.c.l.b16 %v402
      %v468 = vunpack.c.l.b16 %v403
      %v469 = vunpack.c.l.b16 %v404
      %v470 = vunpack.c.l.b16 %v405
      %v471 = vunpack.c.l.b16 %v406
      %v472 = vunpack.c.l.b16 %v407
      %v473 = vunpack.c.l.b16 %v408
      %v474 = vunpack.c.l.b16 %v409
      %v475 = vunpack.c.l.b16 %v410
      %v476 = vunpack.c.l.b16 %v411
      %v477 = vunpack.c.l.b16 %v412
      %v478 = vunpack.c.l.b16 %v413
      %v479 = vunpack.c.l.b16 %v414
      %v480 = vunpack.c.l.b16 %v415
      %v481 = vpack.c.b16 %v452, %v451
      %v482 = vpack.c.b16 %v454, %v453
      %v483 = vpack.c.b16 %v456, %v455
      %v484 = vpack.c.b16 %v458, %v457
      %v485 = vpack.c.b16 %v460, %v459
      %v486 = vpack.c.b16 %v462, %v461
      %v487 = vpack.c.b16 %v464, %v463
      %v488 = vpack.c.b16 %v466, %v465
      %v489 = vpack.c.b16 %v468, %v467
      %v490 = vpack.c.b16 %v470, %v469
      %v491 = vpack.c.b16 %v472, %v471
      %v492 = vpack.c.b16 %v474, %v473
      %v493 = vpack.c.b16 %v476, %v475
      %v494 = vpack.c.b16 %v478, %v477
      %v495 = vpack.c.b16 %v480, %v479
      %vm496 = vsmask.f32 256
      %v498 = vshrl.u32 %v481, 16
      %v500 = vrot.slane %v498, 7
      %v501 = vshll.u32 %v481, 16
      %v503 = vor.u32 %v500, %v501
      %v505 = vshrl.u32 %v482, 16
      %v507 = vrot.slane %v505, 7
      %v508 = vshll.u32 %v482, 16
      %v510 = vor.u32 %v507, %v508
      %v511 = vsel %vm496, %v500, %v510
      %v513 = vshrl.u32 %v483, 16
      %v515 = vrot.slane %v513, 7
      %v516 = vshll.u32 %v483, 16
      %v518 = vor.u32 %v515, %v516
      %v519 = vsel %vm496, %v507, %v518
      %v521 = vshrl.u32 %v484, 16
      %v523 = vrot.slane %v521, 7
      %v524 = vshll.u32 %v484, 16
      %v526 = vor.u32 %v523, %v524
      %v527 = vsel %vm496, %v515, %v526
      %v529 = vshrl.u32 %v485, 16
      %v531 = vrot.slane %v529, 7
      %v532 = vshll.u32 %v485, 16
      %v534 = vor.u32 %v531, %v532
      %v535 = vsel %vm496, %v523, %v534
      %v537 = vshrl.u32 %v486, 16
      %v539 = vrot.slane %v537, 7
      %v540 = vshll.u32 %v486, 16
      %v542 = vor.u32 %v539, %v540
      %v543 = vsel %vm496, %v531, %v542
      %v545 = vshrl.u32 %v487, 16
      %v547 = vrot.slane %v545, 7
      %v548 = vshll.u32 %v487, 16
      %v550 = vor.u32 %v547, %v548
      %v551 = vsel %vm496, %v539, %v550
      %v553 = vshrl.u32 %v488, 16
      %v555 = vrot.slane %v553, 7
      %v556 = vshll.u32 %v488, 16
      %v558 = vor.u32 %v555, %v556
      %v559 = vsel %vm496, %v547, %v558
      %v561 = vshrl.u32 %v489, 16
      %v563 = vrot.slane %v561, 7
      %v564 = vshll.u32 %v489, 16
      %v566 = vor.u32 %v563, %v564
      %v567 = vsel %vm496, %v555, %v566
      %v569 = vshrl.u32 %v490, 16
      %v571 = vrot.slane %v569, 7
      %v572 = vshll.u32 %v490, 16
      %v574 = vor.u32 %v571, %v572
      %v575 = vsel %vm496, %v563, %v574
      %v577 = vshrl.u32 %v491, 16
      %v579 = vrot.slane %v577, 7
      %v580 = vshll.u32 %v491, 16
      %v582 = vor.u32 %v579, %v580
      %v583 = vsel %vm496, %v571, %v582
      %v585 = vshrl.u32 %v492, 16
      %v587 = vrot.slane %v585, 7
      %v588 = vshll.u32 %v492, 16
      %v590 = vor.u32 %v587, %v588
      %v591 = vsel %vm496, %v579, %v590
      %v593 = vshrl.u32 %v493, 16
      %v595 = vrot.slane %v593, 7
      %v596 = vshll.u32 %v493, 16
      %v598 = vor.u32 %v595, %v596
      %v599 = vsel %vm496, %v587, %v598
      %v601 = vshrl.u32 %v494, 16
      %v603 = vrot.slane %v601, 7
      %v604 = vshll.u32 %v494, 16
      %v606 = vor.u32 %v603, %v604
      %v607 = vsel %vm496, %v595, %v606
      %v609 = vshrl.u32 %v495, 16
      %v611 = vrot.slane %v609, 7
      %v612 = vshll.u32 %v495, 16
      %v614 = vor.u32 %v611, %v612
      %v615 = vsel %vm496, %v603, %v614
      %vm631 = vcmask 1040384
      %vm632 = vmand %vm631, %vm496
      %v633 = vsel %vm632, 0, %v503
      %vm634 = vcmp.gt.s32.totalorder %v419, 0
      %vm635 = vcmp.gt.s32.totalorder %v420, 0
      %v636 = vsel %vm634, 1, 0
      %v637 = vsel %vm635, 1, 0
      %vm638 = vcmp.eq.s32.totalorder %v636, 1
      %vm639 = vcmp.eq.s32.totalorder %v637, 1
      %vm640 = vmpackc.low %vm638, %vm638
      %vm641 = vmpackc.low %vm639, %vm639
      %v642 = vsel %vm640, 65537, 0
      %v643 = vsel %vm641, 65537, 0
      %v644 = vunpack.c.l.b16 %v642
      %v645 = vunpack.c.l.b16 %v643
      %v646 = vpack.c.b16 %v645, %v644
      %v647 = vunpack.c.l.b16 %v646
      %v648 = vunpack.c.h.b16 %v646
      %v649 = vunpack.c.l.b16 0
      %v650 = vunpack.c.h.b16 0
      %vm651 = vcmp.ne.s32.totalorder %v647, %v649
      %vm652 = vcmp.ne.s32.totalorder %v648, %v650
      %vm653 = vmpackc.low %vm652, %vm651
      %v654 = vsel %vm653, %v633, 0
      %v655 = vsel %vm653, %v511, 0
      %v656 = vsel %vm653, %v519, 0
      %v657 = vsel %vm653, %v527, 0
      %v658 = vsel %vm653, %v535, 0
      %v659 = vsel %vm653, %v543, 0
      %v660 = vsel %vm653, %v551, 0
      %v661 = vsel %vm653, %v559, 0
      %v662 = vsel %vm653, %v567, 0
      %v663 = vsel %vm653, %v575, 0
      %v664 = vsel %vm653, %v583, 0
      %v665 = vsel %vm653, %v591, 0
      %v666 = vsel %vm653, %v599, 0
      %v667 = vsel %vm653, %v607, 0
      %v668 = vsel %vm653, %v615, 0
      %v685 = vunpack.c.l.b16 %v416
      %v686 = vpack.c.b16 %v685, %v685
      %vm687 = vsmask.f32 7424
      %v688 = vrot.slane %v501, 1
      %v689 = vor.u32 %v498, %v688
      %v690 = vrot.slane %v508, 1
      %v691 = vsel %vm687, %v689, %v690
      %v692 = vor.u32 %v505, %v690
      %v693 = vrot.slane %v516, 1
      %v694 = vsel %vm687, %v692, %v693
      %v695 = vor.u32 %v513, %v693
      %v696 = vrot.slane %v524, 1
      %v697 = vsel %vm687, %v695, %v696
      %v698 = vor.u32 %v521, %v696
      %v699 = vrot.slane %v532, 1
      %v700 = vsel %vm687, %v698, %v699
      %v701 = vor.u32 %v529, %v699
      %v702 = vrot.slane %v540, 1
      %v703 = vsel %vm687, %v701, %v702
      %v704 = vor.u32 %v537, %v702
      %v705 = vrot.slane %v548, 1
      %v706 = vsel %vm687, %v704, %v705
      %v707 = vor.u32 %v545, %v705
      %v708 = vrot.slane %v556, 1
      %v709 = vsel %vm687, %v707, %v708
      %v710 = vor.u32 %v553, %v708
      %v711 = vrot.slane %v564, 1
      %v712 = vsel %vm687, %v710, %v711
      %v713 = vor.u32 %v561, %v711
      %v714 = vrot.slane %v572, 1
      %v715 = vsel %vm687, %v713, %v714
      %v716 = vor.u32 %v569, %v714
      %v717 = vrot.slane %v580, 1
      %v718 = vsel %vm687, %v716, %v717
      %v719 = vor.u32 %v577, %v717
      %v720 = vrot.slane %v588, 1
      %v721 = vsel %vm687, %v719, %v720
      %v722 = vor.u32 %v585, %v720
      %v723 = vrot.slane %v596, 1
      %v724 = vsel %vm687, %v722, %v723
      %v725 = vor.u32 %v593, %v723
      %v726 = vrot.slane %v604, 1
      %v727 = vsel %vm687, %v725, %v726
      %v728 = vor.u32 %v601, %v726
      %v729 = vrot.slane %v612, 1
      %v730 = vsel %vm687, %v728, %v729
      %v731 = vor.u32 %v609, %v729
      %v733 = vshll.u32 %v686, 16
      %v735 = vrot.slane %v733, 1
      %v736 = vsel %vm687, %v731, %v735
      %vm753 = vcmask 1047552
      %vm754 = vmand %vm753, %vm687
      %v755 = vsel %vm754, 0, %v688
      %vm756 = vcmp.lt.s32.totalorder %v419, 15
      %vm757 = vcmp.lt.s32.totalorder %v420, 15
      %v758 = vsel %vm756, 1, 0
      %v759 = vsel %vm757, 1, 0
      %vm760 = vcmp.eq.s32.totalorder %v758, 1
      %vm761 = vcmp.eq.s32.totalorder %v759, 1
      %vm762 = vmpackc.low %vm760, %vm760
      %vm763 = vmpackc.low %vm761, %vm761
      %v764 = vsel %vm762, 65537, 0
      %v765 = vsel %vm763, 65537, 0
      %v766 = vunpack.c.l.b16 %v764
      %v767 = vunpack.c.l.b16 %v765
      %v768 = vpack.c.b16 %v767, %v766
      %v769 = vunpack.c.l.b16 %v768
      %v770 = vunpack.c.h.b16 %v768
      %v771 = vunpack.c.l.b16 0
      %v772 = vunpack.c.h.b16 0
      %vm773 = vcmp.ne.s32.totalorder %v769, %v771
      %vm774 = vcmp.ne.s32.totalorder %v770, %v772
      %vm775 = vmpackc.low %vm774, %vm773
      %v776 = vsel %vm775, %v755, 0
      %v777 = vsel %vm775, %v691, 0
      %v778 = vsel %vm775, %v694, 0
      %v779 = vsel %vm775, %v697, 0
      %v780 = vsel %vm775, %v700, 0
      %v781 = vsel %vm775, %v703, 0
      %v782 = vsel %vm775, %v706, 0
      %v783 = vsel %vm775, %v709, 0
      %v784 = vsel %vm775, %v712, 0
      %v785 = vsel %vm775, %v715, 0
      %v786 = vsel %vm775, %v718, 0
      %v787 = vsel %vm775, %v721, 0
      %v788 = vsel %vm775, %v724, 0
      %v789 = vsel %vm775, %v727, 0
      %v790 = vsel %vm775, %v730, 0
      %v791 = vsel %vm775, %v736, 0
      %v793 = vunpack.c.l.b16 %v417
      %v794 = vpack.c.b16 %v793, %v685
      %v796 = vshrl.u32 %v794, 16
      %v798 = vrot.slane %v796, 7
      %v799 = vshll.u32 %v794, 16
      %v801 = vor.u32 %v798, %v799
      %v802 = vsel %vm496, %v611, %v801
      %v804 = vsel %vm653, %v802, 0
      %v805 = vrot.slane %v799, 1
      %v806 = vsel %vm687, %v731, %v805
      %v807 = vor.u32 %v796, %v805
      %v810 = vsel %vm754, %v807, 0
      %v811 = vsel %vm775, %v806, 0
      %v812 = vsel %vm775, %v810, 0
      %v813 = vpack.c.b16 %v453, %v452
      %v814 = vpack.c.b16 %v455, %v454
      %v815 = vpack.c.b16 %v457, %v456
      %v816 = vpack.c.b16 %v459, %v458
      %v817 = vpack.c.b16 %v461, %v460
      %v818 = vpack.c.b16 %v463, %v462
      %v819 = vpack.c.b16 %v465, %v464
      %v820 = vpack.c.b16 %v467, %v466
      %v821 = vpack.c.b16 %v469, %v468
      %v822 = vpack.c.b16 %v471, %v470
      %v823 = vpack.c.b16 %v473, %v472
      %v824 = vpack.c.b16 %v475, %v474
      %v825 = vpack.c.b16 %v477, %v476
      %v826 = vpack.c.b16 %v479, %v478
      %v827 = vpack.c.b16 %v685, %v480
      %v828 = vpack.c.b16 %v793, %v793
      %vm829 = vsmask.f32 4352
      %v831 = vshrl.u32 %v813, 16
      %v833 = vrot.slane %v831, 3
      %v834 = vshll.u32 %v813, 16
      %v836 = vrot.slane %v834, 4
      %v837 = vor.u32 %v833, %v836
      %v839 = vshrl.u32 %v814, 16
      %v841 = vrot.slane %v839, 3
      %v842 = vshll.u32 %v814, 16
      %v844 = vrot.slane %v842, 4
      %v845 = vor.u32 %v841, %v844
      %v846 = vsel %vm829, %v837, %v845
      %v848 = vshrl.u32 %v815, 16
      %v850 = vrot.slane %v848, 3
      %v851 = vshll.u32 %v815, 16
      %v853 = vrot.slane %v851, 4
      %v854 = vor.u32 %v850, %v853
      %v855 = vsel %vm829, %v845, %v854
      %v857 = vshrl.u32 %v816, 16
      %v859 = vrot.slane %v857, 3
      %v860 = vshll.u32 %v816, 16
      %v862 = vrot.slane %v860, 4
      %v863 = vor.u32 %v859, %v862
      %v864 = vsel %vm829, %v854, %v863
      %v866 = vshrl.u32 %v817, 16
      %v868 = vrot.slane %v866, 3
      %v869 = vshll.u32 %v817, 16
      %v871 = vrot.slane %v869, 4
      %v872 = vor.u32 %v868, %v871
      %v873 = vsel %vm829, %v863, %v872
      %v875 = vshrl.u32 %v818, 16
      %v877 = vrot.slane %v875, 3
      %v878 = vshll.u32 %v818, 16
      %v880 = vrot.slane %v878, 4
      %v881 = vor.u32 %v877, %v880
      %v882 = vsel %vm829, %v872, %v881
      %v884 = vshrl.u32 %v819, 16
      %v886 = vrot.slane %v884, 3
      %v887 = vshll.u32 %v819, 16
      %v889 = vrot.slane %v887, 4
      %v890 = vor.u32 %v886, %v889
      %v891 = vsel %vm829, %v881, %v890
      %v893 = vshrl.u32 %v820, 16
      %v895 = vrot.slane %v893, 3
      %v896 = vshll.u32 %v820, 16
      %v898 = vrot.slane %v896, 4
      %v899 = vor.u32 %v895, %v898
      %v900 = vsel %vm829, %v890, %v899
      %v902 = vshrl.u32 %v821, 16
      %v904 = vrot.slane %v902, 3
      %v905 = vshll.u32 %v821, 16
      %v907 = vrot.slane %v905, 4
      %v908 = vor.u32 %v904, %v907
      %v909 = vsel %vm829, %v899, %v908
      %v911 = vshrl.u32 %v822, 16
      %v913 = vrot.slane %v911, 3
      %v914 = vshll.u32 %v822, 16
      %v916 = vrot.slane %v914, 4
      %v917 = vor.u32 %v913, %v916
      %v918 = vsel %vm829, %v908, %v917
      %v920 = vshrl.u32 %v823, 16
      %v922 = vrot.slane %v920, 3
      %v923 = vshll.u32 %v823, 16
      %v925 = vrot.slane %v923, 4
      %v926 = vor.u32 %v922, %v925
      %v927 = vsel %vm829, %v917, %v926
      %v929 = vshrl.u32 %v824, 16
      %v931 = vrot.slane %v929, 3
      %v932 = vshll.u32 %v824, 16
      %v934 = vrot.slane %v932, 4
      %v935 = vor.u32 %v931, %v934
      %v936 = vsel %vm829, %v926, %v935
      %v938 = vshrl.u32 %v825, 16
      %v940 = vrot.slane %v938, 3
      %v941 = vshll.u32 %v825, 16
      %v943 = vrot.slane %v941, 4
      %v944 = vor.u32 %v940, %v943
      %v945 = vsel %vm829, %v935, %v944
      %v947 = vshrl.u32 %v826, 16
      %v949 = vrot.slane %v947, 3
      %v950 = vshll.u32 %v826, 16
      %v952 = vrot.slane %v950, 4
      %v953 = vor.u32 %v949, %v952
      %v954 = vsel %vm829, %v944, %v953
      %v956 = vshrl.u32 %v827, 16
      %v958 = vrot.slane %v956, 3
      %v959 = vshll.u32 %v827, 16
      %v961 = vrot.slane %v959, 4
      %v962 = vor.u32 %v958, %v961
      %v963 = vsel %vm829, %v953, %v962
      %v965 = vshrl.u32 %v828, 16
      %v967 = vrot.slane %v965, 3
      %v968 = vshll.u32 %v828, 16
      %v970 = vrot.slane %v968, 4
      %v971 = vor.u32 %v967, %v970
      %v972 = vsel %vm829, %v962, %v971
      %v989 = vsel %vm632, %v967, 0
      %v990 = vsel %vm653, %v846, 0
      %v991 = vsel %vm653, %v855, 0
      %v992 = vsel %vm653, %v864, 0
      %v993 = vsel %vm653, %v873, 0
      %v994 = vsel %vm653, %v882, 0
      %v995 = vsel %vm653, %v891, 0
      %v996 = vsel %vm653, %v900, 0
      %v997 = vsel %vm653, %v909, 0
      %v998 = vsel %vm653, %v918, 0
      %v999 = vsel %vm653, %v927, 0
      %v1000 = vsel %vm653, %v936, 0
      %v1001 = vsel %vm653, %v945, 0
      %v1002 = vsel %vm653, %v954, 0
      %v1003 = vsel %vm653, %v963, 0
      %v1004 = vsel %vm653, %v972, 0
      %v1005 = vsel %vm653, %v989, 0
      %v1007 = vld [vmem:[%s3] sm:$0xf]
      %v1008 = vld [vmem:[%s3 + $0x4] sm:$0xf]
      %v1009 = vld [vmem:[%s3 + $0x8] sm:$0xf]
      %v1010 = vld [vmem:[%s3 + $0xc] sm:$0xf]
      %v1011 = vld [vmem:[%s3 + $0x10] sm:$0xf]
      %v1012 = vld [vmem:[%s3 + $0x14] sm:$0xf]
      %v1013 = vld [vmem:[%s3 + $0x18] sm:$0xf]
      %v1014 = vld [vmem:[%s3 + $0x1c] sm:$0xf]
      %v1015 = vld [vmem:[%s3 + $0x20] sm:$0xf]
      %v1016 = vld [vmem:[%s3 + $0x24] sm:$0xf]
      %v1017 = vld [vmem:[%s3 + $0x28] sm:$0xf]
      %v1018 = vld [vmem:[%s3 + $0x2c] sm:$0xf]
      %v1019 = vld [vmem:[%s3 + $0x30] sm:$0xf]
      %v1020 = vld [vmem:[%s3 + $0x34] sm:$0xf]
      %v1021 = vld [vmem:[%s3 + $0x38] sm:$0xf]
      %v1022 = vld [vmem:[%s3 + $0x3c] sm:$0xf]
      %v1023 = vld [vmem:[%s3 + $0x40] sm:$0xf]
      %v1024 = vld [vmem:[%s3 + $0x44] sm:$0xf]
      %v1025 = vld [vmem:[%s3 + $0x48] sm:$0xf]
      %v1026 = vld [vmem:[%s3 + $0x4c] sm:$0xf]
      %v1027 = vld [vmem:[%s3 + $0x50] sm:$0xf]
      %v1028 = vld [vmem:[%s3 + $0x54] sm:$0xf]
      %v1029 = vld [vmem:[%s3 + $0x58] sm:$0xf]
      %v1030 = vld [vmem:[%s3 + $0x5c] sm:$0xf]
      %v1031 = vld [vmem:[%s3 + $0x60] sm:$0xf]
      %v1032 = vld [vmem:[%s3 + $0x64] sm:$0xf]
      %v1033 = vld [vmem:[%s3 + $0x68] sm:$0xf]
      %v1034 = vld [vmem:[%s3 + $0x6c] sm:$0xf]
      %v1035 = vld [vmem:[%s3 + $0x70] sm:$0xf]
      %v1036 = vld [vmem:[%s3 + $0x74] sm:$0xf]
      %v1037 = vld [vmem:[%s3 + $0x78] sm:$0xf]
      %v1038 = vld [vmem:[%s3 + $0x7c] sm:$0xf]
      %v1039 = vld [vmem:[%s3 + $0x80] sm:$0xf]
      %v1040 = vld [vmem:[%s3 + $0x84] sm:$0xf]
      %v1041 = vld [vmem:[%s3 + $0x88] sm:$0xf]
      %v1042 = vld [vmem:[%s3 + $0x8c] sm:$0xf]
      %v1043 = vld [vmem:[%s3 + $0x90] sm:$0xf]
      %v1044 = vld [vmem:[%s3 + $0x94] sm:$0xf]
      %v1045 = vld [vmem:[%s3 + $0x98] sm:$0xf]
      %v1046 = vld [vmem:[%s3 + $0x9c] sm:$0xf]
      %v1047 = vld [vmem:[%s3 + $0xa0] sm:$0xf]
      %v1048 = vld [vmem:[%s3 + $0xa4] sm:$0xf]
      %v1049 = vld [vmem:[%s3 + $0xa8] sm:$0xf]
      %v1050 = vld [vmem:[%s3 + $0xac] sm:$0xf]
      %v1051 = vld [vmem:[%s3 + $0xb0] sm:$0xf]
      %v1052 = vld [vmem:[%s3 + $0xb4] sm:$0xf]
      %v1053 = vld [vmem:[%s3 + $0xb8] sm:$0xf]
      %v1054 = vld [vmem:[%s3 + $0xbc] sm:$0xf]
      %v1055 = vld [vmem:[%s3 + $0xc0] sm:$0xf]
      %v1056 = vld [vmem:[%s3 + $0xc4] sm:$0xf]
      %v1057 = vld [vmem:[%s3 + $0xc8] sm:$0xf]
      %v1058 = vld [vmem:[%s3 + $0xcc] sm:$0xf]
      %v1059 = vld [vmem:[%s3 + $0xd0] sm:$0xf]
      %v1060 = vld [vmem:[%s3 + $0xd4] sm:$0xf]
      %v1061 = vld [vmem:[%s3 + $0xd8] sm:$0xf]
      %v1062 = vld [vmem:[%s3 + $0xdc] sm:$0xf]
      %v1063 = vld [vmem:[%s3 + $0xe0] sm:$0xf]
      %v1064 = vld [vmem:[%s3 + $0xe4] sm:$0xf]
      %v1065 = vld [vmem:[%s3 + $0xe8] sm:$0xf]
      %v1066 = vld [vmem:[%s3 + $0xec] sm:$0xf]
      %v1067 = vld [vmem:[%s3 + $0xf0] sm:$0xf]
      %v1068 = vld [vmem:[%s3 + $0xf4] sm:$0xf]
      %v1069 = vld [vmem:[%s3 + $0xf8] sm:$0xf]
      %v1070 = vld [vmem:[%s3 + $0xfc] sm:$0xf]
      %v1071 = vld [vmem:[%s3 + $0x100] sm:$0xf]
      %v1072 = vld [vmem:[%s3 + $0x104] sm:$0xf]
      %v1073 = vld [vmem:[%s3 + $0x108] sm:$0xf]
      %v1074 = vld [vmem:[%s3 + $0x10c] sm:$0xf]
      %v1075 = vld [vmem:[%s3 + $0x110] sm:$0xf]
      %v1076 = vld [vmem:[%s3 + $0x114] sm:$0xf]
      %v1077 = vld [vmem:[%s3 + $0x118] sm:$0xf]
      %v1078 = vld [vmem:[%s3 + $0x11c] sm:$0xf]
      %v1079 = vld [vmem:[%s3 + $0x120] sm:$0xf]
      %v1080 = vld [vmem:[%s3 + $0x124] sm:$0xf]
      %v1081 = vld [vmem:[%s3 + $0x128] sm:$0xf]
      %v1082 = vld [vmem:[%s3 + $0x12c] sm:$0xf]
      %v1083 = vld [vmem:[%s3 + $0x130] sm:$0xf]
      %v1084 = vld [vmem:[%s3 + $0x134] sm:$0xf]
      %v1085 = vld [vmem:[%s3 + $0x138] sm:$0xf]
      %v1086 = vld [vmem:[%s3 + $0x13c] sm:$0xf]
      %v1087 = vld [vmem:[%s3 + $0x140] sm:$0xf]
      %v1088 = vld [vmem:[%s3 + $0x144] sm:$0xf]
      %v1089 = vld [vmem:[%s3 + $0x148] sm:$0xf]
      %v1090 = vld [vmem:[%s3 + $0x14c] sm:$0xf]
      %v1091 = vld [vmem:[%s3 + $0x150] sm:$0xf]
      %v1092 = vld [vmem:[%s3 + $0x154] sm:$0xf]
      %v1093 = vld [vmem:[%s3 + $0x158] sm:$0xf]
      %v1094 = vld [vmem:[%s3 + $0x15c] sm:$0xf]
      %v1095 = vld [vmem:[%s3 + $0x160] sm:$0xf]
      %v1096 = vld [vmem:[%s3 + $0x164] sm:$0xf]
      %v1097 = vld [vmem:[%s3 + $0x168] sm:$0xf]
      %v1098 = vld [vmem:[%s3 + $0x16c] sm:$0xf]
      %v1099 = vld [vmem:[%s3 + $0x170] sm:$0xf]
      %v1100 = vld [vmem:[%s3 + $0x174] sm:$0xf]
      %v1101 = vld [vmem:[%s3 + $0x178] sm:$0xf]
      %v1102 = vld [vmem:[%s3 + $0x17c] sm:$0xf]
      %v1103 = vld [vmem:[%s3 + $0x180] sm:$0xf]
      %v1104 = vld [vmem:[%s3 + $0x184] sm:$0xf]
      %v1105 = vld [vmem:[%s3 + $0x188] sm:$0xf]
      %v1106 = vld [vmem:[%s3 + $0x18c] sm:$0xf]
      %v1107 = vld [vmem:[%s3 + $0x190] sm:$0xf]
      %v1108 = vld [vmem:[%s3 + $0x194] sm:$0xf]
      %v1109 = vld [vmem:[%s3 + $0x198] sm:$0xf]
      %v1110 = vld [vmem:[%s3 + $0x19c] sm:$0xf]
      %v1111 = vld [vmem:[%s3 + $0x1a0] sm:$0xf]
      %v1112 = vld [vmem:[%s3 + $0x1a4] sm:$0xf]
      %v1113 = vld [vmem:[%s3 + $0x1a8] sm:$0xf]
      %v1114 = vld [vmem:[%s3 + $0x1ac] sm:$0xf]
      %v1115 = vld [vmem:[%s3 + $0x1b0] sm:$0xf]
      %v1116 = vld [vmem:[%s3 + $0x1b4] sm:$0xf]
      %v1117 = vld [vmem:[%s3 + $0x1b8] sm:$0xf]
      %v1118 = vld [vmem:[%s3 + $0x1bc] sm:$0xf]
      %v1119 = vld [vmem:[%s3 + $0x1c0] sm:$0xf]
      %v1120 = vld [vmem:[%s3 + $0x1c4] sm:$0xf]
      %v1121 = vld [vmem:[%s3 + $0x1c8] sm:$0xf]
      %v1122 = vld [vmem:[%s3 + $0x1cc] sm:$0xf]
      %v1123 = vld [vmem:[%s3 + $0x1d0] sm:$0xf]
      %v1124 = vld [vmem:[%s3 + $0x1d4] sm:$0xf]
      %v1125 = vld [vmem:[%s3 + $0x1d8] sm:$0xf]
      %v1126 = vld [vmem:[%s3 + $0x1dc] sm:$0xf]
      %v1127 = vld [vmem:[%s3 + $0x1e0] sm:$0xf]
      %v1128 = vld [vmem:[%s3 + $0x1e4] sm:$0xf]
      %v1129 = vld [vmem:[%s3 + $0x1e8] sm:$0xf]
      %v1130 = vld [vmem:[%s3 + $0x1ec] sm:$0xf]
      %v1131 = vld [vmem:[%s3 + $0x1f0] sm:$0xf]
      %v1132 = vld [vmem:[%s3 + $0x1f4] sm:$0xf]
      %v1133 = vld [vmem:[%s3 + $0x1f8] sm:$0xf]
      %v1134 = vld [vmem:[%s3 + $0x1fc] sm:$0xf]
      %v1135 = vld [vmem:[%s3 + $0x200] sm:$0xf]
      %v1136 = vld [vmem:[%s3 + $0x204] sm:$0xf]
      %v1137 = vld [vmem:[%s3 + $0x208] sm:$0xf]
      %v1138 = vld [vmem:[%s3 + $0x20c] sm:$0xf]
      %v1139 = vld [vmem:[%s3 + $0x210] sm:$0xf]
      %v1140 = vld [vmem:[%s3 + $0x214] sm:$0xf]
      %v1141 = vld [vmem:[%s3 + $0x218] sm:$0xf]
      %v1142 = vld [vmem:[%s3 + $0x21c] sm:$0xf]
      %v1143 = vld [vmem:[%s3 + $0x220] sm:$0xf]
      %v1144 = vld [vmem:[%s3 + $0x224] sm:$0xf]
      %v1145 = vld [vmem:[%s3 + $0x228] sm:$0xf]
      %v1146 = vld [vmem:[%s3 + $0x22c] sm:$0xf]
      %v1147 = vld [vmem:[%s3 + $0x230] sm:$0xf]
      %v1148 = vld [vmem:[%s3 + $0x234] sm:$0xf]
      %v1149 = vld [vmem:[%s3 + $0x238] sm:$0xf]
      %v1150 = vld [vmem:[%s3 + $0x23c] sm:$0xf]
      %v1295 = vunpack.c.l.b16 %v1007
      %v1296 = vunpack.c.l.b16 %v1008
      %v1297 = vunpack.c.l.b16 %v1009
      %v1298 = vunpack.c.l.b16 %v1010
      %v1299 = vunpack.c.l.b16 %v1011
      %v1300 = vunpack.c.l.b16 %v1012
      %v1301 = vunpack.c.l.b16 %v1013
      %v1302 = vunpack.c.l.b16 %v1014
      %v1303 = vunpack.c.l.b16 %v1015
      %v1304 = vunpack.c.l.b16 %v1016
      %v1305 = vunpack.c.l.b16 %v1017
      %v1306 = vunpack.c.l.b16 %v1018
      %v1307 = vunpack.c.l.b16 %v1019
      %v1308 = vunpack.c.l.b16 %v1020
      %v1309 = vunpack.c.l.b16 %v1021
      %v1310 = vunpack.c.l.b16 %v1022
      %v1311 = vunpack.c.l.b16 %v1023
      %v1312 = vunpack.c.l.b16 %v1024
      %v1313 = vunpack.c.l.b16 %v1025
      %v1314 = vunpack.c.l.b16 %v1026
      %v1315 = vunpack.c.l.b16 %v1027
      %v1316 = vunpack.c.l.b16 %v1028
      %v1317 = vunpack.c.l.b16 %v1029
      %v1318 = vunpack.c.l.b16 %v1030
      %v1319 = vunpack.c.l.b16 %v1031
      %v1320 = vunpack.c.l.b16 %v1032
      %v1321 = vunpack.c.l.b16 %v1033
      %v1322 = vunpack.c.l.b16 %v1034
      %v1323 = vunpack.c.l.b16 %v1035
      %v1324 = vunpack.c.l.b16 %v1036
      %v1325 = vunpack.c.l.b16 %v1037
      %v1326 = vunpack.c.l.b16 %v1038
      %v1327 = vunpack.c.l.b16 %v1039
      %v1328 = vunpack.c.l.b16 %v1040
      %v1329 = vunpack.c.l.b16 %v1041
      %v1330 = vunpack.c.l.b16 %v1042
      %v1331 = vunpack.c.l.b16 %v1043
      %v1332 = vunpack.c.l.b16 %v1044
      %v1333 = vunpack.c.l.b16 %v1045
      %v1334 = vunpack.c.l.b16 %v1046
      %v1335 = vunpack.c.l.b16 %v1047
      %v1336 = vunpack.c.l.b16 %v1048
      %v1337 = vunpack.c.l.b16 %v1049
      %v1338 = vunpack.c.l.b16 %v1050
      %v1339 = vunpack.c.l.b16 %v1051
      %v1340 = vunpack.c.l.b16 %v1052
      %v1341 = vunpack.c.l.b16 %v1053
      %v1342 = vunpack.c.l.b16 %v1054
      %v1343 = vunpack.c.l.b16 %v1055
      %v1344 = vunpack.c.l.b16 %v1056
      %v1345 = vunpack.c.l.b16 %v1057
      %v1346 = vunpack.c.l.b16 %v1058
      %v1347 = vunpack.c.l.b16 %v1059
      %v1348 = vunpack.c.l.b16 %v1060
      %v1349 = vunpack.c.l.b16 %v1061
      %v1350 = vunpack.c.l.b16 %v1062
      %v1351 = vunpack.c.l.b16 %v1063
      %v1352 = vunpack.c.l.b16 %v1064
      %v1353 = vunpack.c.l.b16 %v1065
      %v1354 = vunpack.c.l.b16 %v1066
      %v1355 = vunpack.c.l.b16 %v1067
      %v1356 = vunpack.c.l.b16 %v1068
      %v1357 = vunpack.c.l.b16 %v1069
      %v1358 = vunpack.c.l.b16 %v1070
      %v1359 = vunpack.c.l.b16 %v1071
      %v1360 = vunpack.c.l.b16 %v1072
      %v1361 = vunpack.c.l.b16 %v1073
      %v1362 = vunpack.c.l.b16 %v1074
      %v1363 = vunpack.c.l.b16 %v1075
      %v1364 = vunpack.c.l.b16 %v1076
      %v1365 = vunpack.c.l.b16 %v1077
      %v1366 = vunpack.c.l.b16 %v1078
      %v1367 = vunpack.c.l.b16 %v1079
      %v1368 = vunpack.c.l.b16 %v1080
      %v1369 = vunpack.c.l.b16 %v1081
      %v1370 = vunpack.c.l.b16 %v1082
      %v1371 = vunpack.c.l.b16 %v1083
      %v1372 = vunpack.c.l.b16 %v1084
      %v1373 = vunpack.c.l.b16 %v1085
      %v1374 = vunpack.c.l.b16 %v1086
      %v1375 = vunpack.c.l.b16 %v1087
      %v1376 = vunpack.c.l.b16 %v1088
      %v1377 = vunpack.c.l.b16 %v1089
      %v1378 = vunpack.c.l.b16 %v1090
      %v1379 = vunpack.c.l.b16 %v1091
      %v1380 = vunpack.c.l.b16 %v1092
      %v1381 = vunpack.c.l.b16 %v1093
      %v1382 = vunpack.c.l.b16 %v1094
      %v1383 = vunpack.c.l.b16 %v1095
      %v1384 = vunpack.c.l.b16 %v1096
      %v1385 = vunpack.c.l.b16 %v1097
      %v1386 = vunpack.c.l.b16 %v1098
      %v1387 = vunpack.c.l.b16 %v1099
      %v1388 = vunpack.c.l.b16 %v1100
      %v1389 = vunpack.c.l.b16 %v1101
      %v1390 = vunpack.c.l.b16 %v1102
      %v1391 = vunpack.c.l.b16 %v1103
      %v1392 = vunpack.c.l.b16 %v1104
      %v1393 = vunpack.c.l.b16 %v1105
      %v1394 = vunpack.c.l.b16 %v1106
      %v1395 = vunpack.c.l.b16 %v1107
      %v1396 = vunpack.c.l.b16 %v1108
      %v1397 = vunpack.c.l.b16 %v1109
      %v1398 = vunpack.c.l.b16 %v1110
      %v1399 = vunpack.c.l.b16 %v1111
      %v1400 = vunpack.c.l.b16 %v1112
      %v1401 = vunpack.c.l.b16 %v1113
      %v1402 = vunpack.c.l.b16 %v1114
      %v1403 = vunpack.c.l.b16 %v1115
      %v1404 = vunpack.c.l.b16 %v1116
      %v1405 = vunpack.c.l.b16 %v1117
      %v1406 = vunpack.c.l.b16 %v1118
      %v1407 = vunpack.c.l.b16 %v1119
      %v1408 = vunpack.c.l.b16 %v1120
      %v1409 = vunpack.c.l.b16 %v1121
      %v1410 = vunpack.c.l.b16 %v1122
      %v1411 = vunpack.c.l.b16 %v1123
      %v1412 = vunpack.c.l.b16 %v1124
      %v1413 = vunpack.c.l.b16 %v1125
      %v1414 = vunpack.c.l.b16 %v1126
      %v1415 = vunpack.c.l.b16 %v1127
      %v1416 = vunpack.c.l.b16 %v1128
      %v1417 = vunpack.c.l.b16 %v1129
      %v1418 = vunpack.c.l.b16 %v1130
      %v1419 = vunpack.c.l.b16 %v1131
      %v1420 = vunpack.c.l.b16 %v1132
      %v1421 = vunpack.c.l.b16 %v1133
      %v1422 = vunpack.c.l.b16 %v1134
      %v1423 = vunpack.c.l.b16 %v1135
      %v1424 = vunpack.c.l.b16 %v1136
      %v1425 = vunpack.c.l.b16 %v1137
      %v1426 = vunpack.c.l.b16 %v1138
      %v1427 = vunpack.c.l.b16 %v1139
      %v1428 = vunpack.c.l.b16 %v1140
      %v1429 = vunpack.c.l.b16 %v1141
      %v1430 = vunpack.c.l.b16 %v1142
      %v1431 = vunpack.c.l.b16 %v1143
      %v1432 = vunpack.c.l.b16 %v1144
      %v1433 = vunpack.c.l.b16 %v1145
      %v1434 = vunpack.c.l.b16 %v1146
      %v1435 = vunpack.c.l.b16 %v1147
      %v1436 = vunpack.c.l.b16 %v1148
      %v1437 = vunpack.c.l.b16 %v1149
      %v1438 = vunpack.c.l.b16 %v1150
      %v1439 = vpack.c.b16 %v1296, %v1295
      %v1440 = vpack.c.b16 %v1298, %v1297
      %v1441 = vpack.c.b16 %v1300, %v1299
      %v1442 = vpack.c.b16 %v1302, %v1301
      %v1443 = vpack.c.b16 %v1304, %v1303
      %v1444 = vpack.c.b16 %v1306, %v1305
      %v1445 = vpack.c.b16 %v1308, %v1307
      %v1446 = vpack.c.b16 %v1310, %v1309
      %v1447 = vpack.c.b16 %v1312, %v1311
      %v1448 = vpack.c.b16 %v1314, %v1313
      %v1449 = vpack.c.b16 %v1316, %v1315
      %v1450 = vpack.c.b16 %v1318, %v1317
      %v1451 = vpack.c.b16 %v1320, %v1319
      %v1452 = vpack.c.b16 %v1322, %v1321
      %v1453 = vpack.c.b16 %v1324, %v1323
      %v1454 = vpack.c.b16 %v1326, %v1325
      %v1455 = vpack.c.b16 %v1328, %v1327
      %v1456 = vpack.c.b16 %v1330, %v1329
      %v1457 = vpack.c.b16 %v1332, %v1331
      %v1458 = vpack.c.b16 %v1334, %v1333
      %v1459 = vpack.c.b16 %v1336, %v1335
      %v1460 = vpack.c.b16 %v1338, %v1337
      %v1461 = vpack.c.b16 %v1340, %v1339
      %v1462 = vpack.c.b16 %v1342, %v1341
      %v1463 = vpack.c.b16 %v1344, %v1343
      %v1464 = vpack.c.b16 %v1346, %v1345
      %v1465 = vpack.c.b16 %v1348, %v1347
      %v1466 = vpack.c.b16 %v1350, %v1349
      %v1467 = vpack.c.b16 %v1352, %v1351
      %v1468 = vpack.c.b16 %v1354, %v1353
      %v1469 = vpack.c.b16 %v1356, %v1355
      %v1470 = vpack.c.b16 %v1358, %v1357
      %v1471 = vpack.c.b16 %v1360, %v1359
      %v1472 = vpack.c.b16 %v1362, %v1361
      %v1473 = vpack.c.b16 %v1364, %v1363
      %v1474 = vpack.c.b16 %v1366, %v1365
      %v1475 = vpack.c.b16 %v1368, %v1367
      %v1476 = vpack.c.b16 %v1370, %v1369
      %v1477 = vpack.c.b16 %v1372, %v1371
      %v1478 = vpack.c.b16 %v1374, %v1373
      %v1479 = vpack.c.b16 %v1376, %v1375
      %v1480 = vpack.c.b16 %v1378, %v1377
      %v1481 = vpack.c.b16 %v1380, %v1379
      %v1482 = vpack.c.b16 %v1382, %v1381
      %v1483 = vpack.c.b16 %v1384, %v1383
      %v1484 = vpack.c.b16 %v1386, %v1385
      %v1485 = vpack.c.b16 %v1388, %v1387
      %v1486 = vpack.c.b16 %v1390, %v1389
      %v1487 = vpack.c.b16 %v1392, %v1391
      %v1488 = vpack.c.b16 %v1394, %v1393
      %v1489 = vpack.c.b16 %v1396, %v1395
      %v1490 = vpack.c.b16 %v1398, %v1397
      %v1491 = vpack.c.b16 %v1400, %v1399
      %v1492 = vpack.c.b16 %v1402, %v1401
      %v1493 = vpack.c.b16 %v1404, %v1403
      %v1494 = vpack.c.b16 %v1406, %v1405
      %v1495 = vpack.c.b16 %v1408, %v1407
      %v1496 = vpack.c.b16 %v1410, %v1409
      %v1497 = vpack.c.b16 %v1412, %v1411
      %v1498 = vpack.c.b16 %v1414, %v1413
      %v1499 = vpack.c.b16 %v1416, %v1415
      %v1500 = vpack.c.b16 %v1418, %v1417
      %v1501 = vpack.c.b16 %v1420, %v1419
      %v1502 = vpack.c.b16 %v1422, %v1421
      %v1503 = vpack.c.b16 %v1424, %v1423
      %v1504 = vpack.c.b16 %v1426, %v1425
      %v1505 = vpack.c.b16 %v1428, %v1427
      %v1506 = vpack.c.b16 %v1430, %v1429
      %v1507 = vpack.c.b16 %v1432, %v1431
      %v1508 = vpack.c.b16 %v1434, %v1433
      %v1509 = vpack.c.b16 %v1436, %v1435
      %v1510 = vpack.c.b16 %v1438, %v1437
      %1583 = vmatpush.bf16.msra.mxu0 %v1446
      %1584 = vmatpush.bf16.msra.mxu0 %v1445
      %1585 = vmatpush.bf16.msra.mxu0 %v1444
      %1586 = vmatpush.bf16.msra.mxu0 %v1443
      %1587 = vmatpush.bf16.msra.mxu0 %v1442
      %1588 = vmatpush.bf16.msra.mxu0 %v1441
      %1589 = vmatpush.bf16.msra.mxu0 %v1440
      %1590 = vmatpush.bf16.msra.mxu0 %v1439
      %1591 = vmatmul.bf16.gmra.mxu0 0
      %v1592 = vpop.f32.mrf.mxu0
      %v1593 = vadd.f32 0.0, %v1592
      %v1594 = vpop.f32.mrf.mxu0
      %v1595 = vadd.f32 0.0, %v1594
      %1596 = vmatmul.bf16.gmra.mxu0 %v654
      %v1597 = vpop.f32.mrf.mxu0
      %v1598 = vadd.f32 0.0, %v1597
      %v1599 = vpop.f32.mrf.mxu0
      %v1600 = vadd.f32 0.0, %v1599
      %1601 = vmatmul.bf16.gmra.mxu0 %v655
      %v1602 = vpop.f32.mrf.mxu0
      %v1603 = vadd.f32 0.0, %v1602
      %v1604 = vpop.f32.mrf.mxu0
      %v1605 = vadd.f32 0.0, %v1604
      %1606 = vmatmul.bf16.gmra.mxu0 %v656
      %v1607 = vpop.f32.mrf.mxu0
      %v1608 = vadd.f32 0.0, %v1607
      %v1609 = vpop.f32.mrf.mxu0
      %v1610 = vadd.f32 0.0, %v1609
      %1611 = vmatmul.bf16.gmra.mxu0 %v657
      %v1612 = vpop.f32.mrf.mxu0
      %v1613 = vadd.f32 0.0, %v1612
      %v1614 = vpop.f32.mrf.mxu0
      %v1615 = vadd.f32 0.0, %v1614
      %1616 = vmatmul.bf16.gmra.mxu0 %v658
      %v1617 = vpop.f32.mrf.mxu0
      %v1618 = vadd.f32 0.0, %v1617
      %v1619 = vpop.f32.mrf.mxu0
      %v1620 = vadd.f32 0.0, %v1619
      %1621 = vmatmul.bf16.gmra.mxu0 %v659
      %v1622 = vpop.f32.mrf.mxu0
      %v1623 = vadd.f32 0.0, %v1622
      %v1624 = vpop.f32.mrf.mxu0
      %v1625 = vadd.f32 0.0, %v1624
      %1626 = vmatmul.bf16.gmra.mxu0 %v660
      %v1627 = vpop.f32.mrf.mxu0
      %v1628 = vadd.f32 0.0, %v1627
      %v1629 = vpop.f32.mrf.mxu0
      %v1630 = vadd.f32 0.0, %v1629
      %1631 = vmatmul.bf16.gmra.mxu0 %v661
      %v1632 = vpop.f32.mrf.mxu0
      %v1633 = vadd.f32 0.0, %v1632
      %v1634 = vpop.f32.mrf.mxu0
      %v1635 = vadd.f32 0.0, %v1634
      %1636 = vmatmul.bf16.gmra.mxu0 %v662
      %v1637 = vpop.f32.mrf.mxu0
      %v1638 = vadd.f32 0.0, %v1637
      %v1639 = vpop.f32.mrf.mxu0
      %v1640 = vadd.f32 0.0, %v1639
      %1641 = vmatmul.bf16.gmra.mxu0 %v663
      %v1642 = vpop.f32.mrf.mxu0
      %v1643 = vadd.f32 0.0, %v1642
      %v1644 = vpop.f32.mrf.mxu0
      %v1645 = vadd.f32 0.0, %v1644
      %1646 = vmatmul.bf16.gmra.mxu0 %v664
      %v1647 = vpop.f32.mrf.mxu0
      %v1648 = vadd.f32 0.0, %v1647
      %v1649 = vpop.f32.mrf.mxu0
      %v1650 = vadd.f32 0.0, %v1649
      %1651 = vmatmul.bf16.gmra.mxu0 %v665
      %v1652 = vpop.f32.mrf.mxu0
      %v1653 = vadd.f32 0.0, %v1652
      %v1654 = vpop.f32.mrf.mxu0
      %v1655 = vadd.f32 0.0, %v1654
      %1656 = vmatmul.bf16.gmra.mxu0 %v666
      %v1657 = vpop.f32.mrf.mxu0
      %v1658 = vadd.f32 0.0, %v1657
      %v1659 = vpop.f32.mrf.mxu0
      %v1660 = vadd.f32 0.0, %v1659
      %1661 = vmatmul.bf16.gmra.mxu0 %v667
      %v1662 = vpop.f32.mrf.mxu0
      %v1663 = vadd.f32 0.0, %v1662
      %v1664 = vpop.f32.mrf.mxu0
      %v1665 = vadd.f32 0.0, %v1664
      %1666 = vmatmul.bf16.gmra.mxu0 %v668
      %v1667 = vpop.f32.mrf.mxu0
      %v1668 = vadd.f32 0.0, %v1667
      %v1669 = vpop.f32.mrf.mxu0
      %v1670 = vadd.f32 0.0, %v1669
      %1671 = vdwg.mxu0
      %1672 = vmatpush.bf16.msra.mxu0 %v1454
      %1673 = vmatpush.bf16.msra.mxu0 %v1453
      %1674 = vmatpush.bf16.msra.mxu0 %v1452
      %1675 = vmatpush.bf16.msra.mxu0 %v1451
      %1676 = vmatpush.bf16.msra.mxu0 %v1450
      %1677 = vmatpush.bf16.msra.mxu0 %v1449
      %1678 = vmatpush.bf16.msra.mxu0 %v1448
      %1679 = vmatpush.bf16.msra.mxu0 %v1447
      %1680 = vmatmul.bf16.gmra.mxu0 0
      %v1681 = vpop.f32.mrf.mxu0
      %v1682 = vadd.f32 %v1593, %v1681
      %v1683 = vpop.f32.mrf.mxu0
      %v1684 = vadd.f32 %v1595, %v1683
      %1685 = vmatmul.bf16.gmra.mxu0 %v481
      %v1686 = vpop.f32.mrf.mxu0
      %v1687 = vadd.f32 %v1598, %v1686
      %v1688 = vpop.f32.mrf.mxu0
      %v1689 = vadd.f32 %v1600, %v1688
      %1690 = vmatmul.bf16.gmra.mxu0 %v482
      %v1691 = vpop.f32.mrf.mxu0
      %v1692 = vadd.f32 %v1603, %v1691
      %v1693 = vpop.f32.mrf.mxu0
      %v1694 = vadd.f32 %v1605, %v1693
      %1695 = vmatmul.bf16.gmra.mxu0 %v483
      %v1696 = vpop.f32.mrf.mxu0
      %v1697 = vadd.f32 %v1608, %v1696
      %v1698 = vpop.f32.mrf.mxu0
      %v1699 = vadd.f32 %v1610, %v1698
      %1700 = vmatmul.bf16.gmra.mxu0 %v484
      %v1701 = vpop.f32.mrf.mxu0
      %v1702 = vadd.f32 %v1613, %v1701
      %v1703 = vpop.f32.mrf.mxu0
      %v1704 = vadd.f32 %v1615, %v1703
      %1705 = vmatmul.bf16.gmra.mxu0 %v485
      %v1706 = vpop.f32.mrf.mxu0
      %v1707 = vadd.f32 %v1618, %v1706
      %v1708 = vpop.f32.mrf.mxu0
      %v1709 = vadd.f32 %v1620, %v1708
      %1710 = vmatmul.bf16.gmra.mxu0 %v486
      %v1711 = vpop.f32.mrf.mxu0
      %v1712 = vadd.f32 %v1623, %v1711
      %v1713 = vpop.f32.mrf.mxu0
      %v1714 = vadd.f32 %v1625, %v1713
      %1715 = vmatmul.bf16.gmra.mxu0 %v487
      %v1716 = vpop.f32.mrf.mxu0
      %v1717 = vadd.f32 %v1628, %v1716
      %v1718 = vpop.f32.mrf.mxu0
      %v1719 = vadd.f32 %v1630, %v1718
      %1720 = vmatmul.bf16.gmra.mxu0 %v488
      %v1721 = vpop.f32.mrf.mxu0
      %v1722 = vadd.f32 %v1633, %v1721
      %v1723 = vpop.f32.mrf.mxu0
      %v1724 = vadd.f32 %v1635, %v1723
      %1725 = vmatmul.bf16.gmra.mxu0 %v489
      %v1726 = vpop.f32.mrf.mxu0
      %v1727 = vadd.f32 %v1638, %v1726
      %v1728 = vpop.f32.mrf.mxu0
      %v1729 = vadd.f32 %v1640, %v1728
      %1730 = vmatmul.bf16.gmra.mxu0 %v490
      %v1731 = vpop.f32.mrf.mxu0
      %v1732 = vadd.f32 %v1643, %v1731
      %v1733 = vpop.f32.mrf.mxu0
      %v1734 = vadd.f32 %v1645, %v1733
      %1735 = vmatmul.bf16.gmra.mxu0 %v491
      %v1736 = vpop.f32.mrf.mxu0
      %v1737 = vadd.f32 %v1648, %v1736
      %v1738 = vpop.f32.mrf.mxu0
      %v1739 = vadd.f32 %v1650, %v1738
      %1740 = vmatmul.bf16.gmra.mxu0 %v492
      %v1741 = vpop.f32.mrf.mxu0
      %v1742 = vadd.f32 %v1653, %v1741
      %v1743 = vpop.f32.mrf.mxu0
      %v1744 = vadd.f32 %v1655, %v1743
      %1745 = vmatmul.bf16.gmra.mxu0 %v493
      %v1746 = vpop.f32.mrf.mxu0
      %v1747 = vadd.f32 %v1658, %v1746
      %v1748 = vpop.f32.mrf.mxu0
      %v1749 = vadd.f32 %v1660, %v1748
      %1750 = vmatmul.bf16.gmra.mxu0 %v494
      %v1751 = vpop.f32.mrf.mxu0
      %v1752 = vadd.f32 %v1663, %v1751
      %v1753 = vpop.f32.mrf.mxu0
      %v1754 = vadd.f32 %v1665, %v1753
      %1755 = vmatmul.bf16.gmra.mxu0 %v495
      %v1756 = vpop.f32.mrf.mxu0
      %v1757 = vadd.f32 %v1668, %v1756
      %v1758 = vpop.f32.mrf.mxu0
      %v1759 = vadd.f32 %v1670, %v1758
      %1760 = vdwg.mxu0
      %1761 = vmatpush.bf16.msra.mxu0 %v1462
      %1762 = vmatpush.bf16.msra.mxu0 %v1461
      %1763 = vmatpush.bf16.msra.mxu0 %v1460
      %1764 = vmatpush.bf16.msra.mxu0 %v1459
      %1765 = vmatpush.bf16.msra.mxu0 %v1458
      %1766 = vmatpush.bf16.msra.mxu0 %v1457
      %1767 = vmatpush.bf16.msra.mxu0 %v1456
      %1768 = vmatpush.bf16.msra.mxu0 %v1455
      %1769 = vmatmul.bf16.gmra.mxu0 %v776
      %v1770 = vpop.f32.mrf.mxu0
      %v1771 = vadd.f32 %v1682, %v1770
      %v1772 = vpop.f32.mrf.mxu0
      %v1773 = vadd.f32 %v1684, %v1772
      %1774 = vmatmul.bf16.gmra.mxu0 %v777
      %v1775 = vpop.f32.mrf.mxu0
      %v1776 = vadd.f32 %v1687, %v1775
      %v1777 = vpop.f32.mrf.mxu0
      %v1778 = vadd.f32 %v1689, %v1777
      %1779 = vmatmul.bf16.gmra.mxu0 %v778
      %v1780 = vpop.f32.mrf.mxu0
      %v1781 = vadd.f32 %v1692, %v1780
      %v1782 = vpop.f32.mrf.mxu0
      %v1783 = vadd.f32 %v1694, %v1782
      %1784 = vmatmul.bf16.gmra.mxu0 %v779
      %v1785 = vpop.f32.mrf.mxu0
      %v1786 = vadd.f32 %v1697, %v1785
      %v1787 = vpop.f32.mrf.mxu0
      %v1788 = vadd.f32 %v1699, %v1787
      %1789 = vmatmul.bf16.gmra.mxu0 %v780
      %v1790 = vpop.f32.mrf.mxu0
      %v1791 = vadd.f32 %v1702, %v1790
      %v1792 = vpop.f32.mrf.mxu0
      %v1793 = vadd.f32 %v1704, %v1792
      %1794 = vmatmul.bf16.gmra.mxu0 %v781
      %v1795 = vpop.f32.mrf.mxu0
      %v1796 = vadd.f32 %v1707, %v1795
      %v1797 = vpop.f32.mrf.mxu0
      %v1798 = vadd.f32 %v1709, %v1797
      %1799 = vmatmul.bf16.gmra.mxu0 %v782
      %v1800 = vpop.f32.mrf.mxu0
      %v1801 = vadd.f32 %v1712, %v1800
      %v1802 = vpop.f32.mrf.mxu0
      %v1803 = vadd.f32 %v1714, %v1802
      %1804 = vmatmul.bf16.gmra.mxu0 %v783
      %v1805 = vpop.f32.mrf.mxu0
      %v1806 = vadd.f32 %v1717, %v1805
      %v1807 = vpop.f32.mrf.mxu0
      %v1808 = vadd.f32 %v1719, %v1807
      %1809 = vmatmul.bf16.gmra.mxu0 %v784
      %v1810 = vpop.f32.mrf.mxu0
      %v1811 = vadd.f32 %v1722, %v1810
      %v1812 = vpop.f32.mrf.mxu0
      %v1813 = vadd.f32 %v1724, %v1812
      %1814 = vmatmul.bf16.gmra.mxu0 %v785
      %v1815 = vpop.f32.mrf.mxu0
      %v1816 = vadd.f32 %v1727, %v1815
      %v1817 = vpop.f32.mrf.mxu0
      %v1818 = vadd.f32 %v1729, %v1817
      %1819 = vmatmul.bf16.gmra.mxu0 %v786
      %v1820 = vpop.f32.mrf.mxu0
      %v1821 = vadd.f32 %v1732, %v1820
      %v1822 = vpop.f32.mrf.mxu0
      %v1823 = vadd.f32 %v1734, %v1822
      %1824 = vmatmul.bf16.gmra.mxu0 %v787
      %v1825 = vpop.f32.mrf.mxu0
      %v1826 = vadd.f32 %v1737, %v1825
      %v1827 = vpop.f32.mrf.mxu0
      %v1828 = vadd.f32 %v1739, %v1827
      %1829 = vmatmul.bf16.gmra.mxu0 %v788
      %v1830 = vpop.f32.mrf.mxu0
      %v1831 = vadd.f32 %v1742, %v1830
      %v1832 = vpop.f32.mrf.mxu0
      %v1833 = vadd.f32 %v1744, %v1832
      %1834 = vmatmul.bf16.gmra.mxu0 %v789
      %v1835 = vpop.f32.mrf.mxu0
      %v1836 = vadd.f32 %v1747, %v1835
      %v1837 = vpop.f32.mrf.mxu0
      %v1838 = vadd.f32 %v1749, %v1837
      %1839 = vmatmul.bf16.gmra.mxu0 %v790
      %v1840 = vpop.f32.mrf.mxu0
      %v1841 = vadd.f32 %v1752, %v1840
      %v1842 = vpop.f32.mrf.mxu0
      %v1843 = vadd.f32 %v1754, %v1842
      %1844 = vmatmul.bf16.gmra.mxu0 %v791
      %v1845 = vpop.f32.mrf.mxu0
      %v1846 = vadd.f32 %v1757, %v1845
      %v1847 = vpop.f32.mrf.mxu0
      %v1848 = vadd.f32 %v1759, %v1847
      %1849 = vdwg.mxu0
      %1850 = vmatpush.bf16.msra.mxu0 %v1470
      %1851 = vmatpush.bf16.msra.mxu0 %v1469
      %1852 = vmatpush.bf16.msra.mxu0 %v1468
      %1853 = vmatpush.bf16.msra.mxu0 %v1467
      %1854 = vmatpush.bf16.msra.mxu0 %v1466
      %1855 = vmatpush.bf16.msra.mxu0 %v1465
      %1856 = vmatpush.bf16.msra.mxu0 %v1464
      %1857 = vmatpush.bf16.msra.mxu0 %v1463
      %1858 = vmatmul.bf16.gmra.mxu0 %v654
      %v1859 = vpop.f32.mrf.mxu0
      %v1860 = vadd.f32 %v1771, %v1859
      %v1861 = vpop.f32.mrf.mxu0
      %v1862 = vadd.f32 %v1773, %v1861
      %1863 = vmatmul.bf16.gmra.mxu0 %v655
      %v1864 = vpop.f32.mrf.mxu0
      %v1865 = vadd.f32 %v1776, %v1864
      %v1866 = vpop.f32.mrf.mxu0
      %v1867 = vadd.f32 %v1778, %v1866
      %1868 = vmatmul.bf16.gmra.mxu0 %v656
      %v1869 = vpop.f32.mrf.mxu0
      %v1870 = vadd.f32 %v1781, %v1869
      %v1871 = vpop.f32.mrf.mxu0
      %v1872 = vadd.f32 %v1783, %v1871
      %1873 = vmatmul.bf16.gmra.mxu0 %v657
      %v1874 = vpop.f32.mrf.mxu0
      %v1875 = vadd.f32 %v1786, %v1874
      %v1876 = vpop.f32.mrf.mxu0
      %v1877 = vadd.f32 %v1788, %v1876
      %1878 = vmatmul.bf16.gmra.mxu0 %v658
      %v1879 = vpop.f32.mrf.mxu0
      %v1880 = vadd.f32 %v1791, %v1879
      %v1881 = vpop.f32.mrf.mxu0
      %v1882 = vadd.f32 %v1793, %v1881
      %1883 = vmatmul.bf16.gmra.mxu0 %v659
      %v1884 = vpop.f32.mrf.mxu0
      %v1885 = vadd.f32 %v1796, %v1884
      %v1886 = vpop.f32.mrf.mxu0
      %v1887 = vadd.f32 %v1798, %v1886
      %1888 = vmatmul.bf16.gmra.mxu0 %v660
      %v1889 = vpop.f32.mrf.mxu0
      %v1890 = vadd.f32 %v1801, %v1889
      %v1891 = vpop.f32.mrf.mxu0
      %v1892 = vadd.f32 %v1803, %v1891
      %1893 = vmatmul.bf16.gmra.mxu0 %v661
      %v1894 = vpop.f32.mrf.mxu0
      %v1895 = vadd.f32 %v1806, %v1894
      %v1896 = vpop.f32.mrf.mxu0
      %v1897 = vadd.f32 %v1808, %v1896
      %1898 = vmatmul.bf16.gmra.mxu0 %v662
      %v1899 = vpop.f32.mrf.mxu0
      %v1900 = vadd.f32 %v1811, %v1899
      %v1901 = vpop.f32.mrf.mxu0
      %v1902 = vadd.f32 %v1813, %v1901
      %1903 = vmatmul.bf16.gmra.mxu0 %v663
      %v1904 = vpop.f32.mrf.mxu0
      %v1905 = vadd.f32 %v1816, %v1904
      %v1906 = vpop.f32.mrf.mxu0
      %v1907 = vadd.f32 %v1818, %v1906
      %1908 = vmatmul.bf16.gmra.mxu0 %v664
      %v1909 = vpop.f32.mrf.mxu0
      %v1910 = vadd.f32 %v1821, %v1909
      %v1911 = vpop.f32.mrf.mxu0
      %v1912 = vadd.f32 %v1823, %v1911
      %1913 = vmatmul.bf16.gmra.mxu0 %v665
      %v1914 = vpop.f32.mrf.mxu0
      %v1915 = vadd.f32 %v1826, %v1914
      %v1916 = vpop.f32.mrf.mxu0
      %v1917 = vadd.f32 %v1828, %v1916
      %1918 = vmatmul.bf16.gmra.mxu0 %v666
      %v1919 = vpop.f32.mrf.mxu0
      %v1920 = vadd.f32 %v1831, %v1919
      %v1921 = vpop.f32.mrf.mxu0
      %v1922 = vadd.f32 %v1833, %v1921
      %1923 = vmatmul.bf16.gmra.mxu0 %v667
      %v1924 = vpop.f32.mrf.mxu0
      %v1925 = vadd.f32 %v1836, %v1924
      %v1926 = vpop.f32.mrf.mxu0
      %v1927 = vadd.f32 %v1838, %v1926
      %1928 = vmatmul.bf16.gmra.mxu0 %v668
      %v1929 = vpop.f32.mrf.mxu0
      %v1930 = vadd.f32 %v1841, %v1929
      %v1931 = vpop.f32.mrf.mxu0
      %v1932 = vadd.f32 %v1843, %v1931
      %1933 = vmatmul.bf16.gmra.mxu0 %v804
      %v1934 = vpop.f32.mrf.mxu0
      %v1935 = vadd.f32 %v1846, %v1934
      %v1936 = vpop.f32.mrf.mxu0
      %v1937 = vadd.f32 %v1848, %v1936
      %1938 = vdwg.mxu0
      %1939 = vmatpush.bf16.msra.mxu0 %v1478
      %1940 = vmatpush.bf16.msra.mxu0 %v1477
      %1941 = vmatpush.bf16.msra.mxu0 %v1476
      %1942 = vmatpush.bf16.msra.mxu0 %v1475
      %1943 = vmatpush.bf16.msra.mxu0 %v1474
      %1944 = vmatpush.bf16.msra.mxu0 %v1473
      %1945 = vmatpush.bf16.msra.mxu0 %v1472
      %1946 = vmatpush.bf16.msra.mxu0 %v1471
      %1947 = vmatmul.bf16.gmra.mxu0 %v481
      %v1948 = vpop.f32.mrf.mxu0
      %v1949 = vadd.f32 %v1860, %v1948
      %v1950 = vpop.f32.mrf.mxu0
      %v1951 = vadd.f32 %v1862, %v1950
      %1952 = vmatmul.bf16.gmra.mxu0 %v482
      %v1953 = vpop.f32.mrf.mxu0
      %v1954 = vadd.f32 %v1865, %v1953
      %v1955 = vpop.f32.mrf.mxu0
      %v1956 = vadd.f32 %v1867, %v1955
      %1957 = vmatmul.bf16.gmra.mxu0 %v483
      %v1958 = vpop.f32.mrf.mxu0
      %v1959 = vadd.f32 %v1870, %v1958
      %v1960 = vpop.f32.mrf.mxu0
      %v1961 = vadd.f32 %v1872, %v1960
      %1962 = vmatmul.bf16.gmra.mxu0 %v484
      %v1963 = vpop.f32.mrf.mxu0
      %v1964 = vadd.f32 %v1875, %v1963
      %v1965 = vpop.f32.mrf.mxu0
      %v1966 = vadd.f32 %v1877, %v1965
      %1967 = vmatmul.bf16.gmra.mxu0 %v485
      %v1968 = vpop.f32.mrf.mxu0
      %v1969 = vadd.f32 %v1880, %v1968
      %v1970 = vpop.f32.mrf.mxu0
      %v1971 = vadd.f32 %v1882, %v1970
      %1972 = vmatmul.bf16.gmra.mxu0 %v486
      %v1973 = vpop.f32.mrf.mxu0
      %v1974 = vadd.f32 %v1885, %v1973
      %v1975 = vpop.f32.mrf.mxu0
      %v1976 = vadd.f32 %v1887, %v1975
      %1977 = vmatmul.bf16.gmra.mxu0 %v487
      %v1978 = vpop.f32.mrf.mxu0
      %v1979 = vadd.f32 %v1890, %v1978
      %v1980 = vpop.f32.mrf.mxu0
      %v1981 = vadd.f32 %v1892, %v1980
      %1982 = vmatmul.bf16.gmra.mxu0 %v488
      %v1983 = vpop.f32.mrf.mxu0
      %v1984 = vadd.f32 %v1895, %v1983
      %v1985 = vpop.f32.mrf.mxu0
      %v1986 = vadd.f32 %v1897, %v1985
      %1987 = vmatmul.bf16.gmra.mxu0 %v489
      %v1988 = vpop.f32.mrf.mxu0
      %v1989 = vadd.f32 %v1900, %v1988
      %v1990 = vpop.f32.mrf.mxu0
      %v1991 = vadd.f32 %v1902, %v1990
      %1992 = vmatmul.bf16.gmra.mxu0 %v490
      %v1993 = vpop.f32.mrf.mxu0
      %v1994 = vadd.f32 %v1905, %v1993
      %v1995 = vpop.f32.mrf.mxu0
      %v1996 = vadd.f32 %v1907, %v1995
      %1997 = vmatmul.bf16.gmra.mxu0 %v491
      %v1998 = vpop.f32.mrf.mxu0
      %v1999 = vadd.f32 %v1910, %v1998
      %v2000 = vpop.f32.mrf.mxu0
      %v2001 = vadd.f32 %v1912, %v2000
      %2002 = vmatmul.bf16.gmra.mxu0 %v492
      %v2003 = vpop.f32.mrf.mxu0
      %v2004 = vadd.f32 %v1915, %v2003
      %v2005 = vpop.f32.mrf.mxu0
      %v2006 = vadd.f32 %v1917, %v2005
      %2007 = vmatmul.bf16.gmra.mxu0 %v493
      %v2008 = vpop.f32.mrf.mxu0
      %v2009 = vadd.f32 %v1920, %v2008
      %v2010 = vpop.f32.mrf.mxu0
      %v2011 = vadd.f32 %v1922, %v2010
      %2012 = vmatmul.bf16.gmra.mxu0 %v494
      %v2013 = vpop.f32.mrf.mxu0
      %v2014 = vadd.f32 %v1925, %v2013
      %v2015 = vpop.f32.mrf.mxu0
      %v2016 = vadd.f32 %v1927, %v2015
      %2017 = vmatmul.bf16.gmra.mxu0 %v495
      %v2018 = vpop.f32.mrf.mxu0
      %v2019 = vadd.f32 %v1930, %v2018
      %v2020 = vpop.f32.mrf.mxu0
      %v2021 = vadd.f32 %v1932, %v2020
      %2022 = vmatmul.bf16.gmra.mxu0 %v794
      %v2023 = vpop.f32.mrf.mxu0
      %v2024 = vadd.f32 %v1935, %v2023
      %v2025 = vpop.f32.mrf.mxu0
      %v2026 = vadd.f32 %v1937, %v2025
      %2027 = vdwg.mxu0
      %2028 = vmatpush.bf16.msra.mxu0 %v1486
      %2029 = vmatpush.bf16.msra.mxu0 %v1485
      %2030 = vmatpush.bf16.msra.mxu0 %v1484
      %2031 = vmatpush.bf16.msra.mxu0 %v1483
      %2032 = vmatpush.bf16.msra.mxu0 %v1482
      %2033 = vmatpush.bf16.msra.mxu0 %v1481
      %2034 = vmatpush.bf16.msra.mxu0 %v1480
      %2035 = vmatpush.bf16.msra.mxu0 %v1479
      %2036 = vmatmul.bf16.gmra.mxu0 %v777
      %v2037 = vpop.f32.mrf.mxu0
      %v2038 = vadd.f32 %v1949, %v2037
      %v2039 = vpop.f32.mrf.mxu0
      %v2040 = vadd.f32 %v1951, %v2039
      %2041 = vmatmul.bf16.gmra.mxu0 %v778
      %v2042 = vpop.f32.mrf.mxu0
      %v2043 = vadd.f32 %v1954, %v2042
      %v2044 = vpop.f32.mrf.mxu0
      %v2045 = vadd.f32 %v1956, %v2044
      %2046 = vmatmul.bf16.gmra.mxu0 %v779
      %v2047 = vpop.f32.mrf.mxu0
      %v2048 = vadd.f32 %v1959, %v2047
      %v2049 = vpop.f32.mrf.mxu0
      %v2050 = vadd.f32 %v1961, %v2049
      %2051 = vmatmul.bf16.gmra.mxu0 %v780
      %v2052 = vpop.f32.mrf.mxu0
      %v2053 = vadd.f32 %v1964, %v2052
      %v2054 = vpop.f32.mrf.mxu0
      %v2055 = vadd.f32 %v1966, %v2054
      %2056 = vmatmul.bf16.gmra.mxu0 %v781
      %v2057 = vpop.f32.mrf.mxu0
      %v2058 = vadd.f32 %v1969, %v2057
      %v2059 = vpop.f32.mrf.mxu0
      %v2060 = vadd.f32 %v1971, %v2059
      %2061 = vmatmul.bf16.gmra.mxu0 %v782
      %v2062 = vpop.f32.mrf.mxu0
      %v2063 = vadd.f32 %v1974, %v2062
      %v2064 = vpop.f32.mrf.mxu0
      %v2065 = vadd.f32 %v1976, %v2064
      %2066 = vmatmul.bf16.gmra.mxu0 %v783
      %v2067 = vpop.f32.mrf.mxu0
      %v2068 = vadd.f32 %v1979, %v2067
      %v2069 = vpop.f32.mrf.mxu0
      %v2070 = vadd.f32 %v1981, %v2069
      %2071 = vmatmul.bf16.gmra.mxu0 %v784
      %v2072 = vpop.f32.mrf.mxu0
      %v2073 = vadd.f32 %v1984, %v2072
      %v2074 = vpop.f32.mrf.mxu0
      %v2075 = vadd.f32 %v1986, %v2074
      %2076 = vmatmul.bf16.gmra.mxu0 %v785
      %v2077 = vpop.f32.mrf.mxu0
      %v2078 = vadd.f32 %v1989, %v2077
      %v2079 = vpop.f32.mrf.mxu0
      %v2080 = vadd.f32 %v1991, %v2079
      %2081 = vmatmul.bf16.gmra.mxu0 %v786
      %v2082 = vpop.f32.mrf.mxu0
      %v2083 = vadd.f32 %v1994, %v2082
      %v2084 = vpop.f32.mrf.mxu0
      %v2085 = vadd.f32 %v1996, %v2084
      %2086 = vmatmul.bf16.gmra.mxu0 %v787
      %v2087 = vpop.f32.mrf.mxu0
      %v2088 = vadd.f32 %v1999, %v2087
      %v2089 = vpop.f32.mrf.mxu0
      %v2090 = vadd.f32 %v2001, %v2089
      %2091 = vmatmul.bf16.gmra.mxu0 %v788
      %v2092 = vpop.f32.mrf.mxu0
      %v2093 = vadd.f32 %v2004, %v2092
      %v2094 = vpop.f32.mrf.mxu0
      %v2095 = vadd.f32 %v2006, %v2094
      %2096 = vmatmul.bf16.gmra.mxu0 %v789
      %v2097 = vpop.f32.mrf.mxu0
      %v2098 = vadd.f32 %v2009, %v2097
      %v2099 = vpop.f32.mrf.mxu0
      %v2100 = vadd.f32 %v2011, %v2099
      %2101 = vmatmul.bf16.gmra.mxu0 %v790
      %v2102 = vpop.f32.mrf.mxu0
      %v2103 = vadd.f32 %v2014, %v2102
      %v2104 = vpop.f32.mrf.mxu0
      %v2105 = vadd.f32 %v2016, %v2104
      %2106 = vmatmul.bf16.gmra.mxu0 %v811
      %v2107 = vpop.f32.mrf.mxu0
      %v2108 = vadd.f32 %v2019, %v2107
      %v2109 = vpop.f32.mrf.mxu0
      %v2110 = vadd.f32 %v2021, %v2109
      %2111 = vmatmul.bf16.gmra.mxu0 %v812
      %v2112 = vpop.f32.mrf.mxu0
      %v2113 = vadd.f32 %v2024, %v2112
      %v2114 = vpop.f32.mrf.mxu0
      %v2115 = vadd.f32 %v2026, %v2114
      %2116 = vdwg.mxu0
      %2117 = vmatpush.bf16.msra.mxu0 %v1494
      %2118 = vmatpush.bf16.msra.mxu0 %v1493
      %2119 = vmatpush.bf16.msra.mxu0 %v1492
      %2120 = vmatpush.bf16.msra.mxu0 %v1491
      %2121 = vmatpush.bf16.msra.mxu0 %v1490
      %2122 = vmatpush.bf16.msra.mxu0 %v1489
      %2123 = vmatpush.bf16.msra.mxu0 %v1488
      %2124 = vmatpush.bf16.msra.mxu0 %v1487
      %2125 = vmatmul.bf16.gmra.mxu0 %v990
      %v2126 = vpop.f32.mrf.mxu0
      %v2127 = vadd.f32 %v2038, %v2126
      %v2128 = vpop.f32.mrf.mxu0
      %v2129 = vadd.f32 %v2040, %v2128
      %2130 = vmatmul.bf16.gmra.mxu0 %v991
      %v2131 = vpop.f32.mrf.mxu0
      %v2132 = vadd.f32 %v2043, %v2131
      %v2133 = vpop.f32.mrf.mxu0
      %v2134 = vadd.f32 %v2045, %v2133
      %2135 = vmatmul.bf16.gmra.mxu0 %v992
      %v2136 = vpop.f32.mrf.mxu0
      %v2137 = vadd.f32 %v2048, %v2136
      %v2138 = vpop.f32.mrf.mxu0
      %v2139 = vadd.f32 %v2050, %v2138
      %2140 = vmatmul.bf16.gmra.mxu0 %v993
      %v2141 = vpop.f32.mrf.mxu0
      %v2142 = vadd.f32 %v2053, %v2141
      %v2143 = vpop.f32.mrf.mxu0
      %v2144 = vadd.f32 %v2055, %v2143
      %2145 = vmatmul.bf16.gmra.mxu0 %v994
      %v2146 = vpop.f32.mrf.mxu0
      %v2147 = vadd.f32 %v2058, %v2146
      %v2148 = vpop.f32.mrf.mxu0
      %v2149 = vadd.f32 %v2060, %v2148
      %2150 = vmatmul.bf16.gmra.mxu0 %v995
      %v2151 = vpop.f32.mrf.mxu0
      %v2152 = vadd.f32 %v2063, %v2151
      %v2153 = vpop.f32.mrf.mxu0
      %v2154 = vadd.f32 %v2065, %v2153
      %2155 = vmatmul.bf16.gmra.mxu0 %v996
      %v2156 = vpop.f32.mrf.mxu0
      %v2157 = vadd.f32 %v2068, %v2156
      %v2158 = vpop.f32.mrf.mxu0
      %v2159 = vadd.f32 %v2070, %v2158
      %2160 = vmatmul.bf16.gmra.mxu0 %v997
      %v2161 = vpop.f32.mrf.mxu0
      %v2162 = vadd.f32 %v2073, %v2161
      %v2163 = vpop.f32.mrf.mxu0
      %v2164 = vadd.f32 %v2075, %v2163
      %2165 = vmatmul.bf16.gmra.mxu0 %v998
      %v2166 = vpop.f32.mrf.mxu0
      %v2167 = vadd.f32 %v2078, %v2166
      %v2168 = vpop.f32.mrf.mxu0
      %v2169 = vadd.f32 %v2080, %v2168
      %2170 = vmatmul.bf16.gmra.mxu0 %v999
      %v2171 = vpop.f32.mrf.mxu0
      %v2172 = vadd.f32 %v2083, %v2171
      %v2173 = vpop.f32.mrf.mxu0
      %v2174 = vadd.f32 %v2085, %v2173
      %2175 = vmatmul.bf16.gmra.mxu0 %v1000
      %v2176 = vpop.f32.mrf.mxu0
      %v2177 = vadd.f32 %v2088, %v2176
      %v2178 = vpop.f32.mrf.mxu0
      %v2179 = vadd.f32 %v2090, %v2178
      %2180 = vmatmul.bf16.gmra.mxu0 %v1001
      %v2181 = vpop.f32.mrf.mxu0
      %v2182 = vadd.f32 %v2093, %v2181
      %v2183 = vpop.f32.mrf.mxu0
      %v2184 = vadd.f32 %v2095, %v2183
      %2185 = vmatmul.bf16.gmra.mxu0 %v1002
      %v2186 = vpop.f32.mrf.mxu0
      %v2187 = vadd.f32 %v2098, %v2186
      %v2188 = vpop.f32.mrf.mxu0
      %v2189 = vadd.f32 %v2100, %v2188
      %2190 = vmatmul.bf16.gmra.mxu0 %v1003
      %v2191 = vpop.f32.mrf.mxu0
      %v2192 = vadd.f32 %v2103, %v2191
      %v2193 = vpop.f32.mrf.mxu0
      %v2194 = vadd.f32 %v2105, %v2193
      %2195 = vmatmul.bf16.gmra.mxu0 %v1004
      %v2196 = vpop.f32.mrf.mxu0
      %v2197 = vadd.f32 %v2108, %v2196
      %v2198 = vpop.f32.mrf.mxu0
      %v2199 = vadd.f32 %v2110, %v2198
      %2200 = vmatmul.bf16.gmra.mxu0 %v1005
      %v2201 = vpop.f32.mrf.mxu0
      %v2202 = vadd.f32 %v2113, %v2201
      %v2203 = vpop.f32.mrf.mxu0
      %v2204 = vadd.f32 %v2115, %v2203
      %2205 = vdwg.mxu0
      %2206 = vmatpush.bf16.msra.mxu0 %v1502
      %2207 = vmatpush.bf16.msra.mxu0 %v1501
      %2208 = vmatpush.bf16.msra.mxu0 %v1500
      %2209 = vmatpush.bf16.msra.mxu0 %v1499
      %2210 = vmatpush.bf16.msra.mxu0 %v1498
      %2211 = vmatpush.bf16.msra.mxu0 %v1497
      %2212 = vmatpush.bf16.msra.mxu0 %v1496
      %2213 = vmatpush.bf16.msra.mxu0 %v1495
      %2214 = vmatmul.bf16.gmra.mxu0 %v482
      %v2215 = vpop.f32.mrf.mxu0
      %v2216 = vadd.f32 %v2127, %v2215
      %v2217 = vpop.f32.mrf.mxu0
      %v2218 = vadd.f32 %v2129, %v2217
      %2219 = vmatmul.bf16.gmra.mxu0 %v483
      %v2220 = vpop.f32.mrf.mxu0
      %v2221 = vadd.f32 %v2132, %v2220
      %v2222 = vpop.f32.mrf.mxu0
      %v2223 = vadd.f32 %v2134, %v2222
      %2224 = vmatmul.bf16.gmra.mxu0 %v484
      %v2225 = vpop.f32.mrf.mxu0
      %v2226 = vadd.f32 %v2137, %v2225
      %v2227 = vpop.f32.mrf.mxu0
      %v2228 = vadd.f32 %v2139, %v2227
      %2229 = vmatmul.bf16.gmra.mxu0 %v485
      %v2230 = vpop.f32.mrf.mxu0
      %v2231 = vadd.f32 %v2142, %v2230
      %v2232 = vpop.f32.mrf.mxu0
      %v2233 = vadd.f32 %v2144, %v2232
      %2234 = vmatmul.bf16.gmra.mxu0 %v486
      %v2235 = vpop.f32.mrf.mxu0
      %v2236 = vadd.f32 %v2147, %v2235
      %v2237 = vpop.f32.mrf.mxu0
      %v2238 = vadd.f32 %v2149, %v2237
      %2239 = vmatmul.bf16.gmra.mxu0 %v487
      %v2240 = vpop.f32.mrf.mxu0
      %v2241 = vadd.f32 %v2152, %v2240
      %v2242 = vpop.f32.mrf.mxu0
      %v2243 = vadd.f32 %v2154, %v2242
      %2244 = vmatmul.bf16.gmra.mxu0 %v488
      %v2245 = vpop.f32.mrf.mxu0
      %v2246 = vadd.f32 %v2157, %v2245
      %v2247 = vpop.f32.mrf.mxu0
      %v2248 = vadd.f32 %v2159, %v2247
      %2249 = vmatmul.bf16.gmra.mxu0 %v489
      %v2250 = vpop.f32.mrf.mxu0
      %v2251 = vadd.f32 %v2162, %v2250
      %v2252 = vpop.f32.mrf.mxu0
      %v2253 = vadd.f32 %v2164, %v2252
      %2254 = vmatmul.bf16.gmra.mxu0 %v490
      %v2255 = vpop.f32.mrf.mxu0
      %v2256 = vadd.f32 %v2167, %v2255
      %v2257 = vpop.f32.mrf.mxu0
      %v2258 = vadd.f32 %v2169, %v2257
      %2259 = vmatmul.bf16.gmra.mxu0 %v491
      %v2260 = vpop.f32.mrf.mxu0
      %v2261 = vadd.f32 %v2172, %v2260
      %v2262 = vpop.f32.mrf.mxu0
      %v2263 = vadd.f32 %v2174, %v2262
      %2264 = vmatmul.bf16.gmra.mxu0 %v492
      %v2265 = vpop.f32.mrf.mxu0
      %v2266 = vadd.f32 %v2177, %v2265
      %v2267 = vpop.f32.mrf.mxu0
      %v2268 = vadd.f32 %v2179, %v2267
      %2269 = vmatmul.bf16.gmra.mxu0 %v493
      %v2270 = vpop.f32.mrf.mxu0
      %v2271 = vadd.f32 %v2182, %v2270
      %v2272 = vpop.f32.mrf.mxu0
      %v2273 = vadd.f32 %v2184, %v2272
      %2274 = vmatmul.bf16.gmra.mxu0 %v494
      %v2275 = vpop.f32.mrf.mxu0
      %v2276 = vadd.f32 %v2187, %v2275
      %v2277 = vpop.f32.mrf.mxu0
      %v2278 = vadd.f32 %v2189, %v2277
      %2279 = vmatmul.bf16.gmra.mxu0 %v495
      %v2280 = vpop.f32.mrf.mxu0
      %v2281 = vadd.f32 %v2192, %v2280
      %v2282 = vpop.f32.mrf.mxu0
      %v2283 = vadd.f32 %v2194, %v2282
      %2284 = vmatmul.bf16.gmra.mxu0 %v794
      %v2285 = vpop.f32.mrf.mxu0
      %v2286 = vadd.f32 %v2197, %v2285
      %v2287 = vpop.f32.mrf.mxu0
      %v2288 = vadd.f32 %v2199, %v2287
      %2289 = vmatmul.bf16.gmra.mxu0 0
      %v2290 = vpop.f32.mrf.mxu0
      %v2291 = vadd.f32 %v2202, %v2290
      %v2292 = vpop.f32.mrf.mxu0
      %v2293 = vadd.f32 %v2204, %v2292
      %2294 = vdwg.mxu0
      %2295 = vmatpush.bf16.msra.mxu0 %v1510
      %2296 = vmatpush.bf16.msra.mxu0 %v1509
      %2297 = vmatpush.bf16.msra.mxu0 %v1508
      %2298 = vmatpush.bf16.msra.mxu0 %v1507
      %2299 = vmatpush.bf16.msra.mxu0 %v1506
      %2300 = vmatpush.bf16.msra.mxu0 %v1505
      %2301 = vmatpush.bf16.msra.mxu0 %v1504
      %2302 = vmatpush.bf16.msra.mxu0 %v1503
      %2303 = vmatmul.bf16.gmra.mxu0 %v778
      %v2304 = vpop.f32.mrf.mxu0
      %v2305 = vadd.f32 %v2216, %v2304
      %v2306 = vpop.f32.mrf.mxu0
      %v2307 = vadd.f32 %v2218, %v2306
      %2308 = vmatmul.bf16.gmra.mxu0 %v779
      %v2309 = vpop.f32.mrf.mxu0
      %v2310 = vadd.f32 %v2221, %v2309
      %v2311 = vpop.f32.mrf.mxu0
      %v2312 = vadd.f32 %v2223, %v2311
      %2313 = vmatmul.bf16.gmra.mxu0 %v780
      %v2314 = vpop.f32.mrf.mxu0
      %v2315 = vadd.f32 %v2226, %v2314
      %v2316 = vpop.f32.mrf.mxu0
      %v2317 = vadd.f32 %v2228, %v2316
      %2318 = vmatmul.bf16.gmra.mxu0 %v781
      %v2319 = vpop.f32.mrf.mxu0
      %v2320 = vadd.f32 %v2231, %v2319
      %v2321 = vpop.f32.mrf.mxu0
      %v2322 = vadd.f32 %v2233, %v2321
      %2323 = vmatmul.bf16.gmra.mxu0 %v782
      %v2324 = vpop.f32.mrf.mxu0
      %v2325 = vadd.f32 %v2236, %v2324
      %v2326 = vpop.f32.mrf.mxu0
      %v2327 = vadd.f32 %v2238, %v2326
      %2328 = vmatmul.bf16.gmra.mxu0 %v783
      %v2329 = vpop.f32.mrf.mxu0
      %v2330 = vadd.f32 %v2241, %v2329
      %v2331 = vpop.f32.mrf.mxu0
      %v2332 = vadd.f32 %v2243, %v2331
      %2333 = vmatmul.bf16.gmra.mxu0 %v784
      %v2334 = vpop.f32.mrf.mxu0
      %v2335 = vadd.f32 %v2246, %v2334
      %v2336 = vpop.f32.mrf.mxu0
      %v2337 = vadd.f32 %v2248, %v2336
      %2338 = vmatmul.bf16.gmra.mxu0 %v785
      %v2339 = vpop.f32.mrf.mxu0
      %v2340 = vadd.f32 %v2251, %v2339
      %v2341 = vpop.f32.mrf.mxu0
      %v2342 = vadd.f32 %v2253, %v2341
      %2343 = vmatmul.bf16.gmra.mxu0 %v786
      %v2344 = vpop.f32.mrf.mxu0
      %v2345 = vadd.f32 %v2256, %v2344
      %v2346 = vpop.f32.mrf.mxu0
      %v2347 = vadd.f32 %v2258, %v2346
      %2348 = vmatmul.bf16.gmra.mxu0 %v787
      %v2349 = vpop.f32.mrf.mxu0
      %v2350 = vadd.f32 %v2261, %v2349
      %v2351 = vpop.f32.mrf.mxu0
      %v2352 = vadd.f32 %v2263, %v2351
      %2353 = vmatmul.bf16.gmra.mxu0 %v788
      %v2354 = vpop.f32.mrf.mxu0
      %v2355 = vadd.f32 %v2266, %v2354
      %v2356 = vpop.f32.mrf.mxu0
      %v2357 = vadd.f32 %v2268, %v2356
      %2358 = vmatmul.bf16.gmra.mxu0 %v789
      %v2359 = vpop.f32.mrf.mxu0
      %v2360 = vadd.f32 %v2271, %v2359
      %v2361 = vpop.f32.mrf.mxu0
      %v2362 = vadd.f32 %v2273, %v2361
      %2363 = vmatmul.bf16.gmra.mxu0 %v790
      %v2364 = vpop.f32.mrf.mxu0
      %v2365 = vadd.f32 %v2276, %v2364
      %v2366 = vpop.f32.mrf.mxu0
      %v2367 = vadd.f32 %v2278, %v2366
      %2368 = vmatmul.bf16.gmra.mxu0 %v811
      %v2369 = vpop.f32.mrf.mxu0
      %v2370 = vadd.f32 %v2281, %v2369
      %v2371 = vpop.f32.mrf.mxu0
      %v2372 = vadd.f32 %v2283, %v2371
      %2373 = vmatmul.bf16.gmra.mxu0 %v812
      %v2374 = vpop.f32.mrf.mxu0
      %v2375 = vadd.f32 %v2286, %v2374
      %v2376 = vpop.f32.mrf.mxu0
      %v2377 = vadd.f32 %v2288, %v2376
      %2378 = vmatmul.bf16.gmra.mxu0 0
      %v2379 = vpop.f32.mrf.mxu0
      %v2380 = vadd.f32 %v2291, %v2379
      %v2381 = vpop.f32.mrf.mxu0
      %v2382 = vadd.f32 %v2293, %v2381
      %2383 = vdwg.mxu0
      %2384 = vst [vmem:[%s246] sm:$0xff] %v2305
      %2385 = vst [vmem:[%s246 + $0x8] sm:$0xff] %v2307
      %2386 = vst [vmem:[%s246 + $0x10] sm:$0xff] %v2310
      %2387 = vst [vmem:[%s246 + $0x18] sm:$0xff] %v2312
      %2388 = vst [vmem:[%s246 + $0x20] sm:$0xff] %v2315
      %2389 = vst [vmem:[%s246 + $0x28] sm:$0xff] %v2317
      %2390 = vst [vmem:[%s246 + $0x30] sm:$0xff] %v2320
      %2391 = vst [vmem:[%s246 + $0x38] sm:$0xff] %v2322
      %2392 = vst [vmem:[%s246 + $0x40] sm:$0xff] %v2325
      %2393 = vst [vmem:[%s246 + $0x48] sm:$0xff] %v2327
      %2394 = vst [vmem:[%s246 + $0x50] sm:$0xff] %v2330
      %2395 = vst [vmem:[%s246 + $0x58] sm:$0xff] %v2332
      %2396 = vst [vmem:[%s246 + $0x60] sm:$0xff] %v2335
      %2397 = vst [vmem:[%s246 + $0x68] sm:$0xff] %v2337
      %2398 = vst [vmem:[%s246 + $0x70] sm:$0xff] %v2340
      %2399 = vst [vmem:[%s246 + $0x78] sm:$0xff] %v2342
      %2400 = vst [vmem:[%s246 + $0x80] sm:$0xff] %v2345
      %2401 = vst [vmem:[%s246 + $0x88] sm:$0xff] %v2347
      %2402 = vst [vmem:[%s246 + $0x90] sm:$0xff] %v2350
      %2403 = vst [vmem:[%s246 + $0x98] sm:$0xff] %v2352
      %2404 = vst [vmem:[%s246 + $0xa0] sm:$0xff] %v2355
      %2405 = vst [vmem:[%s246 + $0xa8] sm:$0xff] %v2357
      %2406 = vst [vmem:[%s246 + $0xb0] sm:$0xff] %v2360
      %2407 = vst [vmem:[%s246 + $0xb8] sm:$0xff] %v2362
      %2408 = vst [vmem:[%s246 + $0xc0] sm:$0xff] %v2365
      %2409 = vst [vmem:[%s246 + $0xc8] sm:$0xff] %v2367
      %2410 = vst [vmem:[%s246 + $0xd0] sm:$0xff] %v2370
      %2411 = vst [vmem:[%s246 + $0xd8] sm:$0xff] %v2372
      %2412 = vst [vmem:[%s246 + $0xe0] sm:$0xff] %v2375
      %2413 = vst [vmem:[%s246 + $0xe8] sm:$0xff] %v2377
      %2414 = vst [vmem:[%s246 + $0xf0] sm:$0xff] %v2380
      %2415 = vst [vmem:[%s246 + $0xf8] sm:$0xff] %v2382
      %p2416 = scmp.eq.s32.totalorder %s18, 0
      // Predicated region
      $region37: #{bottleneck_pallas.5} parent=35 // pred_check
        %p2417 = pneg %p2416
      $region38: #{bottleneck_pallas.5} parent=35 // pred_check_branch
        %2419 = sbr.rel (%p2417) target = $region40
      $region39: #{bottleneck_pallas.5} parent=35 // pred_region
        %2420 = vst [vmem:[%s5] sm:$0x1] 0.0
        %2421 = vst [vmem:[%s6] sm:$0x1] 0.0
      $region40: #{bottleneck_pallas.5} parent=35 // pred_fallthru
        _
      %v2422 = vld [vmem:[%s5] sm:$0x1]
      %v2423 = vadd.f32 %v2305, %v2307
      %v2424 = vadd.f32 %v2423, %v2310
      %v2425 = vadd.f32 %v2424, %v2312
      %v2426 = vadd.f32 %v2425, %v2315
      %v2427 = vadd.f32 %v2426, %v2317
      %v2428 = vadd.f32 %v2427, %v2320
      %v2429 = vadd.f32 %v2428, %v2322
      %v2430 = vadd.f32 %v2429, %v2325
      %v2431 = vadd.f32 %v2430, %v2327
      %v2432 = vadd.f32 %v2431, %v2330
      %v2433 = vadd.f32 %v2432, %v2332
      %v2434 = vadd.f32 %v2433, %v2335
      %v2435 = vadd.f32 %v2434, %v2337
      %v2436 = vadd.f32 %v2435, %v2340
      %v2437 = vadd.f32 %v2436, %v2342
      %v2438 = vadd.f32 %v2437, %v2345
      %v2439 = vadd.f32 %v2438, %v2347
      %v2440 = vadd.f32 %v2439, %v2350
      %v2441 = vadd.f32 %v2440, %v2352
      %v2442 = vadd.f32 %v2441, %v2355
      %v2443 = vadd.f32 %v2442, %v2357
      %v2444 = vadd.f32 %v2443, %v2360
      %v2445 = vadd.f32 %v2444, %v2362
      %v2446 = vadd.f32 %v2445, %v2365
      %v2447 = vadd.f32 %v2446, %v2367
      %v2448 = vadd.f32 %v2447, %v2370
      %v2449 = vadd.f32 %v2448, %v2372
      %v2450 = vadd.f32 %v2449, %v2375
      %v2451 = vadd.f32 %v2450, %v2377
      %v2452 = vadd.f32 %v2451, %v2380
      %v2453 = vadd.f32 %v2452, %v2382
      %v2454 = vrot.slane %v2453, 4
      %v2455 = vadd.f32 %v2453, %v2454
      %v2456 = vrot.slane %v2455, 2
      %v2457 = vadd.f32 %v2455, %v2456
      %v2458 = vrot.slane %v2457, 1
      %v2459 = vadd.f32 %v2457, %v2458
      %v2460 = vadd.f32 %v2422, %v2459
      %2461 = vst [vmem:[%s5] sm:$0x1] %v2460
      %v2462 = vld [vmem:[%s6] sm:$0x1]
      %v2463 = vmul.f32 %v2305, %v2305
      %v2464 = vmul.f32 %v2307, %v2307
      %v2465 = vmul.f32 %v2310, %v2310
      %v2466 = vmul.f32 %v2312, %v2312
      %v2467 = vmul.f32 %v2315, %v2315
      %v2468 = vmul.f32 %v2317, %v2317
      %v2469 = vmul.f32 %v2320, %v2320
      %v2470 = vmul.f32 %v2322, %v2322
      %v2471 = vmul.f32 %v2325, %v2325
      %v2472 = vmul.f32 %v2327, %v2327
      %v2473 = vmul.f32 %v2330, %v2330
      %v2474 = vmul.f32 %v2332, %v2332
      %v2475 = vmul.f32 %v2335, %v2335
      %v2476 = vmul.f32 %v2337, %v2337
      %v2477 = vmul.f32 %v2340, %v2340
      %v2478 = vmul.f32 %v2342, %v2342
      %v2479 = vmul.f32 %v2345, %v2345
      %v2480 = vmul.f32 %v2347, %v2347
      %v2481 = vmul.f32 %v2350, %v2350
      %v2482 = vmul.f32 %v2352, %v2352
      %v2483 = vmul.f32 %v2355, %v2355
      %v2484 = vmul.f32 %v2357, %v2357
      %v2485 = vmul.f32 %v2360, %v2360
      %v2486 = vmul.f32 %v2362, %v2362
      %v2487 = vmul.f32 %v2365, %v2365
      %v2488 = vmul.f32 %v2367, %v2367
      %v2489 = vmul.f32 %v2370, %v2370
      %v2490 = vmul.f32 %v2372, %v2372
      %v2491 = vmul.f32 %v2375, %v2375
      %v2492 = vmul.f32 %v2377, %v2377
      %v2493 = vmul.f32 %v2380, %v2380
      %v2494 = vmul.f32 %v2382, %v2382
      %v2495 = vadd.f32 %v2463, %v2464
      %v2496 = vadd.f32 %v2495, %v2465
      %v2497 = vadd.f32 %v2496, %v2466
      %v2498 = vadd.f32 %v2497, %v2467
      %v2499 = vadd.f32 %v2498, %v2468
      %v2500 = vadd.f32 %v2499, %v2469
      %v2501 = vadd.f32 %v2500, %v2470
      %v2502 = vadd.f32 %v2501, %v2471
      %v2503 = vadd.f32 %v2502, %v2472
      %v2504 = vadd.f32 %v2503, %v2473
      %v2505 = vadd.f32 %v2504, %v2474
      %v2506 = vadd.f32 %v2505, %v2475
      %v2507 = vadd.f32 %v2506, %v2476
      %v2508 = vadd.f32 %v2507, %v2477
      %v2509 = vadd.f32 %v2508, %v2478
      %v2510 = vadd.f32 %v2509, %v2479
      %v2511 = vadd.f32 %v2510, %v2480
      %v2512 = vadd.f32 %v2511, %v2481
      %v2513 = vadd.f32 %v2512, %v2482
      %v2514 = vadd.f32 %v2513, %v2483
      %v2515 = vadd.f32 %v2514, %v2484
      %v2516 = vadd.f32 %v2515, %v2485
      %v2517 = vadd.f32 %v2516, %v2486
      %v2518 = vadd.f32 %v2517, %v2487
      %v2519 = vadd.f32 %v2518, %v2488
      %v2520 = vadd.f32 %v2519, %v2489
      %v2521 = vadd.f32 %v2520, %v2490
      %v2522 = vadd.f32 %v2521, %v2491
      %v2523 = vadd.f32 %v2522, %v2492
      %v2524 = vadd.f32 %v2523, %v2493
      %v2525 = vadd.f32 %v2524, %v2494
      %v2526 = vrot.slane %v2525, 4
      %v2527 = vadd.f32 %v2525, %v2526
      %v2528 = vrot.slane %v2527, 2
      %v2529 = vadd.f32 %v2527, %v2528
      %v2530 = vrot.slane %v2529, 1
      %v2531 = vadd.f32 %v2529, %v2530
      %v2532 = vadd.f32 %v2462, %v2531
      %2533 = vst [vmem:[%s6] sm:$0x1] %v2532
      %p2534 = scmp.lt.s32.totalorder %s18, 1
      %s2535 = scalar_select %p2534, %s18, 1
      %s2536 = smul.addr %s2535, 32
      %s2537 = smul.addr %s2536, 8
      %s2538 = scalar_lea.vmem %s4, %s2537
      // Predicated region
      $region41: #{bottleneck_pallas.5} parent=35 // pred_check
        %p2539 = pneg %p125
      $region42: #{bottleneck_pallas.5} parent=35 // pred_check_branch
        %2541 = sbr.rel (%p2539) target = $region44
      $region43: #{bottleneck_pallas.5} parent=35 // pred_region
        _
      $region44: #{bottleneck_pallas.5} parent=35 // pred_fallthru
        _
      // Predicated region
      $region45: #{bottleneck_pallas.5} parent=35 // pred_check
        %p2542 = pneg %p146
      $region46: #{bottleneck_pallas.5} parent=35 // pred_check_branch
        %2544 = sbr.rel (%p2542) target = $region48
      $region47: #{bottleneck_pallas.5} parent=35 // pred_region
        _
      $region48: #{bottleneck_pallas.5} parent=35 // pred_fallthru
        _
      // Predicated region
      $region49: #{bottleneck_pallas.5} parent=35 // pred_check
        %p2545 = pneg %p167
      $region50: #{bottleneck_pallas.5} parent=35 // pred_check_branch
        %2547 = sbr.rel (%p2545) target = $region52
      $region51: #{bottleneck_pallas.5} parent=35 // pred_region
        _
      $region52: #{bottleneck_pallas.5} parent=35 // pred_fallthru
        _
      // Predicated region
      $region53: #{bottleneck_pallas.5} parent=35 // pred_check
        %p2548 = pneg %p146
      $region54: #{bottleneck_pallas.5} parent=35 // pred_check_branch
        %2550 = sbr.rel (%p2548) target = $region56
      $region55: #{bottleneck_pallas.5} parent=35 // pred_region
        _
      $region56: #{bottleneck_pallas.5} parent=35 // pred_fallthru
        _
      // Predicated region
      $region57: #{bottleneck_pallas.5} parent=35 // pred_check
        %p2551 = pneg %p167
      $region58: #{bottleneck_pallas.5} parent=35 // pred_check_branch
        %2553 = sbr.rel (%p2551) target = $region60
      $region59: #{bottleneck_pallas.5} parent=35 // pred_region
        _
      $region60: #{bottleneck_pallas.5} parent=35 // pred_fallthru
        _
    $region36: #{bottleneck_pallas.5} parent=5 // pred_fallthru
      _
    %p2554 = scmp.le.s32.totalorder 2, %s13
    // Predicated region
    $region61: #{bottleneck_pallas.5} parent=5 // pred_check
      %p2555 = pneg %p2554
    $region62: #{bottleneck_pallas.5} parent=5 // pred_check_branch
      %2557 = sbr.rel (%p2555) target = $region64
    $region63: #{bottleneck_pallas.5} parent=5 // pred_region
      %s2558 = ssub.s32 %s13, 2
      // Predicated region
      $region65: #{bottleneck_pallas.5} parent=63 // pred_check
        %p2559 = pneg %p131
      $region66: #{bottleneck_pallas.5} parent=63 // pred_check_branch
        %2561 = sbr.rel (%p2559) target = $region68
      $region67: #{bottleneck_pallas.5} parent=63 // pred_region
        %p2562 = scmp.lt.s32.totalorder %s19, 1
        %s2563 = scalar_select %p2562, %s19, 1
        %s2564 = smul.addr %s2563, 32
        %s2565 = smul.addr %s2564, 8
        %s2566 = scalar_lea.vmem %s4, %s2565
      $region68: #{bottleneck_pallas.5} parent=63 // pred_fallthru
        _
    $region64: #{bottleneck_pallas.5} parent=5 // pred_fallthru
      _
  $region6: #{bottleneck_pallas.5} parent=0 // loop_footer
    %s17 = sadd.s32 1, %s13
  $region7: #{bottleneck_pallas.5} parent=0 // loop_footer_branch
    %12 = sbr.rel target = $region3
  $region8: #{bottleneck_pallas.5} parent=0 // loop_exit
    _

</llo_original>
